<compile_context>
chip_gen: v6e
topology: v6e:2x2x1
jax: 0.10.0
libtpu: 0.0.40
codegen_flags: <defaults>
</compile_context>

<pallas_src>
import functools

import jax
import jax.numpy as jnp
from jax.experimental import pallas as pl
from jax.experimental.pallas import tpu as pltpu

_BN_EPS = 1e-5            # nn.BatchNorm2d default
_SLOPE = 0.2              # LeakyReLU slope
_VMEM_LIMIT = 32 * 1024 * 1024


def _round_up(v, m):
    return (v + m - 1) // m * m


def _lrelu(y):
    return jnp.where(y >= 0, y, _SLOPE * y)


# ---------------------------------------------------------------------------
# In-kernel helpers
# ---------------------------------------------------------------------------
def _im2col_s2d(x_ref, ho, wo):
    """Gather the 4 overlapping 2x2-cell taps of a space-to-depth'd, zero
    padded input into an (M, 16*Cin) bf16 im2col matrix, entirely in VMEM
    (no expanded patch tensor ever touches HBM)."""
    m = x_ref.shape[0] * ho * wo
    parts = []
    for a in range(2):
        for b in range(2):
            xs = x_ref[:, a:a + ho, b:b + wo, :]          # bf16, no casts
            parts.append(xs.reshape(m, xs.shape[-1]))
    return jnp.concatenate(parts, axis=-1)


def _bn_lrelu(acc, gamma, beta, eps):
    """BatchNorm2d (training-mode batch stats, biased variance) folded into a
    per-channel scale/shift, fused with LeakyReLU(0.2).  Variance is computed
    from sums (E[x^2]-E[x]^2) so no second (M, C) f32 temp is materialized."""
    m = acc.shape[0]
    mean = jnp.sum(acc, axis=0, keepdims=True) * (1.0 / m)
    ex2 = jnp.sum(acc * acc, axis=0, keepdims=True) * (1.0 / m)
    var = ex2 - mean * mean
    scale = gamma * jax.lax.rsqrt(var + eps)
    shift = beta - mean * scale
    return _lrelu(acc * scale + shift)


# ---------------------------------------------------------------------------
# Pallas kernels
# ---------------------------------------------------------------------------
def _conv1_kernel(x_ref, w_ref, o_ref, *, ho, wo):
    # Layer 1: Conv(4,2,1) + LeakyReLU.  One image per grid step ("parallel").
    lhs = _im2col_s2d(x_ref, ho, wo)                       # bf16 (M, 16*Cin)
    acc = jnp.dot(lhs, w_ref[...], preferred_element_type=jnp.float32)
    o_ref[...] = _lrelu(acc).astype(o_ref.dtype)


def _conv_bn_kernel(x_ref, w_ref, g_ref, b_ref, o_ref, *, ho, wo, eps):
    # Conv(4,2,1) + BatchNorm2d + LeakyReLU on the whole batch (exact stats).
    lhs = _im2col_s2d(x_ref, ho, wo)                       # bf16
    acc = jnp.dot(lhs, w_ref[...], preferred_element_type=jnp.float32)
    o_ref[...] = _bn_lrelu(acc, g_ref[...], b_ref[...], eps).astype(o_ref.dtype)


def _head_kernel(lhs_ref, w4_ref, g_ref, b_ref, w5_ref, o_ref, *, n, eps):
    # Layer 4: single MXU matmul over all N*16 output pixels + fused BN/LReLU.
    acc = jnp.dot(lhs_ref[...], w4_ref[...],
                  preferred_element_type=jnp.float32)      # (N*16, C4) f32
    y = _bn_lrelu(acc, g_ref[...], b_ref[...], eps)
    # Layer 5: full 4x4 conv -> 1 channel == per-image multiply + reduce.
    c4 = y.shape[-1]
    z = y.reshape(n, 16, c4) * w5_ref[...][None, :, :]     # (N, 16, C4)
    per_pos = jnp.sum(z, axis=-1)                          # (N, 16)
    logits = jnp.sum(per_pos, axis=-1, keepdims=True)      # (N, 1)
    o_ref[...] = jax.nn.sigmoid(logits)


# ---------------------------------------------------------------------------
# Wrapper-side layout helpers (cheap, non-expanding XLA glue)
# ---------------------------------------------------------------------------
def _space_to_depth(x):
    n, h, w, c = x.shape
    x = x.reshape(n, h // 2, 2, w // 2, 2, c)
    x = x.transpose(0, 1, 3, 2, 4, 5)
    return x.reshape(n, h // 2, w // 2, 4 * c)


def _reblock(y_flat, n, hw, c, pad):
    # (N*H*W, C) flat activation -> space-to-depth of the zero-padded map.
    y = y_flat.reshape(n, hw, hw, c)
    if pad:
        y = jnp.pad(y, ((0, 0), (pad, pad), (pad, pad), (0, 0)))
    return _space_to_depth(y)


def _pack_conv_weight(w):
    # (4, 4, Cin, Cout) -> (16*Cin, Cout), rows ordered (cell-row A, cell-col
    # B, intra-cell dh, dw, cin) to match the kernels' space-to-depth packing.
    cin, cout = w.shape[2], w.shape[3]
    w = w.reshape(2, 2, 2, 2, cin, cout)        # (A, dh, B, dw, cin, cout)
    w = w.transpose(0, 2, 1, 3, 4, 5)           # (A, B, dh, dw, cin, cout)
    return w.reshape(16 * cin, cout)


# ---------------------------------------------------------------------------
# Parameters (DCGAN-style normal(0, 0.02) conv weights, default BN affine)
# ---------------------------------------------------------------------------
def init_params(key, num_channels, num_df):
    ks = jax.random.split(key, 5)
    cin_pad = _round_up(num_channels, 8)        # layer-1 K = 16*cin_pad = 128

    def conv_w(k, cin, cout, cin_to):
        w = 0.02 * jax.random.normal(k, (4, 4, cin, cout), jnp.float32)
        if cin_to > cin:
            w = jnp.pad(w, ((0, 0), (0, 0), (0, cin_to - cin), (0, 0)))
        return w

    params = {
        "w1": _pack_conv_weight(
            conv_w(ks[0], num_channels, num_df, cin_pad)).astype(jnp.bfloat16),
        "w2": _pack_conv_weight(
            conv_w(ks[1], num_df, 2 * num_df, num_df)).astype(jnp.bfloat16),
        "w3": _pack_conv_weight(
            conv_w(ks[2], 2 * num_df, 4 * num_df, 2 * num_df)).astype(jnp.bfloat16),
        "w4": _pack_conv_weight(
            conv_w(ks[3], 4 * num_df, 8 * num_df, 4 * num_df)).astype(jnp.bfloat16),
        # Layer 5 (Cout=1): kept as a (16, 8*ndf) per-position weight table for
        # the in-kernel VPU multiply + reduce.
        "w5": conv_w(ks[4], 8 * num_df, 1, 8 * num_df)[..., 0].reshape(
            16, 8 * num_df).astype(jnp.float32),
    }
    for i, ch in ((2, 2 * num_df), (3, 4 * num_df), (4, 8 * num_df)):
        params[f"g{i}"] = jnp.ones((1, ch), jnp.float32)
        params[f"b{i}"] = jnp.zeros((1, ch), jnp.float32)
    return params


# ---------------------------------------------------------------------------
# Forward pass (mirrors Discriminator.forward; use_cuda/num_gpus is a
# device-placement detail with no kernel semantics)
# ---------------------------------------------------------------------------
def discriminator_forward(x_nchw, params):
    n, c, h, w = x_nchw.shape
    assert h == 64 and w == 64, "DCGAN discriminator expects 64x64 inputs"
    ndf = params["w1"].shape[1]
    cin_pad = params["w1"].shape[0] // 16

    x = jnp.transpose(x_nchw, (0, 2, 3, 1)).astype(jnp.float32)   # NCHW -> NHWC
    if cin_pad > c:
        x = jnp.pad(x, ((0, 0), (0, 0), (0, 0), (0, cin_pad - c)))
    x1 = _space_to_depth(
        jnp.pad(x, ((0, 0), (1, 1), (1, 1), (0, 0)))).astype(jnp.bfloat16)

    s1 = h // 2                                                   # 32
    cp = pltpu.CompilerParams(vmem_limit_bytes=_VMEM_LIMIT)
    vmem = pltpu.MemorySpace.VMEM

    # ---- Layer 1: Conv + LeakyReLU, grid over the batch ("parallel"). ----
    y = pl.pallas_call(
        functools.partial(_conv1_kernel, ho=s1, wo=s1),
        out_shape=jax.ShapeDtypeStruct((n * s1 * s1, ndf), jnp.bfloat16),
        grid=(n,),
        in_specs=[
            pl.BlockSpec((1, s1 + 1, s1 + 1, 4 * cin_pad),
                         lambda i: (i, 0, 0, 0)),
            pl.BlockSpec((16 * cin_pad, ndf), lambda i: (0, 0)),
        ],
        out_specs=pl.BlockSpec((s1 * s1, ndf), lambda i: (i, 0)),
        compiler_params=pltpu.CompilerParams(
            dimension_semantics=("parallel",),
            vmem_limit_bytes=_VMEM_LIMIT),
    )(x1, params["w1"])

    # ---- Layers 2 & 3: Conv + BatchNorm + LeakyReLU (fused epilogue). ----
    for idx in (2, 3):
        hw_in = h // (2 ** (idx - 1))        # 32, 16
        cin = ndf * 2 ** (idx - 2)           # ndf, 2*ndf
        cout = 2 * cin
        ho = hw_in // 2
        xs2d = _reblock(y, n, hw_in, cin, 1)                      # bf16
        y = pl.pallas_call(
            functools.partial(_conv_bn_kernel, ho=ho, wo=ho, eps=_BN_EPS),
            out_shape=jax.ShapeDtypeStruct((n * ho * ho, cout), jnp.bfloat16),
            in_specs=[pl.BlockSpec(memory_space=vmem)] * 4,
            out_specs=pl.BlockSpec(memory_space=vmem),
            compiler_params=cp,
        )(xs2d, params[f"w{idx}"], params[f"g{idx}"], params[f"b{idx}"])

    # ---- Layers 4 + 5 fused head: Conv+BN+LReLU then Conv(->1)+Sigmoid. ----
    # The layer-4 im2col (N*16 x 64*ndf, a few KiB) is assembled by cheap XLA
    # glue here so the kernel is a single lane-aligned matmul with no
    # sub-8-sublane in-kernel reshapes.
    s3 = h // 8                                                   # 8
    x4 = _reblock(y, n, s3, 4 * ndf, 1)                           # (n,5,5,16*ndf)
    lhs4 = jnp.concatenate(
        [x4[:, a:a + 4, b:b + 4, :].reshape(n * 16, 16 * ndf)
         for a in range(2) for b in range(2)], axis=-1)           # (n*16, 64*ndf)

    out = pl.pallas_call(
        functools.partial(_head_kernel, n=n, eps=_BN_EPS),
        out_shape=jax.ShapeDtypeStruct((n, 1), jnp.float32),
        in_specs=[pl.BlockSpec(memory_space=vmem)] * 5,
        out_specs=pl.BlockSpec(memory_space=vmem),
        compiler_params=cp,
    )(lhs4, params["w4"], params["g4"], params["b4"], params["w5"])

    # output.view(-1, 1).squeeze(1) -> shape (N,)
    return out[:, 0]


if __name__ == "__main__":
    num_channels, num_df = 3, 8
    batch, spatial = 2, 64   # the architecture requires 64x64 inputs

    key = jax.random.PRNGKey(0)
    pkey, xkey = jax.random.split(key)
    params = init_params(pkey, num_channels, num_df)
    x = jax.random.normal(xkey, (batch, num_channels, spatial, spatial),
                          jnp.float32)

    fwd = jax.jit(discriminator_forward)
    out = jax.block_until_ready(fwd(x, params))

    assert out.shape == (batch,), out.shape
    assert bool(jnp.all(jnp.isfinite(out)))
    assert bool(jnp.all((out >= 0.0) & (out <= 1.0)))   # sigmoid output
    print("KERNEL_OK")
</pallas_src>

<mosaic_0001>
module attributes {stable_mosaic.version = 11 : i64} {
  func.func @_conv1_kernel(%arg0: i32, %arg1: memref<1x33x33x32xbf16, #tpu.memory_space<vmem>>, %arg2: memref<128x8xbf16, #tpu.memory_space<vmem>>, %arg3: memref<1024x8xbf16, #tpu.memory_space<vmem>>) attributes {dimension_semantics = [#tpu.dimension_semantics<parallel>], iteration_bounds = array<i64: 2>, scalar_prefetch = 0 : i64, scratch_operands = 0 : i64, tpu.core_type = #tpu.core_type<tc>, window_params = [{transform_indices = @transform_0, window_bounds = array<i64: 1, 33, 33, 32>}, {pipeline_mode = #tpu.pipeline_mode<synchronous>, transform_indices = @transform_1, window_bounds = array<i64: 128, 8>}, {transform_indices = @transform_2, window_bounds = array<i64: 1024, 8>}]} {
    %c0 = arith.constant 0 : index
    %c0_0 = arith.constant 0 : index
    %c0_1 = arith.constant 0 : index
    %c0_2 = arith.constant 0 : index
    %0 = vector.load %arg1[%c0, %c0_0, %c0_1, %c0_2] : memref<1x33x33x32xbf16, #tpu.memory_space<vmem>>, vector<1x32x32x32xbf16>
    %1 = vector.shape_cast %0 : vector<1x32x32x32xbf16> to vector<1024x32xbf16>
    %c0_3 = arith.constant 0 : index
    %c0_4 = arith.constant 0 : index
    %c1 = arith.constant 1 : index
    %c0_5 = arith.constant 0 : index
    %2 = vector.load %arg1[%c0_3, %c0_4, %c1, %c0_5] : memref<1x33x33x32xbf16, #tpu.memory_space<vmem>>, vector<1x32x32x32xbf16>
    %3 = vector.shape_cast %2 : vector<1x32x32x32xbf16> to vector<1024x32xbf16>
    %c0_6 = arith.constant 0 : index
    %c1_7 = arith.constant 1 : index
    %c0_8 = arith.constant 0 : index
    %c0_9 = arith.constant 0 : index
    %4 = vector.load %arg1[%c0_6, %c1_7, %c0_8, %c0_9] : memref<1x33x33x32xbf16, #tpu.memory_space<vmem>>, vector<1x32x32x32xbf16>
    %5 = vector.shape_cast %4 : vector<1x32x32x32xbf16> to vector<1024x32xbf16>
    %c0_10 = arith.constant 0 : index
    %c1_11 = arith.constant 1 : index
    %c1_12 = arith.constant 1 : index
    %c0_13 = arith.constant 0 : index
    %6 = vector.load %arg1[%c0_10, %c1_11, %c1_12, %c0_13] : memref<1x33x33x32xbf16, #tpu.memory_space<vmem>>, vector<1x32x32x32xbf16>
    %7 = vector.shape_cast %6 : vector<1x32x32x32xbf16> to vector<1024x32xbf16>
    %8 = tpu.concatenate %1, %3, %5, %7 in 1 : vector<1024x32xbf16>, vector<1024x32xbf16>, vector<1024x32xbf16>, vector<1024x32xbf16> -> vector<1024x128xbf16>
    %c0_14 = arith.constant 0 : index
    %c0_15 = arith.constant 0 : index
    %9 = vector.load %arg2[%c0_14, %c0_15] : memref<128x8xbf16, #tpu.memory_space<vmem>>, vector<128x8xbf16>
    %cst = arith.constant dense<0.000000e+00> : vector<1024x8xf32>
    %10 = tpu.matmul %8, %9, %cst {dimension_numbers = #tpu.dot_dimension_numbers<[1], [0], [0], [1], [0, 0, 1, 1], [], []>} : vector<1024x128xbf16>, vector<128x8xbf16>, vector<1024x8xf32> -> vector<1024x8xf32>
    %cst_16 = arith.constant 0.000000e+00 : f32
    %11 = vector.broadcast %cst_16 : f32 to vector<1024x8xf32>
    %12 = arith.cmpf oge, %10, %11 : vector<1024x8xf32>
    %cst_17 = arith.constant 2.000000e-01 : f32
    %13 = vector.broadcast %cst_17 : f32 to vector<1024x8xf32>
    %14 = arith.mulf %13, %10 : vector<1024x8xf32>
    %15 = arith.select %12, %10, %14 : vector<1024x8xi1>, vector<1024x8xf32>
    %16 = arith.truncf %15 : vector<1024x8xf32> to vector<1024x8xbf16>
    %c0_18 = arith.constant 0 : index
    %c0_19 = arith.constant 0 : index
    %17 = vector.load %arg3[%c0_18, %c0_19] : memref<1024x8xbf16, #tpu.memory_space<vmem>>, vector<1024x8xbf16>
    tpu.vector_store %arg3[%c0_18, %c0_19], %16 {strides = array<i32>} : memref<1024x8xbf16, #tpu.memory_space<vmem>>, vector<1024x8xbf16>,
    return
  }
  func.func @transform_0(%arg0: i32) -> (i32, i32, i32, i32) {
    %c0_i32 = arith.constant 0 : i32
    %c0_i32_0 = arith.constant 0 : i32
    %c0_i32_1 = arith.constant 0 : i32
    %c0_i32_2 = arith.constant 0 : i32
    return %arg0, %c0_i32, %c0_i32_0, %c0_i32_1 : i32, i32, i32, i32
  }
  func.func @transform_1(%arg0: i32) -> (i32, i32) {
    %c0_i32 = arith.constant 0 : i32
    %c0_i32_0 = arith.constant 0 : i32
    %c0_i32_1 = arith.constant 0 : i32
    return %c0_i32, %c0_i32_0 : i32, i32
  }
  func.func @transform_2(%arg0: i32) -> (i32, i32) {
    %c0_i32 = arith.constant 0 : i32
    %c0_i32_0 = arith.constant 0 : i32
    return %arg0, %c0_i32 : i32, i32
  }
}

module attributes {stable_mosaic.version = 11 : i64} {
  func.func @_conv_bn_kernel(%arg0: memref<2x17x17x32xbf16, #tpu.memory_space<vmem>>, %arg1: memref<128x16xbf16, #tpu.memory_space<vmem>>, %arg2: memref<1x16xf32, #tpu.memory_space<vmem>>, %arg3: memref<1x16xf32, #tpu.memory_space<vmem>>, %arg4: memref<512x16xbf16, #tpu.memory_space<vmem>>) attributes {dimension_semantics = [], scalar_prefetch = 0 : i64, scratch_operands = 0 : i64, tpu.core_type = #tpu.core_type<tc>} {
    %c0 = arith.constant 0 : index
    %c0_0 = arith.constant 0 : index
    %c0_1 = arith.constant 0 : index
    %c0_2 = arith.constant 0 : index
    %0 = vector.load %arg0[%c0, %c0_0, %c0_1, %c0_2] : memref<2x17x17x32xbf16, #tpu.memory_space<vmem>>, vector<2x16x16x32xbf16>
    %1 = vector.shape_cast %0 : vector<2x16x16x32xbf16> to vector<512x32xbf16>
    %c0_3 = arith.constant 0 : index
    %c0_4 = arith.constant 0 : index
    %c1 = arith.constant 1 : index
    %c0_5 = arith.constant 0 : index
    %2 = vector.load %arg0[%c0_3, %c0_4, %c1, %c0_5] : memref<2x17x17x32xbf16, #tpu.memory_space<vmem>>, vector<2x16x16x32xbf16>
    %3 = vector.shape_cast %2 : vector<2x16x16x32xbf16> to vector<512x32xbf16>
    %c0_6 = arith.constant 0 : index
    %c1_7 = arith.constant 1 : index
    %c0_8 = arith.constant 0 : index
    %c0_9 = arith.constant 0 : index
    %4 = vector.load %arg0[%c0_6, %c1_7, %c0_8, %c0_9] : memref<2x17x17x32xbf16, #tpu.memory_space<vmem>>, vector<2x16x16x32xbf16>
    %5 = vector.shape_cast %4 : vector<2x16x16x32xbf16> to vector<512x32xbf16>
    %c0_10 = arith.constant 0 : index
    %c1_11 = arith.constant 1 : index
    %c1_12 = arith.constant 1 : index
    %c0_13 = arith.constant 0 : index
    %6 = vector.load %arg0[%c0_10, %c1_11, %c1_12, %c0_13] : memref<2x17x17x32xbf16, #tpu.memory_space<vmem>>, vector<2x16x16x32xbf16>
    %7 = vector.shape_cast %6 : vector<2x16x16x32xbf16> to vector<512x32xbf16>
    %8 = tpu.concatenate %1, %3, %5, %7 in 1 : vector<512x32xbf16>, vector<512x32xbf16>, vector<512x32xbf16>, vector<512x32xbf16> -> vector<512x128xbf16>
    %c0_14 = arith.constant 0 : index
    %c0_15 = arith.constant 0 : index
    %9 = vector.load %arg1[%c0_14, %c0_15] : memref<128x16xbf16, #tpu.memory_space<vmem>>, vector<128x16xbf16>
    %cst = arith.constant dense<0.000000e+00> : vector<512x16xf32>
    %10 = tpu.matmul %8, %9, %cst {dimension_numbers = #tpu.dot_dimension_numbers<[1], [0], [0], [1], [0, 0, 1, 1], [], []>} : vector<512x128xbf16>, vector<128x16xbf16>, vector<512x16xf32> -> vector<512x16xf32>
    %c0_16 = arith.constant 0 : index
    %c0_17 = arith.constant 0 : index
    %11 = vector.load %arg2[%c0_16, %c0_17] : memref<1x16xf32, #tpu.memory_space<vmem>>, vector<1x16xf32>
    %c0_18 = arith.constant 0 : index
    %c0_19 = arith.constant 0 : index
    %12 = vector.load %arg3[%c0_18, %c0_19] : memref<1x16xf32, #tpu.memory_space<vmem>>, vector<1x16xf32>
    %cst_20 = arith.constant dense<0.000000e+00> : vector<16xf32>
    %13 = vector.multi_reduction <add>, %10, %cst_20 [0] : vector<512x16xf32> to vector<16xf32>
    %14 = vector.shape_cast %13 : vector<16xf32> to vector<1x16xf32>
    %cst_21 = arith.constant 0.001953125 : f32
    %15 = vector.broadcast %cst_21 : f32 to vector<1x16xf32>
    %16 = arith.mulf %14, %15 : vector<1x16xf32>
    %17 = arith.mulf %10, %10 : vector<512x16xf32>
    %cst_22 = arith.constant dense<0.000000e+00> : vector<16xf32>
    %18 = vector.multi_reduction <add>, %17, %cst_22 [0] : vector<512x16xf32> to vector<16xf32>
    %19 = vector.shape_cast %18 : vector<16xf32> to vector<1x16xf32>
    %cst_23 = arith.constant 0.001953125 : f32
    %20 = vector.broadcast %cst_23 : f32 to vector<1x16xf32>
    %21 = arith.mulf %19, %20 : vector<1x16xf32>
    %22 = arith.mulf %16, %16 : vector<1x16xf32>
    %23 = arith.subf %21, %22 : vector<1x16xf32>
    %cst_24 = arith.constant 9.99999974E-6 : f32
    %24 = vector.broadcast %cst_24 : f32 to vector<1x16xf32>
    %25 = arith.addf %23, %24 : vector<1x16xf32>
    %26 = math.rsqrt %25 : vector<1x16xf32>
    %27 = arith.mulf %11, %26 : vector<1x16xf32>
    %28 = arith.mulf %16, %27 : vector<1x16xf32>
    %29 = arith.subf %12, %28 : vector<1x16xf32>
    %30 = vector.broadcast %27 : vector<1x16xf32> to vector<512x16xf32>
    %31 = arith.mulf %10, %30 : vector<512x16xf32>
    %32 = vector.broadcast %29 : vector<1x16xf32> to vector<512x16xf32>
    %33 = arith.addf %31, %32 : vector<512x16xf32>
    %cst_25 = arith.constant 0.000000e+00 : f32
    %34 = vector.broadcast %cst_25 : f32 to vector<512x16xf32>
    %35 = arith.cmpf oge, %33, %34 : vector<512x16xf32>
    %cst_26 = arith.constant 2.000000e-01 : f32
    %36 = vector.broadcast %cst_26 : f32 to vector<512x16xf32>
    %37 = arith.mulf %36, %33 : vector<512x16xf32>
    %38 = arith.select %35, %33, %37 : vector<512x16xi1>, vector<512x16xf32>
    %39 = arith.truncf %38 : vector<512x16xf32> to vector<512x16xbf16>
    %c0_27 = arith.constant 0 : index
    %c0_28 = arith.constant 0 : index
    %40 = vector.load %arg4[%c0_27, %c0_28] : memref<512x16xbf16, #tpu.memory_space<vmem>>, vector<512x16xbf16>
    tpu.vector_store %arg4[%c0_27, %c0_28], %39 {strides = array<i32>} : memref<512x16xbf16, #tpu.memory_space<vmem>>, vector<512x16xbf16>,
    return
  }
}

module attributes {stable_mosaic.version = 11 : i64} {
  func.func @_conv_bn_kernel(%arg0: memref<2x9x9x64xbf16, #tpu.memory_space<vmem>>, %arg1: memref<256x32xbf16, #tpu.memory_space<vmem>>, %arg2: memref<1x32xf32, #tpu.memory_space<vmem>>, %arg3: memref<1x32xf32, #tpu.memory_space<vmem>>, %arg4: memref<128x32xbf16, #tpu.memory_space<vmem>>) attributes {dimension_semantics = [], scalar_prefetch = 0 : i64, scratch_operands = 0 : i64, tpu.core_type = #tpu.core_type<tc>} {
    %c0 = arith.constant 0 : index
    %c0_0 = arith.constant 0 : index
    %c0_1 = arith.constant 0 : index
    %c0_2 = arith.constant 0 : index
    %0 = vector.load %arg0[%c0, %c0_0, %c0_1, %c0_2] : memref<2x9x9x64xbf16, #tpu.memory_space<vmem>>, vector<2x8x8x64xbf16>
    %1 = vector.shape_cast %0 : vector<2x8x8x64xbf16> to vector<128x64xbf16>
    %c0_3 = arith.constant 0 : index
    %c0_4 = arith.constant 0 : index
    %c1 = arith.constant 1 : index
    %c0_5 = arith.constant 0 : index
    %2 = vector.load %arg0[%c0_3, %c0_4, %c1, %c0_5] : memref<2x9x9x64xbf16, #tpu.memory_space<vmem>>, vector<2x8x8x64xbf16>
    %3 = vector.shape_cast %2 : vector<2x8x8x64xbf16> to vector<128x64xbf16>
    %c0_6 = arith.constant 0 : index
    %c1_7 = arith.constant 1 : index
    %c0_8 = arith.constant 0 : index
    %c0_9 = arith.constant 0 : index
    %4 = vector.load %arg0[%c0_6, %c1_7, %c0_8, %c0_9] : memref<2x9x9x64xbf16, #tpu.memory_space<vmem>>, vector<2x8x8x64xbf16>
    %5 = vector.shape_cast %4 : vector<2x8x8x64xbf16> to vector<128x64xbf16>
    %c0_10 = arith.constant 0 : index
    %c1_11 = arith.constant 1 : index
    %c1_12 = arith.constant 1 : index
    %c0_13 = arith.constant 0 : index
    %6 = vector.load %arg0[%c0_10, %c1_11, %c1_12, %c0_13] : memref<2x9x9x64xbf16, #tpu.memory_space<vmem>>, vector<2x8x8x64xbf16>
    %7 = vector.shape_cast %6 : vector<2x8x8x64xbf16> to vector<128x64xbf16>
    %8 = tpu.concatenate %1, %3, %5, %7 in 1 : vector<128x64xbf16>, vector<128x64xbf16>, vector<128x64xbf16>, vector<128x64xbf16> -> vector<128x256xbf16>
    %c0_14 = arith.constant 0 : index
    %c0_15 = arith.constant 0 : index
    %9 = vector.load %arg1[%c0_14, %c0_15] : memref<256x32xbf16, #tpu.memory_space<vmem>>, vector<256x32xbf16>
    %cst = arith.constant dense<0.000000e+00> : vector<128x32xf32>
    %10 = tpu.matmul %8, %9, %cst {dimension_numbers = #tpu.dot_dimension_numbers<[1], [0], [0], [1], [0, 0, 1, 1], [], []>} : vector<128x256xbf16>, vector<256x32xbf16>, vector<128x32xf32> -> vector<128x32xf32>
    %c0_16 = arith.constant 0 : index
    %c0_17 = arith.constant 0 : index
    %11 = vector.load %arg2[%c0_16, %c0_17] : memref<1x32xf32, #tpu.memory_space<vmem>>, vector<1x32xf32>
    %c0_18 = arith.constant 0 : index
    %c0_19 = arith.constant 0 : index
    %12 = vector.load %arg3[%c0_18, %c0_19] : memref<1x32xf32, #tpu.memory_space<vmem>>, vector<1x32xf32>
    %cst_20 = arith.constant dense<0.000000e+00> : vector<32xf32>
    %13 = vector.multi_reduction <add>, %10, %cst_20 [0] : vector<128x32xf32> to vector<32xf32>
    %14 = vector.shape_cast %13 : vector<32xf32> to vector<1x32xf32>
    %cst_21 = arith.constant 7.812500e-03 : f32
    %15 = vector.broadcast %cst_21 : f32 to vector<1x32xf32>
    %16 = arith.mulf %14, %15 : vector<1x32xf32>
    %17 = arith.mulf %10, %10 : vector<128x32xf32>
    %cst_22 = arith.constant dense<0.000000e+00> : vector<32xf32>
    %18 = vector.multi_reduction <add>, %17, %cst_22 [0] : vector<128x32xf32> to vector<32xf32>
    %19 = vector.shape_cast %18 : vector<32xf32> to vector<1x32xf32>
    %cst_23 = arith.constant 7.812500e-03 : f32
    %20 = vector.broadcast %cst_23 : f32 to vector<1x32xf32>
    %21 = arith.mulf %19, %20 : vector<1x32xf32>
    %22 = arith.mulf %16, %16 : vector<1x32xf32>
    %23 = arith.subf %21, %22 : vector<1x32xf32>
    %cst_24 = arith.constant 9.99999974E-6 : f32
    %24 = vector.broadcast %cst_24 : f32 to vector<1x32xf32>
    %25 = arith.addf %23, %24 : vector<1x32xf32>
    %26 = math.rsqrt %25 : vector<1x32xf32>
    %27 = arith.mulf %11, %26 : vector<1x32xf32>
    %28 = arith.mulf %16, %27 : vector<1x32xf32>
    %29 = arith.subf %12, %28 : vector<1x32xf32>
    %30 = vector.broadcast %27 : vector<1x32xf32> to vector<128x32xf32>
    %31 = arith.mulf %10, %30 : vector<128x32xf32>
    %32 = vector.broadcast %29 : vector<1x32xf32> to vector<128x32xf32>
    %33 = arith.addf %31, %32 : vector<128x32xf32>
    %cst_25 = arith.constant 0.000000e+00 : f32
    %34 = vector.broadcast %cst_25 : f32 to vector<128x32xf32>
    %35 = arith.cmpf oge, %33, %34 : vector<128x32xf32>
    %cst_26 = arith.constant 2.000000e-01 : f32
    %36 = vector.broadcast %cst_26 : f32 to vector<128x32xf32>
    %37 = arith.mulf %36, %33 : vector<128x32xf32>
    %38 = arith.select %35, %33, %37 : vector<128x32xi1>, vector<128x32xf32>
    %39 = arith.truncf %38 : vector<128x32xf32> to vector<128x32xbf16>
    %c0_27 = arith.constant 0 : index
    %c0_28 = arith.constant 0 : index
    %40 = vector.load %arg4[%c0_27, %c0_28] : memref<128x32xbf16, #tpu.memory_space<vmem>>, vector<128x32xbf16>
    tpu.vector_store %arg4[%c0_27, %c0_28], %39 {strides = array<i32>} : memref<128x32xbf16, #tpu.memory_space<vmem>>, vector<128x32xbf16>,
    return
  }
}

module attributes {stable_mosaic.version = 11 : i64} {
  func.func @_head_kernel(%arg0: memref<32x512xbf16, #tpu.memory_space<vmem>>, %arg1: memref<512x64xbf16, #tpu.memory_space<vmem>>, %arg2: memref<1x64xf32, #tpu.memory_space<vmem>>, %arg3: memref<1x64xf32, #tpu.memory_space<vmem>>, %arg4: memref<16x64xf32, #tpu.memory_space<vmem>>, %arg5: memref<2x1xf32, #tpu.memory_space<vmem>>) attributes {dimension_semantics = [], scalar_prefetch = 0 : i64, scratch_operands = 0 : i64, tpu.core_type = #tpu.core_type<tc>} {
    %c0 = arith.constant 0 : index
    %c0_0 = arith.constant 0 : index
    %0 = vector.load %arg0[%c0, %c0_0] : memref<32x512xbf16, #tpu.memory_space<vmem>>, vector<32x512xbf16>
    %c0_1 = arith.constant 0 : index
    %c0_2 = arith.constant 0 : index
    %1 = vector.load %arg1[%c0_1, %c0_2] : memref<512x64xbf16, #tpu.memory_space<vmem>>, vector<512x64xbf16>
    %cst = arith.constant dense<0.000000e+00> : vector<32x64xf32>
    %2 = tpu.matmul %0, %1, %cst {dimension_numbers = #tpu.dot_dimension_numbers<[1], [0], [0], [1], [0, 0, 1, 1], [], []>} : vector<32x512xbf16>, vector<512x64xbf16>, vector<32x64xf32> -> vector<32x64xf32>
    %c0_3 = arith.constant 0 : index
    %c0_4 = arith.constant 0 : index
    %3 = vector.load %arg2[%c0_3, %c0_4] : memref<1x64xf32, #tpu.memory_space<vmem>>, vector<1x64xf32>
    %c0_5 = arith.constant 0 : index
    %c0_6 = arith.constant 0 : index
    %4 = vector.load %arg3[%c0_5, %c0_6] : memref<1x64xf32, #tpu.memory_space<vmem>>, vector<1x64xf32>
    %cst_7 = arith.constant dense<0.000000e+00> : vector<64xf32>
    %5 = vector.multi_reduction <add>, %2, %cst_7 [0] : vector<32x64xf32> to vector<64xf32>
    %6 = vector.shape_cast %5 : vector<64xf32> to vector<1x64xf32>
    %cst_8 = arith.constant 3.125000e-02 : f32
    %7 = vector.broadcast %cst_8 : f32 to vector<1x64xf32>
    %8 = arith.mulf %6, %7 : vector<1x64xf32>
    %9 = arith.mulf %2, %2 : vector<32x64xf32>
    %cst_9 = arith.constant dense<0.000000e+00> : vector<64xf32>
    %10 = vector.multi_reduction <add>, %9, %cst_9 [0] : vector<32x64xf32> to vector<64xf32>
    %11 = vector.shape_cast %10 : vector<64xf32> to vector<1x64xf32>
    %cst_10 = arith.constant 3.125000e-02 : f32
    %12 = vector.broadcast %cst_10 : f32 to vector<1x64xf32>
    %13 = arith.mulf %11, %12 : vector<1x64xf32>
    %14 = arith.mulf %8, %8 : vector<1x64xf32>
    %15 = arith.subf %13, %14 : vector<1x64xf32>
    %cst_11 = arith.constant 9.99999974E-6 : f32
    %16 = vector.broadcast %cst_11 : f32 to vector<1x64xf32>
    %17 = arith.addf %15, %16 : vector<1x64xf32>
    %18 = math.rsqrt %17 : vector<1x64xf32>
    %19 = arith.mulf %3, %18 : vector<1x64xf32>
    %20 = arith.mulf %8, %19 : vector<1x64xf32>
    %21 = arith.subf %4, %20 : vector<1x64xf32>
    %22 = vector.broadcast %19 : vector<1x64xf32> to vector<32x64xf32>
    %23 = arith.mulf %2, %22 : vector<32x64xf32>
    %24 = vector.broadcast %21 : vector<1x64xf32> to vector<32x64xf32>
    %25 = arith.addf %23, %24 : vector<32x64xf32>
    %cst_12 = arith.constant 0.000000e+00 : f32
    %26 = vector.broadcast %cst_12 : f32 to vector<32x64xf32>
    %27 = arith.cmpf oge, %25, %26 : vector<32x64xf32>
    %cst_13 = arith.constant 2.000000e-01 : f32
    %28 = vector.broadcast %cst_13 : f32 to vector<32x64xf32>
    %29 = arith.mulf %28, %25 : vector<32x64xf32>
    %30 = arith.select %27, %25, %29 : vector<32x64xi1>, vector<32x64xf32>
    %31 = vector.shape_cast %30 : vector<32x64xf32> to vector<2x16x64xf32>
    %c0_14 = arith.constant 0 : index
    %c0_15 = arith.constant 0 : index
    %32 = vector.load %arg4[%c0_14, %c0_15] : memref<16x64xf32, #tpu.memory_space<vmem>>, vector<16x64xf32>
    %33 = vector.shape_cast %32 : vector<16x64xf32> to vector<1x16x64xf32>
    %34 = vector.broadcast %33 : vector<1x16x64xf32> to vector<2x16x64xf32>
    %35 = arith.mulf %31, %34 : vector<2x16x64xf32>
    %cst_16 = arith.constant dense<0.000000e+00> : vector<2x16xf32>
    %36 = vector.multi_reduction <add>, %35, %cst_16 [2] : vector<2x16x64xf32> to vector<2x16xf32>
    %cst_17 = arith.constant dense<0.000000e+00> : vector<2xf32>
    %37 = vector.multi_reduction <add>, %36, %cst_17 [1] : vector<2x16xf32> to vector<2xf32>
    %38 = vector.shape_cast %37 : vector<2xf32> to vector<2x1xf32>
    %39 = arith.negf %38 : vector<2x1xf32>
    %40 = math.exp %39 : vector<2x1xf32>
    %cst_18 = arith.constant 1.000000e+00 : f32
    %41 = vector.broadcast %cst_18 : f32 to vector<2x1xf32>
    %42 = arith.addf %41, %40 : vector<2x1xf32>
    %43 = arith.divf %41, %42 : vector<2x1xf32>
    %c0_19 = arith.constant 0 : index
    %c0_20 = arith.constant 0 : index
    %44 = vector.load %arg5[%c0_19, %c0_20] : memref<2x1xf32, #tpu.memory_space<vmem>>, vector<2x1xf32>
    tpu.vector_store %arg5[%c0_19, %c0_20], %43 {strides = array<i32>} : memref<2x1xf32, #tpu.memory_space<vmem>>, vector<2x1xf32>,
    return
  }
}

</mosaic_0001>

<llo_original>
// kernel: discriminator_forward.4
$region0: #{discriminator_forward.4}
  #allocation0 [shape = 'u32[]', space=smem, size = 0x4, offset = 0x4, fixed_abs, tag = 'smem constant byte address 0x4 - core index']
  #allocation1 [shape = 'u32[144,128]{1,0:T(1,128)}', space=vmem, size = 0x12000, scoped, tag = 'internal scratch']
  %s0 = inlined_call_operand.vmem [shape: bf16[2,33,33,32], index: 0, kind: input, shape index: {}]
  %s1 = inlined_call_operand.vmem [shape: bf16[128,8], index: 1, kind: input, shape index: {}]
  %s2 = inlined_call_operand.vmem [shape: bf16[2048,8], index: 2, kind: output, shape index: {}]
  %s3 = sld [smem:[#allocation0]]
  $region41: #{discriminator_forward.4} parent=0
    _
  %s5 = ssub.s32 1, %s3
  %s6 = scalar_select 0, %s5, %s3
  loop: start=0, step=1, limit=4
  $region2: #{discriminator_forward.4} parent=0 // loop_pre_header
    _
  $region3: #{discriminator_forward.4} parent=0 // loop_header
    %s8 = sphi 0, %s12
    %p9 = scmp.ge.s32.totalorder %s8, 4
    %s18 = sphi 0, %s20
    %s21 = sphi 0, %s18
    %s22 = sphi 0, %s21
    %s38 = sphi 0, %s22
    %s42 = sphi 0, %s42
    %s44 = sphi 0, %s42
    %s45 = sphi 0, %s44
    %s59 = sphi 0, %s45
    %s65 = sphi 0, %s67
    %s68 = sphi 0, %s65
    %s69 = sphi 0, %s68
    %s85 = sphi 0, %s69
  $region4: #{discriminator_forward.4} parent=0 // loop_header_branch
    %11 = sbr.rel (%p9) target = $region8
  $region5: #{discriminator_forward.4} parent=0 // loop_body
    %s13 = ssub.s32 %s8, 1
    %s14 = ssub.s32 %s8, 2
    %s15 = sadd.s32 %s8, 1
    %s16 = ssub.s32 %s8, %s15
    %p17 = scmp.eq.s32.totalorder %s16, 0
    %s19 = sadd.s32 %s18, 1
    %s20 = scalar_select %p17, %s18, %s19
    %p23 = pneg %p17
    %p24 = scmp.eq.s32.totalorder %s8, 1
    %p25 = por %p23, %p24
    %p26 = scmp.ne.s32.totalorder %s18, %s21
    %p27 = scmp.eq.s32.totalorder %s8, 0
    %p28 = por %p26, %p27
    %p29 = scmp.ne.s32.totalorder %s18, %s21
    %p30 = scmp.eq.s32.totalorder %s13, 1
    %p31 = por %p29, %p30
    %p32 = scmp.ne.s32.totalorder %s21, %s22
    %p33 = scmp.eq.s32.totalorder %s13, 0
    %p34 = por %p32, %p33
    %p35 = scmp.ne.s32.totalorder %s21, %s22
    %p36 = scmp.eq.s32.totalorder %s14, 1
    %p37 = por %p35, %p36
    %p39 = scmp.ne.s32.totalorder %s22, %s38
    %p40 = scmp.eq.s32.totalorder %s14, 0
    %p41 = por %p39, %p40
    %s43 = sadd.s32 %s42, 1
    %p46 = scmp.eq.s32.totalorder %s8, 1
    %p47 = scmp.ne.s32.totalorder %s42, %s44
    %p48 = scmp.eq.s32.totalorder %s8, 0
    %p49 = por %p47, %p48
    %p50 = scmp.ne.s32.totalorder %s42, %s44
    %p51 = scmp.eq.s32.totalorder %s13, 1
    %p52 = por %p50, %p51
    %p53 = scmp.ne.s32.totalorder %s44, %s45
    %p54 = scmp.eq.s32.totalorder %s13, 0
    %p55 = por %p53, %p54
    %p56 = scmp.ne.s32.totalorder %s44, %s45
    %p57 = scmp.eq.s32.totalorder %s14, 1
    %p58 = por %p56, %p57
    %p60 = scmp.ne.s32.totalorder %s45, %s59
    %p61 = scmp.eq.s32.totalorder %s14, 0
    %p62 = por %p60, %p61
    %s63 = ssub.s32 %s8, %s15
    %p64 = scmp.eq.s32.totalorder %s63, 0
    %s66 = sadd.s32 %s65, 1
    %s67 = scalar_select %p64, %s65, %s66
    %p70 = pneg %p64
    %p71 = scmp.eq.s32.totalorder %s8, 1
    %p72 = por %p70, %p71
    %p73 = scmp.ne.s32.totalorder %s65, %s68
    %p74 = scmp.eq.s32.totalorder %s8, 0
    %p75 = por %p73, %p74
    %p76 = scmp.ne.s32.totalorder %s65, %s68
    %p77 = scmp.eq.s32.totalorder %s13, 1
    %p78 = por %p76, %p77
    %p79 = scmp.ne.s32.totalorder %s68, %s69
    %p80 = scmp.eq.s32.totalorder %s13, 0
    %p81 = por %p79, %p80
    %p82 = scmp.ne.s32.totalorder %s68, %s69
    %p83 = scmp.eq.s32.totalorder %s14, 1
    %p84 = por %p82, %p83
    %p86 = scmp.ne.s32.totalorder %s69, %s85
    %p87 = scmp.eq.s32.totalorder %s14, 0
    %p88 = por %p86, %p87
    %p89 = scmp.le.s32.totalorder 1, %s8
    %p90 = scmp.lt.s32.totalorder %s8, 3
    %p91 = pnand %p89, %p90
    %p92 = pneg %p91
    // Predicated region
    $region9: #{discriminator_forward.4} parent=5 // pred_check
      _
    $region10: #{discriminator_forward.4} parent=5 // pred_check_branch
      %94 = sbr.rel (%p91) target = $region12
    $region11: #{discriminator_forward.4} parent=5 // pred_region
      %s95 = ssub.s32 %s8, 1
      // Predicated region
      $region13: #{discriminator_forward.4} parent=11 // pred_check
        %p96 = pneg %p55
      $region14: #{discriminator_forward.4} parent=11 // pred_check_branch
        %98 = sbr.rel (%p96) target = $region16
      $region15: #{discriminator_forward.4} parent=11 // pred_region
        _
      $region16: #{discriminator_forward.4} parent=11 // pred_fallthru
        _
    $region12: #{discriminator_forward.4} parent=5 // pred_fallthru
      _
    %p99 = scmp.lt.s32.totalorder %s8, 2
    // Predicated region
    $region17: #{discriminator_forward.4} parent=5 // pred_check
      %p100 = pneg %p99
    $region18: #{discriminator_forward.4} parent=5 // pred_check_branch
      %102 = sbr.rel (%p100) target = $region20
    $region19: #{discriminator_forward.4} parent=5 // pred_region
      // Predicated region
      $region21: #{discriminator_forward.4} parent=19 // pred_check
        %p103 = pneg %p28
      $region22: #{discriminator_forward.4} parent=19 // pred_check_branch
        %105 = sbr.rel (%p103) target = $region24
      $region23: #{discriminator_forward.4} parent=19 // pred_region
        %p106 = scmp.lt.s32.totalorder %s8, 1
        %s107 = scalar_select %p106, %s8, 1
        %s108 = smul.addr %s107, 165
        %s109 = smul.addr %s108, 4
        %s110 = scalar_lea.vmem %s0, %s109
      $region24: #{discriminator_forward.4} parent=19 // pred_fallthru
        _
    $region20: #{discriminator_forward.4} parent=5 // pred_fallthru
      _
    %p111 = scmp.le.s32.totalorder 1, %s8
    %p112 = scmp.lt.s32.totalorder %s8, 3
    %p113 = pnand %p111, %p112
    %p114 = pneg %p113
    // Predicated region
    $region25: #{discriminator_forward.4} parent=5 // pred_check
      _
    $region26: #{discriminator_forward.4} parent=5 // pred_check_branch
      %116 = sbr.rel (%p113) target = $region28
    $region27: #{discriminator_forward.4} parent=5 // pred_region
      %s117 = ssub.s32 %s8, 1
      %p118 = scmp.lt.s32.totalorder %s13, 1
      %s119 = scalar_select %p118, %s13, 1
      %s120 = smul.addr %s119, 165
      %s121 = smul.addr %s120, 4
      %s122 = scalar_lea.vmem %s0, %s121
      %p123 = pneg %p34
      %p124 = pneg %p31
      %p125 = pneg %p55
      %p126 = pneg %p52
      %p127 = pneg %p81
      %p128 = pneg %p78
      %s129 = smul.u32 128, %s13
      %p130 = scmp.lt.s32.totalorder %s129, 255
      %s131 = scalar_select %p130, %s129, 255
      %s132 = smul.addr %s131, 4
      %s133 = scalar_lea.vmem %s2, %s132
      %p134 = scmp.lt.s32.totalorder %s13, 1
      %s135 = scalar_select %p134, %s13, 1
      %s136 = smul.addr %s135, 165
      %s137 = smul.addr %s136, 4
      %s138 = scalar_lea.vmem %s0, %s137
      %s139 = smul.u32 128, %s13
      %p140 = scmp.lt.s32.totalorder %s139, 255
      %s141 = scalar_select %p140, %s139, 255
      %s142 = smul.addr %s141, 4
      %s143 = scalar_lea.vmem %s2, %s142
      %s144 = smul.u32 128, %s13
      %v146 = vld [vmem:[%s138] sm:$0xf]
      %v147 = vld [vmem:[%s138 + $0x4] sm:$0xf]
      %v148 = vld [vmem:[%s138 + $0x8] sm:$0xf]
      %v149 = vld [vmem:[%s138 + $0xc] sm:$0xf]
      %v150 = vld [vmem:[%s138 + $0x14] sm:$0xf]
      %v151 = vld [vmem:[%s138 + $0x18] sm:$0xf]
      %v152 = vld [vmem:[%s138 + $0x1c] sm:$0xf]
      %v153 = vld [vmem:[%s138 + $0x20] sm:$0xf]
      %v154 = vld [vmem:[%s138 + $0x28] sm:$0xf]
      %v155 = vld [vmem:[%s138 + $0x2c] sm:$0xf]
      %v156 = vld [vmem:[%s138 + $0x30] sm:$0xf]
      %v157 = vld [vmem:[%s138 + $0x34] sm:$0xf]
      %v158 = vld [vmem:[%s138 + $0x3c] sm:$0xf]
      %v159 = vld [vmem:[%s138 + $0x40] sm:$0xf]
      %v160 = vld [vmem:[%s138 + $0x44] sm:$0xf]
      %v161 = vld [vmem:[%s138 + $0x48] sm:$0xf]
      %v162 = vld [vmem:[%s138 + $0x50] sm:$0xf]
      %v163 = vld [vmem:[%s138 + $0x54] sm:$0xf]
      %v164 = vld [vmem:[%s138 + $0x58] sm:$0xf]
      %v165 = vld [vmem:[%s138 + $0x5c] sm:$0xf]
      %v166 = vld [vmem:[%s138 + $0x64] sm:$0xf]
      %v167 = vld [vmem:[%s138 + $0x68] sm:$0xf]
      %v168 = vld [vmem:[%s138 + $0x6c] sm:$0xf]
      %v169 = vld [vmem:[%s138 + $0x70] sm:$0xf]
      %v170 = vld [vmem:[%s138 + $0x78] sm:$0xf]
      %v171 = vld [vmem:[%s138 + $0x7c] sm:$0xf]
      %v172 = vld [vmem:[%s138 + $0x80] sm:$0xf]
      %v173 = vld [vmem:[%s138 + $0x84] sm:$0xf]
      %v174 = vld [vmem:[%s138 + $0x8c] sm:$0xf]
      %v175 = vld [vmem:[%s138 + $0x90] sm:$0xf]
      %v176 = vld [vmem:[%s138 + $0x94] sm:$0xf]
      %v177 = vld [vmem:[%s138 + $0x98] sm:$0xf]
      %v178 = vld [vmem:[%s138 + $0xa0] sm:$0xf]
      %v179 = vld [vmem:[%s138 + $0xa4] sm:$0xf]
      %v180 = vld [vmem:[%s138 + $0xa8] sm:$0xf]
      %v181 = vld [vmem:[%s138 + $0xac] sm:$0xf]
      %v182 = vld [vmem:[%s138 + $0xb4] sm:$0xf]
      %v183 = vld [vmem:[%s138 + $0xb8] sm:$0xf]
      %v184 = vld [vmem:[%s138 + $0xbc] sm:$0xf]
      %v185 = vld [vmem:[%s138 + $0xc0] sm:$0xf]
      %v186 = vld [vmem:[%s138 + $0xc8] sm:$0xf]
      %v187 = vld [vmem:[%s138 + $0xcc] sm:$0xf]
      %v188 = vld [vmem:[%s138 + $0xd0] sm:$0xf]
      %v189 = vld [vmem:[%s138 + $0xd4] sm:$0xf]
      %v190 = vld [vmem:[%s138 + $0xdc] sm:$0xf]
      %v191 = vld [vmem:[%s138 + $0xe0] sm:$0xf]
      %v192 = vld [vmem:[%s138 + $0xe4] sm:$0xf]
      %v193 = vld [vmem:[%s138 + $0xe8] sm:$0xf]
      %v194 = vld [vmem:[%s138 + $0xf0] sm:$0xf]
      %v195 = vld [vmem:[%s138 + $0xf4] sm:$0xf]
      %v196 = vld [vmem:[%s138 + $0xf8] sm:$0xf]
      %v197 = vld [vmem:[%s138 + $0xfc] sm:$0xf]
      %v198 = vld [vmem:[%s138 + $0x104] sm:$0xf]
      %v199 = vld [vmem:[%s138 + $0x108] sm:$0xf]
      %v200 = vld [vmem:[%s138 + $0x10c] sm:$0xf]
      %v201 = vld [vmem:[%s138 + $0x110] sm:$0xf]
      %v202 = vld [vmem:[%s138 + $0x118] sm:$0xf]
      %v203 = vld [vmem:[%s138 + $0x11c] sm:$0xf]
      %v204 = vld [vmem:[%s138 + $0x120] sm:$0xf]
      %v205 = vld [vmem:[%s138 + $0x124] sm:$0xf]
      %v206 = vld [vmem:[%s138 + $0x12c] sm:$0xf]
      %v207 = vld [vmem:[%s138 + $0x130] sm:$0xf]
      %v208 = vld [vmem:[%s138 + $0x134] sm:$0xf]
      %v209 = vld [vmem:[%s138 + $0x138] sm:$0xf]
      %v210 = vld [vmem:[%s138 + $0x140] sm:$0xf]
      %v211 = vld [vmem:[%s138 + $0x144] sm:$0xf]
      %v212 = vld [vmem:[%s138 + $0x148] sm:$0xf]
      %v213 = vld [vmem:[%s138 + $0x14c] sm:$0xf]
      %v214 = vld [vmem:[%s138 + $0x154] sm:$0xf]
      %v215 = vld [vmem:[%s138 + $0x158] sm:$0xf]
      %v216 = vld [vmem:[%s138 + $0x15c] sm:$0xf]
      %v217 = vld [vmem:[%s138 + $0x160] sm:$0xf]
      %v218 = vld [vmem:[%s138 + $0x168] sm:$0xf]
      %v219 = vld [vmem:[%s138 + $0x16c] sm:$0xf]
      %v220 = vld [vmem:[%s138 + $0x170] sm:$0xf]
      %v221 = vld [vmem:[%s138 + $0x174] sm:$0xf]
      %v222 = vld [vmem:[%s138 + $0x17c] sm:$0xf]
      %v223 = vld [vmem:[%s138 + $0x180] sm:$0xf]
      %v224 = vld [vmem:[%s138 + $0x184] sm:$0xf]
      %v225 = vld [vmem:[%s138 + $0x188] sm:$0xf]
      %v226 = vld [vmem:[%s138 + $0x190] sm:$0xf]
      %v227 = vld [vmem:[%s138 + $0x194] sm:$0xf]
      %v228 = vld [vmem:[%s138 + $0x198] sm:$0xf]
      %v229 = vld [vmem:[%s138 + $0x19c] sm:$0xf]
      %v230 = vld [vmem:[%s138 + $0x1a4] sm:$0xf]
      %v231 = vld [vmem:[%s138 + $0x1a8] sm:$0xf]
      %v232 = vld [vmem:[%s138 + $0x1ac] sm:$0xf]
      %v233 = vld [vmem:[%s138 + $0x1b0] sm:$0xf]
      %v234 = vld [vmem:[%s138 + $0x1b8] sm:$0xf]
      %v235 = vld [vmem:[%s138 + $0x1bc] sm:$0xf]
      %v236 = vld [vmem:[%s138 + $0x1c0] sm:$0xf]
      %v237 = vld [vmem:[%s138 + $0x1c4] sm:$0xf]
      %v238 = vld [vmem:[%s138 + $0x1cc] sm:$0xf]
      %v239 = vld [vmem:[%s138 + $0x1d0] sm:$0xf]
      %v240 = vld [vmem:[%s138 + $0x1d4] sm:$0xf]
      %v241 = vld [vmem:[%s138 + $0x1d8] sm:$0xf]
      %v242 = vld [vmem:[%s138 + $0x1e0] sm:$0xf]
      %v243 = vld [vmem:[%s138 + $0x1e4] sm:$0xf]
      %v244 = vld [vmem:[%s138 + $0x1e8] sm:$0xf]
      %v245 = vld [vmem:[%s138 + $0x1ec] sm:$0xf]
      %v246 = vld [vmem:[%s138 + $0x1f4] sm:$0xf]
      %v247 = vld [vmem:[%s138 + $0x1f8] sm:$0xf]
      %v248 = vld [vmem:[%s138 + $0x1fc] sm:$0xf]
      %v249 = vld [vmem:[%s138 + $0x200] sm:$0xf]
      %v250 = vld [vmem:[%s138 + $0x208] sm:$0xf]
      %v251 = vld [vmem:[%s138 + $0x20c] sm:$0xf]
      %v252 = vld [vmem:[%s138 + $0x210] sm:$0xf]
      %v253 = vld [vmem:[%s138 + $0x214] sm:$0xf]
      %v254 = vld [vmem:[%s138 + $0x21c] sm:$0xf]
      %v255 = vld [vmem:[%s138 + $0x220] sm:$0xf]
      %v256 = vld [vmem:[%s138 + $0x224] sm:$0xf]
      %v257 = vld [vmem:[%s138 + $0x228] sm:$0xf]
      %v258 = vld [vmem:[%s138 + $0x230] sm:$0xf]
      %v259 = vld [vmem:[%s138 + $0x234] sm:$0xf]
      %v260 = vld [vmem:[%s138 + $0x238] sm:$0xf]
      %v261 = vld [vmem:[%s138 + $0x23c] sm:$0xf]
      %v262 = vld [vmem:[%s138 + $0x244] sm:$0xf]
      %v263 = vld [vmem:[%s138 + $0x248] sm:$0xf]
      %v264 = vld [vmem:[%s138 + $0x24c] sm:$0xf]
      %v265 = vld [vmem:[%s138 + $0x250] sm:$0xf]
      %v266 = vld [vmem:[%s138 + $0x258] sm:$0xf]
      %v267 = vld [vmem:[%s138 + $0x25c] sm:$0xf]
      %v268 = vld [vmem:[%s138 + $0x260] sm:$0xf]
      %v269 = vld [vmem:[%s138 + $0x264] sm:$0xf]
      %v270 = vld [vmem:[%s138 + $0x26c] sm:$0xf]
      %v271 = vld [vmem:[%s138 + $0x270] sm:$0xf]
      %v272 = vld [vmem:[%s138 + $0x274] sm:$0xf]
      %v273 = vld [vmem:[%s138 + $0x278] sm:$0xf]
      %v274 = vld [vmem:[%s138 + $0x10] sm:$0x1]
      %v275 = vld [vmem:[%s138 + $0x24] sm:$0x1]
      %v276 = vld [vmem:[%s138 + $0x38] sm:$0x1]
      %v277 = vld [vmem:[%s138 + $0x4c] sm:$0x1]
      %v278 = vld [vmem:[%s138 + $0x60] sm:$0x1]
      %v279 = vld [vmem:[%s138 + $0x74] sm:$0x1]
      %v280 = vld [vmem:[%s138 + $0x88] sm:$0x1]
      %v281 = vld [vmem:[%s138 + $0x9c] sm:$0x1]
      %v282 = vld [vmem:[%s138 + $0xb0] sm:$0x1]
      %v283 = vld [vmem:[%s138 + $0xc4] sm:$0x1]
      %v284 = vld [vmem:[%s138 + $0xd8] sm:$0x1]
      %v285 = vld [vmem:[%s138 + $0xec] sm:$0x1]
      %v286 = vld [vmem:[%s138 + $0x100] sm:$0x1]
      %v287 = vld [vmem:[%s138 + $0x114] sm:$0x1]
      %v288 = vld [vmem:[%s138 + $0x128] sm:$0x1]
      %v289 = vld [vmem:[%s138 + $0x13c] sm:$0x1]
      %v290 = vld [vmem:[%s138 + $0x150] sm:$0x1]
      %v291 = vld [vmem:[%s138 + $0x164] sm:$0x1]
      %v292 = vld [vmem:[%s138 + $0x178] sm:$0x1]
      %v293 = vld [vmem:[%s138 + $0x18c] sm:$0x1]
      %v294 = vld [vmem:[%s138 + $0x1a0] sm:$0x1]
      %v295 = vld [vmem:[%s138 + $0x1b4] sm:$0x1]
      %v296 = vld [vmem:[%s138 + $0x1c8] sm:$0x1]
      %v297 = vld [vmem:[%s138 + $0x1dc] sm:$0x1]
      %v298 = vld [vmem:[%s138 + $0x1f0] sm:$0x1]
      %v299 = vld [vmem:[%s138 + $0x204] sm:$0x1]
      %v300 = vld [vmem:[%s138 + $0x218] sm:$0x1]
      %v301 = vld [vmem:[%s138 + $0x22c] sm:$0x1]
      %v302 = vld [vmem:[%s138 + $0x240] sm:$0x1]
      %v303 = vld [vmem:[%s138 + $0x254] sm:$0x1]
      %v304 = vld [vmem:[%s138 + $0x268] sm:$0x1]
      %v305 = vld [vmem:[%s138 + $0x27c] sm:$0x1]
      %vm306 = vsmask.f32 3328
      %vm307 = vsmask.f32 7440
      %vm308 = vmor %vm306, %vm307
      %v310 = vshrl.u32 %v146, 16
      %v312 = vrot.slane %v310, 4
      %v313 = vshll.u32 %v146, 16
      %v315 = vrot.slane %v313, 5
      %v316 = vor.u32 %v312, %v315
      %v317 = vrot.slane %v316, 4
      %v319 = vshll.u32 %v147, 16
      %v321 = vrot.slane %v319, 5
      %v322 = vsel %vm308, %v317, %v321
      %v323 = vshrl.u32 %v147, 16
      %v325 = vrot.slane %v323, 4
      %v326 = vor.u32 %v325, %v321
      %v327 = vrot.slane %v326, 4
      %v329 = vshll.u32 %v148, 16
      %v331 = vrot.slane %v329, 5
      %v332 = vsel %vm308, %v327, %v331
      %v333 = vshrl.u32 %v148, 16
      %v335 = vrot.slane %v333, 4
      %v336 = vor.u32 %v335, %v331
      %v337 = vrot.slane %v336, 4
      %v339 = vshll.u32 %v149, 16
      %v341 = vrot.slane %v339, 5
      %v342 = vsel %vm308, %v337, %v341
      %v343 = vshrl.u32 %v149, 16
      %v345 = vrot.slane %v343, 4
      %v346 = vor.u32 %v345, %v341
      %v347 = vrot.slane %v346, 4
      %v349 = vshll.u32 %v274, 16
      %v351 = vrot.slane %v349, 5
      %v352 = vsel %vm308, %v347, %v351
      %v354 = vshrl.u32 %v150, 16
      %v356 = vrot.slane %v354, 4
      %v357 = vshll.u32 %v150, 16
      %v359 = vrot.slane %v357, 5
      %v360 = vor.u32 %v356, %v359
      %v361 = vrot.slane %v360, 4
      %v363 = vshll.u32 %v151, 16
      %v365 = vrot.slane %v363, 5
      %v366 = vsel %vm308, %v361, %v365
      %v367 = vshrl.u32 %v151, 16
      %v369 = vrot.slane %v367, 4
      %v370 = vor.u32 %v369, %v365
      %v371 = vrot.slane %v370, 4
      %v373 = vshll.u32 %v152, 16
      %v375 = vrot.slane %v373, 5
      %v376 = vsel %vm308, %v371, %v375
      %v377 = vshrl.u32 %v152, 16
      %v379 = vrot.slane %v377, 4
      %v380 = vor.u32 %v379, %v375
      %v381 = vrot.slane %v380, 4
      %v383 = vshll.u32 %v153, 16
      %v385 = vrot.slane %v383, 5
      %v386 = vsel %vm308, %v381, %v385
      %v387 = vshrl.u32 %v153, 16
      %v389 = vrot.slane %v387, 4
      %v390 = vor.u32 %v389, %v385
      %v391 = vrot.slane %v390, 4
      %v393 = vshll.u32 %v275, 16
      %v395 = vrot.slane %v393, 5
      %v396 = vsel %vm308, %v391, %v395
      %v398 = vshrl.u32 %v154, 16
      %v400 = vrot.slane %v398, 4
      %v401 = vshll.u32 %v154, 16
      %v403 = vrot.slane %v401, 5
      %v404 = vor.u32 %v400, %v403
      %v405 = vrot.slane %v404, 4
      %v407 = vshll.u32 %v155, 16
      %v409 = vrot.slane %v407, 5
      %v410 = vsel %vm308, %v405, %v409
      %v411 = vshrl.u32 %v155, 16
      %v413 = vrot.slane %v411, 4
      %v414 = vor.u32 %v413, %v409
      %v415 = vrot.slane %v414, 4
      %v417 = vshll.u32 %v156, 16
      %v419 = vrot.slane %v417, 5
      %v420 = vsel %vm308, %v415, %v419
      %v421 = vshrl.u32 %v156, 16
      %v423 = vrot.slane %v421, 4
      %v424 = vor.u32 %v423, %v419
      %v425 = vrot.slane %v424, 4
      %v427 = vshll.u32 %v157, 16
      %v429 = vrot.slane %v427, 5
      %v430 = vsel %vm308, %v425, %v429
      %v431 = vshrl.u32 %v157, 16
      %v433 = vrot.slane %v431, 4
      %v434 = vor.u32 %v433, %v429
      %v435 = vrot.slane %v434, 4
      %v437 = vshll.u32 %v276, 16
      %v439 = vrot.slane %v437, 5
      %v440 = vsel %vm308, %v435, %v439
      %v442 = vshrl.u32 %v158, 16
      %v444 = vrot.slane %v442, 4
      %v445 = vshll.u32 %v158, 16
      %v447 = vrot.slane %v445, 5
      %v448 = vor.u32 %v444, %v447
      %v449 = vrot.slane %v448, 4
      %v451 = vshll.u32 %v159, 16
      %v453 = vrot.slane %v451, 5
      %v454 = vsel %vm308, %v449, %v453
      %v455 = vshrl.u32 %v159, 16
      %v457 = vrot.slane %v455, 4
      %v458 = vor.u32 %v457, %v453
      %v459 = vrot.slane %v458, 4
      %v461 = vshll.u32 %v160, 16
      %v463 = vrot.slane %v461, 5
      %v464 = vsel %vm308, %v459, %v463
      %v465 = vshrl.u32 %v160, 16
      %v467 = vrot.slane %v465, 4
      %v468 = vor.u32 %v467, %v463
      %v469 = vrot.slane %v468, 4
      %v471 = vshll.u32 %v161, 16
      %v473 = vrot.slane %v471, 5
      %v474 = vsel %vm308, %v469, %v473
      %v475 = vshrl.u32 %v161, 16
      %v477 = vrot.slane %v475, 4
      %v478 = vor.u32 %v477, %v473
      %v479 = vrot.slane %v478, 4
      %v481 = vshll.u32 %v277, 16
      %v483 = vrot.slane %v481, 5
      %v484 = vsel %vm308, %v479, %v483
      %v486 = vshrl.u32 %v162, 16
      %v488 = vrot.slane %v486, 4
      %v489 = vshll.u32 %v162, 16
      %v491 = vrot.slane %v489, 5
      %v492 = vor.u32 %v488, %v491
      %v493 = vrot.slane %v492, 4
      %v495 = vshll.u32 %v163, 16
      %v497 = vrot.slane %v495, 5
      %v498 = vsel %vm308, %v493, %v497
      %v499 = vshrl.u32 %v163, 16
      %v501 = vrot.slane %v499, 4
      %v502 = vor.u32 %v501, %v497
      %v503 = vrot.slane %v502, 4
      %v505 = vshll.u32 %v164, 16
      %v507 = vrot.slane %v505, 5
      %v508 = vsel %vm308, %v503, %v507
      %v509 = vshrl.u32 %v164, 16
      %v511 = vrot.slane %v509, 4
      %v512 = vor.u32 %v511, %v507
      %v513 = vrot.slane %v512, 4
      %v515 = vshll.u32 %v165, 16
      %v517 = vrot.slane %v515, 5
      %v518 = vsel %vm308, %v513, %v517
      %v519 = vshrl.u32 %v165, 16
      %v521 = vrot.slane %v519, 4
      %v522 = vor.u32 %v521, %v517
      %v523 = vrot.slane %v522, 4
      %v525 = vshll.u32 %v278, 16
      %v527 = vrot.slane %v525, 5
      %v528 = vsel %vm308, %v523, %v527
      %v530 = vshrl.u32 %v166, 16
      %v532 = vrot.slane %v530, 4
      %v533 = vshll.u32 %v166, 16
      %v535 = vrot.slane %v533, 5
      %v536 = vor.u32 %v532, %v535
      %v537 = vrot.slane %v536, 4
      %v539 = vshll.u32 %v167, 16
      %v541 = vrot.slane %v539, 5
      %v542 = vsel %vm308, %v537, %v541
      %v543 = vshrl.u32 %v167, 16
      %v545 = vrot.slane %v543, 4
      %v546 = vor.u32 %v545, %v541
      %v547 = vrot.slane %v546, 4
      %v549 = vshll.u32 %v168, 16
      %v551 = vrot.slane %v549, 5
      %v552 = vsel %vm308, %v547, %v551
      %v553 = vshrl.u32 %v168, 16
      %v555 = vrot.slane %v553, 4
      %v556 = vor.u32 %v555, %v551
      %v557 = vrot.slane %v556, 4
      %v559 = vshll.u32 %v169, 16
      %v561 = vrot.slane %v559, 5
      %v562 = vsel %vm308, %v557, %v561
      %v563 = vshrl.u32 %v169, 16
      %v565 = vrot.slane %v563, 4
      %v566 = vor.u32 %v565, %v561
      %v567 = vrot.slane %v566, 4
      %v569 = vshll.u32 %v279, 16
      %v571 = vrot.slane %v569, 5
      %v572 = vsel %vm308, %v567, %v571
      %v574 = vshrl.u32 %v170, 16
      %v576 = vrot.slane %v574, 4
      %v577 = vshll.u32 %v170, 16
      %v579 = vrot.slane %v577, 5
      %v580 = vor.u32 %v576, %v579
      %v581 = vrot.slane %v580, 4
      %v583 = vshll.u32 %v171, 16
      %v585 = vrot.slane %v583, 5
      %v586 = vsel %vm308, %v581, %v585
      %v587 = vshrl.u32 %v171, 16
      %v589 = vrot.slane %v587, 4
      %v590 = vor.u32 %v589, %v585
      %v591 = vrot.slane %v590, 4
      %v593 = vshll.u32 %v172, 16
      %v595 = vrot.slane %v593, 5
      %v596 = vsel %vm308, %v591, %v595
      %v597 = vshrl.u32 %v172, 16
      %v599 = vrot.slane %v597, 4
      %v600 = vor.u32 %v599, %v595
      %v601 = vrot.slane %v600, 4
      %v603 = vshll.u32 %v173, 16
      %v605 = vrot.slane %v603, 5
      %v606 = vsel %vm308, %v601, %v605
      %v607 = vshrl.u32 %v173, 16
      %v609 = vrot.slane %v607, 4
      %v610 = vor.u32 %v609, %v605
      %v611 = vrot.slane %v610, 4
      %v613 = vshll.u32 %v280, 16
      %v615 = vrot.slane %v613, 5
      %v616 = vsel %vm308, %v611, %v615
      %v618 = vshrl.u32 %v174, 16
      %v620 = vrot.slane %v618, 4
      %v621 = vshll.u32 %v174, 16
      %v623 = vrot.slane %v621, 5
      %v624 = vor.u32 %v620, %v623
      %v625 = vrot.slane %v624, 4
      %v627 = vshll.u32 %v175, 16
      %v629 = vrot.slane %v627, 5
      %v630 = vsel %vm308, %v625, %v629
      %v631 = vshrl.u32 %v175, 16
      %v633 = vrot.slane %v631, 4
      %v634 = vor.u32 %v633, %v629
      %v635 = vrot.slane %v634, 4
      %v637 = vshll.u32 %v176, 16
      %v639 = vrot.slane %v637, 5
      %v640 = vsel %vm308, %v635, %v639
      %v641 = vshrl.u32 %v176, 16
      %v643 = vrot.slane %v641, 4
      %v644 = vor.u32 %v643, %v639
      %v645 = vrot.slane %v644, 4
      %v647 = vshll.u32 %v177, 16
      %v649 = vrot.slane %v647, 5
      %v650 = vsel %vm308, %v645, %v649
      %v651 = vshrl.u32 %v177, 16
      %v653 = vrot.slane %v651, 4
      %v654 = vor.u32 %v653, %v649
      %v655 = vrot.slane %v654, 4
      %v657 = vshll.u32 %v281, 16
      %v659 = vrot.slane %v657, 5
      %v660 = vsel %vm308, %v655, %v659
      %v662 = vshrl.u32 %v178, 16
      %v664 = vrot.slane %v662, 4
      %v665 = vshll.u32 %v178, 16
      %v667 = vrot.slane %v665, 5
      %v668 = vor.u32 %v664, %v667
      %v669 = vrot.slane %v668, 4
      %v671 = vshll.u32 %v179, 16
      %v673 = vrot.slane %v671, 5
      %v674 = vsel %vm308, %v669, %v673
      %v675 = vshrl.u32 %v179, 16
      %v677 = vrot.slane %v675, 4
      %v678 = vor.u32 %v677, %v673
      %v679 = vrot.slane %v678, 4
      %v681 = vshll.u32 %v180, 16
      %v683 = vrot.slane %v681, 5
      %v684 = vsel %vm308, %v679, %v683
      %v685 = vshrl.u32 %v180, 16
      %v687 = vrot.slane %v685, 4
      %v688 = vor.u32 %v687, %v683
      %v689 = vrot.slane %v688, 4
      %v691 = vshll.u32 %v181, 16
      %v693 = vrot.slane %v691, 5
      %v694 = vsel %vm308, %v689, %v693
      %v695 = vshrl.u32 %v181, 16
      %v697 = vrot.slane %v695, 4
      %v698 = vor.u32 %v697, %v693
      %v699 = vrot.slane %v698, 4
      %v701 = vshll.u32 %v282, 16
      %v703 = vrot.slane %v701, 5
      %v704 = vsel %vm308, %v699, %v703
      %v706 = vshrl.u32 %v182, 16
      %v708 = vrot.slane %v706, 4
      %v709 = vshll.u32 %v182, 16
      %v711 = vrot.slane %v709, 5
      %v712 = vor.u32 %v708, %v711
      %v713 = vrot.slane %v712, 4
      %v715 = vshll.u32 %v183, 16
      %v717 = vrot.slane %v715, 5
      %v718 = vsel %vm308, %v713, %v717
      %v719 = vshrl.u32 %v183, 16
      %v721 = vrot.slane %v719, 4
      %v722 = vor.u32 %v721, %v717
      %v723 = vrot.slane %v722, 4
      %v725 = vshll.u32 %v184, 16
      %v727 = vrot.slane %v725, 5
      %v728 = vsel %vm308, %v723, %v727
      %v729 = vshrl.u32 %v184, 16
      %v731 = vrot.slane %v729, 4
      %v732 = vor.u32 %v731, %v727
      %v733 = vrot.slane %v732, 4
      %v735 = vshll.u32 %v185, 16
      %v737 = vrot.slane %v735, 5
      %v738 = vsel %vm308, %v733, %v737
      %v739 = vshrl.u32 %v185, 16
      %v741 = vrot.slane %v739, 4
      %v742 = vor.u32 %v741, %v737
      %v743 = vrot.slane %v742, 4
      %v745 = vshll.u32 %v283, 16
      %v747 = vrot.slane %v745, 5
      %v748 = vsel %vm308, %v743, %v747
      %v750 = vshrl.u32 %v186, 16
      %v752 = vrot.slane %v750, 4
      %v753 = vshll.u32 %v186, 16
      %v755 = vrot.slane %v753, 5
      %v756 = vor.u32 %v752, %v755
      %v757 = vrot.slane %v756, 4
      %v759 = vshll.u32 %v187, 16
      %v761 = vrot.slane %v759, 5
      %v762 = vsel %vm308, %v757, %v761
      %v763 = vshrl.u32 %v187, 16
      %v765 = vrot.slane %v763, 4
      %v766 = vor.u32 %v765, %v761
      %v767 = vrot.slane %v766, 4
      %v769 = vshll.u32 %v188, 16
      %v771 = vrot.slane %v769, 5
      %v772 = vsel %vm308, %v767, %v771
      %v773 = vshrl.u32 %v188, 16
      %v775 = vrot.slane %v773, 4
      %v776 = vor.u32 %v775, %v771
      %v777 = vrot.slane %v776, 4
      %v779 = vshll.u32 %v189, 16
      %v781 = vrot.slane %v779, 5
      %v782 = vsel %vm308, %v777, %v781
      %v783 = vshrl.u32 %v189, 16
      %v785 = vrot.slane %v783, 4
      %v786 = vor.u32 %v785, %v781
      %v787 = vrot.slane %v786, 4
      %v789 = vshll.u32 %v284, 16
      %v791 = vrot.slane %v789, 5
      %v792 = vsel %vm308, %v787, %v791
      %v794 = vshrl.u32 %v190, 16
      %v796 = vrot.slane %v794, 4
      %v797 = vshll.u32 %v190, 16
      %v799 = vrot.slane %v797, 5
      %v800 = vor.u32 %v796, %v799
      %v801 = vrot.slane %v800, 4
      %v803 = vshll.u32 %v191, 16
      %v805 = vrot.slane %v803, 5
      %v806 = vsel %vm308, %v801, %v805
      %v807 = vshrl.u32 %v191, 16
      %v809 = vrot.slane %v807, 4
      %v810 = vor.u32 %v809, %v805
      %v811 = vrot.slane %v810, 4
      %v813 = vshll.u32 %v192, 16
      %v815 = vrot.slane %v813, 5
      %v816 = vsel %vm308, %v811, %v815
      %v817 = vshrl.u32 %v192, 16
      %v819 = vrot.slane %v817, 4
      %v820 = vor.u32 %v819, %v815
      %v821 = vrot.slane %v820, 4
      %v823 = vshll.u32 %v193, 16
      %v825 = vrot.slane %v823, 5
      %v826 = vsel %vm308, %v821, %v825
      %v827 = vshrl.u32 %v193, 16
      %v829 = vrot.slane %v827, 4
      %v830 = vor.u32 %v829, %v825
      %v831 = vrot.slane %v830, 4
      %v833 = vshll.u32 %v285, 16
      %v835 = vrot.slane %v833, 5
      %v836 = vsel %vm308, %v831, %v835
      %v838 = vshrl.u32 %v194, 16
      %v840 = vrot.slane %v838, 4
      %v841 = vshll.u32 %v194, 16
      %v843 = vrot.slane %v841, 5
      %v844 = vor.u32 %v840, %v843
      %v845 = vrot.slane %v844, 4
      %v847 = vshll.u32 %v195, 16
      %v849 = vrot.slane %v847, 5
      %v850 = vsel %vm308, %v845, %v849
      %v851 = vshrl.u32 %v195, 16
      %v853 = vrot.slane %v851, 4
      %v854 = vor.u32 %v853, %v849
      %v855 = vrot.slane %v854, 4
      %v857 = vshll.u32 %v196, 16
      %v859 = vrot.slane %v857, 5
      %v860 = vsel %vm308, %v855, %v859
      %v861 = vshrl.u32 %v196, 16
      %v863 = vrot.slane %v861, 4
      %v864 = vor.u32 %v863, %v859
      %v865 = vrot.slane %v864, 4
      %v867 = vshll.u32 %v197, 16
      %v869 = vrot.slane %v867, 5
      %v870 = vsel %vm308, %v865, %v869
      %v871 = vshrl.u32 %v197, 16
      %v873 = vrot.slane %v871, 4
      %v874 = vor.u32 %v873, %v869
      %v875 = vrot.slane %v874, 4
      %v877 = vshll.u32 %v286, 16
      %v879 = vrot.slane %v877, 5
      %v880 = vsel %vm308, %v875, %v879
      %v882 = vshrl.u32 %v198, 16
      %v884 = vrot.slane %v882, 4
      %v885 = vshll.u32 %v198, 16
      %v887 = vrot.slane %v885, 5
      %v888 = vor.u32 %v884, %v887
      %v889 = vrot.slane %v888, 4
      %v891 = vshll.u32 %v199, 16
      %v893 = vrot.slane %v891, 5
      %v894 = vsel %vm308, %v889, %v893
      %v895 = vshrl.u32 %v199, 16
      %v897 = vrot.slane %v895, 4
      %v898 = vor.u32 %v897, %v893
      %v899 = vrot.slane %v898, 4
      %v901 = vshll.u32 %v200, 16
      %v903 = vrot.slane %v901, 5
      %v904 = vsel %vm308, %v899, %v903
      %v905 = vshrl.u32 %v200, 16
      %v907 = vrot.slane %v905, 4
      %v908 = vor.u32 %v907, %v903
      %v909 = vrot.slane %v908, 4
      %v911 = vshll.u32 %v201, 16
      %v913 = vrot.slane %v911, 5
      %v914 = vsel %vm308, %v909, %v913
      %v915 = vshrl.u32 %v201, 16
      %v917 = vrot.slane %v915, 4
      %v918 = vor.u32 %v917, %v913
      %v919 = vrot.slane %v918, 4
      %v921 = vshll.u32 %v287, 16
      %v923 = vrot.slane %v921, 5
      %v924 = vsel %vm308, %v919, %v923
      %v926 = vshrl.u32 %v202, 16
      %v928 = vrot.slane %v926, 4
      %v929 = vshll.u32 %v202, 16
      %v931 = vrot.slane %v929, 5
      %v932 = vor.u32 %v928, %v931
      %v933 = vrot.slane %v932, 4
      %v935 = vshll.u32 %v203, 16
      %v937 = vrot.slane %v935, 5
      %v938 = vsel %vm308, %v933, %v937
      %v939 = vshrl.u32 %v203, 16
      %v941 = vrot.slane %v939, 4
      %v942 = vor.u32 %v941, %v937
      %v943 = vrot.slane %v942, 4
      %v945 = vshll.u32 %v204, 16
      %v947 = vrot.slane %v945, 5
      %v948 = vsel %vm308, %v943, %v947
      %v949 = vshrl.u32 %v204, 16
      %v951 = vrot.slane %v949, 4
      %v952 = vor.u32 %v951, %v947
      %v953 = vrot.slane %v952, 4
      %v955 = vshll.u32 %v205, 16
      %v957 = vrot.slane %v955, 5
      %v958 = vsel %vm308, %v953, %v957
      %v959 = vshrl.u32 %v205, 16
      %v961 = vrot.slane %v959, 4
      %v962 = vor.u32 %v961, %v957
      %v963 = vrot.slane %v962, 4
      %v965 = vshll.u32 %v288, 16
      %v967 = vrot.slane %v965, 5
      %v968 = vsel %vm308, %v963, %v967
      %v970 = vshrl.u32 %v206, 16
      %v972 = vrot.slane %v970, 4
      %v973 = vshll.u32 %v206, 16
      %v975 = vrot.slane %v973, 5
      %v976 = vor.u32 %v972, %v975
      %v977 = vrot.slane %v976, 4
      %v979 = vshll.u32 %v207, 16
      %v981 = vrot.slane %v979, 5
      %v982 = vsel %vm308, %v977, %v981
      %v983 = vshrl.u32 %v207, 16
      %v985 = vrot.slane %v983, 4
      %v986 = vor.u32 %v985, %v981
      %v987 = vrot.slane %v986, 4
      %v989 = vshll.u32 %v208, 16
      %v991 = vrot.slane %v989, 5
      %v992 = vsel %vm308, %v987, %v991
      %v993 = vshrl.u32 %v208, 16
      %v995 = vrot.slane %v993, 4
      %v996 = vor.u32 %v995, %v991
      %v997 = vrot.slane %v996, 4
      %v999 = vshll.u32 %v209, 16
      %v1001 = vrot.slane %v999, 5
      %v1002 = vsel %vm308, %v997, %v1001
      %v1003 = vshrl.u32 %v209, 16
      %v1005 = vrot.slane %v1003, 4
      %v1006 = vor.u32 %v1005, %v1001
      %v1007 = vrot.slane %v1006, 4
      %v1009 = vshll.u32 %v289, 16
      %v1011 = vrot.slane %v1009, 5
      %v1012 = vsel %vm308, %v1007, %v1011
      %v1014 = vshrl.u32 %v210, 16
      %v1016 = vrot.slane %v1014, 4
      %v1017 = vshll.u32 %v210, 16
      %v1019 = vrot.slane %v1017, 5
      %v1020 = vor.u32 %v1016, %v1019
      %v1021 = vrot.slane %v1020, 4
      %v1023 = vshll.u32 %v211, 16
      %v1025 = vrot.slane %v1023, 5
      %v1026 = vsel %vm308, %v1021, %v1025
      %v1027 = vshrl.u32 %v211, 16
      %v1029 = vrot.slane %v1027, 4
      %v1030 = vor.u32 %v1029, %v1025
      %v1031 = vrot.slane %v1030, 4
      %v1033 = vshll.u32 %v212, 16
      %v1035 = vrot.slane %v1033, 5
      %v1036 = vsel %vm308, %v1031, %v1035
      %v1037 = vshrl.u32 %v212, 16
      %v1039 = vrot.slane %v1037, 4
      %v1040 = vor.u32 %v1039, %v1035
      %v1041 = vrot.slane %v1040, 4
      %v1043 = vshll.u32 %v213, 16
      %v1045 = vrot.slane %v1043, 5
      %v1046 = vsel %vm308, %v1041, %v1045
      %v1047 = vshrl.u32 %v213, 16
      %v1049 = vrot.slane %v1047, 4
      %v1050 = vor.u32 %v1049, %v1045
      %v1051 = vrot.slane %v1050, 4
      %v1053 = vshll.u32 %v290, 16
      %v1055 = vrot.slane %v1053, 5
      %v1056 = vsel %vm308, %v1051, %v1055
      %v1058 = vshrl.u32 %v214, 16
      %v1060 = vrot.slane %v1058, 4
      %v1061 = vshll.u32 %v214, 16
      %v1063 = vrot.slane %v1061, 5
      %v1064 = vor.u32 %v1060, %v1063
      %v1065 = vrot.slane %v1064, 4
      %v1067 = vshll.u32 %v215, 16
      %v1069 = vrot.slane %v1067, 5
      %v1070 = vsel %vm308, %v1065, %v1069
      %v1071 = vshrl.u32 %v215, 16
      %v1073 = vrot.slane %v1071, 4
      %v1074 = vor.u32 %v1073, %v1069
      %v1075 = vrot.slane %v1074, 4
      %v1077 = vshll.u32 %v216, 16
      %v1079 = vrot.slane %v1077, 5
      %v1080 = vsel %vm308, %v1075, %v1079
      %v1081 = vshrl.u32 %v216, 16
      %v1083 = vrot.slane %v1081, 4
      %v1084 = vor.u32 %v1083, %v1079
      %v1085 = vrot.slane %v1084, 4
      %v1087 = vshll.u32 %v217, 16
      %v1089 = vrot.slane %v1087, 5
      %v1090 = vsel %vm308, %v1085, %v1089
      %v1091 = vshrl.u32 %v217, 16
      %v1093 = vrot.slane %v1091, 4
      %v1094 = vor.u32 %v1093, %v1089
      %v1095 = vrot.slane %v1094, 4
      %v1097 = vshll.u32 %v291, 16
      %v1099 = vrot.slane %v1097, 5
      %v1100 = vsel %vm308, %v1095, %v1099
      %v1102 = vshrl.u32 %v218, 16
      %v1104 = vrot.slane %v1102, 4
      %v1105 = vshll.u32 %v218, 16
      %v1107 = vrot.slane %v1105, 5
      %v1108 = vor.u32 %v1104, %v1107
      %v1109 = vrot.slane %v1108, 4
      %v1111 = vshll.u32 %v219, 16
      %v1113 = vrot.slane %v1111, 5
      %v1114 = vsel %vm308, %v1109, %v1113
      %v1115 = vshrl.u32 %v219, 16
      %v1117 = vrot.slane %v1115, 4
      %v1118 = vor.u32 %v1117, %v1113
      %v1119 = vrot.slane %v1118, 4
      %v1121 = vshll.u32 %v220, 16
      %v1123 = vrot.slane %v1121, 5
      %v1124 = vsel %vm308, %v1119, %v1123
      %v1125 = vshrl.u32 %v220, 16
      %v1127 = vrot.slane %v1125, 4
      %v1128 = vor.u32 %v1127, %v1123
      %v1129 = vrot.slane %v1128, 4
      %v1131 = vshll.u32 %v221, 16
      %v1133 = vrot.slane %v1131, 5
      %v1134 = vsel %vm308, %v1129, %v1133
      %v1135 = vshrl.u32 %v221, 16
      %v1137 = vrot.slane %v1135, 4
      %v1138 = vor.u32 %v1137, %v1133
      %v1139 = vrot.slane %v1138, 4
      %v1141 = vshll.u32 %v292, 16
      %v1143 = vrot.slane %v1141, 5
      %v1144 = vsel %vm308, %v1139, %v1143
      %v1146 = vshrl.u32 %v222, 16
      %v1148 = vrot.slane %v1146, 4
      %v1149 = vshll.u32 %v222, 16
      %v1151 = vrot.slane %v1149, 5
      %v1152 = vor.u32 %v1148, %v1151
      %v1153 = vrot.slane %v1152, 4
      %v1155 = vshll.u32 %v223, 16
      %v1157 = vrot.slane %v1155, 5
      %v1158 = vsel %vm308, %v1153, %v1157
      %v1159 = vshrl.u32 %v223, 16
      %v1161 = vrot.slane %v1159, 4
      %v1162 = vor.u32 %v1161, %v1157
      %v1163 = vrot.slane %v1162, 4
      %v1165 = vshll.u32 %v224, 16
      %v1167 = vrot.slane %v1165, 5
      %v1168 = vsel %vm308, %v1163, %v1167
      %v1169 = vshrl.u32 %v224, 16
      %v1171 = vrot.slane %v1169, 4
      %v1172 = vor.u32 %v1171, %v1167
      %v1173 = vrot.slane %v1172, 4
      %v1175 = vshll.u32 %v225, 16
      %v1177 = vrot.slane %v1175, 5
      %v1178 = vsel %vm308, %v1173, %v1177
      %v1179 = vshrl.u32 %v225, 16
      %v1181 = vrot.slane %v1179, 4
      %v1182 = vor.u32 %v1181, %v1177
      %v1183 = vrot.slane %v1182, 4
      %v1185 = vshll.u32 %v293, 16
      %v1187 = vrot.slane %v1185, 5
      %v1188 = vsel %vm308, %v1183, %v1187
      %v1190 = vshrl.u32 %v226, 16
      %v1192 = vrot.slane %v1190, 4
      %v1193 = vshll.u32 %v226, 16
      %v1195 = vrot.slane %v1193, 5
      %v1196 = vor.u32 %v1192, %v1195
      %v1197 = vrot.slane %v1196, 4
      %v1199 = vshll.u32 %v227, 16
      %v1201 = vrot.slane %v1199, 5
      %v1202 = vsel %vm308, %v1197, %v1201
      %v1203 = vshrl.u32 %v227, 16
      %v1205 = vrot.slane %v1203, 4
      %v1206 = vor.u32 %v1205, %v1201
      %v1207 = vrot.slane %v1206, 4
      %v1209 = vshll.u32 %v228, 16
      %v1211 = vrot.slane %v1209, 5
      %v1212 = vsel %vm308, %v1207, %v1211
      %v1213 = vshrl.u32 %v228, 16
      %v1215 = vrot.slane %v1213, 4
      %v1216 = vor.u32 %v1215, %v1211
      %v1217 = vrot.slane %v1216, 4
      %v1219 = vshll.u32 %v229, 16
      %v1221 = vrot.slane %v1219, 5
      %v1222 = vsel %vm308, %v1217, %v1221
      %v1223 = vshrl.u32 %v229, 16
      %v1225 = vrot.slane %v1223, 4
      %v1226 = vor.u32 %v1225, %v1221
      %v1227 = vrot.slane %v1226, 4
      %v1229 = vshll.u32 %v294, 16
      %v1231 = vrot.slane %v1229, 5
      %v1232 = vsel %vm308, %v1227, %v1231
      %v1234 = vshrl.u32 %v230, 16
      %v1236 = vrot.slane %v1234, 4
      %v1237 = vshll.u32 %v230, 16
      %v1239 = vrot.slane %v1237, 5
      %v1240 = vor.u32 %v1236, %v1239
      %v1241 = vrot.slane %v1240, 4
      %v1243 = vshll.u32 %v231, 16
      %v1245 = vrot.slane %v1243, 5
      %v1246 = vsel %vm308, %v1241, %v1245
      %v1247 = vshrl.u32 %v231, 16
      %v1249 = vrot.slane %v1247, 4
      %v1250 = vor.u32 %v1249, %v1245
      %v1251 = vrot.slane %v1250, 4
      %v1253 = vshll.u32 %v232, 16
      %v1255 = vrot.slane %v1253, 5
      %v1256 = vsel %vm308, %v1251, %v1255
      %v1257 = vshrl.u32 %v232, 16
      %v1259 = vrot.slane %v1257, 4
      %v1260 = vor.u32 %v1259, %v1255
      %v1261 = vrot.slane %v1260, 4
      %v1263 = vshll.u32 %v233, 16
      %v1265 = vrot.slane %v1263, 5
      %v1266 = vsel %vm308, %v1261, %v1265
      %v1267 = vshrl.u32 %v233, 16
      %v1269 = vrot.slane %v1267, 4
      %v1270 = vor.u32 %v1269, %v1265
      %v1271 = vrot.slane %v1270, 4
      %v1273 = vshll.u32 %v295, 16
      %v1275 = vrot.slane %v1273, 5
      %v1276 = vsel %vm308, %v1271, %v1275
      %v1278 = vshrl.u32 %v234, 16
      %v1280 = vrot.slane %v1278, 4
      %v1281 = vshll.u32 %v234, 16
      %v1283 = vrot.slane %v1281, 5
      %v1284 = vor.u32 %v1280, %v1283
      %v1285 = vrot.slane %v1284, 4
      %v1287 = vshll.u32 %v235, 16
      %v1289 = vrot.slane %v1287, 5
      %v1290 = vsel %vm308, %v1285, %v1289
      %v1291 = vshrl.u32 %v235, 16
      %v1293 = vrot.slane %v1291, 4
      %v1294 = vor.u32 %v1293, %v1289
      %v1295 = vrot.slane %v1294, 4
      %v1297 = vshll.u32 %v236, 16
      %v1299 = vrot.slane %v1297, 5
      %v1300 = vsel %vm308, %v1295, %v1299
      %v1301 = vshrl.u32 %v236, 16
      %v1303 = vrot.slane %v1301, 4
      %v1304 = vor.u32 %v1303, %v1299
      %v1305 = vrot.slane %v1304, 4
      %v1307 = vshll.u32 %v237, 16
      %v1309 = vrot.slane %v1307, 5
      %v1310 = vsel %vm308, %v1305, %v1309
      %v1311 = vshrl.u32 %v237, 16
      %v1313 = vrot.slane %v1311, 4
      %v1314 = vor.u32 %v1313, %v1309
      %v1315 = vrot.slane %v1314, 4
      %v1317 = vshll.u32 %v296, 16
      %v1319 = vrot.slane %v1317, 5
      %v1320 = vsel %vm308, %v1315, %v1319
      %v1322 = vshrl.u32 %v238, 16
      %v1324 = vrot.slane %v1322, 4
      %v1325 = vshll.u32 %v238, 16
      %v1327 = vrot.slane %v1325, 5
      %v1328 = vor.u32 %v1324, %v1327
      %v1329 = vrot.slane %v1328, 4
      %v1331 = vshll.u32 %v239, 16
      %v1333 = vrot.slane %v1331, 5
      %v1334 = vsel %vm308, %v1329, %v1333
      %v1335 = vshrl.u32 %v239, 16
      %v1337 = vrot.slane %v1335, 4
      %v1338 = vor.u32 %v1337, %v1333
      %v1339 = vrot.slane %v1338, 4
      %v1341 = vshll.u32 %v240, 16
      %v1343 = vrot.slane %v1341, 5
      %v1344 = vsel %vm308, %v1339, %v1343
      %v1345 = vshrl.u32 %v240, 16
      %v1347 = vrot.slane %v1345, 4
      %v1348 = vor.u32 %v1347, %v1343
      %v1349 = vrot.slane %v1348, 4
      %v1351 = vshll.u32 %v241, 16
      %v1353 = vrot.slane %v1351, 5
      %v1354 = vsel %vm308, %v1349, %v1353
      %v1355 = vshrl.u32 %v241, 16
      %v1357 = vrot.slane %v1355, 4
      %v1358 = vor.u32 %v1357, %v1353
      %v1359 = vrot.slane %v1358, 4
      %v1361 = vshll.u32 %v297, 16
      %v1363 = vrot.slane %v1361, 5
      %v1364 = vsel %vm308, %v1359, %v1363
      %v1366 = vshrl.u32 %v242, 16
      %v1368 = vrot.slane %v1366, 4
      %v1369 = vshll.u32 %v242, 16
      %v1371 = vrot.slane %v1369, 5
      %v1372 = vor.u32 %v1368, %v1371
      %v1373 = vrot.slane %v1372, 4
      %v1375 = vshll.u32 %v243, 16
      %v1377 = vrot.slane %v1375, 5
      %v1378 = vsel %vm308, %v1373, %v1377
      %v1379 = vshrl.u32 %v243, 16
      %v1381 = vrot.slane %v1379, 4
      %v1382 = vor.u32 %v1381, %v1377
      %v1383 = vrot.slane %v1382, 4
      %v1385 = vshll.u32 %v244, 16
      %v1387 = vrot.slane %v1385, 5
      %v1388 = vsel %vm308, %v1383, %v1387
      %v1389 = vshrl.u32 %v244, 16
      %v1391 = vrot.slane %v1389, 4
      %v1392 = vor.u32 %v1391, %v1387
      %v1393 = vrot.slane %v1392, 4
      %v1395 = vshll.u32 %v245, 16
      %v1397 = vrot.slane %v1395, 5
      %v1398 = vsel %vm308, %v1393, %v1397
      %v1399 = vshrl.u32 %v245, 16
      %v1401 = vrot.slane %v1399, 4
      %v1402 = vor.u32 %v1401, %v1397
      %v1403 = vrot.slane %v1402, 4
      %v1405 = vshll.u32 %v298, 16
      %v1407 = vrot.slane %v1405, 5
      %v1408 = vsel %vm308, %v1403, %v1407
      %v1410 = vshrl.u32 %v246, 16
      %v1412 = vrot.slane %v1410, 4
      %v1413 = vshll.u32 %v246, 16
      %v1415 = vrot.slane %v1413, 5
      %v1416 = vor.u32 %v1412, %v1415
      %v1417 = vrot.slane %v1416, 4
      %v1419 = vshll.u32 %v247, 16
      %v1421 = vrot.slane %v1419, 5
      %v1422 = vsel %vm308, %v1417, %v1421
      %v1423 = vshrl.u32 %v247, 16
      %v1425 = vrot.slane %v1423, 4
      %v1426 = vor.u32 %v1425, %v1421
      %v1427 = vrot.slane %v1426, 4
      %v1429 = vshll.u32 %v248, 16
      %v1431 = vrot.slane %v1429, 5
      %v1432 = vsel %vm308, %v1427, %v1431
      %v1433 = vshrl.u32 %v248, 16
      %v1435 = vrot.slane %v1433, 4
      %v1436 = vor.u32 %v1435, %v1431
      %v1437 = vrot.slane %v1436, 4
      %v1439 = vshll.u32 %v249, 16
      %v1441 = vrot.slane %v1439, 5
      %v1442 = vsel %vm308, %v1437, %v1441
      %v1443 = vshrl.u32 %v249, 16
      %v1445 = vrot.slane %v1443, 4
      %v1446 = vor.u32 %v1445, %v1441
      %v1447 = vrot.slane %v1446, 4
      %v1449 = vshll.u32 %v299, 16
      %v1451 = vrot.slane %v1449, 5
      %v1452 = vsel %vm308, %v1447, %v1451
      %v1454 = vshrl.u32 %v250, 16
      %v1456 = vrot.slane %v1454, 4
      %v1457 = vshll.u32 %v250, 16
      %v1459 = vrot.slane %v1457, 5
      %v1460 = vor.u32 %v1456, %v1459
      %v1461 = vrot.slane %v1460, 4
      %v1463 = vshll.u32 %v251, 16
      %v1465 = vrot.slane %v1463, 5
      %v1466 = vsel %vm308, %v1461, %v1465
      %v1467 = vshrl.u32 %v251, 16
      %v1469 = vrot.slane %v1467, 4
      %v1470 = vor.u32 %v1469, %v1465
      %v1471 = vrot.slane %v1470, 4
      %v1473 = vshll.u32 %v252, 16
      %v1475 = vrot.slane %v1473, 5
      %v1476 = vsel %vm308, %v1471, %v1475
      %v1477 = vshrl.u32 %v252, 16
      %v1479 = vrot.slane %v1477, 4
      %v1480 = vor.u32 %v1479, %v1475
      %v1481 = vrot.slane %v1480, 4
      %v1483 = vshll.u32 %v253, 16
      %v1485 = vrot.slane %v1483, 5
      %v1486 = vsel %vm308, %v1481, %v1485
      %v1487 = vshrl.u32 %v253, 16
      %v1489 = vrot.slane %v1487, 4
      %v1490 = vor.u32 %v1489, %v1485
      %v1491 = vrot.slane %v1490, 4
      %v1493 = vshll.u32 %v300, 16
      %v1495 = vrot.slane %v1493, 5
      %v1496 = vsel %vm308, %v1491, %v1495
      %v1498 = vshrl.u32 %v254, 16
      %v1500 = vrot.slane %v1498, 4
      %v1501 = vshll.u32 %v254, 16
      %v1503 = vrot.slane %v1501, 5
      %v1504 = vor.u32 %v1500, %v1503
      %v1505 = vrot.slane %v1504, 4
      %v1507 = vshll.u32 %v255, 16
      %v1509 = vrot.slane %v1507, 5
      %v1510 = vsel %vm308, %v1505, %v1509
      %v1511 = vshrl.u32 %v255, 16
      %v1513 = vrot.slane %v1511, 4
      %v1514 = vor.u32 %v1513, %v1509
      %v1515 = vrot.slane %v1514, 4
      %v1517 = vshll.u32 %v256, 16
      %v1519 = vrot.slane %v1517, 5
      %v1520 = vsel %vm308, %v1515, %v1519
      %v1521 = vshrl.u32 %v256, 16
      %v1523 = vrot.slane %v1521, 4
      %v1524 = vor.u32 %v1523, %v1519
      %v1525 = vrot.slane %v1524, 4
      %v1527 = vshll.u32 %v257, 16
      %v1529 = vrot.slane %v1527, 5
      %v1530 = vsel %vm308, %v1525, %v1529
      %v1531 = vshrl.u32 %v257, 16
      %v1533 = vrot.slane %v1531, 4
      %v1534 = vor.u32 %v1533, %v1529
      %v1535 = vrot.slane %v1534, 4
      %v1537 = vshll.u32 %v301, 16
      %v1539 = vrot.slane %v1537, 5
      %v1540 = vsel %vm308, %v1535, %v1539
      %v1542 = vshrl.u32 %v258, 16
      %v1544 = vrot.slane %v1542, 4
      %v1545 = vshll.u32 %v258, 16
      %v1547 = vrot.slane %v1545, 5
      %v1548 = vor.u32 %v1544, %v1547
      %v1549 = vrot.slane %v1548, 4
      %v1551 = vshll.u32 %v259, 16
      %v1553 = vrot.slane %v1551, 5
      %v1554 = vsel %vm308, %v1549, %v1553
      %v1555 = vshrl.u32 %v259, 16
      %v1557 = vrot.slane %v1555, 4
      %v1558 = vor.u32 %v1557, %v1553
      %v1559 = vrot.slane %v1558, 4
      %v1561 = vshll.u32 %v260, 16
      %v1563 = vrot.slane %v1561, 5
      %v1564 = vsel %vm308, %v1559, %v1563
      %v1565 = vshrl.u32 %v260, 16
      %v1567 = vrot.slane %v1565, 4
      %v1568 = vor.u32 %v1567, %v1563
      %v1569 = vrot.slane %v1568, 4
      %v1571 = vshll.u32 %v261, 16
      %v1573 = vrot.slane %v1571, 5
      %v1574 = vsel %vm308, %v1569, %v1573
      %v1575 = vshrl.u32 %v261, 16
      %v1577 = vrot.slane %v1575, 4
      %v1578 = vor.u32 %v1577, %v1573
      %v1579 = vrot.slane %v1578, 4
      %v1581 = vshll.u32 %v302, 16
      %v1583 = vrot.slane %v1581, 5
      %v1584 = vsel %vm308, %v1579, %v1583
      %v1586 = vshrl.u32 %v262, 16
      %v1588 = vrot.slane %v1586, 4
      %v1589 = vshll.u32 %v262, 16
      %v1591 = vrot.slane %v1589, 5
      %v1592 = vor.u32 %v1588, %v1591
      %v1593 = vrot.slane %v1592, 4
      %v1595 = vshll.u32 %v263, 16
      %v1597 = vrot.slane %v1595, 5
      %v1598 = vsel %vm308, %v1593, %v1597
      %v1599 = vshrl.u32 %v263, 16
      %v1601 = vrot.slane %v1599, 4
      %v1602 = vor.u32 %v1601, %v1597
      %v1603 = vrot.slane %v1602, 4
      %v1605 = vshll.u32 %v264, 16
      %v1607 = vrot.slane %v1605, 5
      %v1608 = vsel %vm308, %v1603, %v1607
      %v1609 = vshrl.u32 %v264, 16
      %v1611 = vrot.slane %v1609, 4
      %v1612 = vor.u32 %v1611, %v1607
      %v1613 = vrot.slane %v1612, 4
      %v1615 = vshll.u32 %v265, 16
      %v1617 = vrot.slane %v1615, 5
      %v1618 = vsel %vm308, %v1613, %v1617
      %v1619 = vshrl.u32 %v265, 16
      %v1621 = vrot.slane %v1619, 4
      %v1622 = vor.u32 %v1621, %v1617
      %v1623 = vrot.slane %v1622, 4
      %v1625 = vshll.u32 %v303, 16
      %v1627 = vrot.slane %v1625, 5
      %v1628 = vsel %vm308, %v1623, %v1627
      %v1630 = vshrl.u32 %v266, 16
      %v1632 = vrot.slane %v1630, 4
      %v1633 = vshll.u32 %v266, 16
      %v1635 = vrot.slane %v1633, 5
      %v1636 = vor.u32 %v1632, %v1635
      %v1637 = vrot.slane %v1636, 4
      %v1639 = vshll.u32 %v267, 16
      %v1641 = vrot.slane %v1639, 5
      %v1642 = vsel %vm308, %v1637, %v1641
      %v1643 = vshrl.u32 %v267, 16
      %v1645 = vrot.slane %v1643, 4
      %v1646 = vor.u32 %v1645, %v1641
      %v1647 = vrot.slane %v1646, 4
      %v1649 = vshll.u32 %v268, 16
      %v1651 = vrot.slane %v1649, 5
      %v1652 = vsel %vm308, %v1647, %v1651
      %v1653 = vshrl.u32 %v268, 16
      %v1655 = vrot.slane %v1653, 4
      %v1656 = vor.u32 %v1655, %v1651
      %v1657 = vrot.slane %v1656, 4
      %v1659 = vshll.u32 %v269, 16
      %v1661 = vrot.slane %v1659, 5
      %v1662 = vsel %vm308, %v1657, %v1661
      %v1663 = vshrl.u32 %v269, 16
      %v1665 = vrot.slane %v1663, 4
      %v1666 = vor.u32 %v1665, %v1661
      %v1667 = vrot.slane %v1666, 4
      %v1669 = vshll.u32 %v304, 16
      %v1671 = vrot.slane %v1669, 5
      %v1672 = vsel %vm308, %v1667, %v1671
      %v1674 = vshrl.u32 %v270, 16
      %v1676 = vrot.slane %v1674, 4
      %v1677 = vshll.u32 %v270, 16
      %v1679 = vrot.slane %v1677, 5
      %v1680 = vor.u32 %v1676, %v1679
      %v1681 = vrot.slane %v1680, 4
      %v1683 = vshll.u32 %v271, 16
      %v1685 = vrot.slane %v1683, 5
      %v1686 = vsel %vm308, %v1681, %v1685
      %v1687 = vshrl.u32 %v271, 16
      %v1689 = vrot.slane %v1687, 4
      %v1690 = vor.u32 %v1689, %v1685
      %v1691 = vrot.slane %v1690, 4
      %v1693 = vshll.u32 %v272, 16
      %v1695 = vrot.slane %v1693, 5
      %v1696 = vsel %vm308, %v1691, %v1695
      %v1697 = vshrl.u32 %v272, 16
      %v1699 = vrot.slane %v1697, 4
      %v1700 = vor.u32 %v1699, %v1695
      %v1701 = vrot.slane %v1700, 4
      %v1703 = vshll.u32 %v273, 16
      %v1705 = vrot.slane %v1703, 5
      %v1706 = vsel %vm308, %v1701, %v1705
      %v1707 = vshrl.u32 %v273, 16
      %v1709 = vrot.slane %v1707, 4
      %v1710 = vor.u32 %v1709, %v1705
      %v1711 = vrot.slane %v1710, 4
      %v1713 = vshll.u32 %v305, 16
      %v1715 = vrot.slane %v1713, 5
      %v1716 = vsel %vm308, %v1711, %v1715
      %s1717 = scalar_lea.vmem %s138, 20
      %v1718 = vld [vmem:[%s1717] sm:$0xf]
      %v1719 = vld [vmem:[%s1717 + $0x4] sm:$0xf]
      %v1720 = vld [vmem:[%s1717 + $0x8] sm:$0xf]
      %v1721 = vld [vmem:[%s1717 + $0xc] sm:$0xf]
      %v1722 = vld [vmem:[%s1717 + $0x14] sm:$0xf]
      %v1723 = vld [vmem:[%s1717 + $0x18] sm:$0xf]
      %v1724 = vld [vmem:[%s1717 + $0x1c] sm:$0xf]
      %v1725 = vld [vmem:[%s1717 + $0x20] sm:$0xf]
      %v1726 = vld [vmem:[%s1717 + $0x28] sm:$0xf]
      %v1727 = vld [vmem:[%s1717 + $0x2c] sm:$0xf]
      %v1728 = vld [vmem:[%s1717 + $0x30] sm:$0xf]
      %v1729 = vld [vmem:[%s1717 + $0x34] sm:$0xf]
      %v1730 = vld [vmem:[%s1717 + $0x3c] sm:$0xf]
      %v1731 = vld [vmem:[%s1717 + $0x40] sm:$0xf]
      %v1732 = vld [vmem:[%s1717 + $0x44] sm:$0xf]
      %v1733 = vld [vmem:[%s1717 + $0x48] sm:$0xf]
      %v1734 = vld [vmem:[%s1717 + $0x50] sm:$0xf]
      %v1735 = vld [vmem:[%s1717 + $0x54] sm:$0xf]
      %v1736 = vld [vmem:[%s1717 + $0x58] sm:$0xf]
      %v1737 = vld [vmem:[%s1717 + $0x5c] sm:$0xf]
      %v1738 = vld [vmem:[%s1717 + $0x64] sm:$0xf]
      %v1739 = vld [vmem:[%s1717 + $0x68] sm:$0xf]
      %v1740 = vld [vmem:[%s1717 + $0x6c] sm:$0xf]
      %v1741 = vld [vmem:[%s1717 + $0x70] sm:$0xf]
      %v1742 = vld [vmem:[%s1717 + $0x78] sm:$0xf]
      %v1743 = vld [vmem:[%s1717 + $0x7c] sm:$0xf]
      %v1744 = vld [vmem:[%s1717 + $0x80] sm:$0xf]
      %v1745 = vld [vmem:[%s1717 + $0x84] sm:$0xf]
      %v1746 = vld [vmem:[%s1717 + $0x8c] sm:$0xf]
      %v1747 = vld [vmem:[%s1717 + $0x90] sm:$0xf]
      %v1748 = vld [vmem:[%s1717 + $0x94] sm:$0xf]
      %v1749 = vld [vmem:[%s1717 + $0x98] sm:$0xf]
      %v1750 = vld [vmem:[%s1717 + $0xa0] sm:$0xf]
      %v1751 = vld [vmem:[%s1717 + $0xa4] sm:$0xf]
      %v1752 = vld [vmem:[%s1717 + $0xa8] sm:$0xf]
      %v1753 = vld [vmem:[%s1717 + $0xac] sm:$0xf]
      %v1754 = vld [vmem:[%s1717 + $0xb4] sm:$0xf]
      %v1755 = vld [vmem:[%s1717 + $0xb8] sm:$0xf]
      %v1756 = vld [vmem:[%s1717 + $0xbc] sm:$0xf]
      %v1757 = vld [vmem:[%s1717 + $0xc0] sm:$0xf]
      %v1758 = vld [vmem:[%s1717 + $0xc8] sm:$0xf]
      %v1759 = vld [vmem:[%s1717 + $0xcc] sm:$0xf]
      %v1760 = vld [vmem:[%s1717 + $0xd0] sm:$0xf]
      %v1761 = vld [vmem:[%s1717 + $0xd4] sm:$0xf]
      %v1762 = vld [vmem:[%s1717 + $0xdc] sm:$0xf]
      %v1763 = vld [vmem:[%s1717 + $0xe0] sm:$0xf]
      %v1764 = vld [vmem:[%s1717 + $0xe4] sm:$0xf]
      %v1765 = vld [vmem:[%s1717 + $0xe8] sm:$0xf]
      %v1766 = vld [vmem:[%s1717 + $0xf0] sm:$0xf]
      %v1767 = vld [vmem:[%s1717 + $0xf4] sm:$0xf]
      %v1768 = vld [vmem:[%s1717 + $0xf8] sm:$0xf]
      %v1769 = vld [vmem:[%s1717 + $0xfc] sm:$0xf]
      %v1770 = vld [vmem:[%s1717 + $0x104] sm:$0xf]
      %v1771 = vld [vmem:[%s1717 + $0x108] sm:$0xf]
      %v1772 = vld [vmem:[%s1717 + $0x10c] sm:$0xf]
      %v1773 = vld [vmem:[%s1717 + $0x110] sm:$0xf]
      %v1774 = vld [vmem:[%s1717 + $0x118] sm:$0xf]
      %v1775 = vld [vmem:[%s1717 + $0x11c] sm:$0xf]
      %v1776 = vld [vmem:[%s1717 + $0x120] sm:$0xf]
      %v1777 = vld [vmem:[%s1717 + $0x124] sm:$0xf]
      %v1778 = vld [vmem:[%s1717 + $0x12c] sm:$0xf]
      %v1779 = vld [vmem:[%s1717 + $0x130] sm:$0xf]
      %v1780 = vld [vmem:[%s1717 + $0x134] sm:$0xf]
      %v1781 = vld [vmem:[%s1717 + $0x138] sm:$0xf]
      %v1782 = vld [vmem:[%s1717 + $0x140] sm:$0xf]
      %v1783 = vld [vmem:[%s1717 + $0x144] sm:$0xf]
      %v1784 = vld [vmem:[%s1717 + $0x148] sm:$0xf]
      %v1785 = vld [vmem:[%s1717 + $0x14c] sm:$0xf]
      %v1786 = vld [vmem:[%s1717 + $0x154] sm:$0xf]
      %v1787 = vld [vmem:[%s1717 + $0x158] sm:$0xf]
      %v1788 = vld [vmem:[%s1717 + $0x15c] sm:$0xf]
      %v1789 = vld [vmem:[%s1717 + $0x160] sm:$0xf]
      %v1790 = vld [vmem:[%s1717 + $0x168] sm:$0xf]
      %v1791 = vld [vmem:[%s1717 + $0x16c] sm:$0xf]
      %v1792 = vld [vmem:[%s1717 + $0x170] sm:$0xf]
      %v1793 = vld [vmem:[%s1717 + $0x174] sm:$0xf]
      %v1794 = vld [vmem:[%s1717 + $0x17c] sm:$0xf]
      %v1795 = vld [vmem:[%s1717 + $0x180] sm:$0xf]
      %v1796 = vld [vmem:[%s1717 + $0x184] sm:$0xf]
      %v1797 = vld [vmem:[%s1717 + $0x188] sm:$0xf]
      %v1798 = vld [vmem:[%s1717 + $0x190] sm:$0xf]
      %v1799 = vld [vmem:[%s1717 + $0x194] sm:$0xf]
      %v1800 = vld [vmem:[%s1717 + $0x198] sm:$0xf]
      %v1801 = vld [vmem:[%s1717 + $0x19c] sm:$0xf]
      %v1802 = vld [vmem:[%s1717 + $0x1a4] sm:$0xf]
      %v1803 = vld [vmem:[%s1717 + $0x1a8] sm:$0xf]
      %v1804 = vld [vmem:[%s1717 + $0x1ac] sm:$0xf]
      %v1805 = vld [vmem:[%s1717 + $0x1b0] sm:$0xf]
      %v1806 = vld [vmem:[%s1717 + $0x1b8] sm:$0xf]
      %v1807 = vld [vmem:[%s1717 + $0x1bc] sm:$0xf]
      %v1808 = vld [vmem:[%s1717 + $0x1c0] sm:$0xf]
      %v1809 = vld [vmem:[%s1717 + $0x1c4] sm:$0xf]
      %v1810 = vld [vmem:[%s1717 + $0x1cc] sm:$0xf]
      %v1811 = vld [vmem:[%s1717 + $0x1d0] sm:$0xf]
      %v1812 = vld [vmem:[%s1717 + $0x1d4] sm:$0xf]
      %v1813 = vld [vmem:[%s1717 + $0x1d8] sm:$0xf]
      %v1814 = vld [vmem:[%s1717 + $0x1e0] sm:$0xf]
      %v1815 = vld [vmem:[%s1717 + $0x1e4] sm:$0xf]
      %v1816 = vld [vmem:[%s1717 + $0x1e8] sm:$0xf]
      %v1817 = vld [vmem:[%s1717 + $0x1ec] sm:$0xf]
      %v1818 = vld [vmem:[%s1717 + $0x1f4] sm:$0xf]
      %v1819 = vld [vmem:[%s1717 + $0x1f8] sm:$0xf]
      %v1820 = vld [vmem:[%s1717 + $0x1fc] sm:$0xf]
      %v1821 = vld [vmem:[%s1717 + $0x200] sm:$0xf]
      %v1822 = vld [vmem:[%s1717 + $0x208] sm:$0xf]
      %v1823 = vld [vmem:[%s1717 + $0x20c] sm:$0xf]
      %v1824 = vld [vmem:[%s1717 + $0x210] sm:$0xf]
      %v1825 = vld [vmem:[%s1717 + $0x214] sm:$0xf]
      %v1826 = vld [vmem:[%s1717 + $0x21c] sm:$0xf]
      %v1827 = vld [vmem:[%s1717 + $0x220] sm:$0xf]
      %v1828 = vld [vmem:[%s1717 + $0x224] sm:$0xf]
      %v1829 = vld [vmem:[%s1717 + $0x228] sm:$0xf]
      %v1830 = vld [vmem:[%s1717 + $0x230] sm:$0xf]
      %v1831 = vld [vmem:[%s1717 + $0x234] sm:$0xf]
      %v1832 = vld [vmem:[%s1717 + $0x238] sm:$0xf]
      %v1833 = vld [vmem:[%s1717 + $0x23c] sm:$0xf]
      %v1834 = vld [vmem:[%s1717 + $0x244] sm:$0xf]
      %v1835 = vld [vmem:[%s1717 + $0x248] sm:$0xf]
      %v1836 = vld [vmem:[%s1717 + $0x24c] sm:$0xf]
      %v1837 = vld [vmem:[%s1717 + $0x250] sm:$0xf]
      %v1838 = vld [vmem:[%s1717 + $0x258] sm:$0xf]
      %v1839 = vld [vmem:[%s1717 + $0x25c] sm:$0xf]
      %v1840 = vld [vmem:[%s1717 + $0x260] sm:$0xf]
      %v1841 = vld [vmem:[%s1717 + $0x264] sm:$0xf]
      %v1842 = vld [vmem:[%s1717 + $0x26c] sm:$0xf]
      %v1843 = vld [vmem:[%s1717 + $0x270] sm:$0xf]
      %v1844 = vld [vmem:[%s1717 + $0x274] sm:$0xf]
      %v1845 = vld [vmem:[%s1717 + $0x278] sm:$0xf]
      %v1846 = vld [vmem:[%s1717 + $0x10] sm:$0x1]
      %v1847 = vld [vmem:[%s1717 + $0x24] sm:$0x1]
      %v1848 = vld [vmem:[%s1717 + $0x38] sm:$0x1]
      %v1849 = vld [vmem:[%s1717 + $0x4c] sm:$0x1]
      %v1850 = vld [vmem:[%s1717 + $0x60] sm:$0x1]
      %v1851 = vld [vmem:[%s1717 + $0x74] sm:$0x1]
      %v1852 = vld [vmem:[%s1717 + $0x88] sm:$0x1]
      %v1853 = vld [vmem:[%s1717 + $0x9c] sm:$0x1]
      %v1854 = vld [vmem:[%s1717 + $0xb0] sm:$0x1]
      %v1855 = vld [vmem:[%s1717 + $0xc4] sm:$0x1]
      %v1856 = vld [vmem:[%s1717 + $0xd8] sm:$0x1]
      %v1857 = vld [vmem:[%s1717 + $0xec] sm:$0x1]
      %v1858 = vld [vmem:[%s1717 + $0x100] sm:$0x1]
      %v1859 = vld [vmem:[%s1717 + $0x114] sm:$0x1]
      %v1860 = vld [vmem:[%s1717 + $0x128] sm:$0x1]
      %v1861 = vld [vmem:[%s1717 + $0x13c] sm:$0x1]
      %v1862 = vld [vmem:[%s1717 + $0x150] sm:$0x1]
      %v1863 = vld [vmem:[%s1717 + $0x164] sm:$0x1]
      %v1864 = vld [vmem:[%s1717 + $0x178] sm:$0x1]
      %v1865 = vld [vmem:[%s1717 + $0x18c] sm:$0x1]
      %v1866 = vld [vmem:[%s1717 + $0x1a0] sm:$0x1]
      %v1867 = vld [vmem:[%s1717 + $0x1b4] sm:$0x1]
      %v1868 = vld [vmem:[%s1717 + $0x1c8] sm:$0x1]
      %v1869 = vld [vmem:[%s1717 + $0x1dc] sm:$0x1]
      %v1870 = vld [vmem:[%s1717 + $0x1f0] sm:$0x1]
      %v1871 = vld [vmem:[%s1717 + $0x204] sm:$0x1]
      %v1872 = vld [vmem:[%s1717 + $0x218] sm:$0x1]
      %v1873 = vld [vmem:[%s1717 + $0x22c] sm:$0x1]
      %v1874 = vld [vmem:[%s1717 + $0x240] sm:$0x1]
      %v1875 = vld [vmem:[%s1717 + $0x254] sm:$0x1]
      %v1876 = vld [vmem:[%s1717 + $0x268] sm:$0x1]
      %v1877 = vld [vmem:[%s1717 + $0x27c] sm:$0x1]
      %v1879 = vshrl.u32 %v1718, 16
      %v1881 = vrot.slane %v1879, 4
      %v1882 = vshll.u32 %v1718, 16
      %v1884 = vrot.slane %v1882, 5
      %v1885 = vor.u32 %v1881, %v1884
      %v1886 = vrot.slane %v1885, 4
      %v1888 = vshll.u32 %v1719, 16
      %v1890 = vrot.slane %v1888, 5
      %v1891 = vsel %vm308, %v1886, %v1890
      %v1892 = vshrl.u32 %v1719, 16
      %v1894 = vrot.slane %v1892, 4
      %v1895 = vor.u32 %v1894, %v1890
      %v1896 = vrot.slane %v1895, 4
      %v1898 = vshll.u32 %v1720, 16
      %v1900 = vrot.slane %v1898, 5
      %v1901 = vsel %vm308, %v1896, %v1900
      %v1902 = vshrl.u32 %v1720, 16
      %v1904 = vrot.slane %v1902, 4
      %v1905 = vor.u32 %v1904, %v1900
      %v1906 = vrot.slane %v1905, 4
      %v1908 = vshll.u32 %v1721, 16
      %v1910 = vrot.slane %v1908, 5
      %v1911 = vsel %vm308, %v1906, %v1910
      %v1912 = vshrl.u32 %v1721, 16
      %v1914 = vrot.slane %v1912, 4
      %v1915 = vor.u32 %v1914, %v1910
      %v1916 = vrot.slane %v1915, 4
      %v1918 = vshll.u32 %v1846, 16
      %v1920 = vrot.slane %v1918, 5
      %v1921 = vsel %vm308, %v1916, %v1920
      %v1923 = vshrl.u32 %v1722, 16
      %v1925 = vrot.slane %v1923, 4
      %v1926 = vshll.u32 %v1722, 16
      %v1928 = vrot.slane %v1926, 5
      %v1929 = vor.u32 %v1925, %v1928
      %v1930 = vrot.slane %v1929, 4
      %v1932 = vshll.u32 %v1723, 16
      %v1934 = vrot.slane %v1932, 5
      %v1935 = vsel %vm308, %v1930, %v1934
      %v1936 = vshrl.u32 %v1723, 16
      %v1938 = vrot.slane %v1936, 4
      %v1939 = vor.u32 %v1938, %v1934
      %v1940 = vrot.slane %v1939, 4
      %v1942 = vshll.u32 %v1724, 16
      %v1944 = vrot.slane %v1942, 5
      %v1945 = vsel %vm308, %v1940, %v1944
      %v1946 = vshrl.u32 %v1724, 16
      %v1948 = vrot.slane %v1946, 4
      %v1949 = vor.u32 %v1948, %v1944
      %v1950 = vrot.slane %v1949, 4
      %v1952 = vshll.u32 %v1725, 16
      %v1954 = vrot.slane %v1952, 5
      %v1955 = vsel %vm308, %v1950, %v1954
      %v1956 = vshrl.u32 %v1725, 16
      %v1958 = vrot.slane %v1956, 4
      %v1959 = vor.u32 %v1958, %v1954
      %v1960 = vrot.slane %v1959, 4
      %v1962 = vshll.u32 %v1847, 16
      %v1964 = vrot.slane %v1962, 5
      %v1965 = vsel %vm308, %v1960, %v1964
      %v1967 = vshrl.u32 %v1726, 16
      %v1969 = vrot.slane %v1967, 4
      %v1970 = vshll.u32 %v1726, 16
      %v1972 = vrot.slane %v1970, 5
      %v1973 = vor.u32 %v1969, %v1972
      %v1974 = vrot.slane %v1973, 4
      %v1976 = vshll.u32 %v1727, 16
      %v1978 = vrot.slane %v1976, 5
      %v1979 = vsel %vm308, %v1974, %v1978
      %v1980 = vshrl.u32 %v1727, 16
      %v1982 = vrot.slane %v1980, 4
      %v1983 = vor.u32 %v1982, %v1978
      %v1984 = vrot.slane %v1983, 4
      %v1986 = vshll.u32 %v1728, 16
      %v1988 = vrot.slane %v1986, 5
      %v1989 = vsel %vm308, %v1984, %v1988
      %v1990 = vshrl.u32 %v1728, 16
      %v1992 = vrot.slane %v1990, 4
      %v1993 = vor.u32 %v1992, %v1988
      %v1994 = vrot.slane %v1993, 4
      %v1996 = vshll.u32 %v1729, 16
      %v1998 = vrot.slane %v1996, 5
      %v1999 = vsel %vm308, %v1994, %v1998
      %v2000 = vshrl.u32 %v1729, 16
      %v2002 = vrot.slane %v2000, 4
      %v2003 = vor.u32 %v2002, %v1998
      %v2004 = vrot.slane %v2003, 4
      %v2006 = vshll.u32 %v1848, 16
      %v2008 = vrot.slane %v2006, 5
      %v2009 = vsel %vm308, %v2004, %v2008
      %v2011 = vshrl.u32 %v1730, 16
      %v2013 = vrot.slane %v2011, 4
      %v2014 = vshll.u32 %v1730, 16
      %v2016 = vrot.slane %v2014, 5
      %v2017 = vor.u32 %v2013, %v2016
      %v2018 = vrot.slane %v2017, 4
      %v2020 = vshll.u32 %v1731, 16
      %v2022 = vrot.slane %v2020, 5
      %v2023 = vsel %vm308, %v2018, %v2022
      %v2024 = vshrl.u32 %v1731, 16
      %v2026 = vrot.slane %v2024, 4
      %v2027 = vor.u32 %v2026, %v2022
      %v2028 = vrot.slane %v2027, 4
      %v2030 = vshll.u32 %v1732, 16
      %v2032 = vrot.slane %v2030, 5
      %v2033 = vsel %vm308, %v2028, %v2032
      %v2034 = vshrl.u32 %v1732, 16
      %v2036 = vrot.slane %v2034, 4
      %v2037 = vor.u32 %v2036, %v2032
      %v2038 = vrot.slane %v2037, 4
      %v2040 = vshll.u32 %v1733, 16
      %v2042 = vrot.slane %v2040, 5
      %v2043 = vsel %vm308, %v2038, %v2042
      %v2044 = vshrl.u32 %v1733, 16
      %v2046 = vrot.slane %v2044, 4
      %v2047 = vor.u32 %v2046, %v2042
      %v2048 = vrot.slane %v2047, 4
      %v2050 = vshll.u32 %v1849, 16
      %v2052 = vrot.slane %v2050, 5
      %v2053 = vsel %vm308, %v2048, %v2052
      %v2055 = vshrl.u32 %v1734, 16
      %v2057 = vrot.slane %v2055, 4
      %v2058 = vshll.u32 %v1734, 16
      %v2060 = vrot.slane %v2058, 5
      %v2061 = vor.u32 %v2057, %v2060
      %v2062 = vrot.slane %v2061, 4
      %v2064 = vshll.u32 %v1735, 16
      %v2066 = vrot.slane %v2064, 5
      %v2067 = vsel %vm308, %v2062, %v2066
      %v2068 = vshrl.u32 %v1735, 16
      %v2070 = vrot.slane %v2068, 4
      %v2071 = vor.u32 %v2070, %v2066
      %v2072 = vrot.slane %v2071, 4
      %v2074 = vshll.u32 %v1736, 16
      %v2076 = vrot.slane %v2074, 5
      %v2077 = vsel %vm308, %v2072, %v2076
      %v2078 = vshrl.u32 %v1736, 16
      %v2080 = vrot.slane %v2078, 4
      %v2081 = vor.u32 %v2080, %v2076
      %v2082 = vrot.slane %v2081, 4
      %v2084 = vshll.u32 %v1737, 16
      %v2086 = vrot.slane %v2084, 5
      %v2087 = vsel %vm308, %v2082, %v2086
      %v2088 = vshrl.u32 %v1737, 16
      %v2090 = vrot.slane %v2088, 4
      %v2091 = vor.u32 %v2090, %v2086
      %v2092 = vrot.slane %v2091, 4
      %v2094 = vshll.u32 %v1850, 16
      %v2096 = vrot.slane %v2094, 5
      %v2097 = vsel %vm308, %v2092, %v2096
      %v2099 = vshrl.u32 %v1738, 16
      %v2101 = vrot.slane %v2099, 4
      %v2102 = vshll.u32 %v1738, 16
      %v2104 = vrot.slane %v2102, 5
      %v2105 = vor.u32 %v2101, %v2104
      %v2106 = vrot.slane %v2105, 4
      %v2108 = vshll.u32 %v1739, 16
      %v2110 = vrot.slane %v2108, 5
      %v2111 = vsel %vm308, %v2106, %v2110
      %v2112 = vshrl.u32 %v1739, 16
      %v2114 = vrot.slane %v2112, 4
      %v2115 = vor.u32 %v2114, %v2110
      %v2116 = vrot.slane %v2115, 4
      %v2118 = vshll.u32 %v1740, 16
      %v2120 = vrot.slane %v2118, 5
      %v2121 = vsel %vm308, %v2116, %v2120
      %v2122 = vshrl.u32 %v1740, 16
      %v2124 = vrot.slane %v2122, 4
      %v2125 = vor.u32 %v2124, %v2120
      %v2126 = vrot.slane %v2125, 4
      %v2128 = vshll.u32 %v1741, 16
      %v2130 = vrot.slane %v2128, 5
      %v2131 = vsel %vm308, %v2126, %v2130
      %v2132 = vshrl.u32 %v1741, 16
      %v2134 = vrot.slane %v2132, 4
      %v2135 = vor.u32 %v2134, %v2130
      %v2136 = vrot.slane %v2135, 4
      %v2138 = vshll.u32 %v1851, 16
      %v2140 = vrot.slane %v2138, 5
      %v2141 = vsel %vm308, %v2136, %v2140
      %v2143 = vshrl.u32 %v1742, 16
      %v2145 = vrot.slane %v2143, 4
      %v2146 = vshll.u32 %v1742, 16
      %v2148 = vrot.slane %v2146, 5
      %v2149 = vor.u32 %v2145, %v2148
      %v2150 = vrot.slane %v2149, 4
      %v2152 = vshll.u32 %v1743, 16
      %v2154 = vrot.slane %v2152, 5
      %v2155 = vsel %vm308, %v2150, %v2154
      %v2156 = vshrl.u32 %v1743, 16
      %v2158 = vrot.slane %v2156, 4
      %v2159 = vor.u32 %v2158, %v2154
      %v2160 = vrot.slane %v2159, 4
      %v2162 = vshll.u32 %v1744, 16
      %v2164 = vrot.slane %v2162, 5
      %v2165 = vsel %vm308, %v2160, %v2164
      %v2166 = vshrl.u32 %v1744, 16
      %v2168 = vrot.slane %v2166, 4
      %v2169 = vor.u32 %v2168, %v2164
      %v2170 = vrot.slane %v2169, 4
      %v2172 = vshll.u32 %v1745, 16
      %v2174 = vrot.slane %v2172, 5
      %v2175 = vsel %vm308, %v2170, %v2174
      %v2176 = vshrl.u32 %v1745, 16
      %v2178 = vrot.slane %v2176, 4
      %v2179 = vor.u32 %v2178, %v2174
      %v2180 = vrot.slane %v2179, 4
      %v2182 = vshll.u32 %v1852, 16
      %v2184 = vrot.slane %v2182, 5
      %v2185 = vsel %vm308, %v2180, %v2184
      %v2187 = vshrl.u32 %v1746, 16
      %v2189 = vrot.slane %v2187, 4
      %v2190 = vshll.u32 %v1746, 16
      %v2192 = vrot.slane %v2190, 5
      %v2193 = vor.u32 %v2189, %v2192
      %v2194 = vrot.slane %v2193, 4
      %v2196 = vshll.u32 %v1747, 16
      %v2198 = vrot.slane %v2196, 5
      %v2199 = vsel %vm308, %v2194, %v2198
      %v2200 = vshrl.u32 %v1747, 16
      %v2202 = vrot.slane %v2200, 4
      %v2203 = vor.u32 %v2202, %v2198
      %v2204 = vrot.slane %v2203, 4
      %v2206 = vshll.u32 %v1748, 16
      %v2208 = vrot.slane %v2206, 5
      %v2209 = vsel %vm308, %v2204, %v2208
      %v2210 = vshrl.u32 %v1748, 16
      %v2212 = vrot.slane %v2210, 4
      %v2213 = vor.u32 %v2212, %v2208
      %v2214 = vrot.slane %v2213, 4
      %v2216 = vshll.u32 %v1749, 16
      %v2218 = vrot.slane %v2216, 5
      %v2219 = vsel %vm308, %v2214, %v2218
      %v2220 = vshrl.u32 %v1749, 16
      %v2222 = vrot.slane %v2220, 4
      %v2223 = vor.u32 %v2222, %v2218
      %v2224 = vrot.slane %v2223, 4
      %v2226 = vshll.u32 %v1853, 16
      %v2228 = vrot.slane %v2226, 5
      %v2229 = vsel %vm308, %v2224, %v2228
      %v2231 = vshrl.u32 %v1750, 16
      %v2233 = vrot.slane %v2231, 4
      %v2234 = vshll.u32 %v1750, 16
      %v2236 = vrot.slane %v2234, 5
      %v2237 = vor.u32 %v2233, %v2236
      %v2238 = vrot.slane %v2237, 4
      %v2240 = vshll.u32 %v1751, 16
      %v2242 = vrot.slane %v2240, 5
      %v2243 = vsel %vm308, %v2238, %v2242
      %v2244 = vshrl.u32 %v1751, 16
      %v2246 = vrot.slane %v2244, 4
      %v2247 = vor.u32 %v2246, %v2242
      %v2248 = vrot.slane %v2247, 4
      %v2250 = vshll.u32 %v1752, 16
      %v2252 = vrot.slane %v2250, 5
      %v2253 = vsel %vm308, %v2248, %v2252
      %v2254 = vshrl.u32 %v1752, 16
      %v2256 = vrot.slane %v2254, 4
      %v2257 = vor.u32 %v2256, %v2252
      %v2258 = vrot.slane %v2257, 4
      %v2260 = vshll.u32 %v1753, 16
      %v2262 = vrot.slane %v2260, 5
      %v2263 = vsel %vm308, %v2258, %v2262
      %v2264 = vshrl.u32 %v1753, 16
      %v2266 = vrot.slane %v2264, 4
      %v2267 = vor.u32 %v2266, %v2262
      %v2268 = vrot.slane %v2267, 4
      %v2270 = vshll.u32 %v1854, 16
      %v2272 = vrot.slane %v2270, 5
      %v2273 = vsel %vm308, %v2268, %v2272
      %v2275 = vshrl.u32 %v1754, 16
      %v2277 = vrot.slane %v2275, 4
      %v2278 = vshll.u32 %v1754, 16
      %v2280 = vrot.slane %v2278, 5
      %v2281 = vor.u32 %v2277, %v2280
      %v2282 = vrot.slane %v2281, 4
      %v2284 = vshll.u32 %v1755, 16
      %v2286 = vrot.slane %v2284, 5
      %v2287 = vsel %vm308, %v2282, %v2286
      %v2288 = vshrl.u32 %v1755, 16
      %v2290 = vrot.slane %v2288, 4
      %v2291 = vor.u32 %v2290, %v2286
      %v2292 = vrot.slane %v2291, 4
      %v2294 = vshll.u32 %v1756, 16
      %v2296 = vrot.slane %v2294, 5
      %v2297 = vsel %vm308, %v2292, %v2296
      %v2298 = vshrl.u32 %v1756, 16
      %v2300 = vrot.slane %v2298, 4
      %v2301 = vor.u32 %v2300, %v2296
      %v2302 = vrot.slane %v2301, 4
      %v2304 = vshll.u32 %v1757, 16
      %v2306 = vrot.slane %v2304, 5
      %v2307 = vsel %vm308, %v2302, %v2306
      %v2308 = vshrl.u32 %v1757, 16
      %v2310 = vrot.slane %v2308, 4
      %v2311 = vor.u32 %v2310, %v2306
      %v2312 = vrot.slane %v2311, 4
      %v2314 = vshll.u32 %v1855, 16
      %v2316 = vrot.slane %v2314, 5
      %v2317 = vsel %vm308, %v2312, %v2316
      %v2319 = vshrl.u32 %v1758, 16
      %v2321 = vrot.slane %v2319, 4
      %v2322 = vshll.u32 %v1758, 16
      %v2324 = vrot.slane %v2322, 5
      %v2325 = vor.u32 %v2321, %v2324
      %v2326 = vrot.slane %v2325, 4
      %v2328 = vshll.u32 %v1759, 16
      %v2330 = vrot.slane %v2328, 5
      %v2331 = vsel %vm308, %v2326, %v2330
      %v2332 = vshrl.u32 %v1759, 16
      %v2334 = vrot.slane %v2332, 4
      %v2335 = vor.u32 %v2334, %v2330
      %v2336 = vrot.slane %v2335, 4
      %v2338 = vshll.u32 %v1760, 16
      %v2340 = vrot.slane %v2338, 5
      %v2341 = vsel %vm308, %v2336, %v2340
      %v2342 = vshrl.u32 %v1760, 16
      %v2344 = vrot.slane %v2342, 4
      %v2345 = vor.u32 %v2344, %v2340
      %v2346 = vrot.slane %v2345, 4
      %v2348 = vshll.u32 %v1761, 16
      %v2350 = vrot.slane %v2348, 5
      %v2351 = vsel %vm308, %v2346, %v2350
      %v2352 = vshrl.u32 %v1761, 16
      %v2354 = vrot.slane %v2352, 4
      %v2355 = vor.u32 %v2354, %v2350
      %v2356 = vrot.slane %v2355, 4
      %v2358 = vshll.u32 %v1856, 16
      %v2360 = vrot.slane %v2358, 5
      %v2361 = vsel %vm308, %v2356, %v2360
      %v2363 = vshrl.u32 %v1762, 16
      %v2365 = vrot.slane %v2363, 4
      %v2366 = vshll.u32 %v1762, 16
      %v2368 = vrot.slane %v2366, 5
      %v2369 = vor.u32 %v2365, %v2368
      %v2370 = vrot.slane %v2369, 4
      %v2372 = vshll.u32 %v1763, 16
      %v2374 = vrot.slane %v2372, 5
      %v2375 = vsel %vm308, %v2370, %v2374
      %v2376 = vshrl.u32 %v1763, 16
      %v2378 = vrot.slane %v2376, 4
      %v2379 = vor.u32 %v2378, %v2374
      %v2380 = vrot.slane %v2379, 4
      %v2382 = vshll.u32 %v1764, 16
      %v2384 = vrot.slane %v2382, 5
      %v2385 = vsel %vm308, %v2380, %v2384
      %v2386 = vshrl.u32 %v1764, 16
      %v2388 = vrot.slane %v2386, 4
      %v2389 = vor.u32 %v2388, %v2384
      %v2390 = vrot.slane %v2389, 4
      %v2392 = vshll.u32 %v1765, 16
      %v2394 = vrot.slane %v2392, 5
      %v2395 = vsel %vm308, %v2390, %v2394
      %v2396 = vshrl.u32 %v1765, 16
      %v2398 = vrot.slane %v2396, 4
      %v2399 = vor.u32 %v2398, %v2394
      %v2400 = vrot.slane %v2399, 4
      %v2402 = vshll.u32 %v1857, 16
      %v2404 = vrot.slane %v2402, 5
      %v2405 = vsel %vm308, %v2400, %v2404
      %v2407 = vshrl.u32 %v1766, 16
      %v2409 = vrot.slane %v2407, 4
      %v2410 = vshll.u32 %v1766, 16
      %v2412 = vrot.slane %v2410, 5
      %v2413 = vor.u32 %v2409, %v2412
      %v2414 = vrot.slane %v2413, 4
      %v2416 = vshll.u32 %v1767, 16
      %v2418 = vrot.slane %v2416, 5
      %v2419 = vsel %vm308, %v2414, %v2418
      %v2420 = vshrl.u32 %v1767, 16
      %v2422 = vrot.slane %v2420, 4
      %v2423 = vor.u32 %v2422, %v2418
      %v2424 = vrot.slane %v2423, 4
      %v2426 = vshll.u32 %v1768, 16
      %v2428 = vrot.slane %v2426, 5
      %v2429 = vsel %vm308, %v2424, %v2428
      %v2430 = vshrl.u32 %v1768, 16
      %v2432 = vrot.slane %v2430, 4
      %v2433 = vor.u32 %v2432, %v2428
      %v2434 = vrot.slane %v2433, 4
      %v2436 = vshll.u32 %v1769, 16
      %v2438 = vrot.slane %v2436, 5
      %v2439 = vsel %vm308, %v2434, %v2438
      %v2440 = vshrl.u32 %v1769, 16
      %v2442 = vrot.slane %v2440, 4
      %v2443 = vor.u32 %v2442, %v2438
      %v2444 = vrot.slane %v2443, 4
      %v2446 = vshll.u32 %v1858, 16
      %v2448 = vrot.slane %v2446, 5
      %v2449 = vsel %vm308, %v2444, %v2448
      %v2451 = vshrl.u32 %v1770, 16
      %v2453 = vrot.slane %v2451, 4
      %v2454 = vshll.u32 %v1770, 16
      %v2456 = vrot.slane %v2454, 5
      %v2457 = vor.u32 %v2453, %v2456
      %v2458 = vrot.slane %v2457, 4
      %v2460 = vshll.u32 %v1771, 16
      %v2462 = vrot.slane %v2460, 5
      %v2463 = vsel %vm308, %v2458, %v2462
      %v2464 = vshrl.u32 %v1771, 16
      %v2466 = vrot.slane %v2464, 4
      %v2467 = vor.u32 %v2466, %v2462
      %v2468 = vrot.slane %v2467, 4
      %v2470 = vshll.u32 %v1772, 16
      %v2472 = vrot.slane %v2470, 5
      %v2473 = vsel %vm308, %v2468, %v2472
      %v2474 = vshrl.u32 %v1772, 16
      %v2476 = vrot.slane %v2474, 4
      %v2477 = vor.u32 %v2476, %v2472
      %v2478 = vrot.slane %v2477, 4
      %v2480 = vshll.u32 %v1773, 16
      %v2482 = vrot.slane %v2480, 5
      %v2483 = vsel %vm308, %v2478, %v2482
      %v2484 = vshrl.u32 %v1773, 16
      %v2486 = vrot.slane %v2484, 4
      %v2487 = vor.u32 %v2486, %v2482
      %v2488 = vrot.slane %v2487, 4
      %v2490 = vshll.u32 %v1859, 16
      %v2492 = vrot.slane %v2490, 5
      %v2493 = vsel %vm308, %v2488, %v2492
      %v2495 = vshrl.u32 %v1774, 16
      %v2497 = vrot.slane %v2495, 4
      %v2498 = vshll.u32 %v1774, 16
      %v2500 = vrot.slane %v2498, 5
      %v2501 = vor.u32 %v2497, %v2500
      %v2502 = vrot.slane %v2501, 4
      %v2504 = vshll.u32 %v1775, 16
      %v2506 = vrot.slane %v2504, 5
      %v2507 = vsel %vm308, %v2502, %v2506
      %v2508 = vshrl.u32 %v1775, 16
      %v2510 = vrot.slane %v2508, 4
      %v2511 = vor.u32 %v2510, %v2506
      %v2512 = vrot.slane %v2511, 4
      %v2514 = vshll.u32 %v1776, 16
      %v2516 = vrot.slane %v2514, 5
      %v2517 = vsel %vm308, %v2512, %v2516
      %v2518 = vshrl.u32 %v1776, 16
      %v2520 = vrot.slane %v2518, 4
      %v2521 = vor.u32 %v2520, %v2516
      %v2522 = vrot.slane %v2521, 4
      %v2524 = vshll.u32 %v1777, 16
      %v2526 = vrot.slane %v2524, 5
      %v2527 = vsel %vm308, %v2522, %v2526
      %v2528 = vshrl.u32 %v1777, 16
      %v2530 = vrot.slane %v2528, 4
      %v2531 = vor.u32 %v2530, %v2526
      %v2532 = vrot.slane %v2531, 4
      %v2534 = vshll.u32 %v1860, 16
      %v2536 = vrot.slane %v2534, 5
      %v2537 = vsel %vm308, %v2532, %v2536
      %v2539 = vshrl.u32 %v1778, 16
      %v2541 = vrot.slane %v2539, 4
      %v2542 = vshll.u32 %v1778, 16
      %v2544 = vrot.slane %v2542, 5
      %v2545 = vor.u32 %v2541, %v2544
      %v2546 = vrot.slane %v2545, 4
      %v2548 = vshll.u32 %v1779, 16
      %v2550 = vrot.slane %v2548, 5
      %v2551 = vsel %vm308, %v2546, %v2550
      %v2552 = vshrl.u32 %v1779, 16
      %v2554 = vrot.slane %v2552, 4
      %v2555 = vor.u32 %v2554, %v2550
      %v2556 = vrot.slane %v2555, 4
      %v2558 = vshll.u32 %v1780, 16
      %v2560 = vrot.slane %v2558, 5
      %v2561 = vsel %vm308, %v2556, %v2560
      %v2562 = vshrl.u32 %v1780, 16
      %v2564 = vrot.slane %v2562, 4
      %v2565 = vor.u32 %v2564, %v2560
      %v2566 = vrot.slane %v2565, 4
      %v2568 = vshll.u32 %v1781, 16
      %v2570 = vrot.slane %v2568, 5
      %v2571 = vsel %vm308, %v2566, %v2570
      %v2572 = vshrl.u32 %v1781, 16
      %v2574 = vrot.slane %v2572, 4
      %v2575 = vor.u32 %v2574, %v2570
      %v2576 = vrot.slane %v2575, 4
      %v2578 = vshll.u32 %v1861, 16
      %v2580 = vrot.slane %v2578, 5
      %v2581 = vsel %vm308, %v2576, %v2580
      %v2583 = vshrl.u32 %v1782, 16
      %v2585 = vrot.slane %v2583, 4
      %v2586 = vshll.u32 %v1782, 16
      %v2588 = vrot.slane %v2586, 5
      %v2589 = vor.u32 %v2585, %v2588
      %v2590 = vrot.slane %v2589, 4
      %v2592 = vshll.u32 %v1783, 16
      %v2594 = vrot.slane %v2592, 5
      %v2595 = vsel %vm308, %v2590, %v2594
      %v2596 = vshrl.u32 %v1783, 16
      %v2598 = vrot.slane %v2596, 4
      %v2599 = vor.u32 %v2598, %v2594
      %v2600 = vrot.slane %v2599, 4
      %v2602 = vshll.u32 %v1784, 16
      %v2604 = vrot.slane %v2602, 5
      %v2605 = vsel %vm308, %v2600, %v2604
      %v2606 = vshrl.u32 %v1784, 16
      %v2608 = vrot.slane %v2606, 4
      %v2609 = vor.u32 %v2608, %v2604
      %v2610 = vrot.slane %v2609, 4
      %v2612 = vshll.u32 %v1785, 16
      %v2614 = vrot.slane %v2612, 5
      %v2615 = vsel %vm308, %v2610, %v2614
      %v2616 = vshrl.u32 %v1785, 16
      %v2618 = vrot.slane %v2616, 4
      %v2619 = vor.u32 %v2618, %v2614
      %v2620 = vrot.slane %v2619, 4
      %v2622 = vshll.u32 %v1862, 16
      %v2624 = vrot.slane %v2622, 5
      %v2625 = vsel %vm308, %v2620, %v2624
      %v2627 = vshrl.u32 %v1786, 16
      %v2629 = vrot.slane %v2627, 4
      %v2630 = vshll.u32 %v1786, 16
      %v2632 = vrot.slane %v2630, 5
      %v2633 = vor.u32 %v2629, %v2632
      %v2634 = vrot.slane %v2633, 4
      %v2636 = vshll.u32 %v1787, 16
      %v2638 = vrot.slane %v2636, 5
      %v2639 = vsel %vm308, %v2634, %v2638
      %v2640 = vshrl.u32 %v1787, 16
      %v2642 = vrot.slane %v2640, 4
      %v2643 = vor.u32 %v2642, %v2638
      %v2644 = vrot.slane %v2643, 4
      %v2646 = vshll.u32 %v1788, 16
      %v2648 = vrot.slane %v2646, 5
      %v2649 = vsel %vm308, %v2644, %v2648
      %v2650 = vshrl.u32 %v1788, 16
      %v2652 = vrot.slane %v2650, 4
      %v2653 = vor.u32 %v2652, %v2648
      %v2654 = vrot.slane %v2653, 4
      %v2656 = vshll.u32 %v1789, 16
      %v2658 = vrot.slane %v2656, 5
      %v2659 = vsel %vm308, %v2654, %v2658
      %v2660 = vshrl.u32 %v1789, 16
      %v2662 = vrot.slane %v2660, 4
      %v2663 = vor.u32 %v2662, %v2658
      %v2664 = vrot.slane %v2663, 4
      %v2666 = vshll.u32 %v1863, 16
      %v2668 = vrot.slane %v2666, 5
      %v2669 = vsel %vm308, %v2664, %v2668
      %v2671 = vshrl.u32 %v1790, 16
      %v2673 = vrot.slane %v2671, 4
      %v2674 = vshll.u32 %v1790, 16
      %v2676 = vrot.slane %v2674, 5
      %v2677 = vor.u32 %v2673, %v2676
      %v2678 = vrot.slane %v2677, 4
      %v2680 = vshll.u32 %v1791, 16
      %v2682 = vrot.slane %v2680, 5
      %v2683 = vsel %vm308, %v2678, %v2682
      %v2684 = vshrl.u32 %v1791, 16
      %v2686 = vrot.slane %v2684, 4
      %v2687 = vor.u32 %v2686, %v2682
      %v2688 = vrot.slane %v2687, 4
      %v2690 = vshll.u32 %v1792, 16
      %v2692 = vrot.slane %v2690, 5
      %v2693 = vsel %vm308, %v2688, %v2692
      %v2694 = vshrl.u32 %v1792, 16
      %v2696 = vrot.slane %v2694, 4
      %v2697 = vor.u32 %v2696, %v2692
      %v2698 = vrot.slane %v2697, 4
      %v2700 = vshll.u32 %v1793, 16
      %v2702 = vrot.slane %v2700, 5
      %v2703 = vsel %vm308, %v2698, %v2702
      %v2704 = vshrl.u32 %v1793, 16
      %v2706 = vrot.slane %v2704, 4
      %v2707 = vor.u32 %v2706, %v2702
      %v2708 = vrot.slane %v2707, 4
      %v2710 = vshll.u32 %v1864, 16
      %v2712 = vrot.slane %v2710, 5
      %v2713 = vsel %vm308, %v2708, %v2712
      %v2715 = vshrl.u32 %v1794, 16
      %v2717 = vrot.slane %v2715, 4
      %v2718 = vshll.u32 %v1794, 16
      %v2720 = vrot.slane %v2718, 5
      %v2721 = vor.u32 %v2717, %v2720
      %v2722 = vrot.slane %v2721, 4
      %v2724 = vshll.u32 %v1795, 16
      %v2726 = vrot.slane %v2724, 5
      %v2727 = vsel %vm308, %v2722, %v2726
      %v2728 = vshrl.u32 %v1795, 16
      %v2730 = vrot.slane %v2728, 4
      %v2731 = vor.u32 %v2730, %v2726
      %v2732 = vrot.slane %v2731, 4
      %v2734 = vshll.u32 %v1796, 16
      %v2736 = vrot.slane %v2734, 5
      %v2737 = vsel %vm308, %v2732, %v2736
      %v2738 = vshrl.u32 %v1796, 16
      %v2740 = vrot.slane %v2738, 4
      %v2741 = vor.u32 %v2740, %v2736
      %v2742 = vrot.slane %v2741, 4
      %v2744 = vshll.u32 %v1797, 16
      %v2746 = vrot.slane %v2744, 5
      %v2747 = vsel %vm308, %v2742, %v2746
      %v2748 = vshrl.u32 %v1797, 16
      %v2750 = vrot.slane %v2748, 4
      %v2751 = vor.u32 %v2750, %v2746
      %v2752 = vrot.slane %v2751, 4
      %v2754 = vshll.u32 %v1865, 16
      %v2756 = vrot.slane %v2754, 5
      %v2757 = vsel %vm308, %v2752, %v2756
      %v2759 = vshrl.u32 %v1798, 16
      %v2761 = vrot.slane %v2759, 4
      %v2762 = vshll.u32 %v1798, 16
      %v2764 = vrot.slane %v2762, 5
      %v2765 = vor.u32 %v2761, %v2764
      %v2766 = vrot.slane %v2765, 4
      %v2768 = vshll.u32 %v1799, 16
      %v2770 = vrot.slane %v2768, 5
      %v2771 = vsel %vm308, %v2766, %v2770
      %v2772 = vshrl.u32 %v1799, 16
      %v2774 = vrot.slane %v2772, 4
      %v2775 = vor.u32 %v2774, %v2770
      %v2776 = vrot.slane %v2775, 4
      %v2778 = vshll.u32 %v1800, 16
      %v2780 = vrot.slane %v2778, 5
      %v2781 = vsel %vm308, %v2776, %v2780
      %v2782 = vshrl.u32 %v1800, 16
      %v2784 = vrot.slane %v2782, 4
      %v2785 = vor.u32 %v2784, %v2780
      %v2786 = vrot.slane %v2785, 4
      %v2788 = vshll.u32 %v1801, 16
      %v2790 = vrot.slane %v2788, 5
      %v2791 = vsel %vm308, %v2786, %v2790
      %v2792 = vshrl.u32 %v1801, 16
      %v2794 = vrot.slane %v2792, 4
      %v2795 = vor.u32 %v2794, %v2790
      %v2796 = vrot.slane %v2795, 4
      %v2798 = vshll.u32 %v1866, 16
      %v2800 = vrot.slane %v2798, 5
      %v2801 = vsel %vm308, %v2796, %v2800
      %v2803 = vshrl.u32 %v1802, 16
      %v2805 = vrot.slane %v2803, 4
      %v2806 = vshll.u32 %v1802, 16
      %v2808 = vrot.slane %v2806, 5
      %v2809 = vor.u32 %v2805, %v2808
      %v2810 = vrot.slane %v2809, 4
      %v2812 = vshll.u32 %v1803, 16
      %v2814 = vrot.slane %v2812, 5
      %v2815 = vsel %vm308, %v2810, %v2814
      %v2816 = vshrl.u32 %v1803, 16
      %v2818 = vrot.slane %v2816, 4
      %v2819 = vor.u32 %v2818, %v2814
      %v2820 = vrot.slane %v2819, 4
      %v2822 = vshll.u32 %v1804, 16
      %v2824 = vrot.slane %v2822, 5
      %v2825 = vsel %vm308, %v2820, %v2824
      %v2826 = vshrl.u32 %v1804, 16
      %v2828 = vrot.slane %v2826, 4
      %v2829 = vor.u32 %v2828, %v2824
      %v2830 = vrot.slane %v2829, 4
      %v2832 = vshll.u32 %v1805, 16
      %v2834 = vrot.slane %v2832, 5
      %v2835 = vsel %vm308, %v2830, %v2834
      %v2836 = vshrl.u32 %v1805, 16
      %v2838 = vrot.slane %v2836, 4
      %v2839 = vor.u32 %v2838, %v2834
      %v2840 = vrot.slane %v2839, 4
      %v2842 = vshll.u32 %v1867, 16
      %v2844 = vrot.slane %v2842, 5
      %v2845 = vsel %vm308, %v2840, %v2844
      %v2847 = vshrl.u32 %v1806, 16
      %v2849 = vrot.slane %v2847, 4
      %v2850 = vshll.u32 %v1806, 16
      %v2852 = vrot.slane %v2850, 5
      %v2853 = vor.u32 %v2849, %v2852
      %v2854 = vrot.slane %v2853, 4
      %v2856 = vshll.u32 %v1807, 16
      %v2858 = vrot.slane %v2856, 5
      %v2859 = vsel %vm308, %v2854, %v2858
      %v2860 = vshrl.u32 %v1807, 16
      %v2862 = vrot.slane %v2860, 4
      %v2863 = vor.u32 %v2862, %v2858
      %v2864 = vrot.slane %v2863, 4
      %v2866 = vshll.u32 %v1808, 16
      %v2868 = vrot.slane %v2866, 5
      %v2869 = vsel %vm308, %v2864, %v2868
      %v2870 = vshrl.u32 %v1808, 16
      %v2872 = vrot.slane %v2870, 4
      %v2873 = vor.u32 %v2872, %v2868
      %v2874 = vrot.slane %v2873, 4
      %v2876 = vshll.u32 %v1809, 16
      %v2878 = vrot.slane %v2876, 5
      %v2879 = vsel %vm308, %v2874, %v2878
      %v2880 = vshrl.u32 %v1809, 16
      %v2882 = vrot.slane %v2880, 4
      %v2883 = vor.u32 %v2882, %v2878
      %v2884 = vrot.slane %v2883, 4
      %v2886 = vshll.u32 %v1868, 16
      %v2888 = vrot.slane %v2886, 5
      %v2889 = vsel %vm308, %v2884, %v2888
      %v2891 = vshrl.u32 %v1810, 16
      %v2893 = vrot.slane %v2891, 4
      %v2894 = vshll.u32 %v1810, 16
      %v2896 = vrot.slane %v2894, 5
      %v2897 = vor.u32 %v2893, %v2896
      %v2898 = vrot.slane %v2897, 4
      %v2900 = vshll.u32 %v1811, 16
      %v2902 = vrot.slane %v2900, 5
      %v2903 = vsel %vm308, %v2898, %v2902
      %v2904 = vshrl.u32 %v1811, 16
      %v2906 = vrot.slane %v2904, 4
      %v2907 = vor.u32 %v2906, %v2902
      %v2908 = vrot.slane %v2907, 4
      %v2910 = vshll.u32 %v1812, 16
      %v2912 = vrot.slane %v2910, 5
      %v2913 = vsel %vm308, %v2908, %v2912
      %v2914 = vshrl.u32 %v1812, 16
      %v2916 = vrot.slane %v2914, 4
      %v2917 = vor.u32 %v2916, %v2912
      %v2918 = vrot.slane %v2917, 4
      %v2920 = vshll.u32 %v1813, 16
      %v2922 = vrot.slane %v2920, 5
      %v2923 = vsel %vm308, %v2918, %v2922
      %v2924 = vshrl.u32 %v1813, 16
      %v2926 = vrot.slane %v2924, 4
      %v2927 = vor.u32 %v2926, %v2922
      %v2928 = vrot.slane %v2927, 4
      %v2930 = vshll.u32 %v1869, 16
      %v2932 = vrot.slane %v2930, 5
      %v2933 = vsel %vm308, %v2928, %v2932
      %v2935 = vshrl.u32 %v1814, 16
      %v2937 = vrot.slane %v2935, 4
      %v2938 = vshll.u32 %v1814, 16
      %v2940 = vrot.slane %v2938, 5
      %v2941 = vor.u32 %v2937, %v2940
      %v2942 = vrot.slane %v2941, 4
      %v2944 = vshll.u32 %v1815, 16
      %v2946 = vrot.slane %v2944, 5
      %v2947 = vsel %vm308, %v2942, %v2946
      %v2948 = vshrl.u32 %v1815, 16
      %v2950 = vrot.slane %v2948, 4
      %v2951 = vor.u32 %v2950, %v2946
      %v2952 = vrot.slane %v2951, 4
      %v2954 = vshll.u32 %v1816, 16
      %v2956 = vrot.slane %v2954, 5
      %v2957 = vsel %vm308, %v2952, %v2956
      %v2958 = vshrl.u32 %v1816, 16
      %v2960 = vrot.slane %v2958, 4
      %v2961 = vor.u32 %v2960, %v2956
      %v2962 = vrot.slane %v2961, 4
      %v2964 = vshll.u32 %v1817, 16
      %v2966 = vrot.slane %v2964, 5
      %v2967 = vsel %vm308, %v2962, %v2966
      %v2968 = vshrl.u32 %v1817, 16
      %v2970 = vrot.slane %v2968, 4
      %v2971 = vor.u32 %v2970, %v2966
      %v2972 = vrot.slane %v2971, 4
      %v2974 = vshll.u32 %v1870, 16
      %v2976 = vrot.slane %v2974, 5
      %v2977 = vsel %vm308, %v2972, %v2976
      %v2979 = vshrl.u32 %v1818, 16
      %v2981 = vrot.slane %v2979, 4
      %v2982 = vshll.u32 %v1818, 16
      %v2984 = vrot.slane %v2982, 5
      %v2985 = vor.u32 %v2981, %v2984
      %v2986 = vrot.slane %v2985, 4
      %v2988 = vshll.u32 %v1819, 16
      %v2990 = vrot.slane %v2988, 5
      %v2991 = vsel %vm308, %v2986, %v2990
      %v2992 = vshrl.u32 %v1819, 16
      %v2994 = vrot.slane %v2992, 4
      %v2995 = vor.u32 %v2994, %v2990
      %v2996 = vrot.slane %v2995, 4
      %v2998 = vshll.u32 %v1820, 16
      %v3000 = vrot.slane %v2998, 5
      %v3001 = vsel %vm308, %v2996, %v3000
      %v3002 = vshrl.u32 %v1820, 16
      %v3004 = vrot.slane %v3002, 4
      %v3005 = vor.u32 %v3004, %v3000
      %v3006 = vrot.slane %v3005, 4
      %v3008 = vshll.u32 %v1821, 16
      %v3010 = vrot.slane %v3008, 5
      %v3011 = vsel %vm308, %v3006, %v3010
      %v3012 = vshrl.u32 %v1821, 16
      %v3014 = vrot.slane %v3012, 4
      %v3015 = vor.u32 %v3014, %v3010
      %v3016 = vrot.slane %v3015, 4
      %v3018 = vshll.u32 %v1871, 16
      %v3020 = vrot.slane %v3018, 5
      %v3021 = vsel %vm308, %v3016, %v3020
      %v3023 = vshrl.u32 %v1822, 16
      %v3025 = vrot.slane %v3023, 4
      %v3026 = vshll.u32 %v1822, 16
      %v3028 = vrot.slane %v3026, 5
      %v3029 = vor.u32 %v3025, %v3028
      %v3030 = vrot.slane %v3029, 4
      %v3032 = vshll.u32 %v1823, 16
      %v3034 = vrot.slane %v3032, 5
      %v3035 = vsel %vm308, %v3030, %v3034
      %v3036 = vshrl.u32 %v1823, 16
      %v3038 = vrot.slane %v3036, 4
      %v3039 = vor.u32 %v3038, %v3034
      %v3040 = vrot.slane %v3039, 4
      %v3042 = vshll.u32 %v1824, 16
      %v3044 = vrot.slane %v3042, 5
      %v3045 = vsel %vm308, %v3040, %v3044
      %v3046 = vshrl.u32 %v1824, 16
      %v3048 = vrot.slane %v3046, 4
      %v3049 = vor.u32 %v3048, %v3044
      %v3050 = vrot.slane %v3049, 4
      %v3052 = vshll.u32 %v1825, 16
      %v3054 = vrot.slane %v3052, 5
      %v3055 = vsel %vm308, %v3050, %v3054
      %v3056 = vshrl.u32 %v1825, 16
      %v3058 = vrot.slane %v3056, 4
      %v3059 = vor.u32 %v3058, %v3054
      %v3060 = vrot.slane %v3059, 4
      %v3062 = vshll.u32 %v1872, 16
      %v3064 = vrot.slane %v3062, 5
      %v3065 = vsel %vm308, %v3060, %v3064
      %v3067 = vshrl.u32 %v1826, 16
      %v3069 = vrot.slane %v3067, 4
      %v3070 = vshll.u32 %v1826, 16
      %v3072 = vrot.slane %v3070, 5
      %v3073 = vor.u32 %v3069, %v3072
      %v3074 = vrot.slane %v3073, 4
      %v3076 = vshll.u32 %v1827, 16
      %v3078 = vrot.slane %v3076, 5
      %v3079 = vsel %vm308, %v3074, %v3078
      %v3080 = vshrl.u32 %v1827, 16
      %v3082 = vrot.slane %v3080, 4
      %v3083 = vor.u32 %v3082, %v3078
      %v3084 = vrot.slane %v3083, 4
      %v3086 = vshll.u32 %v1828, 16
      %v3088 = vrot.slane %v3086, 5
      %v3089 = vsel %vm308, %v3084, %v3088
      %v3090 = vshrl.u32 %v1828, 16
      %v3092 = vrot.slane %v3090, 4
      %v3093 = vor.u32 %v3092, %v3088
      %v3094 = vrot.slane %v3093, 4
      %v3096 = vshll.u32 %v1829, 16
      %v3098 = vrot.slane %v3096, 5
      %v3099 = vsel %vm308, %v3094, %v3098
      %v3100 = vshrl.u32 %v1829, 16
      %v3102 = vrot.slane %v3100, 4
      %v3103 = vor.u32 %v3102, %v3098
      %v3104 = vrot.slane %v3103, 4
      %v3106 = vshll.u32 %v1873, 16
      %v3108 = vrot.slane %v3106, 5
      %v3109 = vsel %vm308, %v3104, %v3108
      %v3111 = vshrl.u32 %v1830, 16
      %v3113 = vrot.slane %v3111, 4
      %v3114 = vshll.u32 %v1830, 16
      %v3116 = vrot.slane %v3114, 5
      %v3117 = vor.u32 %v3113, %v3116
      %v3118 = vrot.slane %v3117, 4
      %v3120 = vshll.u32 %v1831, 16
      %v3122 = vrot.slane %v3120, 5
      %v3123 = vsel %vm308, %v3118, %v3122
      %v3124 = vshrl.u32 %v1831, 16
      %v3126 = vrot.slane %v3124, 4
      %v3127 = vor.u32 %v3126, %v3122
      %v3128 = vrot.slane %v3127, 4
      %v3130 = vshll.u32 %v1832, 16
      %v3132 = vrot.slane %v3130, 5
      %v3133 = vsel %vm308, %v3128, %v3132
      %v3134 = vshrl.u32 %v1832, 16
      %v3136 = vrot.slane %v3134, 4
      %v3137 = vor.u32 %v3136, %v3132
      %v3138 = vrot.slane %v3137, 4
      %v3140 = vshll.u32 %v1833, 16
      %v3142 = vrot.slane %v3140, 5
      %v3143 = vsel %vm308, %v3138, %v3142
      %v3144 = vshrl.u32 %v1833, 16
      %v3146 = vrot.slane %v3144, 4
      %v3147 = vor.u32 %v3146, %v3142
      %v3148 = vrot.slane %v3147, 4
      %v3150 = vshll.u32 %v1874, 16
      %v3152 = vrot.slane %v3150, 5
      %v3153 = vsel %vm308, %v3148, %v3152
      %v3155 = vshrl.u32 %v1834, 16
      %v3157 = vrot.slane %v3155, 4
      %v3158 = vshll.u32 %v1834, 16
      %v3160 = vrot.slane %v3158, 5
      %v3161 = vor.u32 %v3157, %v3160
      %v3162 = vrot.slane %v3161, 4
      %v3164 = vshll.u32 %v1835, 16
      %v3166 = vrot.slane %v3164, 5
      %v3167 = vsel %vm308, %v3162, %v3166
      %v3168 = vshrl.u32 %v1835, 16
      %v3170 = vrot.slane %v3168, 4
      %v3171 = vor.u32 %v3170, %v3166
      %v3172 = vrot.slane %v3171, 4
      %v3174 = vshll.u32 %v1836, 16
      %v3176 = vrot.slane %v3174, 5
      %v3177 = vsel %vm308, %v3172, %v3176
      %v3178 = vshrl.u32 %v1836, 16
      %v3180 = vrot.slane %v3178, 4
      %v3181 = vor.u32 %v3180, %v3176
      %v3182 = vrot.slane %v3181, 4
      %v3184 = vshll.u32 %v1837, 16
      %v3186 = vrot.slane %v3184, 5
      %v3187 = vsel %vm308, %v3182, %v3186
      %v3188 = vshrl.u32 %v1837, 16
      %v3190 = vrot.slane %v3188, 4
      %v3191 = vor.u32 %v3190, %v3186
      %v3192 = vrot.slane %v3191, 4
      %v3194 = vshll.u32 %v1875, 16
      %v3196 = vrot.slane %v3194, 5
      %v3197 = vsel %vm308, %v3192, %v3196
      %v3199 = vshrl.u32 %v1838, 16
      %v3201 = vrot.slane %v3199, 4
      %v3202 = vshll.u32 %v1838, 16
      %v3204 = vrot.slane %v3202, 5
      %v3205 = vor.u32 %v3201, %v3204
      %v3206 = vrot.slane %v3205, 4
      %v3208 = vshll.u32 %v1839, 16
      %v3210 = vrot.slane %v3208, 5
      %v3211 = vsel %vm308, %v3206, %v3210
      %v3212 = vshrl.u32 %v1839, 16
      %v3214 = vrot.slane %v3212, 4
      %v3215 = vor.u32 %v3214, %v3210
      %v3216 = vrot.slane %v3215, 4
      %v3218 = vshll.u32 %v1840, 16
      %v3220 = vrot.slane %v3218, 5
      %v3221 = vsel %vm308, %v3216, %v3220
      %v3222 = vshrl.u32 %v1840, 16
      %v3224 = vrot.slane %v3222, 4
      %v3225 = vor.u32 %v3224, %v3220
      %v3226 = vrot.slane %v3225, 4
      %v3228 = vshll.u32 %v1841, 16
      %v3230 = vrot.slane %v3228, 5
      %v3231 = vsel %vm308, %v3226, %v3230
      %v3232 = vshrl.u32 %v1841, 16
      %v3234 = vrot.slane %v3232, 4
      %v3235 = vor.u32 %v3234, %v3230
      %v3236 = vrot.slane %v3235, 4
      %v3238 = vshll.u32 %v1876, 16
      %v3240 = vrot.slane %v3238, 5
      %v3241 = vsel %vm308, %v3236, %v3240
      %v3243 = vshrl.u32 %v1842, 16
      %v3245 = vrot.slane %v3243, 4
      %v3246 = vshll.u32 %v1842, 16
      %v3248 = vrot.slane %v3246, 5
      %v3249 = vor.u32 %v3245, %v3248
      %v3250 = vrot.slane %v3249, 4
      %v3252 = vshll.u32 %v1843, 16
      %v3254 = vrot.slane %v3252, 5
      %v3255 = vsel %vm308, %v3250, %v3254
      %v3256 = vshrl.u32 %v1843, 16
      %v3258 = vrot.slane %v3256, 4
      %v3259 = vor.u32 %v3258, %v3254
      %v3260 = vrot.slane %v3259, 4
      %v3262 = vshll.u32 %v1844, 16
      %v3264 = vrot.slane %v3262, 5
      %v3265 = vsel %vm308, %v3260, %v3264
      %v3266 = vshrl.u32 %v1844, 16
      %v3268 = vrot.slane %v3266, 4
      %v3269 = vor.u32 %v3268, %v3264
      %v3270 = vrot.slane %v3269, 4
      %v3272 = vshll.u32 %v1845, 16
      %v3274 = vrot.slane %v3272, 5
      %v3275 = vsel %vm308, %v3270, %v3274
      %v3276 = vshrl.u32 %v1845, 16
      %v3278 = vrot.slane %v3276, 4
      %v3279 = vor.u32 %v3278, %v3274
      %v3280 = vrot.slane %v3279, 4
      %v3282 = vshll.u32 %v1877, 16
      %v3284 = vrot.slane %v3282, 5
      %v3285 = vsel %vm308, %v3280, %v3284
      %v3414 = vunpack.c.l.b16 %v146
      %v3415 = vunpack.c.l.b16 %v147
      %v3416 = vunpack.c.l.b16 %v148
      %v3417 = vunpack.c.l.b16 %v149
      %v3418 = vunpack.c.l.b16 %v150
      %v3419 = vunpack.c.l.b16 %v151
      %v3420 = vunpack.c.l.b16 %v152
      %v3421 = vunpack.c.l.b16 %v153
      %v3422 = vunpack.c.l.b16 %v154
      %v3423 = vunpack.c.l.b16 %v155
      %v3424 = vunpack.c.l.b16 %v156
      %v3425 = vunpack.c.l.b16 %v157
      %v3426 = vunpack.c.l.b16 %v158
      %v3427 = vunpack.c.l.b16 %v159
      %v3428 = vunpack.c.l.b16 %v160
      %v3429 = vunpack.c.l.b16 %v161
      %v3430 = vunpack.c.l.b16 %v162
      %v3431 = vunpack.c.l.b16 %v163
      %v3432 = vunpack.c.l.b16 %v164
      %v3433 = vunpack.c.l.b16 %v165
      %v3434 = vunpack.c.l.b16 %v166
      %v3435 = vunpack.c.l.b16 %v167
      %v3436 = vunpack.c.l.b16 %v168
      %v3437 = vunpack.c.l.b16 %v169
      %v3438 = vunpack.c.l.b16 %v170
      %v3439 = vunpack.c.l.b16 %v171
      %v3440 = vunpack.c.l.b16 %v172
      %v3441 = vunpack.c.l.b16 %v173
      %v3442 = vunpack.c.l.b16 %v174
      %v3443 = vunpack.c.l.b16 %v175
      %v3444 = vunpack.c.l.b16 %v176
      %v3445 = vunpack.c.l.b16 %v177
      %v3446 = vunpack.c.l.b16 %v178
      %v3447 = vunpack.c.l.b16 %v179
      %v3448 = vunpack.c.l.b16 %v180
      %v3449 = vunpack.c.l.b16 %v181
      %v3450 = vunpack.c.l.b16 %v182
      %v3451 = vunpack.c.l.b16 %v183
      %v3452 = vunpack.c.l.b16 %v184
      %v3453 = vunpack.c.l.b16 %v185
      %v3454 = vunpack.c.l.b16 %v186
      %v3455 = vunpack.c.l.b16 %v187
      %v3456 = vunpack.c.l.b16 %v188
      %v3457 = vunpack.c.l.b16 %v189
      %v3458 = vunpack.c.l.b16 %v190
      %v3459 = vunpack.c.l.b16 %v191
      %v3460 = vunpack.c.l.b16 %v192
      %v3461 = vunpack.c.l.b16 %v193
      %v3462 = vunpack.c.l.b16 %v194
      %v3463 = vunpack.c.l.b16 %v195
      %v3464 = vunpack.c.l.b16 %v196
      %v3465 = vunpack.c.l.b16 %v197
      %v3466 = vunpack.c.l.b16 %v198
      %v3467 = vunpack.c.l.b16 %v199
      %v3468 = vunpack.c.l.b16 %v200
      %v3469 = vunpack.c.l.b16 %v201
      %v3470 = vunpack.c.l.b16 %v202
      %v3471 = vunpack.c.l.b16 %v203
      %v3472 = vunpack.c.l.b16 %v204
      %v3473 = vunpack.c.l.b16 %v205
      %v3474 = vunpack.c.l.b16 %v206
      %v3475 = vunpack.c.l.b16 %v207
      %v3476 = vunpack.c.l.b16 %v208
      %v3477 = vunpack.c.l.b16 %v209
      %v3478 = vunpack.c.l.b16 %v210
      %v3479 = vunpack.c.l.b16 %v211
      %v3480 = vunpack.c.l.b16 %v212
      %v3481 = vunpack.c.l.b16 %v213
      %v3482 = vunpack.c.l.b16 %v214
      %v3483 = vunpack.c.l.b16 %v215
      %v3484 = vunpack.c.l.b16 %v216
      %v3485 = vunpack.c.l.b16 %v217
      %v3486 = vunpack.c.l.b16 %v218
      %v3487 = vunpack.c.l.b16 %v219
      %v3488 = vunpack.c.l.b16 %v220
      %v3489 = vunpack.c.l.b16 %v221
      %v3490 = vunpack.c.l.b16 %v222
      %v3491 = vunpack.c.l.b16 %v223
      %v3492 = vunpack.c.l.b16 %v224
      %v3493 = vunpack.c.l.b16 %v225
      %v3494 = vunpack.c.l.b16 %v226
      %v3495 = vunpack.c.l.b16 %v227
      %v3496 = vunpack.c.l.b16 %v228
      %v3497 = vunpack.c.l.b16 %v229
      %v3498 = vunpack.c.l.b16 %v230
      %v3499 = vunpack.c.l.b16 %v231
      %v3500 = vunpack.c.l.b16 %v232
      %v3501 = vunpack.c.l.b16 %v233
      %v3502 = vunpack.c.l.b16 %v234
      %v3503 = vunpack.c.l.b16 %v235
      %v3504 = vunpack.c.l.b16 %v236
      %v3505 = vunpack.c.l.b16 %v237
      %v3506 = vunpack.c.l.b16 %v238
      %v3507 = vunpack.c.l.b16 %v239
      %v3508 = vunpack.c.l.b16 %v240
      %v3509 = vunpack.c.l.b16 %v241
      %v3510 = vunpack.c.l.b16 %v242
      %v3511 = vunpack.c.l.b16 %v243
      %v3512 = vunpack.c.l.b16 %v244
      %v3513 = vunpack.c.l.b16 %v245
      %v3514 = vunpack.c.l.b16 %v246
      %v3515 = vunpack.c.l.b16 %v247
      %v3516 = vunpack.c.l.b16 %v248
      %v3517 = vunpack.c.l.b16 %v249
      %v3518 = vunpack.c.l.b16 %v250
      %v3519 = vunpack.c.l.b16 %v251
      %v3520 = vunpack.c.l.b16 %v252
      %v3521 = vunpack.c.l.b16 %v253
      %v3522 = vunpack.c.l.b16 %v254
      %v3523 = vunpack.c.l.b16 %v255
      %v3524 = vunpack.c.l.b16 %v256
      %v3525 = vunpack.c.l.b16 %v257
      %v3526 = vunpack.c.l.b16 %v258
      %v3527 = vunpack.c.l.b16 %v259
      %v3528 = vunpack.c.l.b16 %v260
      %v3529 = vunpack.c.l.b16 %v261
      %v3530 = vunpack.c.l.b16 %v262
      %v3531 = vunpack.c.l.b16 %v263
      %v3532 = vunpack.c.l.b16 %v264
      %v3533 = vunpack.c.l.b16 %v265
      %v3534 = vunpack.c.l.b16 %v266
      %v3535 = vunpack.c.l.b16 %v267
      %v3536 = vunpack.c.l.b16 %v268
      %v3537 = vunpack.c.l.b16 %v269
      %v3538 = vunpack.c.l.b16 %v270
      %v3539 = vunpack.c.l.b16 %v271
      %v3540 = vunpack.c.l.b16 %v272
      %v3541 = vunpack.c.l.b16 %v273
      %v3542 = vpack.c.b16 %v3415, %v3414
      %v3543 = vpack.c.b16 %v3417, %v3416
      %v3544 = vpack.c.b16 %v3419, %v3418
      %v3545 = vpack.c.b16 %v3421, %v3420
      %v3546 = vpack.c.b16 %v3423, %v3422
      %v3547 = vpack.c.b16 %v3425, %v3424
      %v3548 = vpack.c.b16 %v3427, %v3426
      %v3549 = vpack.c.b16 %v3429, %v3428
      %v3550 = vpack.c.b16 %v3431, %v3430
      %v3551 = vpack.c.b16 %v3433, %v3432
      %v3552 = vpack.c.b16 %v3435, %v3434
      %v3553 = vpack.c.b16 %v3437, %v3436
      %v3554 = vpack.c.b16 %v3439, %v3438
      %v3555 = vpack.c.b16 %v3441, %v3440
      %v3556 = vpack.c.b16 %v3443, %v3442
      %v3557 = vpack.c.b16 %v3445, %v3444
      %v3558 = vpack.c.b16 %v3447, %v3446
      %v3559 = vpack.c.b16 %v3449, %v3448
      %v3560 = vpack.c.b16 %v3451, %v3450
      %v3561 = vpack.c.b16 %v3453, %v3452
      %v3562 = vpack.c.b16 %v3455, %v3454
      %v3563 = vpack.c.b16 %v3457, %v3456
      %v3564 = vpack.c.b16 %v3459, %v3458
      %v3565 = vpack.c.b16 %v3461, %v3460
      %v3566 = vpack.c.b16 %v3463, %v3462
      %v3567 = vpack.c.b16 %v3465, %v3464
      %v3568 = vpack.c.b16 %v3467, %v3466
      %v3569 = vpack.c.b16 %v3469, %v3468
      %v3570 = vpack.c.b16 %v3471, %v3470
      %v3571 = vpack.c.b16 %v3473, %v3472
      %v3572 = vpack.c.b16 %v3475, %v3474
      %v3573 = vpack.c.b16 %v3477, %v3476
      %v3574 = vpack.c.b16 %v3479, %v3478
      %v3575 = vpack.c.b16 %v3481, %v3480
      %v3576 = vpack.c.b16 %v3483, %v3482
      %v3577 = vpack.c.b16 %v3485, %v3484
      %v3578 = vpack.c.b16 %v3487, %v3486
      %v3579 = vpack.c.b16 %v3489, %v3488
      %v3580 = vpack.c.b16 %v3491, %v3490
      %v3581 = vpack.c.b16 %v3493, %v3492
      %v3582 = vpack.c.b16 %v3495, %v3494
      %v3583 = vpack.c.b16 %v3497, %v3496
      %v3584 = vpack.c.b16 %v3499, %v3498
      %v3585 = vpack.c.b16 %v3501, %v3500
      %v3586 = vpack.c.b16 %v3503, %v3502
      %v3587 = vpack.c.b16 %v3505, %v3504
      %v3588 = vpack.c.b16 %v3507, %v3506
      %v3589 = vpack.c.b16 %v3509, %v3508
      %v3590 = vpack.c.b16 %v3511, %v3510
      %v3591 = vpack.c.b16 %v3513, %v3512
      %v3592 = vpack.c.b16 %v3515, %v3514
      %v3593 = vpack.c.b16 %v3517, %v3516
      %v3594 = vpack.c.b16 %v3519, %v3518
      %v3595 = vpack.c.b16 %v3521, %v3520
      %v3596 = vpack.c.b16 %v3523, %v3522
      %v3597 = vpack.c.b16 %v3525, %v3524
      %v3598 = vpack.c.b16 %v3527, %v3526
      %v3599 = vpack.c.b16 %v3529, %v3528
      %v3600 = vpack.c.b16 %v3531, %v3530
      %v3601 = vpack.c.b16 %v3533, %v3532
      %v3602 = vpack.c.b16 %v3535, %v3534
      %v3603 = vpack.c.b16 %v3537, %v3536
      %v3604 = vpack.c.b16 %v3539, %v3538
      %v3605 = vpack.c.b16 %v3541, %v3540
      %v3606 = vunpack.c.l.b16 %v322
      %v3607 = vunpack.c.l.b16 %v332
      %v3608 = vunpack.c.l.b16 %v342
      %v3609 = vunpack.c.l.b16 %v352
      %v3610 = vunpack.c.l.b16 %v366
      %v3611 = vunpack.c.l.b16 %v376
      %v3612 = vunpack.c.l.b16 %v386
      %v3613 = vunpack.c.l.b16 %v396
      %v3614 = vunpack.c.l.b16 %v410
      %v3615 = vunpack.c.l.b16 %v420
      %v3616 = vunpack.c.l.b16 %v430
      %v3617 = vunpack.c.l.b16 %v440
      %v3618 = vunpack.c.l.b16 %v454
      %v3619 = vunpack.c.l.b16 %v464
      %v3620 = vunpack.c.l.b16 %v474
      %v3621 = vunpack.c.l.b16 %v484
      %v3622 = vunpack.c.l.b16 %v498
      %v3623 = vunpack.c.l.b16 %v508
      %v3624 = vunpack.c.l.b16 %v518
      %v3625 = vunpack.c.l.b16 %v528
      %v3626 = vunpack.c.l.b16 %v542
      %v3627 = vunpack.c.l.b16 %v552
      %v3628 = vunpack.c.l.b16 %v562
      %v3629 = vunpack.c.l.b16 %v572
      %v3630 = vunpack.c.l.b16 %v586
      %v3631 = vunpack.c.l.b16 %v596
      %v3632 = vunpack.c.l.b16 %v606
      %v3633 = vunpack.c.l.b16 %v616
      %v3634 = vunpack.c.l.b16 %v630
      %v3635 = vunpack.c.l.b16 %v640
      %v3636 = vunpack.c.l.b16 %v650
      %v3637 = vunpack.c.l.b16 %v660
      %v3638 = vunpack.c.l.b16 %v674
      %v3639 = vunpack.c.l.b16 %v684
      %v3640 = vunpack.c.l.b16 %v694
      %v3641 = vunpack.c.l.b16 %v704
      %v3642 = vunpack.c.l.b16 %v718
      %v3643 = vunpack.c.l.b16 %v728
      %v3644 = vunpack.c.l.b16 %v738
      %v3645 = vunpack.c.l.b16 %v748
      %v3646 = vunpack.c.l.b16 %v762
      %v3647 = vunpack.c.l.b16 %v772
      %v3648 = vunpack.c.l.b16 %v782
      %v3649 = vunpack.c.l.b16 %v792
      %v3650 = vunpack.c.l.b16 %v806
      %v3651 = vunpack.c.l.b16 %v816
      %v3652 = vunpack.c.l.b16 %v826
      %v3653 = vunpack.c.l.b16 %v836
      %v3654 = vunpack.c.l.b16 %v850
      %v3655 = vunpack.c.l.b16 %v860
      %v3656 = vunpack.c.l.b16 %v870
      %v3657 = vunpack.c.l.b16 %v880
      %v3658 = vunpack.c.l.b16 %v894
      %v3659 = vunpack.c.l.b16 %v904
      %v3660 = vunpack.c.l.b16 %v914
      %v3661 = vunpack.c.l.b16 %v924
      %v3662 = vunpack.c.l.b16 %v938
      %v3663 = vunpack.c.l.b16 %v948
      %v3664 = vunpack.c.l.b16 %v958
      %v3665 = vunpack.c.l.b16 %v968
      %v3666 = vunpack.c.l.b16 %v982
      %v3667 = vunpack.c.l.b16 %v992
      %v3668 = vunpack.c.l.b16 %v1002
      %v3669 = vunpack.c.l.b16 %v1012
      %v3670 = vunpack.c.l.b16 %v1026
      %v3671 = vunpack.c.l.b16 %v1036
      %v3672 = vunpack.c.l.b16 %v1046
      %v3673 = vunpack.c.l.b16 %v1056
      %v3674 = vunpack.c.l.b16 %v1070
      %v3675 = vunpack.c.l.b16 %v1080
      %v3676 = vunpack.c.l.b16 %v1090
      %v3677 = vunpack.c.l.b16 %v1100
      %v3678 = vunpack.c.l.b16 %v1114
      %v3679 = vunpack.c.l.b16 %v1124
      %v3680 = vunpack.c.l.b16 %v1134
      %v3681 = vunpack.c.l.b16 %v1144
      %v3682 = vunpack.c.l.b16 %v1158
      %v3683 = vunpack.c.l.b16 %v1168
      %v3684 = vunpack.c.l.b16 %v1178
      %v3685 = vunpack.c.l.b16 %v1188
      %v3686 = vunpack.c.l.b16 %v1202
      %v3687 = vunpack.c.l.b16 %v1212
      %v3688 = vunpack.c.l.b16 %v1222
      %v3689 = vunpack.c.l.b16 %v1232
      %v3690 = vunpack.c.l.b16 %v1246
      %v3691 = vunpack.c.l.b16 %v1256
      %v3692 = vunpack.c.l.b16 %v1266
      %v3693 = vunpack.c.l.b16 %v1276
      %v3694 = vunpack.c.l.b16 %v1290
      %v3695 = vunpack.c.l.b16 %v1300
      %v3696 = vunpack.c.l.b16 %v1310
      %v3697 = vunpack.c.l.b16 %v1320
      %v3698 = vunpack.c.l.b16 %v1334
      %v3699 = vunpack.c.l.b16 %v1344
      %v3700 = vunpack.c.l.b16 %v1354
      %v3701 = vunpack.c.l.b16 %v1364
      %v3702 = vunpack.c.l.b16 %v1378
      %v3703 = vunpack.c.l.b16 %v1388
      %v3704 = vunpack.c.l.b16 %v1398
      %v3705 = vunpack.c.l.b16 %v1408
      %v3706 = vunpack.c.l.b16 %v1422
      %v3707 = vunpack.c.l.b16 %v1432
      %v3708 = vunpack.c.l.b16 %v1442
      %v3709 = vunpack.c.l.b16 %v1452
      %v3710 = vunpack.c.l.b16 %v1466
      %v3711 = vunpack.c.l.b16 %v1476
      %v3712 = vunpack.c.l.b16 %v1486
      %v3713 = vunpack.c.l.b16 %v1496
      %v3714 = vunpack.c.l.b16 %v1510
      %v3715 = vunpack.c.l.b16 %v1520
      %v3716 = vunpack.c.l.b16 %v1530
      %v3717 = vunpack.c.l.b16 %v1540
      %v3718 = vunpack.c.l.b16 %v1554
      %v3719 = vunpack.c.l.b16 %v1564
      %v3720 = vunpack.c.l.b16 %v1574
      %v3721 = vunpack.c.l.b16 %v1584
      %v3722 = vunpack.c.l.b16 %v1598
      %v3723 = vunpack.c.l.b16 %v1608
      %v3724 = vunpack.c.l.b16 %v1618
      %v3725 = vunpack.c.l.b16 %v1628
      %v3726 = vunpack.c.l.b16 %v1642
      %v3727 = vunpack.c.l.b16 %v1652
      %v3728 = vunpack.c.l.b16 %v1662
      %v3729 = vunpack.c.l.b16 %v1672
      %v3730 = vunpack.c.l.b16 %v1686
      %v3731 = vunpack.c.l.b16 %v1696
      %v3732 = vunpack.c.l.b16 %v1706
      %v3733 = vunpack.c.l.b16 %v1716
      %v3734 = vpack.c.b16 %v3607, %v3606
      %v3735 = vpack.c.b16 %v3609, %v3608
      %v3736 = vpack.c.b16 %v3611, %v3610
      %v3737 = vpack.c.b16 %v3613, %v3612
      %v3738 = vpack.c.b16 %v3615, %v3614
      %v3739 = vpack.c.b16 %v3617, %v3616
      %v3740 = vpack.c.b16 %v3619, %v3618
      %v3741 = vpack.c.b16 %v3621, %v3620
      %v3742 = vpack.c.b16 %v3623, %v3622
      %v3743 = vpack.c.b16 %v3625, %v3624
      %v3744 = vpack.c.b16 %v3627, %v3626
      %v3745 = vpack.c.b16 %v3629, %v3628
      %v3746 = vpack.c.b16 %v3631, %v3630
      %v3747 = vpack.c.b16 %v3633, %v3632
      %v3748 = vpack.c.b16 %v3635, %v3634
      %v3749 = vpack.c.b16 %v3637, %v3636
      %v3750 = vpack.c.b16 %v3639, %v3638
      %v3751 = vpack.c.b16 %v3641, %v3640
      %v3752 = vpack.c.b16 %v3643, %v3642
      %v3753 = vpack.c.b16 %v3645, %v3644
      %v3754 = vpack.c.b16 %v3647, %v3646
      %v3755 = vpack.c.b16 %v3649, %v3648
      %v3756 = vpack.c.b16 %v3651, %v3650
      %v3757 = vpack.c.b16 %v3653, %v3652
      %v3758 = vpack.c.b16 %v3655, %v3654
      %v3759 = vpack.c.b16 %v3657, %v3656
      %v3760 = vpack.c.b16 %v3659, %v3658
      %v3761 = vpack.c.b16 %v3661, %v3660
      %v3762 = vpack.c.b16 %v3663, %v3662
      %v3763 = vpack.c.b16 %v3665, %v3664
      %v3764 = vpack.c.b16 %v3667, %v3666
      %v3765 = vpack.c.b16 %v3669, %v3668
      %v3766 = vpack.c.b16 %v3671, %v3670
      %v3767 = vpack.c.b16 %v3673, %v3672
      %v3768 = vpack.c.b16 %v3675, %v3674
      %v3769 = vpack.c.b16 %v3677, %v3676
      %v3770 = vpack.c.b16 %v3679, %v3678
      %v3771 = vpack.c.b16 %v3681, %v3680
      %v3772 = vpack.c.b16 %v3683, %v3682
      %v3773 = vpack.c.b16 %v3685, %v3684
      %v3774 = vpack.c.b16 %v3687, %v3686
      %v3775 = vpack.c.b16 %v3689, %v3688
      %v3776 = vpack.c.b16 %v3691, %v3690
      %v3777 = vpack.c.b16 %v3693, %v3692
      %v3778 = vpack.c.b16 %v3695, %v3694
      %v3779 = vpack.c.b16 %v3697, %v3696
      %v3780 = vpack.c.b16 %v3699, %v3698
      %v3781 = vpack.c.b16 %v3701, %v3700
      %v3782 = vpack.c.b16 %v3703, %v3702
      %v3783 = vpack.c.b16 %v3705, %v3704
      %v3784 = vpack.c.b16 %v3707, %v3706
      %v3785 = vpack.c.b16 %v3709, %v3708
      %v3786 = vpack.c.b16 %v3711, %v3710
      %v3787 = vpack.c.b16 %v3713, %v3712
      %v3788 = vpack.c.b16 %v3715, %v3714
      %v3789 = vpack.c.b16 %v3717, %v3716
      %v3790 = vpack.c.b16 %v3719, %v3718
      %v3791 = vpack.c.b16 %v3721, %v3720
      %v3792 = vpack.c.b16 %v3723, %v3722
      %v3793 = vpack.c.b16 %v3725, %v3724
      %v3794 = vpack.c.b16 %v3727, %v3726
      %v3795 = vpack.c.b16 %v3729, %v3728
      %v3796 = vpack.c.b16 %v3731, %v3730
      %v3797 = vpack.c.b16 %v3733, %v3732
      %3798 = vrot.lane.b32.xlu0 %v3734, 32
      %v3799 = vpop.permute.xlu0 %3798
      %3800 = vrot.lane.b32.xlu0 %v3735, 32
      %v3801 = vpop.permute.xlu0 %3800
      %3802 = vrot.lane.b32.xlu0 %v3736, 32
      %v3803 = vpop.permute.xlu0 %3802
      %3804 = vrot.lane.b32.xlu0 %v3737, 32
      %v3805 = vpop.permute.xlu0 %3804
      %3806 = vrot.lane.b32.xlu0 %v3738, 32
      %v3807 = vpop.permute.xlu0 %3806
      %3808 = vrot.lane.b32.xlu0 %v3739, 32
      %v3809 = vpop.permute.xlu0 %3808
      %3810 = vrot.lane.b32.xlu0 %v3740, 32
      %v3811 = vpop.permute.xlu0 %3810
      %3812 = vrot.lane.b32.xlu0 %v3741, 32
      %v3813 = vpop.permute.xlu0 %3812
      %3814 = vrot.lane.b32.xlu0 %v3742, 32
      %v3815 = vpop.permute.xlu0 %3814
      %3816 = vrot.lane.b32.xlu0 %v3743, 32
      %v3817 = vpop.permute.xlu0 %3816
      %3818 = vrot.lane.b32.xlu0 %v3744, 32
      %v3819 = vpop.permute.xlu0 %3818
      %3820 = vrot.lane.b32.xlu0 %v3745, 32
      %v3821 = vpop.permute.xlu0 %3820
      %3822 = vrot.lane.b32.xlu0 %v3746, 32
      %v3823 = vpop.permute.xlu0 %3822
      %3824 = vrot.lane.b32.xlu0 %v3747, 32
      %v3825 = vpop.permute.xlu0 %3824
      %3826 = vrot.lane.b32.xlu0 %v3748, 32
      %v3827 = vpop.permute.xlu0 %3826
      %3828 = vrot.lane.b32.xlu0 %v3749, 32
      %v3829 = vpop.permute.xlu0 %3828
      %3830 = vrot.lane.b32.xlu0 %v3750, 32
      %v3831 = vpop.permute.xlu0 %3830
      %3832 = vrot.lane.b32.xlu0 %v3751, 32
      %v3833 = vpop.permute.xlu0 %3832
      %3834 = vrot.lane.b32.xlu0 %v3752, 32
      %v3835 = vpop.permute.xlu0 %3834
      %3836 = vrot.lane.b32.xlu0 %v3753, 32
      %v3837 = vpop.permute.xlu0 %3836
      %3838 = vrot.lane.b32.xlu0 %v3754, 32
      %v3839 = vpop.permute.xlu0 %3838
      %3840 = vrot.lane.b32.xlu0 %v3755, 32
      %v3841 = vpop.permute.xlu0 %3840
      %3842 = vrot.lane.b32.xlu0 %v3756, 32
      %v3843 = vpop.permute.xlu0 %3842
      %3844 = vrot.lane.b32.xlu0 %v3757, 32
      %v3845 = vpop.permute.xlu0 %3844
      %3846 = vrot.lane.b32.xlu0 %v3758, 32
      %v3847 = vpop.permute.xlu0 %3846
      %3848 = vrot.lane.b32.xlu0 %v3759, 32
      %v3849 = vpop.permute.xlu0 %3848
      %3850 = vrot.lane.b32.xlu0 %v3760, 32
      %v3851 = vpop.permute.xlu0 %3850
      %3852 = vrot.lane.b32.xlu0 %v3761, 32
      %v3853 = vpop.permute.xlu0 %3852
      %3854 = vrot.lane.b32.xlu0 %v3762, 32
      %v3855 = vpop.permute.xlu0 %3854
      %3856 = vrot.lane.b32.xlu0 %v3763, 32
      %v3857 = vpop.permute.xlu0 %3856
      %3858 = vrot.lane.b32.xlu0 %v3764, 32
      %v3859 = vpop.permute.xlu0 %3858
      %3860 = vrot.lane.b32.xlu0 %v3765, 32
      %v3861 = vpop.permute.xlu0 %3860
      %3862 = vrot.lane.b32.xlu0 %v3766, 32
      %v3863 = vpop.permute.xlu0 %3862
      %3864 = vrot.lane.b32.xlu0 %v3767, 32
      %v3865 = vpop.permute.xlu0 %3864
      %3866 = vrot.lane.b32.xlu0 %v3768, 32
      %v3867 = vpop.permute.xlu0 %3866
      %3868 = vrot.lane.b32.xlu0 %v3769, 32
      %v3869 = vpop.permute.xlu0 %3868
      %3870 = vrot.lane.b32.xlu0 %v3770, 32
      %v3871 = vpop.permute.xlu0 %3870
      %3872 = vrot.lane.b32.xlu0 %v3771, 32
      %v3873 = vpop.permute.xlu0 %3872
      %3874 = vrot.lane.b32.xlu0 %v3772, 32
      %v3875 = vpop.permute.xlu0 %3874
      %3876 = vrot.lane.b32.xlu0 %v3773, 32
      %v3877 = vpop.permute.xlu0 %3876
      %3878 = vrot.lane.b32.xlu0 %v3774, 32
      %v3879 = vpop.permute.xlu0 %3878
      %3880 = vrot.lane.b32.xlu0 %v3775, 32
      %v3881 = vpop.permute.xlu0 %3880
      %3882 = vrot.lane.b32.xlu0 %v3776, 32
      %v3883 = vpop.permute.xlu0 %3882
      %3884 = vrot.lane.b32.xlu0 %v3777, 32
      %v3885 = vpop.permute.xlu0 %3884
      %3886 = vrot.lane.b32.xlu0 %v3778, 32
      %v3887 = vpop.permute.xlu0 %3886
      %3888 = vrot.lane.b32.xlu0 %v3779, 32
      %v3889 = vpop.permute.xlu0 %3888
      %3890 = vrot.lane.b32.xlu0 %v3780, 32
      %v3891 = vpop.permute.xlu0 %3890
      %3892 = vrot.lane.b32.xlu0 %v3781, 32
      %v3893 = vpop.permute.xlu0 %3892
      %3894 = vrot.lane.b32.xlu0 %v3782, 32
      %v3895 = vpop.permute.xlu0 %3894
      %3896 = vrot.lane.b32.xlu0 %v3783, 32
      %v3897 = vpop.permute.xlu0 %3896
      %3898 = vrot.lane.b32.xlu0 %v3784, 32
      %v3899 = vpop.permute.xlu0 %3898
      %3900 = vrot.lane.b32.xlu0 %v3785, 32
      %v3901 = vpop.permute.xlu0 %3900
      %3902 = vrot.lane.b32.xlu0 %v3786, 32
      %v3903 = vpop.permute.xlu0 %3902
      %3904 = vrot.lane.b32.xlu0 %v3787, 32
      %v3905 = vpop.permute.xlu0 %3904
      %3906 = vrot.lane.b32.xlu0 %v3788, 32
      %v3907 = vpop.permute.xlu0 %3906
      %3908 = vrot.lane.b32.xlu0 %v3789, 32
      %v3909 = vpop.permute.xlu0 %3908
      %3910 = vrot.lane.b32.xlu0 %v3790, 32
      %v3911 = vpop.permute.xlu0 %3910
      %3912 = vrot.lane.b32.xlu0 %v3791, 32
      %v3913 = vpop.permute.xlu0 %3912
      %3914 = vrot.lane.b32.xlu0 %v3792, 32
      %v3915 = vpop.permute.xlu0 %3914
      %3916 = vrot.lane.b32.xlu0 %v3793, 32
      %v3917 = vpop.permute.xlu0 %3916
      %3918 = vrot.lane.b32.xlu0 %v3794, 32
      %v3919 = vpop.permute.xlu0 %3918
      %3920 = vrot.lane.b32.xlu0 %v3795, 32
      %v3921 = vpop.permute.xlu0 %3920
      %3922 = vrot.lane.b32.xlu0 %v3796, 32
      %v3923 = vpop.permute.xlu0 %3922
      %3924 = vrot.lane.b32.xlu0 %v3797, 32
      %v3925 = vpop.permute.xlu0 %3924
      %v4054 = vunpack.c.l.b16 %v1718
      %v4055 = vunpack.c.l.b16 %v1719
      %v4056 = vunpack.c.l.b16 %v1720
      %v4057 = vunpack.c.l.b16 %v1721
      %v4058 = vunpack.c.l.b16 %v1722
      %v4059 = vunpack.c.l.b16 %v1723
      %v4060 = vunpack.c.l.b16 %v1724
      %v4061 = vunpack.c.l.b16 %v1725
      %v4062 = vunpack.c.l.b16 %v1726
      %v4063 = vunpack.c.l.b16 %v1727
      %v4064 = vunpack.c.l.b16 %v1728
      %v4065 = vunpack.c.l.b16 %v1729
      %v4066 = vunpack.c.l.b16 %v1730
      %v4067 = vunpack.c.l.b16 %v1731
      %v4068 = vunpack.c.l.b16 %v1732
      %v4069 = vunpack.c.l.b16 %v1733
      %v4070 = vunpack.c.l.b16 %v1734
      %v4071 = vunpack.c.l.b16 %v1735
      %v4072 = vunpack.c.l.b16 %v1736
      %v4073 = vunpack.c.l.b16 %v1737
      %v4074 = vunpack.c.l.b16 %v1738
      %v4075 = vunpack.c.l.b16 %v1739
      %v4076 = vunpack.c.l.b16 %v1740
      %v4077 = vunpack.c.l.b16 %v1741
      %v4078 = vunpack.c.l.b16 %v1742
      %v4079 = vunpack.c.l.b16 %v1743
      %v4080 = vunpack.c.l.b16 %v1744
      %v4081 = vunpack.c.l.b16 %v1745
      %v4082 = vunpack.c.l.b16 %v1746
      %v4083 = vunpack.c.l.b16 %v1747
      %v4084 = vunpack.c.l.b16 %v1748
      %v4085 = vunpack.c.l.b16 %v1749
      %v4086 = vunpack.c.l.b16 %v1750
      %v4087 = vunpack.c.l.b16 %v1751
      %v4088 = vunpack.c.l.b16 %v1752
      %v4089 = vunpack.c.l.b16 %v1753
      %v4090 = vunpack.c.l.b16 %v1754
      %v4091 = vunpack.c.l.b16 %v1755
      %v4092 = vunpack.c.l.b16 %v1756
      %v4093 = vunpack.c.l.b16 %v1757
      %v4094 = vunpack.c.l.b16 %v1758
      %v4095 = vunpack.c.l.b16 %v1759
      %v4096 = vunpack.c.l.b16 %v1760
      %v4097 = vunpack.c.l.b16 %v1761
      %v4098 = vunpack.c.l.b16 %v1762
      %v4099 = vunpack.c.l.b16 %v1763
      %v4100 = vunpack.c.l.b16 %v1764
      %v4101 = vunpack.c.l.b16 %v1765
      %v4102 = vunpack.c.l.b16 %v1766
      %v4103 = vunpack.c.l.b16 %v1767
      %v4104 = vunpack.c.l.b16 %v1768
      %v4105 = vunpack.c.l.b16 %v1769
      %v4106 = vunpack.c.l.b16 %v1770
      %v4107 = vunpack.c.l.b16 %v1771
      %v4108 = vunpack.c.l.b16 %v1772
      %v4109 = vunpack.c.l.b16 %v1773
      %v4110 = vunpack.c.l.b16 %v1774
      %v4111 = vunpack.c.l.b16 %v1775
      %v4112 = vunpack.c.l.b16 %v1776
      %v4113 = vunpack.c.l.b16 %v1777
      %v4114 = vunpack.c.l.b16 %v1778
      %v4115 = vunpack.c.l.b16 %v1779
      %v4116 = vunpack.c.l.b16 %v1780
      %v4117 = vunpack.c.l.b16 %v1781
      %v4118 = vunpack.c.l.b16 %v1782
      %v4119 = vunpack.c.l.b16 %v1783
      %v4120 = vunpack.c.l.b16 %v1784
      %v4121 = vunpack.c.l.b16 %v1785
      %v4122 = vunpack.c.l.b16 %v1786
      %v4123 = vunpack.c.l.b16 %v1787
      %v4124 = vunpack.c.l.b16 %v1788
      %v4125 = vunpack.c.l.b16 %v1789
      %v4126 = vunpack.c.l.b16 %v1790
      %v4127 = vunpack.c.l.b16 %v1791
      %v4128 = vunpack.c.l.b16 %v1792
      %v4129 = vunpack.c.l.b16 %v1793
      %v4130 = vunpack.c.l.b16 %v1794
      %v4131 = vunpack.c.l.b16 %v1795
      %v4132 = vunpack.c.l.b16 %v1796
      %v4133 = vunpack.c.l.b16 %v1797
      %v4134 = vunpack.c.l.b16 %v1798
      %v4135 = vunpack.c.l.b16 %v1799
      %v4136 = vunpack.c.l.b16 %v1800
      %v4137 = vunpack.c.l.b16 %v1801
      %v4138 = vunpack.c.l.b16 %v1802
      %v4139 = vunpack.c.l.b16 %v1803
      %v4140 = vunpack.c.l.b16 %v1804
      %v4141 = vunpack.c.l.b16 %v1805
      %v4142 = vunpack.c.l.b16 %v1806
      %v4143 = vunpack.c.l.b16 %v1807
      %v4144 = vunpack.c.l.b16 %v1808
      %v4145 = vunpack.c.l.b16 %v1809
      %v4146 = vunpack.c.l.b16 %v1810
      %v4147 = vunpack.c.l.b16 %v1811
      %v4148 = vunpack.c.l.b16 %v1812
      %v4149 = vunpack.c.l.b16 %v1813
      %v4150 = vunpack.c.l.b16 %v1814
      %v4151 = vunpack.c.l.b16 %v1815
      %v4152 = vunpack.c.l.b16 %v1816
      %v4153 = vunpack.c.l.b16 %v1817
      %v4154 = vunpack.c.l.b16 %v1818
      %v4155 = vunpack.c.l.b16 %v1819
      %v4156 = vunpack.c.l.b16 %v1820
      %v4157 = vunpack.c.l.b16 %v1821
      %v4158 = vunpack.c.l.b16 %v1822
      %v4159 = vunpack.c.l.b16 %v1823
      %v4160 = vunpack.c.l.b16 %v1824
      %v4161 = vunpack.c.l.b16 %v1825
      %v4162 = vunpack.c.l.b16 %v1826
      %v4163 = vunpack.c.l.b16 %v1827
      %v4164 = vunpack.c.l.b16 %v1828
      %v4165 = vunpack.c.l.b16 %v1829
      %v4166 = vunpack.c.l.b16 %v1830
      %v4167 = vunpack.c.l.b16 %v1831
      %v4168 = vunpack.c.l.b16 %v1832
      %v4169 = vunpack.c.l.b16 %v1833
      %v4170 = vunpack.c.l.b16 %v1834
      %v4171 = vunpack.c.l.b16 %v1835
      %v4172 = vunpack.c.l.b16 %v1836
      %v4173 = vunpack.c.l.b16 %v1837
      %v4174 = vunpack.c.l.b16 %v1838
      %v4175 = vunpack.c.l.b16 %v1839
      %v4176 = vunpack.c.l.b16 %v1840
      %v4177 = vunpack.c.l.b16 %v1841
      %v4178 = vunpack.c.l.b16 %v1842
      %v4179 = vunpack.c.l.b16 %v1843
      %v4180 = vunpack.c.l.b16 %v1844
      %v4181 = vunpack.c.l.b16 %v1845
      %v4182 = vpack.c.b16 %v4055, %v4054
      %v4183 = vpack.c.b16 %v4057, %v4056
      %v4184 = vpack.c.b16 %v4059, %v4058
      %v4185 = vpack.c.b16 %v4061, %v4060
      %v4186 = vpack.c.b16 %v4063, %v4062
      %v4187 = vpack.c.b16 %v4065, %v4064
      %v4188 = vpack.c.b16 %v4067, %v4066
      %v4189 = vpack.c.b16 %v4069, %v4068
      %v4190 = vpack.c.b16 %v4071, %v4070
      %v4191 = vpack.c.b16 %v4073, %v4072
      %v4192 = vpack.c.b16 %v4075, %v4074
      %v4193 = vpack.c.b16 %v4077, %v4076
      %v4194 = vpack.c.b16 %v4079, %v4078
      %v4195 = vpack.c.b16 %v4081, %v4080
      %v4196 = vpack.c.b16 %v4083, %v4082
      %v4197 = vpack.c.b16 %v4085, %v4084
      %v4198 = vpack.c.b16 %v4087, %v4086
      %v4199 = vpack.c.b16 %v4089, %v4088
      %v4200 = vpack.c.b16 %v4091, %v4090
      %v4201 = vpack.c.b16 %v4093, %v4092
      %v4202 = vpack.c.b16 %v4095, %v4094
      %v4203 = vpack.c.b16 %v4097, %v4096
      %v4204 = vpack.c.b16 %v4099, %v4098
      %v4205 = vpack.c.b16 %v4101, %v4100
      %v4206 = vpack.c.b16 %v4103, %v4102
      %v4207 = vpack.c.b16 %v4105, %v4104
      %v4208 = vpack.c.b16 %v4107, %v4106
      %v4209 = vpack.c.b16 %v4109, %v4108
      %v4210 = vpack.c.b16 %v4111, %v4110
      %v4211 = vpack.c.b16 %v4113, %v4112
      %v4212 = vpack.c.b16 %v4115, %v4114
      %v4213 = vpack.c.b16 %v4117, %v4116
      %v4214 = vpack.c.b16 %v4119, %v4118
      %v4215 = vpack.c.b16 %v4121, %v4120
      %v4216 = vpack.c.b16 %v4123, %v4122
      %v4217 = vpack.c.b16 %v4125, %v4124
      %v4218 = vpack.c.b16 %v4127, %v4126
      %v4219 = vpack.c.b16 %v4129, %v4128
      %v4220 = vpack.c.b16 %v4131, %v4130
      %v4221 = vpack.c.b16 %v4133, %v4132
      %v4222 = vpack.c.b16 %v4135, %v4134
      %v4223 = vpack.c.b16 %v4137, %v4136
      %v4224 = vpack.c.b16 %v4139, %v4138
      %v4225 = vpack.c.b16 %v4141, %v4140
      %v4226 = vpack.c.b16 %v4143, %v4142
      %v4227 = vpack.c.b16 %v4145, %v4144
      %v4228 = vpack.c.b16 %v4147, %v4146
      %v4229 = vpack.c.b16 %v4149, %v4148
      %v4230 = vpack.c.b16 %v4151, %v4150
      %v4231 = vpack.c.b16 %v4153, %v4152
      %v4232 = vpack.c.b16 %v4155, %v4154
      %v4233 = vpack.c.b16 %v4157, %v4156
      %v4234 = vpack.c.b16 %v4159, %v4158
      %v4235 = vpack.c.b16 %v4161, %v4160
      %v4236 = vpack.c.b16 %v4163, %v4162
      %v4237 = vpack.c.b16 %v4165, %v4164
      %v4238 = vpack.c.b16 %v4167, %v4166
      %v4239 = vpack.c.b16 %v4169, %v4168
      %v4240 = vpack.c.b16 %v4171, %v4170
      %v4241 = vpack.c.b16 %v4173, %v4172
      %v4242 = vpack.c.b16 %v4175, %v4174
      %v4243 = vpack.c.b16 %v4177, %v4176
      %v4244 = vpack.c.b16 %v4179, %v4178
      %v4245 = vpack.c.b16 %v4181, %v4180
      %4246 = vrot.lane.b32.xlu0 %v4182, 64
      %v4247 = vpop.permute.xlu0 %4246
      %4248 = vrot.lane.b32.xlu0 %v4183, 64
      %v4249 = vpop.permute.xlu0 %4248
      %4250 = vrot.lane.b32.xlu0 %v4184, 64
      %v4251 = vpop.permute.xlu0 %4250
      %4252 = vrot.lane.b32.xlu0 %v4185, 64
      %v4253 = vpop.permute.xlu0 %4252
      %4254 = vrot.lane.b32.xlu0 %v4186, 64
      %v4255 = vpop.permute.xlu0 %4254
      %4256 = vrot.lane.b32.xlu0 %v4187, 64
      %v4257 = vpop.permute.xlu0 %4256
      %4258 = vrot.lane.b32.xlu0 %v4188, 64
      %v4259 = vpop.permute.xlu0 %4258
      %4260 = vrot.lane.b32.xlu0 %v4189, 64
      %v4261 = vpop.permute.xlu0 %4260
      %4262 = vrot.lane.b32.xlu0 %v4190, 64
      %v4263 = vpop.permute.xlu0 %4262
      %4264 = vrot.lane.b32.xlu0 %v4191, 64
      %v4265 = vpop.permute.xlu0 %4264
      %4266 = vrot.lane.b32.xlu0 %v4192, 64
      %v4267 = vpop.permute.xlu0 %4266
      %4268 = vrot.lane.b32.xlu0 %v4193, 64
      %v4269 = vpop.permute.xlu0 %4268
      %4270 = vrot.lane.b32.xlu0 %v4194, 64
      %v4271 = vpop.permute.xlu0 %4270
      %4272 = vrot.lane.b32.xlu0 %v4195, 64
      %v4273 = vpop.permute.xlu0 %4272
      %4274 = vrot.lane.b32.xlu0 %v4196, 64
      %v4275 = vpop.permute.xlu0 %4274
      %4276 = vrot.lane.b32.xlu0 %v4197, 64
      %v4277 = vpop.permute.xlu0 %4276
      %4278 = vrot.lane.b32.xlu0 %v4198, 64
      %v4279 = vpop.permute.xlu0 %4278
      %4280 = vrot.lane.b32.xlu0 %v4199, 64
      %v4281 = vpop.permute.xlu0 %4280
      %4282 = vrot.lane.b32.xlu0 %v4200, 64
      %v4283 = vpop.permute.xlu0 %4282
      %4284 = vrot.lane.b32.xlu0 %v4201, 64
      %v4285 = vpop.permute.xlu0 %4284
      %4286 = vrot.lane.b32.xlu0 %v4202, 64
      %v4287 = vpop.permute.xlu0 %4286
      %4288 = vrot.lane.b32.xlu0 %v4203, 64
      %v4289 = vpop.permute.xlu0 %4288
      %4290 = vrot.lane.b32.xlu0 %v4204, 64
      %v4291 = vpop.permute.xlu0 %4290
      %4292 = vrot.lane.b32.xlu0 %v4205, 64
      %v4293 = vpop.permute.xlu0 %4292
      %4294 = vrot.lane.b32.xlu0 %v4206, 64
      %v4295 = vpop.permute.xlu0 %4294
      %4296 = vrot.lane.b32.xlu0 %v4207, 64
      %v4297 = vpop.permute.xlu0 %4296
      %4298 = vrot.lane.b32.xlu0 %v4208, 64
      %v4299 = vpop.permute.xlu0 %4298
      %4300 = vrot.lane.b32.xlu0 %v4209, 64
      %v4301 = vpop.permute.xlu0 %4300
      %4302 = vrot.lane.b32.xlu0 %v4210, 64
      %v4303 = vpop.permute.xlu0 %4302
      %4304 = vrot.lane.b32.xlu0 %v4211, 64
      %v4305 = vpop.permute.xlu0 %4304
      %4306 = vrot.lane.b32.xlu0 %v4212, 64
      %v4307 = vpop.permute.xlu0 %4306
      %4308 = vrot.lane.b32.xlu0 %v4213, 64
      %v4309 = vpop.permute.xlu0 %4308
      %4310 = vrot.lane.b32.xlu0 %v4214, 64
      %v4311 = vpop.permute.xlu0 %4310
      %4312 = vrot.lane.b32.xlu0 %v4215, 64
      %v4313 = vpop.permute.xlu0 %4312
      %4314 = vrot.lane.b32.xlu0 %v4216, 64
      %v4315 = vpop.permute.xlu0 %4314
      %4316 = vrot.lane.b32.xlu0 %v4217, 64
      %v4317 = vpop.permute.xlu0 %4316
      %4318 = vrot.lane.b32.xlu0 %v4218, 64
      %v4319 = vpop.permute.xlu0 %4318
      %4320 = vrot.lane.b32.xlu0 %v4219, 64
      %v4321 = vpop.permute.xlu0 %4320
      %4322 = vrot.lane.b32.xlu0 %v4220, 64
      %v4323 = vpop.permute.xlu0 %4322
      %4324 = vrot.lane.b32.xlu0 %v4221, 64
      %v4325 = vpop.permute.xlu0 %4324
      %4326 = vrot.lane.b32.xlu0 %v4222, 64
      %v4327 = vpop.permute.xlu0 %4326
      %4328 = vrot.lane.b32.xlu0 %v4223, 64
      %v4329 = vpop.permute.xlu0 %4328
      %4330 = vrot.lane.b32.xlu0 %v4224, 64
      %v4331 = vpop.permute.xlu0 %4330
      %4332 = vrot.lane.b32.xlu0 %v4225, 64
      %v4333 = vpop.permute.xlu0 %4332
      %4334 = vrot.lane.b32.xlu0 %v4226, 64
      %v4335 = vpop.permute.xlu0 %4334
      %4336 = vrot.lane.b32.xlu0 %v4227, 64
      %v4337 = vpop.permute.xlu0 %4336
      %4338 = vrot.lane.b32.xlu0 %v4228, 64
      %v4339 = vpop.permute.xlu0 %4338
      %4340 = vrot.lane.b32.xlu0 %v4229, 64
      %v4341 = vpop.permute.xlu0 %4340
      %4342 = vrot.lane.b32.xlu0 %v4230, 64
      %v4343 = vpop.permute.xlu0 %4342
      %4344 = vrot.lane.b32.xlu0 %v4231, 64
      %v4345 = vpop.permute.xlu0 %4344
      %4346 = vrot.lane.b32.xlu0 %v4232, 64
      %v4347 = vpop.permute.xlu0 %4346
      %4348 = vrot.lane.b32.xlu0 %v4233, 64
      %v4349 = vpop.permute.xlu0 %4348
      %4350 = vrot.lane.b32.xlu0 %v4234, 64
      %v4351 = vpop.permute.xlu0 %4350
      %4352 = vrot.lane.b32.xlu0 %v4235, 64
      %v4353 = vpop.permute.xlu0 %4352
      %4354 = vrot.lane.b32.xlu0 %v4236, 64
      %v4355 = vpop.permute.xlu0 %4354
      %4356 = vrot.lane.b32.xlu0 %v4237, 64
      %v4357 = vpop.permute.xlu0 %4356
      %4358 = vrot.lane.b32.xlu0 %v4238, 64
      %v4359 = vpop.permute.xlu0 %4358
      %4360 = vrot.lane.b32.xlu0 %v4239, 64
      %v4361 = vpop.permute.xlu0 %4360
      %4362 = vrot.lane.b32.xlu0 %v4240, 64
      %v4363 = vpop.permute.xlu0 %4362
      %4364 = vrot.lane.b32.xlu0 %v4241, 64
      %v4365 = vpop.permute.xlu0 %4364
      %4366 = vrot.lane.b32.xlu0 %v4242, 64
      %v4367 = vpop.permute.xlu0 %4366
      %4368 = vrot.lane.b32.xlu0 %v4243, 64
      %v4369 = vpop.permute.xlu0 %4368
      %4370 = vrot.lane.b32.xlu0 %v4244, 64
      %v4371 = vpop.permute.xlu0 %4370
      %4372 = vrot.lane.b32.xlu0 %v4245, 64
      %v4373 = vpop.permute.xlu0 %4372
      %v4374 = vunpack.c.l.b16 %v1891
      %v4375 = vunpack.c.l.b16 %v1901
      %v4376 = vunpack.c.l.b16 %v1911
      %v4377 = vunpack.c.l.b16 %v1921
      %v4378 = vunpack.c.l.b16 %v1935
      %v4379 = vunpack.c.l.b16 %v1945
      %v4380 = vunpack.c.l.b16 %v1955
      %v4381 = vunpack.c.l.b16 %v1965
      %v4382 = vunpack.c.l.b16 %v1979
      %v4383 = vunpack.c.l.b16 %v1989
      %v4384 = vunpack.c.l.b16 %v1999
      %v4385 = vunpack.c.l.b16 %v2009
      %v4386 = vunpack.c.l.b16 %v2023
      %v4387 = vunpack.c.l.b16 %v2033
      %v4388 = vunpack.c.l.b16 %v2043
      %v4389 = vunpack.c.l.b16 %v2053
      %v4390 = vunpack.c.l.b16 %v2067
      %v4391 = vunpack.c.l.b16 %v2077
      %v4392 = vunpack.c.l.b16 %v2087
      %v4393 = vunpack.c.l.b16 %v2097
      %v4394 = vunpack.c.l.b16 %v2111
      %v4395 = vunpack.c.l.b16 %v2121
      %v4396 = vunpack.c.l.b16 %v2131
      %v4397 = vunpack.c.l.b16 %v2141
      %v4398 = vunpack.c.l.b16 %v2155
      %v4399 = vunpack.c.l.b16 %v2165
      %v4400 = vunpack.c.l.b16 %v2175
      %v4401 = vunpack.c.l.b16 %v2185
      %v4402 = vunpack.c.l.b16 %v2199
      %v4403 = vunpack.c.l.b16 %v2209
      %v4404 = vunpack.c.l.b16 %v2219
      %v4405 = vunpack.c.l.b16 %v2229
      %v4406 = vunpack.c.l.b16 %v2243
      %v4407 = vunpack.c.l.b16 %v2253
      %v4408 = vunpack.c.l.b16 %v2263
      %v4409 = vunpack.c.l.b16 %v2273
      %v4410 = vunpack.c.l.b16 %v2287
      %v4411 = vunpack.c.l.b16 %v2297
      %v4412 = vunpack.c.l.b16 %v2307
      %v4413 = vunpack.c.l.b16 %v2317
      %v4414 = vunpack.c.l.b16 %v2331
      %v4415 = vunpack.c.l.b16 %v2341
      %v4416 = vunpack.c.l.b16 %v2351
      %v4417 = vunpack.c.l.b16 %v2361
      %v4418 = vunpack.c.l.b16 %v2375
      %v4419 = vunpack.c.l.b16 %v2385
      %v4420 = vunpack.c.l.b16 %v2395
      %v4421 = vunpack.c.l.b16 %v2405
      %v4422 = vunpack.c.l.b16 %v2419
      %v4423 = vunpack.c.l.b16 %v2429
      %v4424 = vunpack.c.l.b16 %v2439
      %v4425 = vunpack.c.l.b16 %v2449
      %v4426 = vunpack.c.l.b16 %v2463
      %v4427 = vunpack.c.l.b16 %v2473
      %v4428 = vunpack.c.l.b16 %v2483
      %v4429 = vunpack.c.l.b16 %v2493
      %v4430 = vunpack.c.l.b16 %v2507
      %v4431 = vunpack.c.l.b16 %v2517
      %v4432 = vunpack.c.l.b16 %v2527
      %v4433 = vunpack.c.l.b16 %v2537
      %v4434 = vunpack.c.l.b16 %v2551
      %v4435 = vunpack.c.l.b16 %v2561
      %v4436 = vunpack.c.l.b16 %v2571
      %v4437 = vunpack.c.l.b16 %v2581
      %v4438 = vunpack.c.l.b16 %v2595
      %v4439 = vunpack.c.l.b16 %v2605
      %v4440 = vunpack.c.l.b16 %v2615
      %v4441 = vunpack.c.l.b16 %v2625
      %v4442 = vunpack.c.l.b16 %v2639
      %v4443 = vunpack.c.l.b16 %v2649
      %v4444 = vunpack.c.l.b16 %v2659
      %v4445 = vunpack.c.l.b16 %v2669
      %v4446 = vunpack.c.l.b16 %v2683
      %v4447 = vunpack.c.l.b16 %v2693
      %v4448 = vunpack.c.l.b16 %v2703
      %v4449 = vunpack.c.l.b16 %v2713
      %v4450 = vunpack.c.l.b16 %v2727
      %v4451 = vunpack.c.l.b16 %v2737
      %v4452 = vunpack.c.l.b16 %v2747
      %v4453 = vunpack.c.l.b16 %v2757
      %v4454 = vunpack.c.l.b16 %v2771
      %v4455 = vunpack.c.l.b16 %v2781
      %v4456 = vunpack.c.l.b16 %v2791
      %v4457 = vunpack.c.l.b16 %v2801
      %v4458 = vunpack.c.l.b16 %v2815
      %v4459 = vunpack.c.l.b16 %v2825
      %v4460 = vunpack.c.l.b16 %v2835
      %v4461 = vunpack.c.l.b16 %v2845
      %v4462 = vunpack.c.l.b16 %v2859
      %v4463 = vunpack.c.l.b16 %v2869
      %v4464 = vunpack.c.l.b16 %v2879
      %v4465 = vunpack.c.l.b16 %v2889
      %v4466 = vunpack.c.l.b16 %v2903
      %v4467 = vunpack.c.l.b16 %v2913
      %v4468 = vunpack.c.l.b16 %v2923
      %v4469 = vunpack.c.l.b16 %v2933
      %v4470 = vunpack.c.l.b16 %v2947
      %v4471 = vunpack.c.l.b16 %v2957
      %v4472 = vunpack.c.l.b16 %v2967
      %v4473 = vunpack.c.l.b16 %v2977
      %v4474 = vunpack.c.l.b16 %v2991
      %v4475 = vunpack.c.l.b16 %v3001
      %v4476 = vunpack.c.l.b16 %v3011
      %v4477 = vunpack.c.l.b16 %v3021
      %v4478 = vunpack.c.l.b16 %v3035
      %v4479 = vunpack.c.l.b16 %v3045
      %v4480 = vunpack.c.l.b16 %v3055
      %v4481 = vunpack.c.l.b16 %v3065
      %v4482 = vunpack.c.l.b16 %v3079
      %v4483 = vunpack.c.l.b16 %v3089
      %v4484 = vunpack.c.l.b16 %v3099
      %v4485 = vunpack.c.l.b16 %v3109
      %v4486 = vunpack.c.l.b16 %v3123
      %v4487 = vunpack.c.l.b16 %v3133
      %v4488 = vunpack.c.l.b16 %v3143
      %v4489 = vunpack.c.l.b16 %v3153
      %v4490 = vunpack.c.l.b16 %v3167
      %v4491 = vunpack.c.l.b16 %v3177
      %v4492 = vunpack.c.l.b16 %v3187
      %v4493 = vunpack.c.l.b16 %v3197
      %v4494 = vunpack.c.l.b16 %v3211
      %v4495 = vunpack.c.l.b16 %v3221
      %v4496 = vunpack.c.l.b16 %v3231
      %v4497 = vunpack.c.l.b16 %v3241
      %v4498 = vunpack.c.l.b16 %v3255
      %v4499 = vunpack.c.l.b16 %v3265
      %v4500 = vunpack.c.l.b16 %v3275
      %v4501 = vunpack.c.l.b16 %v3285
      %v4502 = vpack.c.b16 %v4375, %v4374
      %v4503 = vpack.c.b16 %v4377, %v4376
      %v4504 = vpack.c.b16 %v4379, %v4378
      %v4505 = vpack.c.b16 %v4381, %v4380
      %v4506 = vpack.c.b16 %v4383, %v4382
      %v4507 = vpack.c.b16 %v4385, %v4384
      %v4508 = vpack.c.b16 %v4387, %v4386
      %v4509 = vpack.c.b16 %v4389, %v4388
      %v4510 = vpack.c.b16 %v4391, %v4390
      %v4511 = vpack.c.b16 %v4393, %v4392
      %v4512 = vpack.c.b16 %v4395, %v4394
      %v4513 = vpack.c.b16 %v4397, %v4396
      %v4514 = vpack.c.b16 %v4399, %v4398
      %v4515 = vpack.c.b16 %v4401, %v4400
      %v4516 = vpack.c.b16 %v4403, %v4402
      %v4517 = vpack.c.b16 %v4405, %v4404
      %v4518 = vpack.c.b16 %v4407, %v4406
      %v4519 = vpack.c.b16 %v4409, %v4408
      %v4520 = vpack.c.b16 %v4411, %v4410
      %v4521 = vpack.c.b16 %v4413, %v4412
      %v4522 = vpack.c.b16 %v4415, %v4414
      %v4523 = vpack.c.b16 %v4417, %v4416
      %v4524 = vpack.c.b16 %v4419, %v4418
      %v4525 = vpack.c.b16 %v4421, %v4420
      %v4526 = vpack.c.b16 %v4423, %v4422
      %v4527 = vpack.c.b16 %v4425, %v4424
      %v4528 = vpack.c.b16 %v4427, %v4426
      %v4529 = vpack.c.b16 %v4429, %v4428
      %v4530 = vpack.c.b16 %v4431, %v4430
      %v4531 = vpack.c.b16 %v4433, %v4432
      %v4532 = vpack.c.b16 %v4435, %v4434
      %v4533 = vpack.c.b16 %v4437, %v4436
      %v4534 = vpack.c.b16 %v4439, %v4438
      %v4535 = vpack.c.b16 %v4441, %v4440
      %v4536 = vpack.c.b16 %v4443, %v4442
      %v4537 = vpack.c.b16 %v4445, %v4444
      %v4538 = vpack.c.b16 %v4447, %v4446
      %v4539 = vpack.c.b16 %v4449, %v4448
      %v4540 = vpack.c.b16 %v4451, %v4450
      %v4541 = vpack.c.b16 %v4453, %v4452
      %v4542 = vpack.c.b16 %v4455, %v4454
      %v4543 = vpack.c.b16 %v4457, %v4456
      %v4544 = vpack.c.b16 %v4459, %v4458
      %v4545 = vpack.c.b16 %v4461, %v4460
      %v4546 = vpack.c.b16 %v4463, %v4462
      %v4547 = vpack.c.b16 %v4465, %v4464
      %v4548 = vpack.c.b16 %v4467, %v4466
      %v4549 = vpack.c.b16 %v4469, %v4468
      %v4550 = vpack.c.b16 %v4471, %v4470
      %v4551 = vpack.c.b16 %v4473, %v4472
      %v4552 = vpack.c.b16 %v4475, %v4474
      %v4553 = vpack.c.b16 %v4477, %v4476
      %v4554 = vpack.c.b16 %v4479, %v4478
      %v4555 = vpack.c.b16 %v4481, %v4480
      %v4556 = vpack.c.b16 %v4483, %v4482
      %v4557 = vpack.c.b16 %v4485, %v4484
      %v4558 = vpack.c.b16 %v4487, %v4486
      %v4559 = vpack.c.b16 %v4489, %v4488
      %v4560 = vpack.c.b16 %v4491, %v4490
      %v4561 = vpack.c.b16 %v4493, %v4492
      %v4562 = vpack.c.b16 %v4495, %v4494
      %v4563 = vpack.c.b16 %v4497, %v4496
      %v4564 = vpack.c.b16 %v4499, %v4498
      %v4565 = vpack.c.b16 %v4501, %v4500
      %4566 = vrot.lane.b32.xlu0 %v4502, 96
      %v4567 = vpop.permute.xlu0 %4566
      %4568 = vrot.lane.b32.xlu0 %v4503, 96
      %v4569 = vpop.permute.xlu0 %4568
      %4570 = vrot.lane.b32.xlu0 %v4504, 96
      %v4571 = vpop.permute.xlu0 %4570
      %4572 = vrot.lane.b32.xlu0 %v4505, 96
      %v4573 = vpop.permute.xlu0 %4572
      %4574 = vrot.lane.b32.xlu0 %v4506, 96
      %v4575 = vpop.permute.xlu0 %4574
      %4576 = vrot.lane.b32.xlu0 %v4507, 96
      %v4577 = vpop.permute.xlu0 %4576
      %4578 = vrot.lane.b32.xlu0 %v4508, 96
      %v4579 = vpop.permute.xlu0 %4578
      %4580 = vrot.lane.b32.xlu0 %v4509, 96
      %v4581 = vpop.permute.xlu0 %4580
      %4582 = vrot.lane.b32.xlu0 %v4510, 96
      %v4583 = vpop.permute.xlu0 %4582
      %4584 = vrot.lane.b32.xlu0 %v4511, 96
      %v4585 = vpop.permute.xlu0 %4584
      %4586 = vrot.lane.b32.xlu0 %v4512, 96
      %v4587 = vpop.permute.xlu0 %4586
      %4588 = vrot.lane.b32.xlu0 %v4513, 96
      %v4589 = vpop.permute.xlu0 %4588
      %4590 = vrot.lane.b32.xlu0 %v4514, 96
      %v4591 = vpop.permute.xlu0 %4590
      %4592 = vrot.lane.b32.xlu0 %v4515, 96
      %v4593 = vpop.permute.xlu0 %4592
      %4594 = vrot.lane.b32.xlu0 %v4516, 96
      %v4595 = vpop.permute.xlu0 %4594
      %4596 = vrot.lane.b32.xlu0 %v4517, 96
      %v4597 = vpop.permute.xlu0 %4596
      %4598 = vrot.lane.b32.xlu0 %v4518, 96
      %v4599 = vpop.permute.xlu0 %4598
      %4600 = vrot.lane.b32.xlu0 %v4519, 96
      %v4601 = vpop.permute.xlu0 %4600
      %4602 = vrot.lane.b32.xlu0 %v4520, 96
      %v4603 = vpop.permute.xlu0 %4602
      %4604 = vrot.lane.b32.xlu0 %v4521, 96
      %v4605 = vpop.permute.xlu0 %4604
      %4606 = vrot.lane.b32.xlu0 %v4522, 96
      %v4607 = vpop.permute.xlu0 %4606
      %4608 = vrot.lane.b32.xlu0 %v4523, 96
      %v4609 = vpop.permute.xlu0 %4608
      %4610 = vrot.lane.b32.xlu0 %v4524, 96
      %v4611 = vpop.permute.xlu0 %4610
      %4612 = vrot.lane.b32.xlu0 %v4525, 96
      %v4613 = vpop.permute.xlu0 %4612
      %4614 = vrot.lane.b32.xlu0 %v4526, 96
      %v4615 = vpop.permute.xlu0 %4614
      %4616 = vrot.lane.b32.xlu0 %v4527, 96
      %v4617 = vpop.permute.xlu0 %4616
      %4618 = vrot.lane.b32.xlu0 %v4528, 96
      %v4619 = vpop.permute.xlu0 %4618
      %4620 = vrot.lane.b32.xlu0 %v4529, 96
      %v4621 = vpop.permute.xlu0 %4620
      %4622 = vrot.lane.b32.xlu0 %v4530, 96
      %v4623 = vpop.permute.xlu0 %4622
      %4624 = vrot.lane.b32.xlu0 %v4531, 96
      %v4625 = vpop.permute.xlu0 %4624
      %4626 = vrot.lane.b32.xlu0 %v4532, 96
      %v4627 = vpop.permute.xlu0 %4626
      %4628 = vrot.lane.b32.xlu0 %v4533, 96
      %v4629 = vpop.permute.xlu0 %4628
      %4630 = vrot.lane.b32.xlu0 %v4534, 96
      %v4631 = vpop.permute.xlu0 %4630
      %4632 = vrot.lane.b32.xlu0 %v4535, 96
      %v4633 = vpop.permute.xlu0 %4632
      %4634 = vrot.lane.b32.xlu0 %v4536, 96
      %v4635 = vpop.permute.xlu0 %4634
      %4636 = vrot.lane.b32.xlu0 %v4537, 96
      %v4637 = vpop.permute.xlu0 %4636
      %4638 = vrot.lane.b32.xlu0 %v4538, 96
      %v4639 = vpop.permute.xlu0 %4638
      %4640 = vrot.lane.b32.xlu0 %v4539, 96
      %v4641 = vpop.permute.xlu0 %4640
      %4642 = vrot.lane.b32.xlu0 %v4540, 96
      %v4643 = vpop.permute.xlu0 %4642
      %4644 = vrot.lane.b32.xlu0 %v4541, 96
      %v4645 = vpop.permute.xlu0 %4644
      %4646 = vrot.lane.b32.xlu0 %v4542, 96
      %v4647 = vpop.permute.xlu0 %4646
      %4648 = vrot.lane.b32.xlu0 %v4543, 96
      %v4649 = vpop.permute.xlu0 %4648
      %4650 = vrot.lane.b32.xlu0 %v4544, 96
      %v4651 = vpop.permute.xlu0 %4650
      %4652 = vrot.lane.b32.xlu0 %v4545, 96
      %v4653 = vpop.permute.xlu0 %4652
      %4654 = vrot.lane.b32.xlu0 %v4546, 96
      %v4655 = vpop.permute.xlu0 %4654
      %4656 = vrot.lane.b32.xlu0 %v4547, 96
      %v4657 = vpop.permute.xlu0 %4656
      %4658 = vrot.lane.b32.xlu0 %v4548, 96
      %v4659 = vpop.permute.xlu0 %4658
      %4660 = vrot.lane.b32.xlu0 %v4549, 96
      %v4661 = vpop.permute.xlu0 %4660
      %4662 = vrot.lane.b32.xlu0 %v4550, 96
      %v4663 = vpop.permute.xlu0 %4662
      %4664 = vrot.lane.b32.xlu0 %v4551, 96
      %v4665 = vpop.permute.xlu0 %4664
      %4666 = vrot.lane.b32.xlu0 %v4552, 96
      %v4667 = vpop.permute.xlu0 %4666
      %4668 = vrot.lane.b32.xlu0 %v4553, 96
      %v4669 = vpop.permute.xlu0 %4668
      %4670 = vrot.lane.b32.xlu0 %v4554, 96
      %v4671 = vpop.permute.xlu0 %4670
      %4672 = vrot.lane.b32.xlu0 %v4555, 96
      %v4673 = vpop.permute.xlu0 %4672
      %4674 = vrot.lane.b32.xlu0 %v4556, 96
      %v4675 = vpop.permute.xlu0 %4674
      %4676 = vrot.lane.b32.xlu0 %v4557, 96
      %v4677 = vpop.permute.xlu0 %4676
      %4678 = vrot.lane.b32.xlu0 %v4558, 96
      %v4679 = vpop.permute.xlu0 %4678
      %4680 = vrot.lane.b32.xlu0 %v4559, 96
      %v4681 = vpop.permute.xlu0 %4680
      %4682 = vrot.lane.b32.xlu0 %v4560, 96
      %v4683 = vpop.permute.xlu0 %4682
      %4684 = vrot.lane.b32.xlu0 %v4561, 96
      %v4685 = vpop.permute.xlu0 %4684
      %4686 = vrot.lane.b32.xlu0 %v4562, 96
      %v4687 = vpop.permute.xlu0 %4686
      %4688 = vrot.lane.b32.xlu0 %v4563, 96
      %v4689 = vpop.permute.xlu0 %4688
      %4690 = vrot.lane.b32.xlu0 %v4564, 96
      %v4691 = vpop.permute.xlu0 %4690
      %4692 = vrot.lane.b32.xlu0 %v4565, 96
      %v4693 = vpop.permute.xlu0 %4692
      %vm4694 = vcmask 261120
      %v4697 = vsel %vm4694, %v3542, %v3799
      %v4700 = vsel %vm4694, %v3543, %v3801
      %v4703 = vsel %vm4694, %v3544, %v3803
      %v4706 = vsel %vm4694, %v3545, %v3805
      %v4709 = vsel %vm4694, %v3546, %v3807
      %v4712 = vsel %vm4694, %v3547, %v3809
      %v4715 = vsel %vm4694, %v3548, %v3811
      %v4718 = vsel %vm4694, %v3549, %v3813
      %v4721 = vsel %vm4694, %v3550, %v3815
      %v4724 = vsel %vm4694, %v3551, %v3817
      %v4727 = vsel %vm4694, %v3552, %v3819
      %v4730 = vsel %vm4694, %v3553, %v3821
      %v4733 = vsel %vm4694, %v3554, %v3823
      %v4736 = vsel %vm4694, %v3555, %v3825
      %v4739 = vsel %vm4694, %v3556, %v3827
      %v4742 = vsel %vm4694, %v3557, %v3829
      %v4745 = vsel %vm4694, %v3558, %v3831
      %v4748 = vsel %vm4694, %v3559, %v3833
      %v4751 = vsel %vm4694, %v3560, %v3835
      %v4754 = vsel %vm4694, %v3561, %v3837
      %v4757 = vsel %vm4694, %v3562, %v3839
      %v4760 = vsel %vm4694, %v3563, %v3841
      %v4763 = vsel %vm4694, %v3564, %v3843
      %v4766 = vsel %vm4694, %v3565, %v3845
      %v4769 = vsel %vm4694, %v3566, %v3847
      %v4772 = vsel %vm4694, %v3567, %v3849
      %v4775 = vsel %vm4694, %v3568, %v3851
      %v4778 = vsel %vm4694, %v3569, %v3853
      %v4781 = vsel %vm4694, %v3570, %v3855
      %v4784 = vsel %vm4694, %v3571, %v3857
      %v4787 = vsel %vm4694, %v3572, %v3859
      %v4790 = vsel %vm4694, %v3573, %v3861
      %v4793 = vsel %vm4694, %v3574, %v3863
      %v4796 = vsel %vm4694, %v3575, %v3865
      %v4799 = vsel %vm4694, %v3576, %v3867
      %v4802 = vsel %vm4694, %v3577, %v3869
      %v4805 = vsel %vm4694, %v3578, %v3871
      %v4808 = vsel %vm4694, %v3579, %v3873
      %v4811 = vsel %vm4694, %v3580, %v3875
      %v4814 = vsel %vm4694, %v3581, %v3877
      %v4817 = vsel %vm4694, %v3582, %v3879
      %v4820 = vsel %vm4694, %v3583, %v3881
      %v4823 = vsel %vm4694, %v3584, %v3883
      %v4826 = vsel %vm4694, %v3585, %v3885
      %v4829 = vsel %vm4694, %v3586, %v3887
      %v4832 = vsel %vm4694, %v3587, %v3889
      %v4835 = vsel %vm4694, %v3588, %v3891
      %v4838 = vsel %vm4694, %v3589, %v3893
      %v4841 = vsel %vm4694, %v3590, %v3895
      %v4844 = vsel %vm4694, %v3591, %v3897
      %v4847 = vsel %vm4694, %v3592, %v3899
      %v4850 = vsel %vm4694, %v3593, %v3901
      %v4853 = vsel %vm4694, %v3594, %v3903
      %v4856 = vsel %vm4694, %v3595, %v3905
      %v4859 = vsel %vm4694, %v3596, %v3907
      %v4862 = vsel %vm4694, %v3597, %v3909
      %v4865 = vsel %vm4694, %v3598, %v3911
      %v4868 = vsel %vm4694, %v3599, %v3913
      %v4871 = vsel %vm4694, %v3600, %v3915
      %v4874 = vsel %vm4694, %v3601, %v3917
      %v4877 = vsel %vm4694, %v3602, %v3919
      %v4880 = vsel %vm4694, %v3603, %v3921
      %v4883 = vsel %vm4694, %v3604, %v3923
      %v4886 = vsel %vm4694, %v3605, %v3925
      %vm4887 = vcmask 523264
      %v4889 = vsel %vm4887, %v4697, %v4247
      %v4891 = vsel %vm4887, %v4700, %v4249
      %v4893 = vsel %vm4887, %v4703, %v4251
      %v4895 = vsel %vm4887, %v4706, %v4253
      %v4897 = vsel %vm4887, %v4709, %v4255
      %v4899 = vsel %vm4887, %v4712, %v4257
      %v4901 = vsel %vm4887, %v4715, %v4259
      %v4903 = vsel %vm4887, %v4718, %v4261
      %v4905 = vsel %vm4887, %v4721, %v4263
      %v4907 = vsel %vm4887, %v4724, %v4265
      %v4909 = vsel %vm4887, %v4727, %v4267
      %v4911 = vsel %vm4887, %v4730, %v4269
      %v4913 = vsel %vm4887, %v4733, %v4271
      %v4915 = vsel %vm4887, %v4736, %v4273
      %v4917 = vsel %vm4887, %v4739, %v4275
      %v4919 = vsel %vm4887, %v4742, %v4277
      %v4921 = vsel %vm4887, %v4745, %v4279
      %v4923 = vsel %vm4887, %v4748, %v4281
      %v4925 = vsel %vm4887, %v4751, %v4283
      %v4927 = vsel %vm4887, %v4754, %v4285
      %v4929 = vsel %vm4887, %v4757, %v4287
      %v4931 = vsel %vm4887, %v4760, %v4289
      %v4933 = vsel %vm4887, %v4763, %v4291
      %v4935 = vsel %vm4887, %v4766, %v4293
      %v4937 = vsel %vm4887, %v4769, %v4295
      %v4939 = vsel %vm4887, %v4772, %v4297
      %v4941 = vsel %vm4887, %v4775, %v4299
      %v4943 = vsel %vm4887, %v4778, %v4301
      %v4945 = vsel %vm4887, %v4781, %v4303
      %v4947 = vsel %vm4887, %v4784, %v4305
      %v4949 = vsel %vm4887, %v4787, %v4307
      %v4951 = vsel %vm4887, %v4790, %v4309
      %v4953 = vsel %vm4887, %v4793, %v4311
      %v4955 = vsel %vm4887, %v4796, %v4313
      %v4957 = vsel %vm4887, %v4799, %v4315
      %v4959 = vsel %vm4887, %v4802, %v4317
      %v4961 = vsel %vm4887, %v4805, %v4319
      %v4963 = vsel %vm4887, %v4808, %v4321
      %v4965 = vsel %vm4887, %v4811, %v4323
      %v4967 = vsel %vm4887, %v4814, %v4325
      %v4969 = vsel %vm4887, %v4817, %v4327
      %v4971 = vsel %vm4887, %v4820, %v4329
      %v4973 = vsel %vm4887, %v4823, %v4331
      %v4975 = vsel %vm4887, %v4826, %v4333
      %v4977 = vsel %vm4887, %v4829, %v4335
      %v4979 = vsel %vm4887, %v4832, %v4337
      %v4981 = vsel %vm4887, %v4835, %v4339
      %v4983 = vsel %vm4887, %v4838, %v4341
      %v4985 = vsel %vm4887, %v4841, %v4343
      %v4987 = vsel %vm4887, %v4844, %v4345
      %v4989 = vsel %vm4887, %v4847, %v4347
      %v4991 = vsel %vm4887, %v4850, %v4349
      %v4993 = vsel %vm4887, %v4853, %v4351
      %v4995 = vsel %vm4887, %v4856, %v4353
      %v4997 = vsel %vm4887, %v4859, %v4355
      %v4999 = vsel %vm4887, %v4862, %v4357
      %v5001 = vsel %vm4887, %v4865, %v4359
      %v5003 = vsel %vm4887, %v4868, %v4361
      %v5005 = vsel %vm4887, %v4871, %v4363
      %v5007 = vsel %vm4887, %v4874, %v4365
      %v5009 = vsel %vm4887, %v4877, %v4367
      %v5011 = vsel %vm4887, %v4880, %v4369
      %v5013 = vsel %vm4887, %v4883, %v4371
      %v5015 = vsel %vm4887, %v4886, %v4373
      %vm5016 = vcmask 785408
      %v5018 = vsel %vm5016, %v4889, %v4567
      %v5021 = vsel %vm5016, %v4891, %v4569
      %v5024 = vsel %vm5016, %v4893, %v4571
      %v5027 = vsel %vm5016, %v4895, %v4573
      %v5030 = vsel %vm5016, %v4897, %v4575
      %v5033 = vsel %vm5016, %v4899, %v4577
      %v5036 = vsel %vm5016, %v4901, %v4579
      %v5039 = vsel %vm5016, %v4903, %v4581
      %v5042 = vsel %vm5016, %v4905, %v4583
      %v5045 = vsel %vm5016, %v4907, %v4585
      %v5048 = vsel %vm5016, %v4909, %v4587
      %v5051 = vsel %vm5016, %v4911, %v4589
      %v5054 = vsel %vm5016, %v4913, %v4591
      %v5057 = vsel %vm5016, %v4915, %v4593
      %v5060 = vsel %vm5016, %v4917, %v4595
      %v5063 = vsel %vm5016, %v4919, %v4597
      %v5066 = vsel %vm5016, %v4921, %v4599
      %v5069 = vsel %vm5016, %v4923, %v4601
      %v5072 = vsel %vm5016, %v4925, %v4603
      %v5075 = vsel %vm5016, %v4927, %v4605
      %v5078 = vsel %vm5016, %v4929, %v4607
      %v5081 = vsel %vm5016, %v4931, %v4609
      %v5084 = vsel %vm5016, %v4933, %v4611
      %v5087 = vsel %vm5016, %v4935, %v4613
      %v5090 = vsel %vm5016, %v4937, %v4615
      %v5093 = vsel %vm5016, %v4939, %v4617
      %v5096 = vsel %vm5016, %v4941, %v4619
      %v5099 = vsel %vm5016, %v4943, %v4621
      %v5102 = vsel %vm5016, %v4945, %v4623
      %v5105 = vsel %vm5016, %v4947, %v4625
      %v5108 = vsel %vm5016, %v4949, %v4627
      %v5111 = vsel %vm5016, %v4951, %v4629
      %v5114 = vsel %vm5016, %v4953, %v4631
      %v5117 = vsel %vm5016, %v4955, %v4633
      %v5120 = vsel %vm5016, %v4957, %v4635
      %v5123 = vsel %vm5016, %v4959, %v4637
      %v5126 = vsel %vm5016, %v4961, %v4639
      %v5129 = vsel %vm5016, %v4963, %v4641
      %v5132 = vsel %vm5016, %v4965, %v4643
      %v5135 = vsel %vm5016, %v4967, %v4645
      %v5138 = vsel %vm5016, %v4969, %v4647
      %v5141 = vsel %vm5016, %v4971, %v4649
      %v5144 = vsel %vm5016, %v4973, %v4651
      %v5147 = vsel %vm5016, %v4975, %v4653
      %v5150 = vsel %vm5016, %v4977, %v4655
      %v5153 = vsel %vm5016, %v4979, %v4657
      %v5156 = vsel %vm5016, %v4981, %v4659
      %v5159 = vsel %vm5016, %v4983, %v4661
      %v5162 = vsel %vm5016, %v4985, %v4663
      %v5165 = vsel %vm5016, %v4987, %v4665
      %v5168 = vsel %vm5016, %v4989, %v4667
      %v5171 = vsel %vm5016, %v4991, %v4669
      %v5174 = vsel %vm5016, %v4993, %v4671
      %v5177 = vsel %vm5016, %v4995, %v4673
      %v5180 = vsel %vm5016, %v4997, %v4675
      %v5183 = vsel %vm5016, %v4999, %v4677
      %v5186 = vsel %vm5016, %v5001, %v4679
      %v5189 = vsel %vm5016, %v5003, %v4681
      %v5192 = vsel %vm5016, %v5005, %v4683
      %v5195 = vsel %vm5016, %v5007, %v4685
      %v5198 = vsel %vm5016, %v5009, %v4687
      %v5201 = vsel %vm5016, %v5011, %v4689
      %v5204 = vsel %vm5016, %v5013, %v4691
      %v5207 = vsel %vm5016, %v5015, %v4693
      %v5209 = vld [vmem:[%s1] sm:$0xf]
      %v5210 = vld [vmem:[%s1 + $0x4] sm:$0xf]
      %v5211 = vld [vmem:[%s1 + $0x8] sm:$0xf]
      %v5212 = vld [vmem:[%s1 + $0xc] sm:$0xf]
      %v5213 = vld [vmem:[%s1 + $0x10] sm:$0xf]
      %v5214 = vld [vmem:[%s1 + $0x14] sm:$0xf]
      %v5215 = vld [vmem:[%s1 + $0x18] sm:$0xf]
      %v5216 = vld [vmem:[%s1 + $0x1c] sm:$0xf]
      %v5217 = vld [vmem:[%s1 + $0x20] sm:$0xf]
      %v5218 = vld [vmem:[%s1 + $0x24] sm:$0xf]
      %v5219 = vld [vmem:[%s1 + $0x28] sm:$0xf]
      %v5220 = vld [vmem:[%s1 + $0x2c] sm:$0xf]
      %v5221 = vld [vmem:[%s1 + $0x30] sm:$0xf]
      %v5222 = vld [vmem:[%s1 + $0x34] sm:$0xf]
      %v5223 = vld [vmem:[%s1 + $0x38] sm:$0xf]
      %v5224 = vld [vmem:[%s1 + $0x3c] sm:$0xf]
      %v5241 = vunpack.c.l.b16 %v5209
      %v5242 = vunpack.c.l.b16 %v5210
      %v5243 = vunpack.c.l.b16 %v5211
      %v5244 = vunpack.c.l.b16 %v5212
      %v5245 = vunpack.c.l.b16 %v5213
      %v5246 = vunpack.c.l.b16 %v5214
      %v5247 = vunpack.c.l.b16 %v5215
      %v5248 = vunpack.c.l.b16 %v5216
      %v5249 = vunpack.c.l.b16 %v5217
      %v5250 = vunpack.c.l.b16 %v5218
      %v5251 = vunpack.c.l.b16 %v5219
      %v5252 = vunpack.c.l.b16 %v5220
      %v5253 = vunpack.c.l.b16 %v5221
      %v5254 = vunpack.c.l.b16 %v5222
      %v5255 = vunpack.c.l.b16 %v5223
      %v5256 = vunpack.c.l.b16 %v5224
      %v5257 = vpack.c.b16 %v5242, %v5241
      %v5258 = vpack.c.b16 %v5244, %v5243
      %v5259 = vpack.c.b16 %v5246, %v5245
      %v5260 = vpack.c.b16 %v5248, %v5247
      %v5261 = vpack.c.b16 %v5250, %v5249
      %v5262 = vpack.c.b16 %v5252, %v5251
      %v5263 = vpack.c.b16 %v5254, %v5253
      %v5264 = vpack.c.b16 %v5256, %v5255
      %5273 = vmatprep.subr.bf16.mxu0 0
      %5274 = vmatpush1.bf16.msra.mxu0 %v5264
      %5275 = vmatprep.subr.bf16.mxu0 0
      %5276 = vmatpush1.bf16.msra.mxu0 %v5263
      %5277 = vmatprep.subr.bf16.mxu0 0
      %5278 = vmatpush1.bf16.msra.mxu0 %v5262
      %5279 = vmatprep.subr.bf16.mxu0 0
      %5280 = vmatpush1.bf16.msra.mxu0 %v5261
      %5281 = vmatprep.subr.bf16.mxu0 0
      %5282 = vmatpush1.bf16.msra.mxu0 %v5260
      %5283 = vmatprep.subr.bf16.mxu0 0
      %5284 = vmatpush1.bf16.msra.mxu0 %v5259
      %5285 = vmatprep.subr.bf16.mxu0 0
      %5286 = vmatpush1.bf16.msra.mxu0 %v5258
      %5287 = vmatprep.subr.bf16.mxu0 0
      %5288 = vmatpush1.bf16.msra.mxu0 %v5257
      %5289 = vmatprep.subr.bf16.mxu0 0
      %5290 = vmatpush2.bf16.msra.mxu0 0
      %5291 = vmatprep.subr.bf16.mxu0 0
      %5292 = vmatpush2.bf16.msra.mxu0 0
      %5293 = vmatprep.subr.bf16.mxu0 0
      %5294 = vmatpush2.bf16.msra.mxu0 0
      %5295 = vmatprep.subr.bf16.mxu0 0
      %5296 = vmatpush2.bf16.msra.mxu0 0
      %5297 = vmatprep.subr.bf16.mxu0 0
      %5298 = vmatpush2.bf16.msra.mxu0 0
      %5299 = vmatprep.subr.bf16.mxu0 0
      %5300 = vmatpush2.bf16.msra.mxu0 0
      %5301 = vmatprep.subr.bf16.mxu0 0
      %5302 = vmatpush2.bf16.msra.mxu0 0
      %5303 = vmatprep.subr.bf16.mxu0 0
      %5304 = vmatpush2.bf16.msra.mxu0 0
      %5305 = vmatprep.mubr.bf16.mxu0 0
      %5306 = vmatmul.mubr.bf16.gmra.mxu0 %v5018
      %v5307 = vpop.f32.mrf.mxu0
      %v5308 = vadd.f32 0.0, %v5307
      %v5309 = vpop.f32.mrf.mxu0
      %v5310 = vpop.f32.mrf.mxu0
      %v5311 = vadd.f32 0.0, %v5310
      %v5312 = vpop.f32.mrf.mxu0
      %5313 = vmatprep.mubr.bf16.mxu0 0
      %5314 = vmatmul.mubr.bf16.gmra.mxu0 %v5021
      %v5315 = vpop.f32.mrf.mxu0
      %v5316 = vadd.f32 0.0, %v5315
      %v5317 = vpop.f32.mrf.mxu0
      %v5318 = vpop.f32.mrf.mxu0
      %v5319 = vadd.f32 0.0, %v5318
      %v5320 = vpop.f32.mrf.mxu0
      %5321 = vmatprep.mubr.bf16.mxu0 0
      %5322 = vmatmul.mubr.bf16.gmra.mxu0 %v5024
      %v5323 = vpop.f32.mrf.mxu0
      %v5324 = vadd.f32 0.0, %v5323
      %v5325 = vpop.f32.mrf.mxu0
      %v5326 = vpop.f32.mrf.mxu0
      %v5327 = vadd.f32 0.0, %v5326
      %v5328 = vpop.f32.mrf.mxu0
      %5329 = vmatprep.mubr.bf16.mxu0 0
      %5330 = vmatmul.mubr.bf16.gmra.mxu0 %v5027
      %v5331 = vpop.f32.mrf.mxu0
      %v5332 = vadd.f32 0.0, %v5331
      %v5333 = vpop.f32.mrf.mxu0
      %v5334 = vpop.f32.mrf.mxu0
      %v5335 = vadd.f32 0.0, %v5334
      %v5336 = vpop.f32.mrf.mxu0
      %5337 = vmatprep.mubr.bf16.mxu0 0
      %5338 = vmatmul.mubr.bf16.gmra.mxu0 %v5030
      %v5339 = vpop.f32.mrf.mxu0
      %v5340 = vadd.f32 0.0, %v5339
      %v5341 = vpop.f32.mrf.mxu0
      %v5342 = vpop.f32.mrf.mxu0
      %v5343 = vadd.f32 0.0, %v5342
      %v5344 = vpop.f32.mrf.mxu0
      %5345 = vmatprep.mubr.bf16.mxu0 0
      %5346 = vmatmul.mubr.bf16.gmra.mxu0 %v5033
      %v5347 = vpop.f32.mrf.mxu0
      %v5348 = vadd.f32 0.0, %v5347
      %v5349 = vpop.f32.mrf.mxu0
      %v5350 = vpop.f32.mrf.mxu0
      %v5351 = vadd.f32 0.0, %v5350
      %v5352 = vpop.f32.mrf.mxu0
      %5353 = vmatprep.mubr.bf16.mxu0 0
      %5354 = vmatmul.mubr.bf16.gmra.mxu0 %v5036
      %v5355 = vpop.f32.mrf.mxu0
      %v5356 = vadd.f32 0.0, %v5355
      %v5357 = vpop.f32.mrf.mxu0
      %v5358 = vpop.f32.mrf.mxu0
      %v5359 = vadd.f32 0.0, %v5358
      %v5360 = vpop.f32.mrf.mxu0
      %5361 = vmatprep.mubr.bf16.mxu0 0
      %5362 = vmatmul.mubr.bf16.gmra.mxu0 %v5039
      %v5363 = vpop.f32.mrf.mxu0
      %v5364 = vadd.f32 0.0, %v5363
      %v5365 = vpop.f32.mrf.mxu0
      %v5366 = vpop.f32.mrf.mxu0
      %v5367 = vadd.f32 0.0, %v5366
      %v5368 = vpop.f32.mrf.mxu0
      %5369 = vmatprep.mubr.bf16.mxu0 0
      %5370 = vmatmul.mubr.bf16.gmra.mxu0 %v5042
      %v5371 = vpop.f32.mrf.mxu0
      %v5372 = vadd.f32 0.0, %v5371
      %v5373 = vpop.f32.mrf.mxu0
      %v5374 = vpop.f32.mrf.mxu0
      %v5375 = vadd.f32 0.0, %v5374
      %v5376 = vpop.f32.mrf.mxu0
      %5377 = vmatprep.mubr.bf16.mxu0 0
      %5378 = vmatmul.mubr.bf16.gmra.mxu0 %v5045
      %v5379 = vpop.f32.mrf.mxu0
      %v5380 = vadd.f32 0.0, %v5379
      %v5381 = vpop.f32.mrf.mxu0
      %v5382 = vpop.f32.mrf.mxu0
      %v5383 = vadd.f32 0.0, %v5382
      %v5384 = vpop.f32.mrf.mxu0
      %5385 = vmatprep.mubr.bf16.mxu0 0
      %5386 = vmatmul.mubr.bf16.gmra.mxu0 %v5048
      %v5387 = vpop.f32.mrf.mxu0
      %v5388 = vadd.f32 0.0, %v5387
      %v5389 = vpop.f32.mrf.mxu0
      %v5390 = vpop.f32.mrf.mxu0
      %v5391 = vadd.f32 0.0, %v5390
      %v5392 = vpop.f32.mrf.mxu0
      %5393 = vmatprep.mubr.bf16.mxu0 0
      %5394 = vmatmul.mubr.bf16.gmra.mxu0 %v5051
      %v5395 = vpop.f32.mrf.mxu0
      %v5396 = vadd.f32 0.0, %v5395
      %v5397 = vpop.f32.mrf.mxu0
      %v5398 = vpop.f32.mrf.mxu0
      %v5399 = vadd.f32 0.0, %v5398
      %v5400 = vpop.f32.mrf.mxu0
      %5401 = vmatprep.mubr.bf16.mxu0 0
      %5402 = vmatmul.mubr.bf16.gmra.mxu0 %v5054
      %v5403 = vpop.f32.mrf.mxu0
      %v5404 = vadd.f32 0.0, %v5403
      %v5405 = vpop.f32.mrf.mxu0
      %v5406 = vpop.f32.mrf.mxu0
      %v5407 = vadd.f32 0.0, %v5406
      %v5408 = vpop.f32.mrf.mxu0
      %5409 = vmatprep.mubr.bf16.mxu0 0
      %5410 = vmatmul.mubr.bf16.gmra.mxu0 %v5057
      %v5411 = vpop.f32.mrf.mxu0
      %v5412 = vadd.f32 0.0, %v5411
      %v5413 = vpop.f32.mrf.mxu0
      %v5414 = vpop.f32.mrf.mxu0
      %v5415 = vadd.f32 0.0, %v5414
      %v5416 = vpop.f32.mrf.mxu0
      %5417 = vmatprep.mubr.bf16.mxu0 0
      %5418 = vmatmul.mubr.bf16.gmra.mxu0 %v5060
      %v5419 = vpop.f32.mrf.mxu0
      %v5420 = vadd.f32 0.0, %v5419
      %v5421 = vpop.f32.mrf.mxu0
      %v5422 = vpop.f32.mrf.mxu0
      %v5423 = vadd.f32 0.0, %v5422
      %v5424 = vpop.f32.mrf.mxu0
      %5425 = vmatprep.mubr.bf16.mxu0 0
      %5426 = vmatmul.mubr.bf16.gmra.mxu0 %v5063
      %v5427 = vpop.f32.mrf.mxu0
      %v5428 = vadd.f32 0.0, %v5427
      %v5429 = vpop.f32.mrf.mxu0
      %v5430 = vpop.f32.mrf.mxu0
      %v5431 = vadd.f32 0.0, %v5430
      %v5432 = vpop.f32.mrf.mxu0
      %5433 = vmatprep.mubr.bf16.mxu0 0
      %5434 = vmatmul.mubr.bf16.gmra.mxu0 %v5066
      %v5435 = vpop.f32.mrf.mxu0
      %v5436 = vadd.f32 0.0, %v5435
      %v5437 = vpop.f32.mrf.mxu0
      %v5438 = vpop.f32.mrf.mxu0
      %v5439 = vadd.f32 0.0, %v5438
      %v5440 = vpop.f32.mrf.mxu0
      %5441 = vmatprep.mubr.bf16.mxu0 0
      %5442 = vmatmul.mubr.bf16.gmra.mxu0 %v5069
      %v5443 = vpop.f32.mrf.mxu0
      %v5444 = vadd.f32 0.0, %v5443
      %v5445 = vpop.f32.mrf.mxu0
      %v5446 = vpop.f32.mrf.mxu0
      %v5447 = vadd.f32 0.0, %v5446
      %v5448 = vpop.f32.mrf.mxu0
      %5449 = vmatprep.mubr.bf16.mxu0 0
      %5450 = vmatmul.mubr.bf16.gmra.mxu0 %v5072
      %v5451 = vpop.f32.mrf.mxu0
      %v5452 = vadd.f32 0.0, %v5451
      %v5453 = vpop.f32.mrf.mxu0
      %v5454 = vpop.f32.mrf.mxu0
      %v5455 = vadd.f32 0.0, %v5454
      %v5456 = vpop.f32.mrf.mxu0
      %5457 = vmatprep.mubr.bf16.mxu0 0
      %5458 = vmatmul.mubr.bf16.gmra.mxu0 %v5075
      %v5459 = vpop.f32.mrf.mxu0
      %v5460 = vadd.f32 0.0, %v5459
      %v5461 = vpop.f32.mrf.mxu0
      %v5462 = vpop.f32.mrf.mxu0
      %v5463 = vadd.f32 0.0, %v5462
      %v5464 = vpop.f32.mrf.mxu0
      %5465 = vmatprep.mubr.bf16.mxu0 0
      %5466 = vmatmul.mubr.bf16.gmra.mxu0 %v5078
      %v5467 = vpop.f32.mrf.mxu0
      %v5468 = vadd.f32 0.0, %v5467
      %v5469 = vpop.f32.mrf.mxu0
      %v5470 = vpop.f32.mrf.mxu0
      %v5471 = vadd.f32 0.0, %v5470
      %v5472 = vpop.f32.mrf.mxu0
      %5473 = vmatprep.mubr.bf16.mxu0 0
      %5474 = vmatmul.mubr.bf16.gmra.mxu0 %v5081
      %v5475 = vpop.f32.mrf.mxu0
      %v5476 = vadd.f32 0.0, %v5475
      %v5477 = vpop.f32.mrf.mxu0
      %v5478 = vpop.f32.mrf.mxu0
      %v5479 = vadd.f32 0.0, %v5478
      %v5480 = vpop.f32.mrf.mxu0
      %5481 = vmatprep.mubr.bf16.mxu0 0
      %5482 = vmatmul.mubr.bf16.gmra.mxu0 %v5084
      %v5483 = vpop.f32.mrf.mxu0
      %v5484 = vadd.f32 0.0, %v5483
      %v5485 = vpop.f32.mrf.mxu0
      %v5486 = vpop.f32.mrf.mxu0
      %v5487 = vadd.f32 0.0, %v5486
      %v5488 = vpop.f32.mrf.mxu0
      %5489 = vmatprep.mubr.bf16.mxu0 0
      %5490 = vmatmul.mubr.bf16.gmra.mxu0 %v5087
      %v5491 = vpop.f32.mrf.mxu0
      %v5492 = vadd.f32 0.0, %v5491
      %v5493 = vpop.f32.mrf.mxu0
      %v5494 = vpop.f32.mrf.mxu0
      %v5495 = vadd.f32 0.0, %v5494
      %v5496 = vpop.f32.mrf.mxu0
      %5497 = vmatprep.mubr.bf16.mxu0 0
      %5498 = vmatmul.mubr.bf16.gmra.mxu0 %v5090
      %v5499 = vpop.f32.mrf.mxu0
      %v5500 = vadd.f32 0.0, %v5499
      %v5501 = vpop.f32.mrf.mxu0
      %v5502 = vpop.f32.mrf.mxu0
      %v5503 = vadd.f32 0.0, %v5502
      %v5504 = vpop.f32.mrf.mxu0
      %5505 = vmatprep.mubr.bf16.mxu0 0
      %5506 = vmatmul.mubr.bf16.gmra.mxu0 %v5093
      %v5507 = vpop.f32.mrf.mxu0
      %v5508 = vadd.f32 0.0, %v5507
      %v5509 = vpop.f32.mrf.mxu0
      %v5510 = vpop.f32.mrf.mxu0
      %v5511 = vadd.f32 0.0, %v5510
      %v5512 = vpop.f32.mrf.mxu0
      %5513 = vmatprep.mubr.bf16.mxu0 0
      %5514 = vmatmul.mubr.bf16.gmra.mxu0 %v5096
      %v5515 = vpop.f32.mrf.mxu0
      %v5516 = vadd.f32 0.0, %v5515
      %v5517 = vpop.f32.mrf.mxu0
      %v5518 = vpop.f32.mrf.mxu0
      %v5519 = vadd.f32 0.0, %v5518
      %v5520 = vpop.f32.mrf.mxu0
      %5521 = vmatprep.mubr.bf16.mxu0 0
      %5522 = vmatmul.mubr.bf16.gmra.mxu0 %v5099
      %v5523 = vpop.f32.mrf.mxu0
      %v5524 = vadd.f32 0.0, %v5523
      %v5525 = vpop.f32.mrf.mxu0
      %v5526 = vpop.f32.mrf.mxu0
      %v5527 = vadd.f32 0.0, %v5526
      %v5528 = vpop.f32.mrf.mxu0
      %5529 = vmatprep.mubr.bf16.mxu0 0
      %5530 = vmatmul.mubr.bf16.gmra.mxu0 %v5102
      %v5531 = vpop.f32.mrf.mxu0
      %v5532 = vadd.f32 0.0, %v5531
      %v5533 = vpop.f32.mrf.mxu0
      %v5534 = vpop.f32.mrf.mxu0
      %v5535 = vadd.f32 0.0, %v5534
      %v5536 = vpop.f32.mrf.mxu0
      %5537 = vmatprep.mubr.bf16.mxu0 0
      %5538 = vmatmul.mubr.bf16.gmra.mxu0 %v5105
      %v5539 = vpop.f32.mrf.mxu0
      %v5540 = vadd.f32 0.0, %v5539
      %v5541 = vpop.f32.mrf.mxu0
      %v5542 = vpop.f32.mrf.mxu0
      %v5543 = vadd.f32 0.0, %v5542
      %v5544 = vpop.f32.mrf.mxu0
      %5545 = vmatprep.mubr.bf16.mxu0 0
      %5546 = vmatmul.mubr.bf16.gmra.mxu0 %v5108
      %v5547 = vpop.f32.mrf.mxu0
      %v5548 = vadd.f32 0.0, %v5547
      %v5549 = vpop.f32.mrf.mxu0
      %v5550 = vpop.f32.mrf.mxu0
      %v5551 = vadd.f32 0.0, %v5550
      %v5552 = vpop.f32.mrf.mxu0
      %5553 = vmatprep.mubr.bf16.mxu0 0
      %5554 = vmatmul.mubr.bf16.gmra.mxu0 %v5111
      %v5555 = vpop.f32.mrf.mxu0
      %v5556 = vadd.f32 0.0, %v5555
      %v5557 = vpop.f32.mrf.mxu0
      %v5558 = vpop.f32.mrf.mxu0
      %v5559 = vadd.f32 0.0, %v5558
      %v5560 = vpop.f32.mrf.mxu0
      %5561 = vmatprep.mubr.bf16.mxu0 0
      %5562 = vmatmul.mubr.bf16.gmra.mxu0 %v5114
      %v5563 = vpop.f32.mrf.mxu0
      %v5564 = vadd.f32 0.0, %v5563
      %v5565 = vpop.f32.mrf.mxu0
      %v5566 = vpop.f32.mrf.mxu0
      %v5567 = vadd.f32 0.0, %v5566
      %v5568 = vpop.f32.mrf.mxu0
      %5569 = vmatprep.mubr.bf16.mxu0 0
      %5570 = vmatmul.mubr.bf16.gmra.mxu0 %v5117
      %v5571 = vpop.f32.mrf.mxu0
      %v5572 = vadd.f32 0.0, %v5571
      %v5573 = vpop.f32.mrf.mxu0
      %v5574 = vpop.f32.mrf.mxu0
      %v5575 = vadd.f32 0.0, %v5574
      %v5576 = vpop.f32.mrf.mxu0
      %5577 = vmatprep.mubr.bf16.mxu0 0
      %5578 = vmatmul.mubr.bf16.gmra.mxu0 %v5120
      %v5579 = vpop.f32.mrf.mxu0
      %v5580 = vadd.f32 0.0, %v5579
      %v5581 = vpop.f32.mrf.mxu0
      %v5582 = vpop.f32.mrf.mxu0
      %v5583 = vadd.f32 0.0, %v5582
      %v5584 = vpop.f32.mrf.mxu0
      %5585 = vmatprep.mubr.bf16.mxu0 0
      %5586 = vmatmul.mubr.bf16.gmra.mxu0 %v5123
      %v5587 = vpop.f32.mrf.mxu0
      %v5588 = vadd.f32 0.0, %v5587
      %v5589 = vpop.f32.mrf.mxu0
      %v5590 = vpop.f32.mrf.mxu0
      %v5591 = vadd.f32 0.0, %v5590
      %v5592 = vpop.f32.mrf.mxu0
      %5593 = vmatprep.mubr.bf16.mxu0 0
      %5594 = vmatmul.mubr.bf16.gmra.mxu0 %v5126
      %v5595 = vpop.f32.mrf.mxu0
      %v5596 = vadd.f32 0.0, %v5595
      %v5597 = vpop.f32.mrf.mxu0
      %v5598 = vpop.f32.mrf.mxu0
      %v5599 = vadd.f32 0.0, %v5598
      %v5600 = vpop.f32.mrf.mxu0
      %5601 = vmatprep.mubr.bf16.mxu0 0
      %5602 = vmatmul.mubr.bf16.gmra.mxu0 %v5129
      %v5603 = vpop.f32.mrf.mxu0
      %v5604 = vadd.f32 0.0, %v5603
      %v5605 = vpop.f32.mrf.mxu0
      %v5606 = vpop.f32.mrf.mxu0
      %v5607 = vadd.f32 0.0, %v5606
      %v5608 = vpop.f32.mrf.mxu0
      %5609 = vmatprep.mubr.bf16.mxu0 0
      %5610 = vmatmul.mubr.bf16.gmra.mxu0 %v5132
      %v5611 = vpop.f32.mrf.mxu0
      %v5612 = vadd.f32 0.0, %v5611
      %v5613 = vpop.f32.mrf.mxu0
      %v5614 = vpop.f32.mrf.mxu0
      %v5615 = vadd.f32 0.0, %v5614
      %v5616 = vpop.f32.mrf.mxu0
      %5617 = vmatprep.mubr.bf16.mxu0 0
      %5618 = vmatmul.mubr.bf16.gmra.mxu0 %v5135
      %v5619 = vpop.f32.mrf.mxu0
      %v5620 = vadd.f32 0.0, %v5619
      %v5621 = vpop.f32.mrf.mxu0
      %v5622 = vpop.f32.mrf.mxu0
      %v5623 = vadd.f32 0.0, %v5622
      %v5624 = vpop.f32.mrf.mxu0
      %5625 = vmatprep.mubr.bf16.mxu0 0
      %5626 = vmatmul.mubr.bf16.gmra.mxu0 %v5138
      %v5627 = vpop.f32.mrf.mxu0
      %v5628 = vadd.f32 0.0, %v5627
      %v5629 = vpop.f32.mrf.mxu0
      %v5630 = vpop.f32.mrf.mxu0
      %v5631 = vadd.f32 0.0, %v5630
      %v5632 = vpop.f32.mrf.mxu0
      %5633 = vmatprep.mubr.bf16.mxu0 0
      %5634 = vmatmul.mubr.bf16.gmra.mxu0 %v5141
      %v5635 = vpop.f32.mrf.mxu0
      %v5636 = vadd.f32 0.0, %v5635
      %v5637 = vpop.f32.mrf.mxu0
      %v5638 = vpop.f32.mrf.mxu0
      %v5639 = vadd.f32 0.0, %v5638
      %v5640 = vpop.f32.mrf.mxu0
      %5641 = vmatprep.mubr.bf16.mxu0 0
      %5642 = vmatmul.mubr.bf16.gmra.mxu0 %v5144
      %v5643 = vpop.f32.mrf.mxu0
      %v5644 = vadd.f32 0.0, %v5643
      %v5645 = vpop.f32.mrf.mxu0
      %v5646 = vpop.f32.mrf.mxu0
      %v5647 = vadd.f32 0.0, %v5646
      %v5648 = vpop.f32.mrf.mxu0
      %5649 = vmatprep.mubr.bf16.mxu0 0
      %5650 = vmatmul.mubr.bf16.gmra.mxu0 %v5147
      %v5651 = vpop.f32.mrf.mxu0
      %v5652 = vadd.f32 0.0, %v5651
      %v5653 = vpop.f32.mrf.mxu0
      %v5654 = vpop.f32.mrf.mxu0
      %v5655 = vadd.f32 0.0, %v5654
      %v5656 = vpop.f32.mrf.mxu0
      %5657 = vmatprep.mubr.bf16.mxu0 0
      %5658 = vmatmul.mubr.bf16.gmra.mxu0 %v5150
      %v5659 = vpop.f32.mrf.mxu0
      %v5660 = vadd.f32 0.0, %v5659
      %v5661 = vpop.f32.mrf.mxu0
      %v5662 = vpop.f32.mrf.mxu0
      %v5663 = vadd.f32 0.0, %v5662
      %v5664 = vpop.f32.mrf.mxu0
      %5665 = vmatprep.mubr.bf16.mxu0 0
      %5666 = vmatmul.mubr.bf16.gmra.mxu0 %v5153
      %v5667 = vpop.f32.mrf.mxu0
      %v5668 = vadd.f32 0.0, %v5667
      %v5669 = vpop.f32.mrf.mxu0
      %v5670 = vpop.f32.mrf.mxu0
      %v5671 = vadd.f32 0.0, %v5670
      %v5672 = vpop.f32.mrf.mxu0
      %5673 = vmatprep.mubr.bf16.mxu0 0
      %5674 = vmatmul.mubr.bf16.gmra.mxu0 %v5156
      %v5675 = vpop.f32.mrf.mxu0
      %v5676 = vadd.f32 0.0, %v5675
      %v5677 = vpop.f32.mrf.mxu0
      %v5678 = vpop.f32.mrf.mxu0
      %v5679 = vadd.f32 0.0, %v5678
      %v5680 = vpop.f32.mrf.mxu0
      %5681 = vmatprep.mubr.bf16.mxu0 0
      %5682 = vmatmul.mubr.bf16.gmra.mxu0 %v5159
      %v5683 = vpop.f32.mrf.mxu0
      %v5684 = vadd.f32 0.0, %v5683
      %v5685 = vpop.f32.mrf.mxu0
      %v5686 = vpop.f32.mrf.mxu0
      %v5687 = vadd.f32 0.0, %v5686
      %v5688 = vpop.f32.mrf.mxu0
      %5689 = vmatprep.mubr.bf16.mxu0 0
      %5690 = vmatmul.mubr.bf16.gmra.mxu0 %v5162
      %v5691 = vpop.f32.mrf.mxu0
      %v5692 = vadd.f32 0.0, %v5691
      %v5693 = vpop.f32.mrf.mxu0
      %v5694 = vpop.f32.mrf.mxu0
      %v5695 = vadd.f32 0.0, %v5694
      %v5696 = vpop.f32.mrf.mxu0
      %5697 = vmatprep.mubr.bf16.mxu0 0
      %5698 = vmatmul.mubr.bf16.gmra.mxu0 %v5165
      %v5699 = vpop.f32.mrf.mxu0
      %v5700 = vadd.f32 0.0, %v5699
      %v5701 = vpop.f32.mrf.mxu0
      %v5702 = vpop.f32.mrf.mxu0
      %v5703 = vadd.f32 0.0, %v5702
      %v5704 = vpop.f32.mrf.mxu0
      %5705 = vmatprep.mubr.bf16.mxu0 0
      %5706 = vmatmul.mubr.bf16.gmra.mxu0 %v5168
      %v5707 = vpop.f32.mrf.mxu0
      %v5708 = vadd.f32 0.0, %v5707
      %v5709 = vpop.f32.mrf.mxu0
      %v5710 = vpop.f32.mrf.mxu0
      %v5711 = vadd.f32 0.0, %v5710
      %v5712 = vpop.f32.mrf.mxu0
      %5713 = vmatprep.mubr.bf16.mxu0 0
      %5714 = vmatmul.mubr.bf16.gmra.mxu0 %v5171
      %v5715 = vpop.f32.mrf.mxu0
      %v5716 = vadd.f32 0.0, %v5715
      %v5717 = vpop.f32.mrf.mxu0
      %v5718 = vpop.f32.mrf.mxu0
      %v5719 = vadd.f32 0.0, %v5718
      %v5720 = vpop.f32.mrf.mxu0
      %5721 = vmatprep.mubr.bf16.mxu0 0
      %5722 = vmatmul.mubr.bf16.gmra.mxu0 %v5174
      %v5723 = vpop.f32.mrf.mxu0
      %v5724 = vadd.f32 0.0, %v5723
      %v5725 = vpop.f32.mrf.mxu0
      %v5726 = vpop.f32.mrf.mxu0
      %v5727 = vadd.f32 0.0, %v5726
      %v5728 = vpop.f32.mrf.mxu0
      %5729 = vmatprep.mubr.bf16.mxu0 0
      %5730 = vmatmul.mubr.bf16.gmra.mxu0 %v5177
      %v5731 = vpop.f32.mrf.mxu0
      %v5732 = vadd.f32 0.0, %v5731
      %v5733 = vpop.f32.mrf.mxu0
      %v5734 = vpop.f32.mrf.mxu0
      %v5735 = vadd.f32 0.0, %v5734
      %v5736 = vpop.f32.mrf.mxu0
      %5737 = vmatprep.mubr.bf16.mxu0 0
      %5738 = vmatmul.mubr.bf16.gmra.mxu0 %v5180
      %v5739 = vpop.f32.mrf.mxu0
      %v5740 = vadd.f32 0.0, %v5739
      %v5741 = vpop.f32.mrf.mxu0
      %v5742 = vpop.f32.mrf.mxu0
      %v5743 = vadd.f32 0.0, %v5742
      %v5744 = vpop.f32.mrf.mxu0
      %5745 = vmatprep.mubr.bf16.mxu0 0
      %5746 = vmatmul.mubr.bf16.gmra.mxu0 %v5183
      %v5747 = vpop.f32.mrf.mxu0
      %v5748 = vadd.f32 0.0, %v5747
      %v5749 = vpop.f32.mrf.mxu0
      %v5750 = vpop.f32.mrf.mxu0
      %v5751 = vadd.f32 0.0, %v5750
      %v5752 = vpop.f32.mrf.mxu0
      %5753 = vmatprep.mubr.bf16.mxu0 0
      %5754 = vmatmul.mubr.bf16.gmra.mxu0 %v5186
      %v5755 = vpop.f32.mrf.mxu0
      %v5756 = vadd.f32 0.0, %v5755
      %v5757 = vpop.f32.mrf.mxu0
      %v5758 = vpop.f32.mrf.mxu0
      %v5759 = vadd.f32 0.0, %v5758
      %v5760 = vpop.f32.mrf.mxu0
      %5761 = vmatprep.mubr.bf16.mxu0 0
      %5762 = vmatmul.mubr.bf16.gmra.mxu0 %v5189
      %v5763 = vpop.f32.mrf.mxu0
      %v5764 = vadd.f32 0.0, %v5763
      %v5765 = vpop.f32.mrf.mxu0
      %v5766 = vpop.f32.mrf.mxu0
      %v5767 = vadd.f32 0.0, %v5766
      %v5768 = vpop.f32.mrf.mxu0
      %5769 = vmatprep.mubr.bf16.mxu0 0
      %5770 = vmatmul.mubr.bf16.gmra.mxu0 %v5192
      %v5771 = vpop.f32.mrf.mxu0
      %v5772 = vadd.f32 0.0, %v5771
      %v5773 = vpop.f32.mrf.mxu0
      %v5774 = vpop.f32.mrf.mxu0
      %v5775 = vadd.f32 0.0, %v5774
      %v5776 = vpop.f32.mrf.mxu0
      %5777 = vmatprep.mubr.bf16.mxu0 0
      %5778 = vmatmul.mubr.bf16.gmra.mxu0 %v5195
      %v5779 = vpop.f32.mrf.mxu0
      %v5780 = vadd.f32 0.0, %v5779
      %v5781 = vpop.f32.mrf.mxu0
      %v5782 = vpop.f32.mrf.mxu0
      %v5783 = vadd.f32 0.0, %v5782
      %v5784 = vpop.f32.mrf.mxu0
      %5785 = vmatprep.mubr.bf16.mxu0 0
      %5786 = vmatmul.mubr.bf16.gmra.mxu0 %v5198
      %v5787 = vpop.f32.mrf.mxu0
      %v5788 = vadd.f32 0.0, %v5787
      %v5789 = vpop.f32.mrf.mxu0
      %v5790 = vpop.f32.mrf.mxu0
      %v5791 = vadd.f32 0.0, %v5790
      %v5792 = vpop.f32.mrf.mxu0
      %5793 = vmatprep.mubr.bf16.mxu0 0
      %5794 = vmatmul.mubr.bf16.gmra.mxu0 %v5201
      %v5795 = vpop.f32.mrf.mxu0
      %v5796 = vadd.f32 0.0, %v5795
      %v5797 = vpop.f32.mrf.mxu0
      %v5798 = vpop.f32.mrf.mxu0
      %v5799 = vadd.f32 0.0, %v5798
      %v5800 = vpop.f32.mrf.mxu0
      %5801 = vmatprep.mubr.bf16.mxu0 0
      %5802 = vmatmul.mubr.bf16.gmra.mxu0 %v5204
      %v5803 = vpop.f32.mrf.mxu0
      %v5804 = vadd.f32 0.0, %v5803
      %v5805 = vpop.f32.mrf.mxu0
      %v5806 = vpop.f32.mrf.mxu0
      %v5807 = vadd.f32 0.0, %v5806
      %v5808 = vpop.f32.mrf.mxu0
      %5809 = vmatprep.mubr.bf16.mxu0 0
      %5810 = vmatmul.mubr.bf16.gmra.mxu0 %v5207
      %v5811 = vpop.f32.mrf.mxu0
      %v5812 = vadd.f32 0.0, %v5811
      %v5813 = vpop.f32.mrf.mxu0
      %v5814 = vpop.f32.mrf.mxu0
      %v5815 = vadd.f32 0.0, %v5814
      %v5816 = vpop.f32.mrf.mxu0
      %5817 = vdwg.mxu0
      %vm5818 = vcmp.ge.f32.partialorder %v5308, 0.0
      %vm5819 = vcmp.ge.f32.partialorder %v5311, 0.0
      %vm5820 = vcmp.ge.f32.partialorder %v5316, 0.0
      %vm5821 = vcmp.ge.f32.partialorder %v5319, 0.0
      %vm5822 = vcmp.ge.f32.partialorder %v5324, 0.0
      %vm5823 = vcmp.ge.f32.partialorder %v5327, 0.0
      %vm5824 = vcmp.ge.f32.partialorder %v5332, 0.0
      %vm5825 = vcmp.ge.f32.partialorder %v5335, 0.0
      %vm5826 = vcmp.ge.f32.partialorder %v5340, 0.0
      %vm5827 = vcmp.ge.f32.partialorder %v5343, 0.0
      %vm5828 = vcmp.ge.f32.partialorder %v5348, 0.0
      %vm5829 = vcmp.ge.f32.partialorder %v5351, 0.0
      %vm5830 = vcmp.ge.f32.partialorder %v5356, 0.0
      %vm5831 = vcmp.ge.f32.partialorder %v5359, 0.0
      %vm5832 = vcmp.ge.f32.partialorder %v5364, 0.0
      %vm5833 = vcmp.ge.f32.partialorder %v5367, 0.0
      %vm5834 = vcmp.ge.f32.partialorder %v5372, 0.0
      %vm5835 = vcmp.ge.f32.partialorder %v5375, 0.0
      %vm5836 = vcmp.ge.f32.partialorder %v5380, 0.0
      %vm5837 = vcmp.ge.f32.partialorder %v5383, 0.0
      %vm5838 = vcmp.ge.f32.partialorder %v5388, 0.0
      %vm5839 = vcmp.ge.f32.partialorder %v5391, 0.0
      %vm5840 = vcmp.ge.f32.partialorder %v5396, 0.0
      %vm5841 = vcmp.ge.f32.partialorder %v5399, 0.0
      %vm5842 = vcmp.ge.f32.partialorder %v5404, 0.0
      %vm5843 = vcmp.ge.f32.partialorder %v5407, 0.0
      %vm5844 = vcmp.ge.f32.partialorder %v5412, 0.0
      %vm5845 = vcmp.ge.f32.partialorder %v5415, 0.0
      %vm5846 = vcmp.ge.f32.partialorder %v5420, 0.0
      %vm5847 = vcmp.ge.f32.partialorder %v5423, 0.0
      %vm5848 = vcmp.ge.f32.partialorder %v5428, 0.0
      %vm5849 = vcmp.ge.f32.partialorder %v5431, 0.0
      %vm5850 = vcmp.ge.f32.partialorder %v5436, 0.0
      %vm5851 = vcmp.ge.f32.partialorder %v5439, 0.0
      %vm5852 = vcmp.ge.f32.partialorder %v5444, 0.0
      %vm5853 = vcmp.ge.f32.partialorder %v5447, 0.0
      %vm5854 = vcmp.ge.f32.partialorder %v5452, 0.0
      %vm5855 = vcmp.ge.f32.partialorder %v5455, 0.0
      %vm5856 = vcmp.ge.f32.partialorder %v5460, 0.0
      %vm5857 = vcmp.ge.f32.partialorder %v5463, 0.0
      %vm5858 = vcmp.ge.f32.partialorder %v5468, 0.0
      %vm5859 = vcmp.ge.f32.partialorder %v5471, 0.0
      %vm5860 = vcmp.ge.f32.partialorder %v5476, 0.0
      %vm5861 = vcmp.ge.f32.partialorder %v5479, 0.0
      %vm5862 = vcmp.ge.f32.partialorder %v5484, 0.0
      %vm5863 = vcmp.ge.f32.partialorder %v5487, 0.0
      %vm5864 = vcmp.ge.f32.partialorder %v5492, 0.0
      %vm5865 = vcmp.ge.f32.partialorder %v5495, 0.0
      %vm5866 = vcmp.ge.f32.partialorder %v5500, 0.0
      %vm5867 = vcmp.ge.f32.partialorder %v5503, 0.0
      %vm5868 = vcmp.ge.f32.partialorder %v5508, 0.0
      %vm5869 = vcmp.ge.f32.partialorder %v5511, 0.0
      %vm5870 = vcmp.ge.f32.partialorder %v5516, 0.0
      %vm5871 = vcmp.ge.f32.partialorder %v5519, 0.0
      %vm5872 = vcmp.ge.f32.partialorder %v5524, 0.0
      %vm5873 = vcmp.ge.f32.partialorder %v5527, 0.0
      %vm5874 = vcmp.ge.f32.partialorder %v5532, 0.0
      %vm5875 = vcmp.ge.f32.partialorder %v5535, 0.0
      %vm5876 = vcmp.ge.f32.partialorder %v5540, 0.0
      %vm5877 = vcmp.ge.f32.partialorder %v5543, 0.0
      %vm5878 = vcmp.ge.f32.partialorder %v5548, 0.0
      %vm5879 = vcmp.ge.f32.partialorder %v5551, 0.0
      %vm5880 = vcmp.ge.f32.partialorder %v5556, 0.0
      %vm5881 = vcmp.ge.f32.partialorder %v5559, 0.0
      %vm5882 = vcmp.ge.f32.partialorder %v5564, 0.0
      %vm5883 = vcmp.ge.f32.partialorder %v5567, 0.0
      %vm5884 = vcmp.ge.f32.partialorder %v5572, 0.0
      %vm5885 = vcmp.ge.f32.partialorder %v5575, 0.0
      %vm5886 = vcmp.ge.f32.partialorder %v5580, 0.0
      %vm5887 = vcmp.ge.f32.partialorder %v5583, 0.0
      %vm5888 = vcmp.ge.f32.partialorder %v5588, 0.0
      %vm5889 = vcmp.ge.f32.partialorder %v5591, 0.0
      %vm5890 = vcmp.ge.f32.partialorder %v5596, 0.0
      %vm5891 = vcmp.ge.f32.partialorder %v5599, 0.0
      %vm5892 = vcmp.ge.f32.partialorder %v5604, 0.0
      %vm5893 = vcmp.ge.f32.partialorder %v5607, 0.0
      %vm5894 = vcmp.ge.f32.partialorder %v5612, 0.0
      %vm5895 = vcmp.ge.f32.partialorder %v5615, 0.0
      %vm5896 = vcmp.ge.f32.partialorder %v5620, 0.0
      %vm5897 = vcmp.ge.f32.partialorder %v5623, 0.0
      %vm5898 = vcmp.ge.f32.partialorder %v5628, 0.0
      %vm5899 = vcmp.ge.f32.partialorder %v5631, 0.0
      %vm5900 = vcmp.ge.f32.partialorder %v5636, 0.0
      %vm5901 = vcmp.ge.f32.partialorder %v5639, 0.0
      %vm5902 = vcmp.ge.f32.partialorder %v5644, 0.0
      %vm5903 = vcmp.ge.f32.partialorder %v5647, 0.0
      %vm5904 = vcmp.ge.f32.partialorder %v5652, 0.0
      %vm5905 = vcmp.ge.f32.partialorder %v5655, 0.0
      %vm5906 = vcmp.ge.f32.partialorder %v5660, 0.0
      %vm5907 = vcmp.ge.f32.partialorder %v5663, 0.0
      %vm5908 = vcmp.ge.f32.partialorder %v5668, 0.0
      %vm5909 = vcmp.ge.f32.partialorder %v5671, 0.0
      %vm5910 = vcmp.ge.f32.partialorder %v5676, 0.0
      %vm5911 = vcmp.ge.f32.partialorder %v5679, 0.0
      %vm5912 = vcmp.ge.f32.partialorder %v5684, 0.0
      %vm5913 = vcmp.ge.f32.partialorder %v5687, 0.0
      %vm5914 = vcmp.ge.f32.partialorder %v5692, 0.0
      %vm5915 = vcmp.ge.f32.partialorder %v5695, 0.0
      %vm5916 = vcmp.ge.f32.partialorder %v5700, 0.0
      %vm5917 = vcmp.ge.f32.partialorder %v5703, 0.0
      %vm5918 = vcmp.ge.f32.partialorder %v5708, 0.0
      %vm5919 = vcmp.ge.f32.partialorder %v5711, 0.0
      %vm5920 = vcmp.ge.f32.partialorder %v5716, 0.0
      %vm5921 = vcmp.ge.f32.partialorder %v5719, 0.0
      %vm5922 = vcmp.ge.f32.partialorder %v5724, 0.0
      %vm5923 = vcmp.ge.f32.partialorder %v5727, 0.0
      %vm5924 = vcmp.ge.f32.partialorder %v5732, 0.0
      %vm5925 = vcmp.ge.f32.partialorder %v5735, 0.0
      %vm5926 = vcmp.ge.f32.partialorder %v5740, 0.0
      %vm5927 = vcmp.ge.f32.partialorder %v5743, 0.0
      %vm5928 = vcmp.ge.f32.partialorder %v5748, 0.0
      %vm5929 = vcmp.ge.f32.partialorder %v5751, 0.0
      %vm5930 = vcmp.ge.f32.partialorder %v5756, 0.0
      %vm5931 = vcmp.ge.f32.partialorder %v5759, 0.0
      %vm5932 = vcmp.ge.f32.partialorder %v5764, 0.0
      %vm5933 = vcmp.ge.f32.partialorder %v5767, 0.0
      %vm5934 = vcmp.ge.f32.partialorder %v5772, 0.0
      %vm5935 = vcmp.ge.f32.partialorder %v5775, 0.0
      %vm5936 = vcmp.ge.f32.partialorder %v5780, 0.0
      %vm5937 = vcmp.ge.f32.partialorder %v5783, 0.0
      %vm5938 = vcmp.ge.f32.partialorder %v5788, 0.0
      %vm5939 = vcmp.ge.f32.partialorder %v5791, 0.0
      %vm5940 = vcmp.ge.f32.partialorder %v5796, 0.0
      %vm5941 = vcmp.ge.f32.partialorder %v5799, 0.0
      %vm5942 = vcmp.ge.f32.partialorder %v5804, 0.0
      %vm5943 = vcmp.ge.f32.partialorder %v5807, 0.0
      %vm5944 = vcmp.ge.f32.partialorder %v5812, 0.0
      %vm5945 = vcmp.ge.f32.partialorder %v5815, 0.0
      %v5946 = vmul.f32 %v5308, 0.2
      %v5947 = vmul.f32 %v5311, 0.2
      %v5948 = vmul.f32 %v5316, 0.2
      %v5949 = vmul.f32 %v5319, 0.2
      %v5950 = vmul.f32 %v5324, 0.2
      %v5951 = vmul.f32 %v5327, 0.2
      %v5952 = vmul.f32 %v5332, 0.2
      %v5953 = vmul.f32 %v5335, 0.2
      %v5954 = vmul.f32 %v5340, 0.2
      %v5955 = vmul.f32 %v5343, 0.2
      %v5956 = vmul.f32 %v5348, 0.2
      %v5957 = vmul.f32 %v5351, 0.2
      %v5958 = vmul.f32 %v5356, 0.2
      %v5959 = vmul.f32 %v5359, 0.2
      %v5960 = vmul.f32 %v5364, 0.2
      %v5961 = vmul.f32 %v5367, 0.2
      %v5962 = vmul.f32 %v5372, 0.2
      %v5963 = vmul.f32 %v5375, 0.2
      %v5964 = vmul.f32 %v5380, 0.2
      %v5965 = vmul.f32 %v5383, 0.2
      %v5966 = vmul.f32 %v5388, 0.2
      %v5967 = vmul.f32 %v5391, 0.2
      %v5968 = vmul.f32 %v5396, 0.2
      %v5969 = vmul.f32 %v5399, 0.2
      %v5970 = vmul.f32 %v5404, 0.2
      %v5971 = vmul.f32 %v5407, 0.2
      %v5972 = vmul.f32 %v5412, 0.2
      %v5973 = vmul.f32 %v5415, 0.2
      %v5974 = vmul.f32 %v5420, 0.2
      %v5975 = vmul.f32 %v5423, 0.2
      %v5976 = vmul.f32 %v5428, 0.2
      %v5977 = vmul.f32 %v5431, 0.2
      %v5978 = vmul.f32 %v5436, 0.2
      %v5979 = vmul.f32 %v5439, 0.2
      %v5980 = vmul.f32 %v5444, 0.2
      %v5981 = vmul.f32 %v5447, 0.2
      %v5982 = vmul.f32 %v5452, 0.2
      %v5983 = vmul.f32 %v5455, 0.2
      %v5984 = vmul.f32 %v5460, 0.2
      %v5985 = vmul.f32 %v5463, 0.2
      %v5986 = vmul.f32 %v5468, 0.2
      %v5987 = vmul.f32 %v5471, 0.2
      %v5988 = vmul.f32 %v5476, 0.2
      %v5989 = vmul.f32 %v5479, 0.2
      %v5990 = vmul.f32 %v5484, 0.2
      %v5991 = vmul.f32 %v5487, 0.2
      %v5992 = vmul.f32 %v5492, 0.2
      %v5993 = vmul.f32 %v5495, 0.2
      %v5994 = vmul.f32 %v5500, 0.2
      %v5995 = vmul.f32 %v5503, 0.2
      %v5996 = vmul.f32 %v5508, 0.2
      %v5997 = vmul.f32 %v5511, 0.2
      %v5998 = vmul.f32 %v5516, 0.2
      %v5999 = vmul.f32 %v5519, 0.2
      %v6000 = vmul.f32 %v5524, 0.2
      %v6001 = vmul.f32 %v5527, 0.2
      %v6002 = vmul.f32 %v5532, 0.2
      %v6003 = vmul.f32 %v5535, 0.2
      %v6004 = vmul.f32 %v5540, 0.2
      %v6005 = vmul.f32 %v5543, 0.2
      %v6006 = vmul.f32 %v5548, 0.2
      %v6007 = vmul.f32 %v5551, 0.2
      %v6008 = vmul.f32 %v5556, 0.2
      %v6009 = vmul.f32 %v5559, 0.2
      %v6010 = vmul.f32 %v5564, 0.2
      %v6011 = vmul.f32 %v5567, 0.2
      %v6012 = vmul.f32 %v5572, 0.2
      %v6013 = vmul.f32 %v5575, 0.2
      %v6014 = vmul.f32 %v5580, 0.2
      %v6015 = vmul.f32 %v5583, 0.2
      %v6016 = vmul.f32 %v5588, 0.2
      %v6017 = vmul.f32 %v5591, 0.2
      %v6018 = vmul.f32 %v5596, 0.2
      %v6019 = vmul.f32 %v5599, 0.2
      %v6020 = vmul.f32 %v5604, 0.2
      %v6021 = vmul.f32 %v5607, 0.2
      %v6022 = vmul.f32 %v5612, 0.2
      %v6023 = vmul.f32 %v5615, 0.2
      %v6024 = vmul.f32 %v5620, 0.2
      %v6025 = vmul.f32 %v5623, 0.2
      %v6026 = vmul.f32 %v5628, 0.2
      %v6027 = vmul.f32 %v5631, 0.2
      %v6028 = vmul.f32 %v5636, 0.2
      %v6029 = vmul.f32 %v5639, 0.2
      %v6030 = vmul.f32 %v5644, 0.2
      %v6031 = vmul.f32 %v5647, 0.2
      %v6032 = vmul.f32 %v5652, 0.2
      %v6033 = vmul.f32 %v5655, 0.2
      %v6034 = vmul.f32 %v5660, 0.2
      %v6035 = vmul.f32 %v5663, 0.2
      %v6036 = vmul.f32 %v5668, 0.2
      %v6037 = vmul.f32 %v5671, 0.2
      %v6038 = vmul.f32 %v5676, 0.2
      %v6039 = vmul.f32 %v5679, 0.2
      %v6040 = vmul.f32 %v5684, 0.2
      %v6041 = vmul.f32 %v5687, 0.2
      %v6042 = vmul.f32 %v5692, 0.2
      %v6043 = vmul.f32 %v5695, 0.2
      %v6044 = vmul.f32 %v5700, 0.2
      %v6045 = vmul.f32 %v5703, 0.2
      %v6046 = vmul.f32 %v5708, 0.2
      %v6047 = vmul.f32 %v5711, 0.2
      %v6048 = vmul.f32 %v5716, 0.2
      %v6049 = vmul.f32 %v5719, 0.2
      %v6050 = vmul.f32 %v5724, 0.2
      %v6051 = vmul.f32 %v5727, 0.2
      %v6052 = vmul.f32 %v5732, 0.2
      %v6053 = vmul.f32 %v5735, 0.2
      %v6054 = vmul.f32 %v5740, 0.2
      %v6055 = vmul.f32 %v5743, 0.2
      %v6056 = vmul.f32 %v5748, 0.2
      %v6057 = vmul.f32 %v5751, 0.2
      %v6058 = vmul.f32 %v5756, 0.2
      %v6059 = vmul.f32 %v5759, 0.2
      %v6060 = vmul.f32 %v5764, 0.2
      %v6061 = vmul.f32 %v5767, 0.2
      %v6062 = vmul.f32 %v5772, 0.2
      %v6063 = vmul.f32 %v5775, 0.2
      %v6064 = vmul.f32 %v5780, 0.2
      %v6065 = vmul.f32 %v5783, 0.2
      %v6066 = vmul.f32 %v5788, 0.2
      %v6067 = vmul.f32 %v5791, 0.2
      %v6068 = vmul.f32 %v5796, 0.2
      %v6069 = vmul.f32 %v5799, 0.2
      %v6070 = vmul.f32 %v5804, 0.2
      %v6071 = vmul.f32 %v5807, 0.2
      %v6072 = vmul.f32 %v5812, 0.2
      %v6073 = vmul.f32 %v5815, 0.2
      %v6074 = vsel %vm5818, %v5308, %v5946
      %v6075 = vsel %vm5819, %v5311, %v5947
      %v6076 = vsel %vm5820, %v5316, %v5948
      %v6077 = vsel %vm5821, %v5319, %v5949
      %v6078 = vsel %vm5822, %v5324, %v5950
      %v6079 = vsel %vm5823, %v5327, %v5951
      %v6080 = vsel %vm5824, %v5332, %v5952
      %v6081 = vsel %vm5825, %v5335, %v5953
      %v6082 = vsel %vm5826, %v5340, %v5954
      %v6083 = vsel %vm5827, %v5343, %v5955
      %v6084 = vsel %vm5828, %v5348, %v5956
      %v6085 = vsel %vm5829, %v5351, %v5957
      %v6086 = vsel %vm5830, %v5356, %v5958
      %v6087 = vsel %vm5831, %v5359, %v5959
      %v6088 = vsel %vm5832, %v5364, %v5960
      %v6089 = vsel %vm5833, %v5367, %v5961
      %v6090 = vsel %vm5834, %v5372, %v5962
      %v6091 = vsel %vm5835, %v5375, %v5963
      %v6092 = vsel %vm5836, %v5380, %v5964
      %v6093 = vsel %vm5837, %v5383, %v5965
      %v6094 = vsel %vm5838, %v5388, %v5966
      %v6095 = vsel %vm5839, %v5391, %v5967
      %v6096 = vsel %vm5840, %v5396, %v5968
      %v6097 = vsel %vm5841, %v5399, %v5969
      %v6098 = vsel %vm5842, %v5404, %v5970
      %v6099 = vsel %vm5843, %v5407, %v5971
      %v6100 = vsel %vm5844, %v5412, %v5972
      %v6101 = vsel %vm5845, %v5415, %v5973
      %v6102 = vsel %vm5846, %v5420, %v5974
      %v6103 = vsel %vm5847, %v5423, %v5975
      %v6104 = vsel %vm5848, %v5428, %v5976
      %v6105 = vsel %vm5849, %v5431, %v5977
      %v6106 = vsel %vm5850, %v5436, %v5978
      %v6107 = vsel %vm5851, %v5439, %v5979
      %v6108 = vsel %vm5852, %v5444, %v5980
      %v6109 = vsel %vm5853, %v5447, %v5981
      %v6110 = vsel %vm5854, %v5452, %v5982
      %v6111 = vsel %vm5855, %v5455, %v5983
      %v6112 = vsel %vm5856, %v5460, %v5984
      %v6113 = vsel %vm5857, %v5463, %v5985
      %v6114 = vsel %vm5858, %v5468, %v5986
      %v6115 = vsel %vm5859, %v5471, %v5987
      %v6116 = vsel %vm5860, %v5476, %v5988
      %v6117 = vsel %vm5861, %v5479, %v5989
      %v6118 = vsel %vm5862, %v5484, %v5990
      %v6119 = vsel %vm5863, %v5487, %v5991
      %v6120 = vsel %vm5864, %v5492, %v5992
      %v6121 = vsel %vm5865, %v5495, %v5993
      %v6122 = vsel %vm5866, %v5500, %v5994
      %v6123 = vsel %vm5867, %v5503, %v5995
      %v6124 = vsel %vm5868, %v5508, %v5996
      %v6125 = vsel %vm5869, %v5511, %v5997
      %v6126 = vsel %vm5870, %v5516, %v5998
      %v6127 = vsel %vm5871, %v5519, %v5999
      %v6128 = vsel %vm5872, %v5524, %v6000
      %v6129 = vsel %vm5873, %v5527, %v6001
      %v6130 = vsel %vm5874, %v5532, %v6002
      %v6131 = vsel %vm5875, %v5535, %v6003
      %v6132 = vsel %vm5876, %v5540, %v6004
      %v6133 = vsel %vm5877, %v5543, %v6005
      %v6134 = vsel %vm5878, %v5548, %v6006
      %v6135 = vsel %vm5879, %v5551, %v6007
      %v6136 = vsel %vm5880, %v5556, %v6008
      %v6137 = vsel %vm5881, %v5559, %v6009
      %v6138 = vsel %vm5882, %v5564, %v6010
      %v6139 = vsel %vm5883, %v5567, %v6011
      %v6140 = vsel %vm5884, %v5572, %v6012
      %v6141 = vsel %vm5885, %v5575, %v6013
      %v6142 = vsel %vm5886, %v5580, %v6014
      %v6143 = vsel %vm5887, %v5583, %v6015
      %v6144 = vsel %vm5888, %v5588, %v6016
      %v6145 = vsel %vm5889, %v5591, %v6017
      %v6146 = vsel %vm5890, %v5596, %v6018
      %v6147 = vsel %vm5891, %v5599, %v6019
      %v6148 = vsel %vm5892, %v5604, %v6020
      %v6149 = vsel %vm5893, %v5607, %v6021
      %v6150 = vsel %vm5894, %v5612, %v6022
      %v6151 = vsel %vm5895, %v5615, %v6023
      %v6152 = vsel %vm5896, %v5620, %v6024
      %v6153 = vsel %vm5897, %v5623, %v6025
      %v6154 = vsel %vm5898, %v5628, %v6026
      %v6155 = vsel %vm5899, %v5631, %v6027
      %v6156 = vsel %vm5900, %v5636, %v6028
      %v6157 = vsel %vm5901, %v5639, %v6029
      %v6158 = vsel %vm5902, %v5644, %v6030
      %v6159 = vsel %vm5903, %v5647, %v6031
      %v6160 = vsel %vm5904, %v5652, %v6032
      %v6161 = vsel %vm5905, %v5655, %v6033
      %v6162 = vsel %vm5906, %v5660, %v6034
      %v6163 = vsel %vm5907, %v5663, %v6035
      %v6164 = vsel %vm5908, %v5668, %v6036
      %v6165 = vsel %vm5909, %v5671, %v6037
      %v6166 = vsel %vm5910, %v5676, %v6038
      %v6167 = vsel %vm5911, %v5679, %v6039
      %v6168 = vsel %vm5912, %v5684, %v6040
      %v6169 = vsel %vm5913, %v5687, %v6041
      %v6170 = vsel %vm5914, %v5692, %v6042
      %v6171 = vsel %vm5915, %v5695, %v6043
      %v6172 = vsel %vm5916, %v5700, %v6044
      %v6173 = vsel %vm5917, %v5703, %v6045
      %v6174 = vsel %vm5918, %v5708, %v6046
      %v6175 = vsel %vm5919, %v5711, %v6047
      %v6176 = vsel %vm5920, %v5716, %v6048
      %v6177 = vsel %vm5921, %v5719, %v6049
      %v6178 = vsel %vm5922, %v5724, %v6050
      %v6179 = vsel %vm5923, %v5727, %v6051
      %v6180 = vsel %vm5924, %v5732, %v6052
      %v6181 = vsel %vm5925, %v5735, %v6053
      %v6182 = vsel %vm5926, %v5740, %v6054
      %v6183 = vsel %vm5927, %v5743, %v6055
      %v6184 = vsel %vm5928, %v5748, %v6056
      %v6185 = vsel %vm5929, %v5751, %v6057
      %v6186 = vsel %vm5930, %v5756, %v6058
      %v6187 = vsel %vm5931, %v5759, %v6059
      %v6188 = vsel %vm5932, %v5764, %v6060
      %v6189 = vsel %vm5933, %v5767, %v6061
      %v6190 = vsel %vm5934, %v5772, %v6062
      %v6191 = vsel %vm5935, %v5775, %v6063
      %v6192 = vsel %vm5936, %v5780, %v6064
      %v6193 = vsel %vm5937, %v5783, %v6065
      %v6194 = vsel %vm5938, %v5788, %v6066
      %v6195 = vsel %vm5939, %v5791, %v6067
      %v6196 = vsel %vm5940, %v5796, %v6068
      %v6197 = vsel %vm5941, %v5799, %v6069
      %v6198 = vsel %vm5942, %v5804, %v6070
      %v6199 = vsel %vm5943, %v5807, %v6071
      %v6200 = vsel %vm5944, %v5812, %v6072
      %v6201 = vsel %vm5945, %v5815, %v6073
      %v6202 = vpack.c.bf16 %v6075, %v6074
      %v6203 = vpack.c.bf16 %v6077, %v6076
      %v6204 = vpack.c.bf16 %v6079, %v6078
      %v6205 = vpack.c.bf16 %v6081, %v6080
      %v6206 = vpack.c.bf16 %v6083, %v6082
      %v6207 = vpack.c.bf16 %v6085, %v6084
      %v6208 = vpack.c.bf16 %v6087, %v6086
      %v6209 = vpack.c.bf16 %v6089, %v6088
      %v6210 = vpack.c.bf16 %v6091, %v6090
      %v6211 = vpack.c.bf16 %v6093, %v6092
      %v6212 = vpack.c.bf16 %v6095, %v6094
      %v6213 = vpack.c.bf16 %v6097, %v6096
      %v6214 = vpack.c.bf16 %v6099, %v6098
      %v6215 = vpack.c.bf16 %v6101, %v6100
      %v6216 = vpack.c.bf16 %v6103, %v6102
      %v6217 = vpack.c.bf16 %v6105, %v6104
      %v6218 = vpack.c.bf16 %v6107, %v6106
      %v6219 = vpack.c.bf16 %v6109, %v6108
      %v6220 = vpack.c.bf16 %v6111, %v6110
      %v6221 = vpack.c.bf16 %v6113, %v6112
      %v6222 = vpack.c.bf16 %v6115, %v6114
      %v6223 = vpack.c.bf16 %v6117, %v6116
      %v6224 = vpack.c.bf16 %v6119, %v6118
      %v6225 = vpack.c.bf16 %v6121, %v6120
      %v6226 = vpack.c.bf16 %v6123, %v6122
      %v6227 = vpack.c.bf16 %v6125, %v6124
      %v6228 = vpack.c.bf16 %v6127, %v6126
      %v6229 = vpack.c.bf16 %v6129, %v6128
      %v6230 = vpack.c.bf16 %v6131, %v6130
      %v6231 = vpack.c.bf16 %v6133, %v6132
      %v6232 = vpack.c.bf16 %v6135, %v6134
      %v6233 = vpack.c.bf16 %v6137, %v6136
      %v6234 = vpack.c.bf16 %v6139, %v6138
      %v6235 = vpack.c.bf16 %v6141, %v6140
      %v6236 = vpack.c.bf16 %v6143, %v6142
      %v6237 = vpack.c.bf16 %v6145, %v6144
      %v6238 = vpack.c.bf16 %v6147, %v6146
      %v6239 = vpack.c.bf16 %v6149, %v6148
      %v6240 = vpack.c.bf16 %v6151, %v6150
      %v6241 = vpack.c.bf16 %v6153, %v6152
      %v6242 = vpack.c.bf16 %v6155, %v6154
      %v6243 = vpack.c.bf16 %v6157, %v6156
      %v6244 = vpack.c.bf16 %v6159, %v6158
      %v6245 = vpack.c.bf16 %v6161, %v6160
      %v6246 = vpack.c.bf16 %v6163, %v6162
      %v6247 = vpack.c.bf16 %v6165, %v6164
      %v6248 = vpack.c.bf16 %v6167, %v6166
      %v6249 = vpack.c.bf16 %v6169, %v6168
      %v6250 = vpack.c.bf16 %v6171, %v6170
      %v6251 = vpack.c.bf16 %v6173, %v6172
      %v6252 = vpack.c.bf16 %v6175, %v6174
      %v6253 = vpack.c.bf16 %v6177, %v6176
      %v6254 = vpack.c.bf16 %v6179, %v6178
      %v6255 = vpack.c.bf16 %v6181, %v6180
      %v6256 = vpack.c.bf16 %v6183, %v6182
      %v6257 = vpack.c.bf16 %v6185, %v6184
      %v6258 = vpack.c.bf16 %v6187, %v6186
      %v6259 = vpack.c.bf16 %v6189, %v6188
      %v6260 = vpack.c.bf16 %v6191, %v6190
      %v6261 = vpack.c.bf16 %v6193, %v6192
      %v6262 = vpack.c.bf16 %v6195, %v6194
      %v6263 = vpack.c.bf16 %v6197, %v6196
      %v6264 = vpack.c.bf16 %v6199, %v6198
      %v6265 = vpack.c.bf16 %v6201, %v6200
      %v6330 = vunpack.c.l.b16 %v6202
      %v6331 = vunpack.c.h.b16 %v6202
      %v6332 = vunpack.c.l.b16 %v6203
      %v6333 = vunpack.c.h.b16 %v6203
      %v6334 = vunpack.c.l.b16 %v6204
      %v6335 = vunpack.c.h.b16 %v6204
      %v6336 = vunpack.c.l.b16 %v6205
      %v6337 = vunpack.c.h.b16 %v6205
      %v6338 = vunpack.c.l.b16 %v6206
      %v6339 = vunpack.c.h.b16 %v6206
      %v6340 = vunpack.c.l.b16 %v6207
      %v6341 = vunpack.c.h.b16 %v6207
      %v6342 = vunpack.c.l.b16 %v6208
      %v6343 = vunpack.c.h.b16 %v6208
      %v6344 = vunpack.c.l.b16 %v6209
      %v6345 = vunpack.c.h.b16 %v6209
      %v6346 = vunpack.c.l.b16 %v6210
      %v6347 = vunpack.c.h.b16 %v6210
      %v6348 = vunpack.c.l.b16 %v6211
      %v6349 = vunpack.c.h.b16 %v6211
      %v6350 = vunpack.c.l.b16 %v6212
      %v6351 = vunpack.c.h.b16 %v6212
      %v6352 = vunpack.c.l.b16 %v6213
      %v6353 = vunpack.c.h.b16 %v6213
      %v6354 = vunpack.c.l.b16 %v6214
      %v6355 = vunpack.c.h.b16 %v6214
      %v6356 = vunpack.c.l.b16 %v6215
      %v6357 = vunpack.c.h.b16 %v6215
      %v6358 = vunpack.c.l.b16 %v6216
      %v6359 = vunpack.c.h.b16 %v6216
      %v6360 = vunpack.c.l.b16 %v6217
      %v6361 = vunpack.c.h.b16 %v6217
      %v6362 = vunpack.c.l.b16 %v6218
      %v6363 = vunpack.c.h.b16 %v6218
      %v6364 = vunpack.c.l.b16 %v6219
      %v6365 = vunpack.c.h.b16 %v6219
      %v6366 = vunpack.c.l.b16 %v6220
      %v6367 = vunpack.c.h.b16 %v6220
      %v6368 = vunpack.c.l.b16 %v6221
      %v6369 = vunpack.c.h.b16 %v6221
      %v6370 = vunpack.c.l.b16 %v6222
      %v6371 = vunpack.c.h.b16 %v6222
      %v6372 = vunpack.c.l.b16 %v6223
      %v6373 = vunpack.c.h.b16 %v6223
      %v6374 = vunpack.c.l.b16 %v6224
      %v6375 = vunpack.c.h.b16 %v6224
      %v6376 = vunpack.c.l.b16 %v6225
      %v6377 = vunpack.c.h.b16 %v6225
      %v6378 = vunpack.c.l.b16 %v6226
      %v6379 = vunpack.c.h.b16 %v6226
      %v6380 = vunpack.c.l.b16 %v6227
      %v6381 = vunpack.c.h.b16 %v6227
      %v6382 = vunpack.c.l.b16 %v6228
      %v6383 = vunpack.c.h.b16 %v6228
      %v6384 = vunpack.c.l.b16 %v6229
      %v6385 = vunpack.c.h.b16 %v6229
      %v6386 = vunpack.c.l.b16 %v6230
      %v6387 = vunpack.c.h.b16 %v6230
      %v6388 = vunpack.c.l.b16 %v6231
      %v6389 = vunpack.c.h.b16 %v6231
      %v6390 = vunpack.c.l.b16 %v6232
      %v6391 = vunpack.c.h.b16 %v6232
      %v6392 = vunpack.c.l.b16 %v6233
      %v6393 = vunpack.c.h.b16 %v6233
      %v6394 = vunpack.c.l.b16 %v6234
      %v6395 = vunpack.c.h.b16 %v6234
      %v6396 = vunpack.c.l.b16 %v6235
      %v6397 = vunpack.c.h.b16 %v6235
      %v6398 = vunpack.c.l.b16 %v6236
      %v6399 = vunpack.c.h.b16 %v6236
      %v6400 = vunpack.c.l.b16 %v6237
      %v6401 = vunpack.c.h.b16 %v6237
      %v6402 = vunpack.c.l.b16 %v6238
      %v6403 = vunpack.c.h.b16 %v6238
      %v6404 = vunpack.c.l.b16 %v6239
      %v6405 = vunpack.c.h.b16 %v6239
      %v6406 = vunpack.c.l.b16 %v6240
      %v6407 = vunpack.c.h.b16 %v6240
      %v6408 = vunpack.c.l.b16 %v6241
      %v6409 = vunpack.c.h.b16 %v6241
      %v6410 = vunpack.c.l.b16 %v6242
      %v6411 = vunpack.c.h.b16 %v6242
      %v6412 = vunpack.c.l.b16 %v6243
      %v6413 = vunpack.c.h.b16 %v6243
      %v6414 = vunpack.c.l.b16 %v6244
      %v6415 = vunpack.c.h.b16 %v6244
      %v6416 = vunpack.c.l.b16 %v6245
      %v6417 = vunpack.c.h.b16 %v6245
      %v6418 = vunpack.c.l.b16 %v6246
      %v6419 = vunpack.c.h.b16 %v6246
      %v6420 = vunpack.c.l.b16 %v6247
      %v6421 = vunpack.c.h.b16 %v6247
      %v6422 = vunpack.c.l.b16 %v6248
      %v6423 = vunpack.c.h.b16 %v6248
      %v6424 = vunpack.c.l.b16 %v6249
      %v6425 = vunpack.c.h.b16 %v6249
      %v6426 = vunpack.c.l.b16 %v6250
      %v6427 = vunpack.c.h.b16 %v6250
      %v6428 = vunpack.c.l.b16 %v6251
      %v6429 = vunpack.c.h.b16 %v6251
      %v6430 = vunpack.c.l.b16 %v6252
      %v6431 = vunpack.c.h.b16 %v6252
      %v6432 = vunpack.c.l.b16 %v6253
      %v6433 = vunpack.c.h.b16 %v6253
      %v6434 = vunpack.c.l.b16 %v6254
      %v6435 = vunpack.c.h.b16 %v6254
      %v6436 = vunpack.c.l.b16 %v6255
      %v6437 = vunpack.c.h.b16 %v6255
      %v6438 = vunpack.c.l.b16 %v6256
      %v6439 = vunpack.c.h.b16 %v6256
      %v6440 = vunpack.c.l.b16 %v6257
      %v6441 = vunpack.c.h.b16 %v6257
      %v6442 = vunpack.c.l.b16 %v6258
      %v6443 = vunpack.c.h.b16 %v6258
      %v6444 = vunpack.c.l.b16 %v6259
      %v6445 = vunpack.c.h.b16 %v6259
      %v6446 = vunpack.c.l.b16 %v6260
      %v6447 = vunpack.c.h.b16 %v6260
      %v6448 = vunpack.c.l.b16 %v6261
      %v6449 = vunpack.c.h.b16 %v6261
      %v6450 = vunpack.c.l.b16 %v6262
      %v6451 = vunpack.c.h.b16 %v6262
      %v6452 = vunpack.c.l.b16 %v6263
      %v6453 = vunpack.c.h.b16 %v6263
      %v6454 = vunpack.c.l.b16 %v6264
      %v6455 = vunpack.c.h.b16 %v6264
      %v6456 = vunpack.c.l.b16 %v6265
      %v6457 = vunpack.c.h.b16 %v6265
      %v6458 = vpack.c.b16 %v6330, %v6330
      %v6459 = vpack.c.b16 %v6331, %v6331
      %v6460 = vpack.c.b16 %v6332, %v6332
      %v6461 = vpack.c.b16 %v6333, %v6333
      %v6462 = vpack.c.b16 %v6334, %v6334
      %v6463 = vpack.c.b16 %v6335, %v6335
      %v6464 = vpack.c.b16 %v6336, %v6336
      %v6465 = vpack.c.b16 %v6337, %v6337
      %v6466 = vpack.c.b16 %v6338, %v6338
      %v6467 = vpack.c.b16 %v6339, %v6339
      %v6468 = vpack.c.b16 %v6340, %v6340
      %v6469 = vpack.c.b16 %v6341, %v6341
      %v6470 = vpack.c.b16 %v6342, %v6342
      %v6471 = vpack.c.b16 %v6343, %v6343
      %v6472 = vpack.c.b16 %v6344, %v6344
      %v6473 = vpack.c.b16 %v6345, %v6345
      %v6474 = vpack.c.b16 %v6346, %v6346
      %v6475 = vpack.c.b16 %v6347, %v6347
      %v6476 = vpack.c.b16 %v6348, %v6348
      %v6477 = vpack.c.b16 %v6349, %v6349
      %v6478 = vpack.c.b16 %v6350, %v6350
      %v6479 = vpack.c.b16 %v6351, %v6351
      %v6480 = vpack.c.b16 %v6352, %v6352
      %v6481 = vpack.c.b16 %v6353, %v6353
      %v6482 = vpack.c.b16 %v6354, %v6354
      %v6483 = vpack.c.b16 %v6355, %v6355
      %v6484 = vpack.c.b16 %v6356, %v6356
      %v6485 = vpack.c.b16 %v6357, %v6357
      %v6486 = vpack.c.b16 %v6358, %v6358
      %v6487 = vpack.c.b16 %v6359, %v6359
      %v6488 = vpack.c.b16 %v6360, %v6360
      %v6489 = vpack.c.b16 %v6361, %v6361
      %v6490 = vpack.c.b16 %v6362, %v6362
      %v6491 = vpack.c.b16 %v6363, %v6363
      %v6492 = vpack.c.b16 %v6364, %v6364
      %v6493 = vpack.c.b16 %v6365, %v6365
      %v6494 = vpack.c.b16 %v6366, %v6366
      %v6495 = vpack.c.b16 %v6367, %v6367
      %v6496 = vpack.c.b16 %v6368, %v6368
      %v6497 = vpack.c.b16 %v6369, %v6369
      %v6498 = vpack.c.b16 %v6370, %v6370
      %v6499 = vpack.c.b16 %v6371, %v6371
      %v6500 = vpack.c.b16 %v6372, %v6372
      %v6501 = vpack.c.b16 %v6373, %v6373
      %v6502 = vpack.c.b16 %v6374, %v6374
      %v6503 = vpack.c.b16 %v6375, %v6375
      %v6504 = vpack.c.b16 %v6376, %v6376
      %v6505 = vpack.c.b16 %v6377, %v6377
      %v6506 = vpack.c.b16 %v6378, %v6378
      %v6507 = vpack.c.b16 %v6379, %v6379
      %v6508 = vpack.c.b16 %v6380, %v6380
      %v6509 = vpack.c.b16 %v6381, %v6381
      %v6510 = vpack.c.b16 %v6382, %v6382
      %v6511 = vpack.c.b16 %v6383, %v6383
      %v6512 = vpack.c.b16 %v6384, %v6384
      %v6513 = vpack.c.b16 %v6385, %v6385
      %v6514 = vpack.c.b16 %v6386, %v6386
      %v6515 = vpack.c.b16 %v6387, %v6387
      %v6516 = vpack.c.b16 %v6388, %v6388
      %v6517 = vpack.c.b16 %v6389, %v6389
      %v6518 = vpack.c.b16 %v6390, %v6390
      %v6519 = vpack.c.b16 %v6391, %v6391
      %v6520 = vpack.c.b16 %v6392, %v6392
      %v6521 = vpack.c.b16 %v6393, %v6393
      %v6522 = vpack.c.b16 %v6394, %v6394
      %v6523 = vpack.c.b16 %v6395, %v6395
      %v6524 = vpack.c.b16 %v6396, %v6396
      %v6525 = vpack.c.b16 %v6397, %v6397
      %v6526 = vpack.c.b16 %v6398, %v6398
      %v6527 = vpack.c.b16 %v6399, %v6399
      %v6528 = vpack.c.b16 %v6400, %v6400
      %v6529 = vpack.c.b16 %v6401, %v6401
      %v6530 = vpack.c.b16 %v6402, %v6402
      %v6531 = vpack.c.b16 %v6403, %v6403
      %v6532 = vpack.c.b16 %v6404, %v6404
      %v6533 = vpack.c.b16 %v6405, %v6405
      %v6534 = vpack.c.b16 %v6406, %v6406
      %v6535 = vpack.c.b16 %v6407, %v6407
      %v6536 = vpack.c.b16 %v6408, %v6408
      %v6537 = vpack.c.b16 %v6409, %v6409
      %v6538 = vpack.c.b16 %v6410, %v6410
      %v6539 = vpack.c.b16 %v6411, %v6411
      %v6540 = vpack.c.b16 %v6412, %v6412
      %v6541 = vpack.c.b16 %v6413, %v6413
      %v6542 = vpack.c.b16 %v6414, %v6414
      %v6543 = vpack.c.b16 %v6415, %v6415
      %v6544 = vpack.c.b16 %v6416, %v6416
      %v6545 = vpack.c.b16 %v6417, %v6417
      %v6546 = vpack.c.b16 %v6418, %v6418
      %v6547 = vpack.c.b16 %v6419, %v6419
      %v6548 = vpack.c.b16 %v6420, %v6420
      %v6549 = vpack.c.b16 %v6421, %v6421
      %v6550 = vpack.c.b16 %v6422, %v6422
      %v6551 = vpack.c.b16 %v6423, %v6423
      %v6552 = vpack.c.b16 %v6424, %v6424
      %v6553 = vpack.c.b16 %v6425, %v6425
      %v6554 = vpack.c.b16 %v6426, %v6426
      %v6555 = vpack.c.b16 %v6427, %v6427
      %v6556 = vpack.c.b16 %v6428, %v6428
      %v6557 = vpack.c.b16 %v6429, %v6429
      %v6558 = vpack.c.b16 %v6430, %v6430
      %v6559 = vpack.c.b16 %v6431, %v6431
      %v6560 = vpack.c.b16 %v6432, %v6432
      %v6561 = vpack.c.b16 %v6433, %v6433
      %v6562 = vpack.c.b16 %v6434, %v6434
      %v6563 = vpack.c.b16 %v6435, %v6435
      %v6564 = vpack.c.b16 %v6436, %v6436
      %v6565 = vpack.c.b16 %v6437, %v6437
      %v6566 = vpack.c.b16 %v6438, %v6438
      %v6567 = vpack.c.b16 %v6439, %v6439
      %v6568 = vpack.c.b16 %v6440, %v6440
      %v6569 = vpack.c.b16 %v6441, %v6441
      %v6570 = vpack.c.b16 %v6442, %v6442
      %v6571 = vpack.c.b16 %v6443, %v6443
      %v6572 = vpack.c.b16 %v6444, %v6444
      %v6573 = vpack.c.b16 %v6445, %v6445
      %v6574 = vpack.c.b16 %v6446, %v6446
      %v6575 = vpack.c.b16 %v6447, %v6447
      %v6576 = vpack.c.b16 %v6448, %v6448
      %v6577 = vpack.c.b16 %v6449, %v6449
      %v6578 = vpack.c.b16 %v6450, %v6450
      %v6579 = vpack.c.b16 %v6451, %v6451
      %v6580 = vpack.c.b16 %v6452, %v6452
      %v6581 = vpack.c.b16 %v6453, %v6453
      %v6582 = vpack.c.b16 %v6454, %v6454
      %v6583 = vpack.c.b16 %v6455, %v6455
      %v6584 = vpack.c.b16 %v6456, %v6456
      %v6585 = vpack.c.b16 %v6457, %v6457
      %vm6714 = vcmask 60416
      %6715 = vst.msk [vmem:[%s143] sm:$0xf] %vm6714, %v6458
      %6716 = vst.msk [vmem:[%s143 + $0x4] sm:$0xf] %vm6714, %v6459
      %6717 = vst.msk [vmem:[%s143 + $0x8] sm:$0xf] %vm6714, %v6460
      %6718 = vst.msk [vmem:[%s143 + $0xc] sm:$0xf] %vm6714, %v6461
      %6719 = vst.msk [vmem:[%s143 + $0x10] sm:$0xf] %vm6714, %v6462
      %6720 = vst.msk [vmem:[%s143 + $0x14] sm:$0xf] %vm6714, %v6463
      %6721 = vst.msk [vmem:[%s143 + $0x18] sm:$0xf] %vm6714, %v6464
      %6722 = vst.msk [vmem:[%s143 + $0x1c] sm:$0xf] %vm6714, %v6465
      %6723 = vst.msk [vmem:[%s143 + $0x20] sm:$0xf] %vm6714, %v6466
      %6724 = vst.msk [vmem:[%s143 + $0x24] sm:$0xf] %vm6714, %v6467
      %6725 = vst.msk [vmem:[%s143 + $0x28] sm:$0xf] %vm6714, %v6468
      %6726 = vst.msk [vmem:[%s143 + $0x2c] sm:$0xf] %vm6714, %v6469
      %6727 = vst.msk [vmem:[%s143 + $0x30] sm:$0xf] %vm6714, %v6470
      %6728 = vst.msk [vmem:[%s143 + $0x34] sm:$0xf] %vm6714, %v6471
      %6729 = vst.msk [vmem:[%s143 + $0x38] sm:$0xf] %vm6714, %v6472
      %6730 = vst.msk [vmem:[%s143 + $0x3c] sm:$0xf] %vm6714, %v6473
      %6731 = vst.msk [vmem:[%s143 + $0x40] sm:$0xf] %vm6714, %v6474
      %6732 = vst.msk [vmem:[%s143 + $0x44] sm:$0xf] %vm6714, %v6475
      %6733 = vst.msk [vmem:[%s143 + $0x48] sm:$0xf] %vm6714, %v6476
      %6734 = vst.msk [vmem:[%s143 + $0x4c] sm:$0xf] %vm6714, %v6477
      %6735 = vst.msk [vmem:[%s143 + $0x50] sm:$0xf] %vm6714, %v6478
      %6736 = vst.msk [vmem:[%s143 + $0x54] sm:$0xf] %vm6714, %v6479
      %6737 = vst.msk [vmem:[%s143 + $0x58] sm:$0xf] %vm6714, %v6480
      %6738 = vst.msk [vmem:[%s143 + $0x5c] sm:$0xf] %vm6714, %v6481
      %6739 = vst.msk [vmem:[%s143 + $0x60] sm:$0xf] %vm6714, %v6482
      %6740 = vst.msk [vmem:[%s143 + $0x64] sm:$0xf] %vm6714, %v6483
      %6741 = vst.msk [vmem:[%s143 + $0x68] sm:$0xf] %vm6714, %v6484
      %6742 = vst.msk [vmem:[%s143 + $0x6c] sm:$0xf] %vm6714, %v6485
      %6743 = vst.msk [vmem:[%s143 + $0x70] sm:$0xf] %vm6714, %v6486
      %6744 = vst.msk [vmem:[%s143 + $0x74] sm:$0xf] %vm6714, %v6487
      %6745 = vst.msk [vmem:[%s143 + $0x78] sm:$0xf] %vm6714, %v6488
      %6746 = vst.msk [vmem:[%s143 + $0x7c] sm:$0xf] %vm6714, %v6489
      %6747 = vst.msk [vmem:[%s143 + $0x80] sm:$0xf] %vm6714, %v6490
      %6748 = vst.msk [vmem:[%s143 + $0x84] sm:$0xf] %vm6714, %v6491
      %6749 = vst.msk [vmem:[%s143 + $0x88] sm:$0xf] %vm6714, %v6492
      %6750 = vst.msk [vmem:[%s143 + $0x8c] sm:$0xf] %vm6714, %v6493
      %6751 = vst.msk [vmem:[%s143 + $0x90] sm:$0xf] %vm6714, %v6494
      %6752 = vst.msk [vmem:[%s143 + $0x94] sm:$0xf] %vm6714, %v6495
      %6753 = vst.msk [vmem:[%s143 + $0x98] sm:$0xf] %vm6714, %v6496
      %6754 = vst.msk [vmem:[%s143 + $0x9c] sm:$0xf] %vm6714, %v6497
      %6755 = vst.msk [vmem:[%s143 + $0xa0] sm:$0xf] %vm6714, %v6498
      %6756 = vst.msk [vmem:[%s143 + $0xa4] sm:$0xf] %vm6714, %v6499
      %6757 = vst.msk [vmem:[%s143 + $0xa8] sm:$0xf] %vm6714, %v6500
      %6758 = vst.msk [vmem:[%s143 + $0xac] sm:$0xf] %vm6714, %v6501
      %6759 = vst.msk [vmem:[%s143 + $0xb0] sm:$0xf] %vm6714, %v6502
      %6760 = vst.msk [vmem:[%s143 + $0xb4] sm:$0xf] %vm6714, %v6503
      %6761 = vst.msk [vmem:[%s143 + $0xb8] sm:$0xf] %vm6714, %v6504
      %6762 = vst.msk [vmem:[%s143 + $0xbc] sm:$0xf] %vm6714, %v6505
      %6763 = vst.msk [vmem:[%s143 + $0xc0] sm:$0xf] %vm6714, %v6506
      %6764 = vst.msk [vmem:[%s143 + $0xc4] sm:$0xf] %vm6714, %v6507
      %6765 = vst.msk [vmem:[%s143 + $0xc8] sm:$0xf] %vm6714, %v6508
      %6766 = vst.msk [vmem:[%s143 + $0xcc] sm:$0xf] %vm6714, %v6509
      %6767 = vst.msk [vmem:[%s143 + $0xd0] sm:$0xf] %vm6714, %v6510
      %6768 = vst.msk [vmem:[%s143 + $0xd4] sm:$0xf] %vm6714, %v6511
      %6769 = vst.msk [vmem:[%s143 + $0xd8] sm:$0xf] %vm6714, %v6512
      %6770 = vst.msk [vmem:[%s143 + $0xdc] sm:$0xf] %vm6714, %v6513
      %6771 = vst.msk [vmem:[%s143 + $0xe0] sm:$0xf] %vm6714, %v6514
      %6772 = vst.msk [vmem:[%s143 + $0xe4] sm:$0xf] %vm6714, %v6515
      %6773 = vst.msk [vmem:[%s143 + $0xe8] sm:$0xf] %vm6714, %v6516
      %6774 = vst.msk [vmem:[%s143 + $0xec] sm:$0xf] %vm6714, %v6517
      %6775 = vst.msk [vmem:[%s143 + $0xf0] sm:$0xf] %vm6714, %v6518
      %6776 = vst.msk [vmem:[%s143 + $0xf4] sm:$0xf] %vm6714, %v6519
      %6777 = vst.msk [vmem:[%s143 + $0xf8] sm:$0xf] %vm6714, %v6520
      %6778 = vst.msk [vmem:[%s143 + $0xfc] sm:$0xf] %vm6714, %v6521
      %6779 = vst.msk [vmem:[%s143 + $0x100] sm:$0xf] %vm6714, %v6522
      %6780 = vst.msk [vmem:[%s143 + $0x104] sm:$0xf] %vm6714, %v6523
      %6781 = vst.msk [vmem:[%s143 + $0x108] sm:$0xf] %vm6714, %v6524
      %6782 = vst.msk [vmem:[%s143 + $0x10c] sm:$0xf] %vm6714, %v6525
      %6783 = vst.msk [vmem:[%s143 + $0x110] sm:$0xf] %vm6714, %v6526
      %6784 = vst.msk [vmem:[%s143 + $0x114] sm:$0xf] %vm6714, %v6527
      %6785 = vst.msk [vmem:[%s143 + $0x118] sm:$0xf] %vm6714, %v6528
      %6786 = vst.msk [vmem:[%s143 + $0x11c] sm:$0xf] %vm6714, %v6529
      %6787 = vst.msk [vmem:[%s143 + $0x120] sm:$0xf] %vm6714, %v6530
      %6788 = vst.msk [vmem:[%s143 + $0x124] sm:$0xf] %vm6714, %v6531
      %6789 = vst.msk [vmem:[%s143 + $0x128] sm:$0xf] %vm6714, %v6532
      %6790 = vst.msk [vmem:[%s143 + $0x12c] sm:$0xf] %vm6714, %v6533
      %6791 = vst.msk [vmem:[%s143 + $0x130] sm:$0xf] %vm6714, %v6534
      %6792 = vst.msk [vmem:[%s143 + $0x134] sm:$0xf] %vm6714, %v6535
      %6793 = vst.msk [vmem:[%s143 + $0x138] sm:$0xf] %vm6714, %v6536
      %6794 = vst.msk [vmem:[%s143 + $0x13c] sm:$0xf] %vm6714, %v6537
      %6795 = vst.msk [vmem:[%s143 + $0x140] sm:$0xf] %vm6714, %v6538
      %6796 = vst.msk [vmem:[%s143 + $0x144] sm:$0xf] %vm6714, %v6539
      %6797 = vst.msk [vmem:[%s143 + $0x148] sm:$0xf] %vm6714, %v6540
      %6798 = vst.msk [vmem:[%s143 + $0x14c] sm:$0xf] %vm6714, %v6541
      %6799 = vst.msk [vmem:[%s143 + $0x150] sm:$0xf] %vm6714, %v6542
      %6800 = vst.msk [vmem:[%s143 + $0x154] sm:$0xf] %vm6714, %v6543
      %6801 = vst.msk [vmem:[%s143 + $0x158] sm:$0xf] %vm6714, %v6544
      %6802 = vst.msk [vmem:[%s143 + $0x15c] sm:$0xf] %vm6714, %v6545
      %6803 = vst.msk [vmem:[%s143 + $0x160] sm:$0xf] %vm6714, %v6546
      %6804 = vst.msk [vmem:[%s143 + $0x164] sm:$0xf] %vm6714, %v6547
      %6805 = vst.msk [vmem:[%s143 + $0x168] sm:$0xf] %vm6714, %v6548
      %6806 = vst.msk [vmem:[%s143 + $0x16c] sm:$0xf] %vm6714, %v6549
      %6807 = vst.msk [vmem:[%s143 + $0x170] sm:$0xf] %vm6714, %v6550
      %6808 = vst.msk [vmem:[%s143 + $0x174] sm:$0xf] %vm6714, %v6551
      %6809 = vst.msk [vmem:[%s143 + $0x178] sm:$0xf] %vm6714, %v6552
      %6810 = vst.msk [vmem:[%s143 + $0x17c] sm:$0xf] %vm6714, %v6553
      %6811 = vst.msk [vmem:[%s143 + $0x180] sm:$0xf] %vm6714, %v6554
      %6812 = vst.msk [vmem:[%s143 + $0x184] sm:$0xf] %vm6714, %v6555
      %6813 = vst.msk [vmem:[%s143 + $0x188] sm:$0xf] %vm6714, %v6556
      %6814 = vst.msk [vmem:[%s143 + $0x18c] sm:$0xf] %vm6714, %v6557
      %6815 = vst.msk [vmem:[%s143 + $0x190] sm:$0xf] %vm6714, %v6558
      %6816 = vst.msk [vmem:[%s143 + $0x194] sm:$0xf] %vm6714, %v6559
      %6817 = vst.msk [vmem:[%s143 + $0x198] sm:$0xf] %vm6714, %v6560
      %6818 = vst.msk [vmem:[%s143 + $0x19c] sm:$0xf] %vm6714, %v6561
      %6819 = vst.msk [vmem:[%s143 + $0x1a0] sm:$0xf] %vm6714, %v6562
      %6820 = vst.msk [vmem:[%s143 + $0x1a4] sm:$0xf] %vm6714, %v6563
      %6821 = vst.msk [vmem:[%s143 + $0x1a8] sm:$0xf] %vm6714, %v6564
      %6822 = vst.msk [vmem:[%s143 + $0x1ac] sm:$0xf] %vm6714, %v6565
      %6823 = vst.msk [vmem:[%s143 + $0x1b0] sm:$0xf] %vm6714, %v6566
      %6824 = vst.msk [vmem:[%s143 + $0x1b4] sm:$0xf] %vm6714, %v6567
      %6825 = vst.msk [vmem:[%s143 + $0x1b8] sm:$0xf] %vm6714, %v6568
      %6826 = vst.msk [vmem:[%s143 + $0x1bc] sm:$0xf] %vm6714, %v6569
      %6827 = vst.msk [vmem:[%s143 + $0x1c0] sm:$0xf] %vm6714, %v6570
      %6828 = vst.msk [vmem:[%s143 + $0x1c4] sm:$0xf] %vm6714, %v6571
      %6829 = vst.msk [vmem:[%s143 + $0x1c8] sm:$0xf] %vm6714, %v6572
      %6830 = vst.msk [vmem:[%s143 + $0x1cc] sm:$0xf] %vm6714, %v6573
      %6831 = vst.msk [vmem:[%s143 + $0x1d0] sm:$0xf] %vm6714, %v6574
      %6832 = vst.msk [vmem:[%s143 + $0x1d4] sm:$0xf] %vm6714, %v6575
      %6833 = vst.msk [vmem:[%s143 + $0x1d8] sm:$0xf] %vm6714, %v6576
      %6834 = vst.msk [vmem:[%s143 + $0x1dc] sm:$0xf] %vm6714, %v6577
      %6835 = vst.msk [vmem:[%s143 + $0x1e0] sm:$0xf] %vm6714, %v6578
      %6836 = vst.msk [vmem:[%s143 + $0x1e4] sm:$0xf] %vm6714, %v6579
      %6837 = vst.msk [vmem:[%s143 + $0x1e8] sm:$0xf] %vm6714, %v6580
      %6838 = vst.msk [vmem:[%s143 + $0x1ec] sm:$0xf] %vm6714, %v6581
      %6839 = vst.msk [vmem:[%s143 + $0x1f0] sm:$0xf] %vm6714, %v6582
      %6840 = vst.msk [vmem:[%s143 + $0x1f4] sm:$0xf] %vm6714, %v6583
      %6841 = vst.msk [vmem:[%s143 + $0x1f8] sm:$0xf] %vm6714, %v6584
      %6842 = vst.msk [vmem:[%s143 + $0x1fc] sm:$0xf] %vm6714, %v6585
      %s6843 = smul.u32 128, %s13
      %p6844 = scmp.lt.s32.totalorder %s6843, 255
      %s6845 = scalar_select %p6844, %s6843, 255
      %s6846 = smul.addr %s6845, 4
      %s6847 = scalar_lea.vmem %s2, %s6846
      // Predicated region
      $region29: #{discriminator_forward.4} parent=27 // pred_check
        %p6848 = pneg %p78
      $region30: #{discriminator_forward.4} parent=27 // pred_check_branch
        %6850 = sbr.rel (%p6848) target = $region32
      $region31: #{discriminator_forward.4} parent=27 // pred_region
        %s6851 = smul.u32 128, %s13
      $region32: #{discriminator_forward.4} parent=27 // pred_fallthru
        _
    $region28: #{discriminator_forward.4} parent=5 // pred_fallthru
      _
    %p6852 = scmp.le.s32.totalorder 2, %s8
    // Predicated region
    $region33: #{discriminator_forward.4} parent=5 // pred_check
      %p6853 = pneg %p6852
    $region34: #{discriminator_forward.4} parent=5 // pred_check_branch
      %6855 = sbr.rel (%p6853) target = $region36
    $region35: #{discriminator_forward.4} parent=5 // pred_region
      %s6856 = ssub.s32 %s8, 2
      // Predicated region
      $region37: #{discriminator_forward.4} parent=35 // pred_check
        %p6857 = pneg %p84
      $region38: #{discriminator_forward.4} parent=35 // pred_check_branch
        %6859 = sbr.rel (%p6857) target = $region40
      $region39: #{discriminator_forward.4} parent=35 // pred_region
        %s6860 = smul.u32 128, %s14
        %p6861 = scmp.lt.s32.totalorder %s6860, 255
        %s6862 = scalar_select %p6861, %s6860, 255
        %s6863 = smul.addr %s6862, 4
        %s6864 = scalar_lea.vmem %s2, %s6863
      $region40: #{discriminator_forward.4} parent=35 // pred_fallthru
        _
    $region36: #{discriminator_forward.4} parent=5 // pred_fallthru
      _
  $region6: #{discriminator_forward.4} parent=0 // loop_footer
    %s12 = sadd.s32 1, %s8
  $region7: #{discriminator_forward.4} parent=0 // loop_footer_branch
    %7 = sbr.rel target = $region3
  $region8: #{discriminator_forward.4} parent=0 // loop_exit
    _

// kernel: discriminator_forward.6
$region0: #{discriminator_forward.6}
  #allocation0 [shape = 'u32[]', space=smem, size = 0x4, offset = 0x4, fixed_abs, tag = 'smem constant byte address 0x4 - core index']
  #allocation1 [shape = 'u32[144,128]{1,0:T(1,128)}', space=vmem, size = 0x12000, scoped, tag = 'internal scratch']
  %s0 = inlined_call_operand.vmem [shape: bf16[2,9,9,64], index: 0, kind: input, shape index: {}]
  %s1 = inlined_call_operand.vmem [shape: bf16[256,32], index: 1, kind: input, shape index: {}]
  %s2 = inlined_call_operand.vmem [shape: f32[1,32], index: 2, kind: input, shape index: {}]
  %s3 = inlined_call_operand.vmem [shape: f32[1,32], index: 3, kind: input, shape index: {}]
  %s4 = inlined_call_operand.vmem [shape: bf16[128,32], index: 4, kind: output, shape index: {}]
  %s5 = sld [smem:[#allocation0]]
  $region26: #{discriminator_forward.6} parent=0
    _
  %s7 = ssub.s32 1, %s5
  %s8 = scalar_select 0, %s7, %s5
  // Predicated region
  $region2: #{discriminator_forward.6} parent=0 // pred_check
    _
  $region3: #{discriminator_forward.6} parent=0 // pred_check_branch
    %10 = sbr.rel (0) target = $region5
  $region4: #{discriminator_forward.6} parent=0 // pred_region
    _
  $region5: #{discriminator_forward.6} parent=0 // pred_fallthru
    _
  // Predicated region
  $region6: #{discriminator_forward.6} parent=0 // pred_check
    _
  $region7: #{discriminator_forward.6} parent=0 // pred_check_branch
    %12 = sbr.rel (0) target = $region9
  $region8: #{discriminator_forward.6} parent=0 // pred_region
    _
  $region9: #{discriminator_forward.6} parent=0 // pred_fallthru
    _
  // Predicated region
  $region10: #{discriminator_forward.6} parent=0 // pred_check
    _
  $region11: #{discriminator_forward.6} parent=0 // pred_check_branch
    %14 = sbr.rel (0) target = $region13
  $region12: #{discriminator_forward.6} parent=0 // pred_region
    _
  $region13: #{discriminator_forward.6} parent=0 // pred_fallthru
    _
  // Predicated region
  $region14: #{discriminator_forward.6} parent=0 // pred_check
    _
  $region15: #{discriminator_forward.6} parent=0 // pred_check_branch
    %16 = sbr.rel (0) target = $region17
  $region16: #{discriminator_forward.6} parent=0 // pred_region
    _
  $region17: #{discriminator_forward.6} parent=0 // pred_fallthru
    _
  %v18 = vld [vmem:[%s0] sm:$0xf]
  %v19 = vld [vmem:[%s0 + $0x8] sm:$0xf]
  %v20 = vld [vmem:[%s0 + $0x10] sm:$0xf]
  %v21 = vld [vmem:[%s0 + $0x18] sm:$0xf]
  %v22 = vld [vmem:[%s0 + $0x20] sm:$0xf]
  %v23 = vld [vmem:[%s0 + $0x28] sm:$0xf]
  %v24 = vld [vmem:[%s0 + $0x30] sm:$0xf]
  %v25 = vld [vmem:[%s0 + $0x38] sm:$0xf]
  %v26 = vld [vmem:[%s0 + $0x48] sm:$0xf]
  %v27 = vld [vmem:[%s0 + $0x50] sm:$0xf]
  %v28 = vld [vmem:[%s0 + $0x58] sm:$0xf]
  %v29 = vld [vmem:[%s0 + $0x60] sm:$0xf]
  %v30 = vld [vmem:[%s0 + $0x68] sm:$0xf]
  %v31 = vld [vmem:[%s0 + $0x70] sm:$0xf]
  %v32 = vld [vmem:[%s0 + $0x78] sm:$0xf]
  %v33 = vld [vmem:[%s0 + $0x80] sm:$0xf]
  %v34 = vld [vmem:[%s0 + $0x4] sm:$0x1]
  %v35 = vld [vmem:[%s0 + $0xc] sm:$0x1]
  %v36 = vld [vmem:[%s0 + $0x14] sm:$0x1]
  %v37 = vld [vmem:[%s0 + $0x1c] sm:$0x1]
  %v38 = vld [vmem:[%s0 + $0x24] sm:$0x1]
  %v39 = vld [vmem:[%s0 + $0x2c] sm:$0x1]
  %v40 = vld [vmem:[%s0 + $0x34] sm:$0x1]
  %v41 = vld [vmem:[%s0 + $0x3c] sm:$0x1]
  %v42 = vld [vmem:[%s0 + $0x4c] sm:$0x1]
  %v43 = vld [vmem:[%s0 + $0x54] sm:$0x1]
  %v44 = vld [vmem:[%s0 + $0x5c] sm:$0x1]
  %v45 = vld [vmem:[%s0 + $0x64] sm:$0x1]
  %v46 = vld [vmem:[%s0 + $0x6c] sm:$0x1]
  %v47 = vld [vmem:[%s0 + $0x74] sm:$0x1]
  %v48 = vld [vmem:[%s0 + $0x7c] sm:$0x1]
  %v49 = vld [vmem:[%s0 + $0x84] sm:$0x1]
  %vm50 = vsmask.f32 3328
  %vm51 = vsmask.f32 7440
  %vm52 = vmor %vm50, %vm51
  %v54 = vshrl.u32 %v18, 16
  %v56 = vrot.slane %v54, 4
  %v57 = vshll.u32 %v18, 16
  %v59 = vrot.slane %v57, 5
  %v60 = vor.u32 %v56, %v59
  %v61 = vrot.slane %v60, 4
  %v63 = vshll.u32 %v34, 16
  %v65 = vrot.slane %v63, 5
  %v66 = vsel %vm52, %v61, %v65
  %v68 = vshrl.u32 %v19, 16
  %v70 = vrot.slane %v68, 4
  %v71 = vshll.u32 %v19, 16
  %v73 = vrot.slane %v71, 5
  %v74 = vor.u32 %v70, %v73
  %v75 = vrot.slane %v74, 4
  %v77 = vshll.u32 %v35, 16
  %v79 = vrot.slane %v77, 5
  %v80 = vsel %vm52, %v75, %v79
  %v82 = vshrl.u32 %v20, 16
  %v84 = vrot.slane %v82, 4
  %v85 = vshll.u32 %v20, 16
  %v87 = vrot.slane %v85, 5
  %v88 = vor.u32 %v84, %v87
  %v89 = vrot.slane %v88, 4
  %v91 = vshll.u32 %v36, 16
  %v93 = vrot.slane %v91, 5
  %v94 = vsel %vm52, %v89, %v93
  %v96 = vshrl.u32 %v21, 16
  %v98 = vrot.slane %v96, 4
  %v99 = vshll.u32 %v21, 16
  %v101 = vrot.slane %v99, 5
  %v102 = vor.u32 %v98, %v101
  %v103 = vrot.slane %v102, 4
  %v105 = vshll.u32 %v37, 16
  %v107 = vrot.slane %v105, 5
  %v108 = vsel %vm52, %v103, %v107
  %v110 = vshrl.u32 %v22, 16
  %v112 = vrot.slane %v110, 4
  %v113 = vshll.u32 %v22, 16
  %v115 = vrot.slane %v113, 5
  %v116 = vor.u32 %v112, %v115
  %v117 = vrot.slane %v116, 4
  %v119 = vshll.u32 %v38, 16
  %v121 = vrot.slane %v119, 5
  %v122 = vsel %vm52, %v117, %v121
  %v124 = vshrl.u32 %v23, 16
  %v126 = vrot.slane %v124, 4
  %v127 = vshll.u32 %v23, 16
  %v129 = vrot.slane %v127, 5
  %v130 = vor.u32 %v126, %v129
  %v131 = vrot.slane %v130, 4
  %v133 = vshll.u32 %v39, 16
  %v135 = vrot.slane %v133, 5
  %v136 = vsel %vm52, %v131, %v135
  %v138 = vshrl.u32 %v24, 16
  %v140 = vrot.slane %v138, 4
  %v141 = vshll.u32 %v24, 16
  %v143 = vrot.slane %v141, 5
  %v144 = vor.u32 %v140, %v143
  %v145 = vrot.slane %v144, 4
  %v147 = vshll.u32 %v40, 16
  %v149 = vrot.slane %v147, 5
  %v150 = vsel %vm52, %v145, %v149
  %v152 = vshrl.u32 %v25, 16
  %v154 = vrot.slane %v152, 4
  %v155 = vshll.u32 %v25, 16
  %v157 = vrot.slane %v155, 5
  %v158 = vor.u32 %v154, %v157
  %v159 = vrot.slane %v158, 4
  %v161 = vshll.u32 %v41, 16
  %v163 = vrot.slane %v161, 5
  %v164 = vsel %vm52, %v159, %v163
  %v166 = vshrl.u32 %v26, 16
  %v168 = vrot.slane %v166, 4
  %v169 = vshll.u32 %v26, 16
  %v171 = vrot.slane %v169, 5
  %v172 = vor.u32 %v168, %v171
  %v173 = vrot.slane %v172, 4
  %v175 = vshll.u32 %v42, 16
  %v177 = vrot.slane %v175, 5
  %v178 = vsel %vm52, %v173, %v177
  %v180 = vshrl.u32 %v27, 16
  %v182 = vrot.slane %v180, 4
  %v183 = vshll.u32 %v27, 16
  %v185 = vrot.slane %v183, 5
  %v186 = vor.u32 %v182, %v185
  %v187 = vrot.slane %v186, 4
  %v189 = vshll.u32 %v43, 16
  %v191 = vrot.slane %v189, 5
  %v192 = vsel %vm52, %v187, %v191
  %v194 = vshrl.u32 %v28, 16
  %v196 = vrot.slane %v194, 4
  %v197 = vshll.u32 %v28, 16
  %v199 = vrot.slane %v197, 5
  %v200 = vor.u32 %v196, %v199
  %v201 = vrot.slane %v200, 4
  %v203 = vshll.u32 %v44, 16
  %v205 = vrot.slane %v203, 5
  %v206 = vsel %vm52, %v201, %v205
  %v208 = vshrl.u32 %v29, 16
  %v210 = vrot.slane %v208, 4
  %v211 = vshll.u32 %v29, 16
  %v213 = vrot.slane %v211, 5
  %v214 = vor.u32 %v210, %v213
  %v215 = vrot.slane %v214, 4
  %v217 = vshll.u32 %v45, 16
  %v219 = vrot.slane %v217, 5
  %v220 = vsel %vm52, %v215, %v219
  %v222 = vshrl.u32 %v30, 16
  %v224 = vrot.slane %v222, 4
  %v225 = vshll.u32 %v30, 16
  %v227 = vrot.slane %v225, 5
  %v228 = vor.u32 %v224, %v227
  %v229 = vrot.slane %v228, 4
  %v231 = vshll.u32 %v46, 16
  %v233 = vrot.slane %v231, 5
  %v234 = vsel %vm52, %v229, %v233
  %v236 = vshrl.u32 %v31, 16
  %v238 = vrot.slane %v236, 4
  %v239 = vshll.u32 %v31, 16
  %v241 = vrot.slane %v239, 5
  %v242 = vor.u32 %v238, %v241
  %v243 = vrot.slane %v242, 4
  %v245 = vshll.u32 %v47, 16
  %v247 = vrot.slane %v245, 5
  %v248 = vsel %vm52, %v243, %v247
  %v250 = vshrl.u32 %v32, 16
  %v252 = vrot.slane %v250, 4
  %v253 = vshll.u32 %v32, 16
  %v255 = vrot.slane %v253, 5
  %v256 = vor.u32 %v252, %v255
  %v257 = vrot.slane %v256, 4
  %v259 = vshll.u32 %v48, 16
  %v261 = vrot.slane %v259, 5
  %v262 = vsel %vm52, %v257, %v261
  %v264 = vshrl.u32 %v33, 16
  %v266 = vrot.slane %v264, 4
  %v267 = vshll.u32 %v33, 16
  %v269 = vrot.slane %v267, 5
  %v270 = vor.u32 %v266, %v269
  %v271 = vrot.slane %v270, 4
  %v273 = vshll.u32 %v49, 16
  %v275 = vrot.slane %v273, 5
  %v276 = vsel %vm52, %v271, %v275
  %s277 = scalar_lea.vmem %s0, 8
  %v278 = vld [vmem:[%s277] sm:$0xf]
  %v279 = vld [vmem:[%s277 + $0x8] sm:$0xf]
  %v280 = vld [vmem:[%s277 + $0x10] sm:$0xf]
  %v281 = vld [vmem:[%s277 + $0x18] sm:$0xf]
  %v282 = vld [vmem:[%s277 + $0x20] sm:$0xf]
  %v283 = vld [vmem:[%s277 + $0x28] sm:$0xf]
  %v284 = vld [vmem:[%s277 + $0x30] sm:$0xf]
  %v285 = vld [vmem:[%s277 + $0x38] sm:$0xf]
  %v286 = vld [vmem:[%s277 + $0x48] sm:$0xf]
  %v287 = vld [vmem:[%s277 + $0x50] sm:$0xf]
  %v288 = vld [vmem:[%s277 + $0x58] sm:$0xf]
  %v289 = vld [vmem:[%s277 + $0x60] sm:$0xf]
  %v290 = vld [vmem:[%s277 + $0x68] sm:$0xf]
  %v291 = vld [vmem:[%s277 + $0x70] sm:$0xf]
  %v292 = vld [vmem:[%s277 + $0x78] sm:$0xf]
  %v293 = vld [vmem:[%s277 + $0x80] sm:$0xf]
  %v294 = vld [vmem:[%s277 + $0x4] sm:$0x1]
  %v295 = vld [vmem:[%s277 + $0xc] sm:$0x1]
  %v296 = vld [vmem:[%s277 + $0x14] sm:$0x1]
  %v297 = vld [vmem:[%s277 + $0x1c] sm:$0x1]
  %v298 = vld [vmem:[%s277 + $0x24] sm:$0x1]
  %v299 = vld [vmem:[%s277 + $0x2c] sm:$0x1]
  %v300 = vld [vmem:[%s277 + $0x34] sm:$0x1]
  %v301 = vld [vmem:[%s277 + $0x3c] sm:$0x1]
  %v302 = vld [vmem:[%s277 + $0x4c] sm:$0x1]
  %v303 = vld [vmem:[%s277 + $0x54] sm:$0x1]
  %v304 = vld [vmem:[%s277 + $0x5c] sm:$0x1]
  %v305 = vld [vmem:[%s277 + $0x64] sm:$0x1]
  %v306 = vld [vmem:[%s277 + $0x6c] sm:$0x1]
  %v307 = vld [vmem:[%s277 + $0x74] sm:$0x1]
  %v308 = vld [vmem:[%s277 + $0x7c] sm:$0x1]
  %v309 = vld [vmem:[%s277 + $0x84] sm:$0x1]
  %v311 = vshrl.u32 %v278, 16
  %v313 = vrot.slane %v311, 4
  %v314 = vshll.u32 %v278, 16
  %v316 = vrot.slane %v314, 5
  %v317 = vor.u32 %v313, %v316
  %v318 = vrot.slane %v317, 4
  %v320 = vshll.u32 %v294, 16
  %v322 = vrot.slane %v320, 5
  %v323 = vsel %vm52, %v318, %v322
  %v325 = vshrl.u32 %v279, 16
  %v327 = vrot.slane %v325, 4
  %v328 = vshll.u32 %v279, 16
  %v330 = vrot.slane %v328, 5
  %v331 = vor.u32 %v327, %v330
  %v332 = vrot.slane %v331, 4
  %v334 = vshll.u32 %v295, 16
  %v336 = vrot.slane %v334, 5
  %v337 = vsel %vm52, %v332, %v336
  %v339 = vshrl.u32 %v280, 16
  %v341 = vrot.slane %v339, 4
  %v342 = vshll.u32 %v280, 16
  %v344 = vrot.slane %v342, 5
  %v345 = vor.u32 %v341, %v344
  %v346 = vrot.slane %v345, 4
  %v348 = vshll.u32 %v296, 16
  %v350 = vrot.slane %v348, 5
  %v351 = vsel %vm52, %v346, %v350
  %v353 = vshrl.u32 %v281, 16
  %v355 = vrot.slane %v353, 4
  %v356 = vshll.u32 %v281, 16
  %v358 = vrot.slane %v356, 5
  %v359 = vor.u32 %v355, %v358
  %v360 = vrot.slane %v359, 4
  %v362 = vshll.u32 %v297, 16
  %v364 = vrot.slane %v362, 5
  %v365 = vsel %vm52, %v360, %v364
  %v367 = vshrl.u32 %v282, 16
  %v369 = vrot.slane %v367, 4
  %v370 = vshll.u32 %v282, 16
  %v372 = vrot.slane %v370, 5
  %v373 = vor.u32 %v369, %v372
  %v374 = vrot.slane %v373, 4
  %v376 = vshll.u32 %v298, 16
  %v378 = vrot.slane %v376, 5
  %v379 = vsel %vm52, %v374, %v378
  %v381 = vshrl.u32 %v283, 16
  %v383 = vrot.slane %v381, 4
  %v384 = vshll.u32 %v283, 16
  %v386 = vrot.slane %v384, 5
  %v387 = vor.u32 %v383, %v386
  %v388 = vrot.slane %v387, 4
  %v390 = vshll.u32 %v299, 16
  %v392 = vrot.slane %v390, 5
  %v393 = vsel %vm52, %v388, %v392
  %v395 = vshrl.u32 %v284, 16
  %v397 = vrot.slane %v395, 4
  %v398 = vshll.u32 %v284, 16
  %v400 = vrot.slane %v398, 5
  %v401 = vor.u32 %v397, %v400
  %v402 = vrot.slane %v401, 4
  %v404 = vshll.u32 %v300, 16
  %v406 = vrot.slane %v404, 5
  %v407 = vsel %vm52, %v402, %v406
  %v409 = vshrl.u32 %v285, 16
  %v411 = vrot.slane %v409, 4
  %v412 = vshll.u32 %v285, 16
  %v414 = vrot.slane %v412, 5
  %v415 = vor.u32 %v411, %v414
  %v416 = vrot.slane %v415, 4
  %v418 = vshll.u32 %v301, 16
  %v420 = vrot.slane %v418, 5
  %v421 = vsel %vm52, %v416, %v420
  %v423 = vshrl.u32 %v286, 16
  %v425 = vrot.slane %v423, 4
  %v426 = vshll.u32 %v286, 16
  %v428 = vrot.slane %v426, 5
  %v429 = vor.u32 %v425, %v428
  %v430 = vrot.slane %v429, 4
  %v432 = vshll.u32 %v302, 16
  %v434 = vrot.slane %v432, 5
  %v435 = vsel %vm52, %v430, %v434
  %v437 = vshrl.u32 %v287, 16
  %v439 = vrot.slane %v437, 4
  %v440 = vshll.u32 %v287, 16
  %v442 = vrot.slane %v440, 5
  %v443 = vor.u32 %v439, %v442
  %v444 = vrot.slane %v443, 4
  %v446 = vshll.u32 %v303, 16
  %v448 = vrot.slane %v446, 5
  %v449 = vsel %vm52, %v444, %v448
  %v451 = vshrl.u32 %v288, 16
  %v453 = vrot.slane %v451, 4
  %v454 = vshll.u32 %v288, 16
  %v456 = vrot.slane %v454, 5
  %v457 = vor.u32 %v453, %v456
  %v458 = vrot.slane %v457, 4
  %v460 = vshll.u32 %v304, 16
  %v462 = vrot.slane %v460, 5
  %v463 = vsel %vm52, %v458, %v462
  %v465 = vshrl.u32 %v289, 16
  %v467 = vrot.slane %v465, 4
  %v468 = vshll.u32 %v289, 16
  %v470 = vrot.slane %v468, 5
  %v471 = vor.u32 %v467, %v470
  %v472 = vrot.slane %v471, 4
  %v474 = vshll.u32 %v305, 16
  %v476 = vrot.slane %v474, 5
  %v477 = vsel %vm52, %v472, %v476
  %v479 = vshrl.u32 %v290, 16
  %v481 = vrot.slane %v479, 4
  %v482 = vshll.u32 %v290, 16
  %v484 = vrot.slane %v482, 5
  %v485 = vor.u32 %v481, %v484
  %v486 = vrot.slane %v485, 4
  %v488 = vshll.u32 %v306, 16
  %v490 = vrot.slane %v488, 5
  %v491 = vsel %vm52, %v486, %v490
  %v493 = vshrl.u32 %v291, 16
  %v495 = vrot.slane %v493, 4
  %v496 = vshll.u32 %v291, 16
  %v498 = vrot.slane %v496, 5
  %v499 = vor.u32 %v495, %v498
  %v500 = vrot.slane %v499, 4
  %v502 = vshll.u32 %v307, 16
  %v504 = vrot.slane %v502, 5
  %v505 = vsel %vm52, %v500, %v504
  %v507 = vshrl.u32 %v292, 16
  %v509 = vrot.slane %v507, 4
  %v510 = vshll.u32 %v292, 16
  %v512 = vrot.slane %v510, 5
  %v513 = vor.u32 %v509, %v512
  %v514 = vrot.slane %v513, 4
  %v516 = vshll.u32 %v308, 16
  %v518 = vrot.slane %v516, 5
  %v519 = vsel %vm52, %v514, %v518
  %v521 = vshrl.u32 %v293, 16
  %v523 = vrot.slane %v521, 4
  %v524 = vshll.u32 %v293, 16
  %v526 = vrot.slane %v524, 5
  %v527 = vor.u32 %v523, %v526
  %v528 = vrot.slane %v527, 4
  %v530 = vshll.u32 %v309, 16
  %v532 = vrot.slane %v530, 5
  %v533 = vsel %vm52, %v528, %v532
  %v550 = vunpack.c.l.b16 %v18
  %v551 = vunpack.c.l.b16 %v19
  %v552 = vunpack.c.l.b16 %v20
  %v553 = vunpack.c.l.b16 %v21
  %v554 = vunpack.c.l.b16 %v22
  %v555 = vunpack.c.l.b16 %v23
  %v556 = vunpack.c.l.b16 %v24
  %v557 = vunpack.c.l.b16 %v25
  %v558 = vunpack.c.l.b16 %v26
  %v559 = vunpack.c.l.b16 %v27
  %v560 = vunpack.c.l.b16 %v28
  %v561 = vunpack.c.l.b16 %v29
  %v562 = vunpack.c.l.b16 %v30
  %v563 = vunpack.c.l.b16 %v31
  %v564 = vunpack.c.l.b16 %v32
  %v565 = vunpack.c.l.b16 %v33
  %v566 = vpack.c.b16 %v551, %v550
  %v567 = vpack.c.b16 %v553, %v552
  %v568 = vpack.c.b16 %v555, %v554
  %v569 = vpack.c.b16 %v557, %v556
  %v570 = vpack.c.b16 %v559, %v558
  %v571 = vpack.c.b16 %v561, %v560
  %v572 = vpack.c.b16 %v563, %v562
  %v573 = vpack.c.b16 %v565, %v564
  %v574 = vunpack.c.l.b16 %v66
  %v575 = vunpack.c.l.b16 %v80
  %v576 = vunpack.c.l.b16 %v94
  %v577 = vunpack.c.l.b16 %v108
  %v578 = vunpack.c.l.b16 %v122
  %v579 = vunpack.c.l.b16 %v136
  %v580 = vunpack.c.l.b16 %v150
  %v581 = vunpack.c.l.b16 %v164
  %v582 = vunpack.c.l.b16 %v178
  %v583 = vunpack.c.l.b16 %v192
  %v584 = vunpack.c.l.b16 %v206
  %v585 = vunpack.c.l.b16 %v220
  %v586 = vunpack.c.l.b16 %v234
  %v587 = vunpack.c.l.b16 %v248
  %v588 = vunpack.c.l.b16 %v262
  %v589 = vunpack.c.l.b16 %v276
  %v590 = vpack.c.b16 %v575, %v574
  %v591 = vpack.c.b16 %v577, %v576
  %v592 = vpack.c.b16 %v579, %v578
  %v593 = vpack.c.b16 %v581, %v580
  %v594 = vpack.c.b16 %v583, %v582
  %v595 = vpack.c.b16 %v585, %v584
  %v596 = vpack.c.b16 %v587, %v586
  %v597 = vpack.c.b16 %v589, %v588
  %598 = vrot.lane.b32.xlu0 %v590, 64
  %v599 = vpop.permute.xlu0 %598
  %600 = vrot.lane.b32.xlu0 %v591, 64
  %v601 = vpop.permute.xlu0 %600
  %602 = vrot.lane.b32.xlu0 %v592, 64
  %v603 = vpop.permute.xlu0 %602
  %604 = vrot.lane.b32.xlu0 %v593, 64
  %v605 = vpop.permute.xlu0 %604
  %606 = vrot.lane.b32.xlu0 %v594, 64
  %v607 = vpop.permute.xlu0 %606
  %608 = vrot.lane.b32.xlu0 %v595, 64
  %v609 = vpop.permute.xlu0 %608
  %610 = vrot.lane.b32.xlu0 %v596, 64
  %v611 = vpop.permute.xlu0 %610
  %612 = vrot.lane.b32.xlu0 %v597, 64
  %v613 = vpop.permute.xlu0 %612
  %v630 = vunpack.c.l.b16 %v278
  %v631 = vunpack.c.l.b16 %v279
  %v632 = vunpack.c.l.b16 %v280
  %v633 = vunpack.c.l.b16 %v281
  %v634 = vunpack.c.l.b16 %v282
  %v635 = vunpack.c.l.b16 %v283
  %v636 = vunpack.c.l.b16 %v284
  %v637 = vunpack.c.l.b16 %v285
  %v638 = vunpack.c.l.b16 %v286
  %v639 = vunpack.c.l.b16 %v287
  %v640 = vunpack.c.l.b16 %v288
  %v641 = vunpack.c.l.b16 %v289
  %v642 = vunpack.c.l.b16 %v290
  %v643 = vunpack.c.l.b16 %v291
  %v644 = vunpack.c.l.b16 %v292
  %v645 = vunpack.c.l.b16 %v293
  %v646 = vpack.c.b16 %v631, %v630
  %v647 = vpack.c.b16 %v633, %v632
  %v648 = vpack.c.b16 %v635, %v634
  %v649 = vpack.c.b16 %v637, %v636
  %v650 = vpack.c.b16 %v639, %v638
  %v651 = vpack.c.b16 %v641, %v640
  %v652 = vpack.c.b16 %v643, %v642
  %v653 = vpack.c.b16 %v645, %v644
  %v654 = vunpack.c.l.b16 %v323
  %v655 = vunpack.c.l.b16 %v337
  %v656 = vunpack.c.l.b16 %v351
  %v657 = vunpack.c.l.b16 %v365
  %v658 = vunpack.c.l.b16 %v379
  %v659 = vunpack.c.l.b16 %v393
  %v660 = vunpack.c.l.b16 %v407
  %v661 = vunpack.c.l.b16 %v421
  %v662 = vunpack.c.l.b16 %v435
  %v663 = vunpack.c.l.b16 %v449
  %v664 = vunpack.c.l.b16 %v463
  %v665 = vunpack.c.l.b16 %v477
  %v666 = vunpack.c.l.b16 %v491
  %v667 = vunpack.c.l.b16 %v505
  %v668 = vunpack.c.l.b16 %v519
  %v669 = vunpack.c.l.b16 %v533
  %v670 = vpack.c.b16 %v655, %v654
  %v671 = vpack.c.b16 %v657, %v656
  %v672 = vpack.c.b16 %v659, %v658
  %v673 = vpack.c.b16 %v661, %v660
  %v674 = vpack.c.b16 %v663, %v662
  %v675 = vpack.c.b16 %v665, %v664
  %v676 = vpack.c.b16 %v667, %v666
  %v677 = vpack.c.b16 %v669, %v668
  %678 = vrot.lane.b32.xlu0 %v670, 64
  %v679 = vpop.permute.xlu0 %678
  %680 = vrot.lane.b32.xlu0 %v671, 64
  %v681 = vpop.permute.xlu0 %680
  %682 = vrot.lane.b32.xlu0 %v672, 64
  %v683 = vpop.permute.xlu0 %682
  %684 = vrot.lane.b32.xlu0 %v673, 64
  %v685 = vpop.permute.xlu0 %684
  %686 = vrot.lane.b32.xlu0 %v674, 64
  %v687 = vpop.permute.xlu0 %686
  %688 = vrot.lane.b32.xlu0 %v675, 64
  %v689 = vpop.permute.xlu0 %688
  %690 = vrot.lane.b32.xlu0 %v676, 64
  %v691 = vpop.permute.xlu0 %690
  %692 = vrot.lane.b32.xlu0 %v677, 64
  %v693 = vpop.permute.xlu0 %692
  %vm694 = vcmask 523264
  %v697 = vsel %vm694, %v566, %v599
  %v701 = vsel %vm694, %v567, %v601
  %v705 = vsel %vm694, %v568, %v603
  %v709 = vsel %vm694, %v569, %v605
  %v713 = vsel %vm694, %v570, %v607
  %v717 = vsel %vm694, %v571, %v609
  %v721 = vsel %vm694, %v572, %v611
  %v725 = vsel %vm694, %v573, %v613
  %v729 = vsel %vm694, %v646, %v679
  %v733 = vsel %vm694, %v647, %v681
  %v737 = vsel %vm694, %v648, %v683
  %v741 = vsel %vm694, %v649, %v685
  %v745 = vsel %vm694, %v650, %v687
  %v749 = vsel %vm694, %v651, %v689
  %v753 = vsel %vm694, %v652, %v691
  %v757 = vsel %vm694, %v653, %v693
  %v759 = vld [vmem:[%s1] sm:$0xf]
  %v760 = vld [vmem:[%s1 + $0x4] sm:$0xf]
  %v761 = vld [vmem:[%s1 + $0x8] sm:$0xf]
  %v762 = vld [vmem:[%s1 + $0xc] sm:$0xf]
  %v763 = vld [vmem:[%s1 + $0x10] sm:$0xf]
  %v764 = vld [vmem:[%s1 + $0x14] sm:$0xf]
  %v765 = vld [vmem:[%s1 + $0x18] sm:$0xf]
  %v766 = vld [vmem:[%s1 + $0x1c] sm:$0xf]
  %v767 = vld [vmem:[%s1 + $0x20] sm:$0xf]
  %v768 = vld [vmem:[%s1 + $0x24] sm:$0xf]
  %v769 = vld [vmem:[%s1 + $0x28] sm:$0xf]
  %v770 = vld [vmem:[%s1 + $0x2c] sm:$0xf]
  %v771 = vld [vmem:[%s1 + $0x30] sm:$0xf]
  %v772 = vld [vmem:[%s1 + $0x34] sm:$0xf]
  %v773 = vld [vmem:[%s1 + $0x38] sm:$0xf]
  %v774 = vld [vmem:[%s1 + $0x3c] sm:$0xf]
  %v775 = vld [vmem:[%s1 + $0x40] sm:$0xf]
  %v776 = vld [vmem:[%s1 + $0x44] sm:$0xf]
  %v777 = vld [vmem:[%s1 + $0x48] sm:$0xf]
  %v778 = vld [vmem:[%s1 + $0x4c] sm:$0xf]
  %v779 = vld [vmem:[%s1 + $0x50] sm:$0xf]
  %v780 = vld [vmem:[%s1 + $0x54] sm:$0xf]
  %v781 = vld [vmem:[%s1 + $0x58] sm:$0xf]
  %v782 = vld [vmem:[%s1 + $0x5c] sm:$0xf]
  %v783 = vld [vmem:[%s1 + $0x60] sm:$0xf]
  %v784 = vld [vmem:[%s1 + $0x64] sm:$0xf]
  %v785 = vld [vmem:[%s1 + $0x68] sm:$0xf]
  %v786 = vld [vmem:[%s1 + $0x6c] sm:$0xf]
  %v787 = vld [vmem:[%s1 + $0x70] sm:$0xf]
  %v788 = vld [vmem:[%s1 + $0x74] sm:$0xf]
  %v789 = vld [vmem:[%s1 + $0x78] sm:$0xf]
  %v790 = vld [vmem:[%s1 + $0x7c] sm:$0xf]
  %v823 = vunpack.c.l.b16 %v759
  %v824 = vunpack.c.l.b16 %v760
  %v825 = vunpack.c.l.b16 %v761
  %v826 = vunpack.c.l.b16 %v762
  %v827 = vunpack.c.l.b16 %v763
  %v828 = vunpack.c.l.b16 %v764
  %v829 = vunpack.c.l.b16 %v765
  %v830 = vunpack.c.l.b16 %v766
  %v831 = vunpack.c.l.b16 %v767
  %v832 = vunpack.c.l.b16 %v768
  %v833 = vunpack.c.l.b16 %v769
  %v834 = vunpack.c.l.b16 %v770
  %v835 = vunpack.c.l.b16 %v771
  %v836 = vunpack.c.l.b16 %v772
  %v837 = vunpack.c.l.b16 %v773
  %v838 = vunpack.c.l.b16 %v774
  %v839 = vunpack.c.l.b16 %v775
  %v840 = vunpack.c.l.b16 %v776
  %v841 = vunpack.c.l.b16 %v777
  %v842 = vunpack.c.l.b16 %v778
  %v843 = vunpack.c.l.b16 %v779
  %v844 = vunpack.c.l.b16 %v780
  %v845 = vunpack.c.l.b16 %v781
  %v846 = vunpack.c.l.b16 %v782
  %v847 = vunpack.c.l.b16 %v783
  %v848 = vunpack.c.l.b16 %v784
  %v849 = vunpack.c.l.b16 %v785
  %v850 = vunpack.c.l.b16 %v786
  %v851 = vunpack.c.l.b16 %v787
  %v852 = vunpack.c.l.b16 %v788
  %v853 = vunpack.c.l.b16 %v789
  %v854 = vunpack.c.l.b16 %v790
  %v855 = vpack.c.b16 %v824, %v823
  %v856 = vpack.c.b16 %v826, %v825
  %v857 = vpack.c.b16 %v828, %v827
  %v858 = vpack.c.b16 %v830, %v829
  %v859 = vpack.c.b16 %v832, %v831
  %v860 = vpack.c.b16 %v834, %v833
  %v861 = vpack.c.b16 %v836, %v835
  %v862 = vpack.c.b16 %v838, %v837
  %v863 = vpack.c.b16 %v840, %v839
  %v864 = vpack.c.b16 %v842, %v841
  %v865 = vpack.c.b16 %v844, %v843
  %v866 = vpack.c.b16 %v846, %v845
  %v867 = vpack.c.b16 %v848, %v847
  %v868 = vpack.c.b16 %v850, %v849
  %v869 = vpack.c.b16 %v852, %v851
  %v870 = vpack.c.b16 %v854, %v853
  %887 = vmatprep.subr.bf16.mxu0 0
  %888 = vmatpush1.bf16.msra.mxu0 %v862
  %889 = vmatprep.subr.bf16.mxu0 0
  %890 = vmatpush1.bf16.msra.mxu0 %v861
  %891 = vmatprep.subr.bf16.mxu0 0
  %892 = vmatpush1.bf16.msra.mxu0 %v860
  %893 = vmatprep.subr.bf16.mxu0 0
  %894 = vmatpush1.bf16.msra.mxu0 %v859
  %895 = vmatprep.subr.bf16.mxu0 0
  %896 = vmatpush1.bf16.msra.mxu0 %v858
  %897 = vmatprep.subr.bf16.mxu0 0
  %898 = vmatpush1.bf16.msra.mxu0 %v857
  %899 = vmatprep.subr.bf16.mxu0 0
  %900 = vmatpush1.bf16.msra.mxu0 %v856
  %901 = vmatprep.subr.bf16.mxu0 0
  %902 = vmatpush1.bf16.msra.mxu0 %v855
  %903 = vmatprep.subr.bf16.mxu0 0
  %904 = vmatpush2.bf16.msra.mxu0 %v870
  %905 = vmatprep.subr.bf16.mxu0 0
  %906 = vmatpush2.bf16.msra.mxu0 %v869
  %907 = vmatprep.subr.bf16.mxu0 0
  %908 = vmatpush2.bf16.msra.mxu0 %v868
  %909 = vmatprep.subr.bf16.mxu0 0
  %910 = vmatpush2.bf16.msra.mxu0 %v867
  %911 = vmatprep.subr.bf16.mxu0 0
  %912 = vmatpush2.bf16.msra.mxu0 %v866
  %913 = vmatprep.subr.bf16.mxu0 0
  %914 = vmatpush2.bf16.msra.mxu0 %v865
  %915 = vmatprep.subr.bf16.mxu0 0
  %916 = vmatpush2.bf16.msra.mxu0 %v864
  %917 = vmatprep.subr.bf16.mxu0 0
  %918 = vmatpush2.bf16.msra.mxu0 %v863
  %919 = vmatprep.mubr.bf16.mxu0 %v729
  %920 = vmatmul.mubr.bf16.gmra.mxu0 %v697
  %v921 = vpop.f32.mrf.mxu0
  %v922 = vadd.f32 0.0, %v921
  %v923 = vpop.f32.mrf.mxu0
  %v924 = vpop.f32.mrf.mxu0
  %v925 = vadd.f32 0.0, %v924
  %v926 = vpop.f32.mrf.mxu0
  %927 = vmatprep.mubr.bf16.mxu0 %v733
  %928 = vmatmul.mubr.bf16.gmra.mxu0 %v701
  %v929 = vpop.f32.mrf.mxu0
  %v930 = vadd.f32 0.0, %v929
  %v931 = vpop.f32.mrf.mxu0
  %v932 = vpop.f32.mrf.mxu0
  %v933 = vadd.f32 0.0, %v932
  %v934 = vpop.f32.mrf.mxu0
  %935 = vmatprep.mubr.bf16.mxu0 %v737
  %936 = vmatmul.mubr.bf16.gmra.mxu0 %v705
  %v937 = vpop.f32.mrf.mxu0
  %v938 = vadd.f32 0.0, %v937
  %v939 = vpop.f32.mrf.mxu0
  %v940 = vpop.f32.mrf.mxu0
  %v941 = vadd.f32 0.0, %v940
  %v942 = vpop.f32.mrf.mxu0
  %943 = vmatprep.mubr.bf16.mxu0 %v741
  %944 = vmatmul.mubr.bf16.gmra.mxu0 %v709
  %v945 = vpop.f32.mrf.mxu0
  %v946 = vadd.f32 0.0, %v945
  %v947 = vpop.f32.mrf.mxu0
  %v948 = vpop.f32.mrf.mxu0
  %v949 = vadd.f32 0.0, %v948
  %v950 = vpop.f32.mrf.mxu0
  %951 = vmatprep.mubr.bf16.mxu0 %v745
  %952 = vmatmul.mubr.bf16.gmra.mxu0 %v713
  %v953 = vpop.f32.mrf.mxu0
  %v954 = vadd.f32 0.0, %v953
  %v955 = vpop.f32.mrf.mxu0
  %v956 = vpop.f32.mrf.mxu0
  %v957 = vadd.f32 0.0, %v956
  %v958 = vpop.f32.mrf.mxu0
  %959 = vmatprep.mubr.bf16.mxu0 %v749
  %960 = vmatmul.mubr.bf16.gmra.mxu0 %v717
  %v961 = vpop.f32.mrf.mxu0
  %v962 = vadd.f32 0.0, %v961
  %v963 = vpop.f32.mrf.mxu0
  %v964 = vpop.f32.mrf.mxu0
  %v965 = vadd.f32 0.0, %v964
  %v966 = vpop.f32.mrf.mxu0
  %967 = vmatprep.mubr.bf16.mxu0 %v753
  %968 = vmatmul.mubr.bf16.gmra.mxu0 %v721
  %v969 = vpop.f32.mrf.mxu0
  %v970 = vadd.f32 0.0, %v969
  %v971 = vpop.f32.mrf.mxu0
  %v972 = vpop.f32.mrf.mxu0
  %v973 = vadd.f32 0.0, %v972
  %v974 = vpop.f32.mrf.mxu0
  %975 = vmatprep.mubr.bf16.mxu0 %v757
  %976 = vmatmul.mubr.bf16.gmra.mxu0 %v725
  %v977 = vpop.f32.mrf.mxu0
  %v978 = vadd.f32 0.0, %v977
  %v979 = vpop.f32.mrf.mxu0
  %v980 = vpop.f32.mrf.mxu0
  %v981 = vadd.f32 0.0, %v980
  %v982 = vpop.f32.mrf.mxu0
  %983 = vdwg.mxu0
  %v984 = vld [vmem:[%s2] sm:$0x1]
  %v985 = vld [vmem:[%s3] sm:$0x1]
  %vm986 = vcmask 261120
  %v987 = vsel %vm986, %v922, 0.0
  %v988 = vsel %vm986, %v925, 0.0
  %v989 = vadd.f32 %v987, %v988
  %v990 = vsel %vm986, %v930, 0.0
  %v991 = vadd.f32 %v989, %v990
  %v992 = vsel %vm986, %v933, 0.0
  %v993 = vadd.f32 %v991, %v992
  %v994 = vsel %vm986, %v938, 0.0
  %v995 = vadd.f32 %v993, %v994
  %v996 = vsel %vm986, %v941, 0.0
  %v997 = vadd.f32 %v995, %v996
  %v998 = vsel %vm986, %v946, 0.0
  %v999 = vadd.f32 %v997, %v998
  %v1000 = vsel %vm986, %v949, 0.0
  %v1001 = vadd.f32 %v999, %v1000
  %v1002 = vsel %vm986, %v954, 0.0
  %v1003 = vadd.f32 %v1001, %v1002
  %v1004 = vsel %vm986, %v957, 0.0
  %v1005 = vadd.f32 %v1003, %v1004
  %v1006 = vsel %vm986, %v962, 0.0
  %v1007 = vadd.f32 %v1005, %v1006
  %v1008 = vsel %vm986, %v965, 0.0
  %v1009 = vadd.f32 %v1007, %v1008
  %v1010 = vsel %vm986, %v970, 0.0
  %v1011 = vadd.f32 %v1009, %v1010
  %v1012 = vsel %vm986, %v973, 0.0
  %v1013 = vadd.f32 %v1011, %v1012
  %v1014 = vsel %vm986, %v978, 0.0
  %v1015 = vadd.f32 %v1013, %v1014
  %v1016 = vsel %vm986, %v981, 0.0
  %v1017 = vadd.f32 %v1015, %v1016
  %v1018 = vrot.slane %v1017, 4
  %v1019 = vadd.f32 %v1017, %v1018
  %v1020 = vrot.slane %v1019, 2
  %v1021 = vadd.f32 %v1019, %v1020
  %v1022 = vrot.slane %v1021, 1
  %v1023 = vadd.f32 %v1021, %v1022
  %v1024 = vmul.f32 %v1023, 0.0078125
  %v1025 = vmul.f32 %v922, %v922
  %v1026 = vmul.f32 %v925, %v925
  %v1027 = vmul.f32 %v930, %v930
  %v1028 = vmul.f32 %v933, %v933
  %v1029 = vmul.f32 %v938, %v938
  %v1030 = vmul.f32 %v941, %v941
  %v1031 = vmul.f32 %v946, %v946
  %v1032 = vmul.f32 %v949, %v949
  %v1033 = vmul.f32 %v954, %v954
  %v1034 = vmul.f32 %v957, %v957
  %v1035 = vmul.f32 %v962, %v962
  %v1036 = vmul.f32 %v965, %v965
  %v1037 = vmul.f32 %v970, %v970
  %v1038 = vmul.f32 %v973, %v973
  %v1039 = vmul.f32 %v978, %v978
  %v1040 = vmul.f32 %v981, %v981
  %v1041 = vsel %vm986, %v1025, 0.0
  %v1042 = vsel %vm986, %v1026, 0.0
  %v1043 = vadd.f32 %v1041, %v1042
  %v1044 = vsel %vm986, %v1027, 0.0
  %v1045 = vadd.f32 %v1043, %v1044
  %v1046 = vsel %vm986, %v1028, 0.0
  %v1047 = vadd.f32 %v1045, %v1046
  %v1048 = vsel %vm986, %v1029, 0.0
  %v1049 = vadd.f32 %v1047, %v1048
  %v1050 = vsel %vm986, %v1030, 0.0
  %v1051 = vadd.f32 %v1049, %v1050
  %v1052 = vsel %vm986, %v1031, 0.0
  %v1053 = vadd.f32 %v1051, %v1052
  %v1054 = vsel %vm986, %v1032, 0.0
  %v1055 = vadd.f32 %v1053, %v1054
  %v1056 = vsel %vm986, %v1033, 0.0
  %v1057 = vadd.f32 %v1055, %v1056
  %v1058 = vsel %vm986, %v1034, 0.0
  %v1059 = vadd.f32 %v1057, %v1058
  %v1060 = vsel %vm986, %v1035, 0.0
  %v1061 = vadd.f32 %v1059, %v1060
  %v1062 = vsel %vm986, %v1036, 0.0
  %v1063 = vadd.f32 %v1061, %v1062
  %v1064 = vsel %vm986, %v1037, 0.0
  %v1065 = vadd.f32 %v1063, %v1064
  %v1066 = vsel %vm986, %v1038, 0.0
  %v1067 = vadd.f32 %v1065, %v1066
  %v1068 = vsel %vm986, %v1039, 0.0
  %v1069 = vadd.f32 %v1067, %v1068
  %v1070 = vsel %vm986, %v1040, 0.0
  %v1071 = vadd.f32 %v1069, %v1070
  %v1072 = vrot.slane %v1071, 4
  %v1073 = vadd.f32 %v1071, %v1072
  %v1074 = vrot.slane %v1073, 2
  %v1075 = vadd.f32 %v1073, %v1074
  %v1076 = vrot.slane %v1075, 1
  %v1077 = vadd.f32 %v1075, %v1076
  %v1078 = vmul.f32 %v1077, 0.0078125
  %v1079 = vmul.f32 %v1024, %v1024
  %v1080 = vsub.f32 %v1078, %v1079
  %v1081 = vadd.f32 %v1080, 1e-05
  %v1082 = vrsqrt.pop %v1081
  %v1083 = vmul.f32 %v984, %v1082
  %v1084 = vmul.f32 %v1024, %v1083
  %v1085 = vsub.f32 %v985, %v1084
  %v1087 = vlaneseq
  %v1088 = vshrl.u32 %v1087, 7
  %v1089 = vsub.s32 0, %v1088
  %v1090 = vrot.slane %v1083, %v1089
  %v1092 = vmul.f32 %v922, %v1090
  %v1093 = vmul.f32 %v925, %v1090
  %v1094 = vmul.f32 %v930, %v1090
  %v1095 = vmul.f32 %v933, %v1090
  %v1096 = vmul.f32 %v938, %v1090
  %v1097 = vmul.f32 %v941, %v1090
  %v1098 = vmul.f32 %v946, %v1090
  %v1099 = vmul.f32 %v949, %v1090
  %v1100 = vmul.f32 %v954, %v1090
  %v1101 = vmul.f32 %v957, %v1090
  %v1102 = vmul.f32 %v962, %v1090
  %v1103 = vmul.f32 %v965, %v1090
  %v1104 = vmul.f32 %v970, %v1090
  %v1105 = vmul.f32 %v973, %v1090
  %v1106 = vmul.f32 %v978, %v1090
  %v1107 = vmul.f32 %v981, %v1090
  %v1109 = vlaneseq
  %v1110 = vshrl.u32 %v1109, 7
  %v1111 = vsub.s32 0, %v1110
  %v1112 = vrot.slane %v1085, %v1111
  %v1114 = vadd.f32 %v1092, %v1112
  %v1115 = vadd.f32 %v1093, %v1112
  %v1116 = vadd.f32 %v1094, %v1112
  %v1117 = vadd.f32 %v1095, %v1112
  %v1118 = vadd.f32 %v1096, %v1112
  %v1119 = vadd.f32 %v1097, %v1112
  %v1120 = vadd.f32 %v1098, %v1112
  %v1121 = vadd.f32 %v1099, %v1112
  %v1122 = vadd.f32 %v1100, %v1112
  %v1123 = vadd.f32 %v1101, %v1112
  %v1124 = vadd.f32 %v1102, %v1112
  %v1125 = vadd.f32 %v1103, %v1112
  %v1126 = vadd.f32 %v1104, %v1112
  %v1127 = vadd.f32 %v1105, %v1112
  %v1128 = vadd.f32 %v1106, %v1112
  %v1129 = vadd.f32 %v1107, %v1112
  %vm1130 = vcmp.ge.f32.partialorder %v1114, 0.0
  %vm1131 = vcmp.ge.f32.partialorder %v1115, 0.0
  %vm1132 = vcmp.ge.f32.partialorder %v1116, 0.0
  %vm1133 = vcmp.ge.f32.partialorder %v1117, 0.0
  %vm1134 = vcmp.ge.f32.partialorder %v1118, 0.0
  %vm1135 = vcmp.ge.f32.partialorder %v1119, 0.0
  %vm1136 = vcmp.ge.f32.partialorder %v1120, 0.0
  %vm1137 = vcmp.ge.f32.partialorder %v1121, 0.0
  %vm1138 = vcmp.ge.f32.partialorder %v1122, 0.0
  %vm1139 = vcmp.ge.f32.partialorder %v1123, 0.0
  %vm1140 = vcmp.ge.f32.partialorder %v1124, 0.0
  %vm1141 = vcmp.ge.f32.partialorder %v1125, 0.0
  %vm1142 = vcmp.ge.f32.partialorder %v1126, 0.0
  %vm1143 = vcmp.ge.f32.partialorder %v1127, 0.0
  %vm1144 = vcmp.ge.f32.partialorder %v1128, 0.0
  %vm1145 = vcmp.ge.f32.partialorder %v1129, 0.0
  %v1146 = vmul.f32 %v1114, 0.2
  %v1147 = vmul.f32 %v1115, 0.2
  %v1148 = vmul.f32 %v1116, 0.2
  %v1149 = vmul.f32 %v1117, 0.2
  %v1150 = vmul.f32 %v1118, 0.2
  %v1151 = vmul.f32 %v1119, 0.2
  %v1152 = vmul.f32 %v1120, 0.2
  %v1153 = vmul.f32 %v1121, 0.2
  %v1154 = vmul.f32 %v1122, 0.2
  %v1155 = vmul.f32 %v1123, 0.2
  %v1156 = vmul.f32 %v1124, 0.2
  %v1157 = vmul.f32 %v1125, 0.2
  %v1158 = vmul.f32 %v1126, 0.2
  %v1159 = vmul.f32 %v1127, 0.2
  %v1160 = vmul.f32 %v1128, 0.2
  %v1161 = vmul.f32 %v1129, 0.2
  %v1162 = vsel %vm1130, %v1114, %v1146
  %v1163 = vsel %vm1131, %v1115, %v1147
  %v1164 = vsel %vm1132, %v1116, %v1148
  %v1165 = vsel %vm1133, %v1117, %v1149
  %v1166 = vsel %vm1134, %v1118, %v1150
  %v1167 = vsel %vm1135, %v1119, %v1151
  %v1168 = vsel %vm1136, %v1120, %v1152
  %v1169 = vsel %vm1137, %v1121, %v1153
  %v1170 = vsel %vm1138, %v1122, %v1154
  %v1171 = vsel %vm1139, %v1123, %v1155
  %v1172 = vsel %vm1140, %v1124, %v1156
  %v1173 = vsel %vm1141, %v1125, %v1157
  %v1174 = vsel %vm1142, %v1126, %v1158
  %v1175 = vsel %vm1143, %v1127, %v1159
  %v1176 = vsel %vm1144, %v1128, %v1160
  %v1177 = vsel %vm1145, %v1129, %v1161
  %v1178 = vpack.c.bf16 %v1163, %v1162
  %v1179 = vpack.c.bf16 %v1165, %v1164
  %v1180 = vpack.c.bf16 %v1167, %v1166
  %v1181 = vpack.c.bf16 %v1169, %v1168
  %v1182 = vpack.c.bf16 %v1171, %v1170
  %v1183 = vpack.c.bf16 %v1173, %v1172
  %v1184 = vpack.c.bf16 %v1175, %v1174
  %v1185 = vpack.c.bf16 %v1177, %v1176
  %v1194 = vunpack.c.l.b16 %v1178
  %v1195 = vunpack.c.h.b16 %v1178
  %v1196 = vunpack.c.l.b16 %v1179
  %v1197 = vunpack.c.h.b16 %v1179
  %v1198 = vunpack.c.l.b16 %v1180
  %v1199 = vunpack.c.h.b16 %v1180
  %v1200 = vunpack.c.l.b16 %v1181
  %v1201 = vunpack.c.h.b16 %v1181
  %v1202 = vunpack.c.l.b16 %v1182
  %v1203 = vunpack.c.h.b16 %v1182
  %v1204 = vunpack.c.l.b16 %v1183
  %v1205 = vunpack.c.h.b16 %v1183
  %v1206 = vunpack.c.l.b16 %v1184
  %v1207 = vunpack.c.h.b16 %v1184
  %v1208 = vunpack.c.l.b16 %v1185
  %v1209 = vunpack.c.h.b16 %v1185
  %v1210 = vpack.c.b16 %v1194, %v1194
  %v1211 = vpack.c.b16 %v1195, %v1195
  %v1212 = vpack.c.b16 %v1196, %v1196
  %v1213 = vpack.c.b16 %v1197, %v1197
  %v1214 = vpack.c.b16 %v1198, %v1198
  %v1215 = vpack.c.b16 %v1199, %v1199
  %v1216 = vpack.c.b16 %v1200, %v1200
  %v1217 = vpack.c.b16 %v1201, %v1201
  %v1218 = vpack.c.b16 %v1202, %v1202
  %v1219 = vpack.c.b16 %v1203, %v1203
  %v1220 = vpack.c.b16 %v1204, %v1204
  %v1221 = vpack.c.b16 %v1205, %v1205
  %v1222 = vpack.c.b16 %v1206, %v1206
  %v1223 = vpack.c.b16 %v1207, %v1207
  %v1224 = vpack.c.b16 %v1208, %v1208
  %v1225 = vpack.c.b16 %v1209, %v1209
  %vm1242 = vcmask 257024
  %1243 = vst.msk [vmem:[%s4] sm:$0xf] %vm1242, %v1210
  %1244 = vst.msk [vmem:[%s4 + $0x4] sm:$0xf] %vm1242, %v1211
  %1245 = vst.msk [vmem:[%s4 + $0x8] sm:$0xf] %vm1242, %v1212
  %1246 = vst.msk [vmem:[%s4 + $0xc] sm:$0xf] %vm1242, %v1213
  %1247 = vst.msk [vmem:[%s4 + $0x10] sm:$0xf] %vm1242, %v1214
  %1248 = vst.msk [vmem:[%s4 + $0x14] sm:$0xf] %vm1242, %v1215
  %1249 = vst.msk [vmem:[%s4 + $0x18] sm:$0xf] %vm1242, %v1216
  %1250 = vst.msk [vmem:[%s4 + $0x1c] sm:$0xf] %vm1242, %v1217
  %1251 = vst.msk [vmem:[%s4 + $0x20] sm:$0xf] %vm1242, %v1218
  %1252 = vst.msk [vmem:[%s4 + $0x24] sm:$0xf] %vm1242, %v1219
  %1253 = vst.msk [vmem:[%s4 + $0x28] sm:$0xf] %vm1242, %v1220
  %1254 = vst.msk [vmem:[%s4 + $0x2c] sm:$0xf] %vm1242, %v1221
  %1255 = vst.msk [vmem:[%s4 + $0x30] sm:$0xf] %vm1242, %v1222
  %1256 = vst.msk [vmem:[%s4 + $0x34] sm:$0xf] %vm1242, %v1223
  %1257 = vst.msk [vmem:[%s4 + $0x38] sm:$0xf] %vm1242, %v1224
  %1258 = vst.msk [vmem:[%s4 + $0x3c] sm:$0xf] %vm1242, %v1225
  // Predicated region
  $region18: #{discriminator_forward.6} parent=0 // pred_check
    _
  $region19: #{discriminator_forward.6} parent=0 // pred_check_branch
    %1260 = sbr.rel (0) target = $region21
  $region20: #{discriminator_forward.6} parent=0 // pred_region
    _
  $region21: #{discriminator_forward.6} parent=0 // pred_fallthru
    _
  // Predicated region
  $region22: #{discriminator_forward.6} parent=0 // pred_check
    _
  $region23: #{discriminator_forward.6} parent=0 // pred_check_branch
    %1262 = sbr.rel (0) target = $region25
  $region24: #{discriminator_forward.6} parent=0 // pred_region
    _
  $region25: #{discriminator_forward.6} parent=0 // pred_fallthru
    _

// kernel: discriminator_forward.5
$region0: #{discriminator_forward.5}
  #allocation0 [shape = 'u32[]', space=smem, size = 0x4, offset = 0x4, fixed_abs, tag = 'smem constant byte address 0x4 - core index']
  #allocation1 [shape = 'u32[144,128]{1,0:T(1,128)}', space=vmem, size = 0x12000, scoped, tag = 'internal scratch']
  %s0 = inlined_call_operand.vmem [shape: bf16[2,17,17,32], index: 0, kind: input, shape index: {}]
  %s1 = inlined_call_operand.vmem [shape: bf16[128,16], index: 1, kind: input, shape index: {}]
  %s2 = inlined_call_operand.vmem [shape: f32[1,16], index: 2, kind: input, shape index: {}]
  %s3 = inlined_call_operand.vmem [shape: f32[1,16], index: 3, kind: input, shape index: {}]
  %s4 = inlined_call_operand.vmem [shape: bf16[512,16], index: 4, kind: output, shape index: {}]
  %s5 = sld [smem:[#allocation0]]
  $region26: #{discriminator_forward.5} parent=0
    _
  %s7 = ssub.s32 1, %s5
  %s8 = scalar_select 0, %s7, %s5
  // Predicated region
  $region2: #{discriminator_forward.5} parent=0 // pred_check
    _
  $region3: #{discriminator_forward.5} parent=0 // pred_check_branch
    %10 = sbr.rel (0) target = $region5
  $region4: #{discriminator_forward.5} parent=0 // pred_region
    _
  $region5: #{discriminator_forward.5} parent=0 // pred_fallthru
    _
  // Predicated region
  $region6: #{discriminator_forward.5} parent=0 // pred_check
    _
  $region7: #{discriminator_forward.5} parent=0 // pred_check_branch
    %12 = sbr.rel (0) target = $region9
  $region8: #{discriminator_forward.5} parent=0 // pred_region
    _
  $region9: #{discriminator_forward.5} parent=0 // pred_fallthru
    _
  // Predicated region
  $region10: #{discriminator_forward.5} parent=0 // pred_check
    _
  $region11: #{discriminator_forward.5} parent=0 // pred_check_branch
    %14 = sbr.rel (0) target = $region13
  $region12: #{discriminator_forward.5} parent=0 // pred_region
    _
  $region13: #{discriminator_forward.5} parent=0 // pred_fallthru
    _
  // Predicated region
  $region14: #{discriminator_forward.5} parent=0 // pred_check
    _
  $region15: #{discriminator_forward.5} parent=0 // pred_check_branch
    %16 = sbr.rel (0) target = $region17
  $region16: #{discriminator_forward.5} parent=0 // pred_region
    _
  $region17: #{discriminator_forward.5} parent=0 // pred_fallthru
    _
  %v18 = vld [vmem:[%s0] sm:$0xf]
  %v19 = vld [vmem:[%s0 + $0x4] sm:$0xf]
  %v20 = vld [vmem:[%s0 + $0xc] sm:$0xf]
  %v21 = vld [vmem:[%s0 + $0x10] sm:$0xf]
  %v22 = vld [vmem:[%s0 + $0x18] sm:$0xf]
  %v23 = vld [vmem:[%s0 + $0x1c] sm:$0xf]
  %v24 = vld [vmem:[%s0 + $0x24] sm:$0xf]
  %v25 = vld [vmem:[%s0 + $0x28] sm:$0xf]
  %v26 = vld [vmem:[%s0 + $0x30] sm:$0xf]
  %v27 = vld [vmem:[%s0 + $0x34] sm:$0xf]
  %v28 = vld [vmem:[%s0 + $0x3c] sm:$0xf]
  %v29 = vld [vmem:[%s0 + $0x40] sm:$0xf]
  %v30 = vld [vmem:[%s0 + $0x48] sm:$0xf]
  %v31 = vld [vmem:[%s0 + $0x4c] sm:$0xf]
  %v32 = vld [vmem:[%s0 + $0x54] sm:$0xf]
  %v33 = vld [vmem:[%s0 + $0x58] sm:$0xf]
  %v34 = vld [vmem:[%s0 + $0x60] sm:$0xf]
  %v35 = vld [vmem:[%s0 + $0x64] sm:$0xf]
  %v36 = vld [vmem:[%s0 + $0x6c] sm:$0xf]
  %v37 = vld [vmem:[%s0 + $0x70] sm:$0xf]
  %v38 = vld [vmem:[%s0 + $0x78] sm:$0xf]
  %v39 = vld [vmem:[%s0 + $0x7c] sm:$0xf]
  %v40 = vld [vmem:[%s0 + $0x84] sm:$0xf]
  %v41 = vld [vmem:[%s0 + $0x88] sm:$0xf]
  %v42 = vld [vmem:[%s0 + $0x90] sm:$0xf]
  %v43 = vld [vmem:[%s0 + $0x94] sm:$0xf]
  %v44 = vld [vmem:[%s0 + $0x9c] sm:$0xf]
  %v45 = vld [vmem:[%s0 + $0xa0] sm:$0xf]
  %v46 = vld [vmem:[%s0 + $0xa8] sm:$0xf]
  %v47 = vld [vmem:[%s0 + $0xac] sm:$0xf]
  %v48 = vld [vmem:[%s0 + $0xb4] sm:$0xf]
  %v49 = vld [vmem:[%s0 + $0xb8] sm:$0xf]
  %v50 = vld [vmem:[%s0 + $0xcc] sm:$0xf]
  %v51 = vld [vmem:[%s0 + $0xd0] sm:$0xf]
  %v52 = vld [vmem:[%s0 + $0xd8] sm:$0xf]
  %v53 = vld [vmem:[%s0 + $0xdc] sm:$0xf]
  %v54 = vld [vmem:[%s0 + $0xe4] sm:$0xf]
  %v55 = vld [vmem:[%s0 + $0xe8] sm:$0xf]
  %v56 = vld [vmem:[%s0 + $0xf0] sm:$0xf]
  %v57 = vld [vmem:[%s0 + $0xf4] sm:$0xf]
  %v58 = vld [vmem:[%s0 + $0xfc] sm:$0xf]
  %v59 = vld [vmem:[%s0 + $0x100] sm:$0xf]
  %v60 = vld [vmem:[%s0 + $0x108] sm:$0xf]
  %v61 = vld [vmem:[%s0 + $0x10c] sm:$0xf]
  %v62 = vld [vmem:[%s0 + $0x114] sm:$0xf]
  %v63 = vld [vmem:[%s0 + $0x118] sm:$0xf]
  %v64 = vld [vmem:[%s0 + $0x120] sm:$0xf]
  %v65 = vld [vmem:[%s0 + $0x124] sm:$0xf]
  %v66 = vld [vmem:[%s0 + $0x12c] sm:$0xf]
  %v67 = vld [vmem:[%s0 + $0x130] sm:$0xf]
  %v68 = vld [vmem:[%s0 + $0x138] sm:$0xf]
  %v69 = vld [vmem:[%s0 + $0x13c] sm:$0xf]
  %v70 = vld [vmem:[%s0 + $0x144] sm:$0xf]
  %v71 = vld [vmem:[%s0 + $0x148] sm:$0xf]
  %v72 = vld [vmem:[%s0 + $0x150] sm:$0xf]
  %v73 = vld [vmem:[%s0 + $0x154] sm:$0xf]
  %v74 = vld [vmem:[%s0 + $0x15c] sm:$0xf]
  %v75 = vld [vmem:[%s0 + $0x160] sm:$0xf]
  %v76 = vld [vmem:[%s0 + $0x168] sm:$0xf]
  %v77 = vld [vmem:[%s0 + $0x16c] sm:$0xf]
  %v78 = vld [vmem:[%s0 + $0x174] sm:$0xf]
  %v79 = vld [vmem:[%s0 + $0x178] sm:$0xf]
  %v80 = vld [vmem:[%s0 + $0x180] sm:$0xf]
  %v81 = vld [vmem:[%s0 + $0x184] sm:$0xf]
  %v82 = vld [vmem:[%s0 + $0x8] sm:$0x1]
  %v83 = vld [vmem:[%s0 + $0x14] sm:$0x1]
  %v84 = vld [vmem:[%s0 + $0x20] sm:$0x1]
  %v85 = vld [vmem:[%s0 + $0x2c] sm:$0x1]
  %v86 = vld [vmem:[%s0 + $0x38] sm:$0x1]
  %v87 = vld [vmem:[%s0 + $0x44] sm:$0x1]
  %v88 = vld [vmem:[%s0 + $0x50] sm:$0x1]
  %v89 = vld [vmem:[%s0 + $0x5c] sm:$0x1]
  %v90 = vld [vmem:[%s0 + $0x68] sm:$0x1]
  %v91 = vld [vmem:[%s0 + $0x74] sm:$0x1]
  %v92 = vld [vmem:[%s0 + $0x80] sm:$0x1]
  %v93 = vld [vmem:[%s0 + $0x8c] sm:$0x1]
  %v94 = vld [vmem:[%s0 + $0x98] sm:$0x1]
  %v95 = vld [vmem:[%s0 + $0xa4] sm:$0x1]
  %v96 = vld [vmem:[%s0 + $0xb0] sm:$0x1]
  %v97 = vld [vmem:[%s0 + $0xbc] sm:$0x1]
  %v98 = vld [vmem:[%s0 + $0xd4] sm:$0x1]
  %v99 = vld [vmem:[%s0 + $0xe0] sm:$0x1]
  %v100 = vld [vmem:[%s0 + $0xec] sm:$0x1]
  %v101 = vld [vmem:[%s0 + $0xf8] sm:$0x1]
  %v102 = vld [vmem:[%s0 + $0x104] sm:$0x1]
  %v103 = vld [vmem:[%s0 + $0x110] sm:$0x1]
  %v104 = vld [vmem:[%s0 + $0x11c] sm:$0x1]
  %v105 = vld [vmem:[%s0 + $0x128] sm:$0x1]
  %v106 = vld [vmem:[%s0 + $0x134] sm:$0x1]
  %v107 = vld [vmem:[%s0 + $0x140] sm:$0x1]
  %v108 = vld [vmem:[%s0 + $0x14c] sm:$0x1]
  %v109 = vld [vmem:[%s0 + $0x158] sm:$0x1]
  %v110 = vld [vmem:[%s0 + $0x164] sm:$0x1]
  %v111 = vld [vmem:[%s0 + $0x170] sm:$0x1]
  %v112 = vld [vmem:[%s0 + $0x17c] sm:$0x1]
  %v113 = vld [vmem:[%s0 + $0x188] sm:$0x1]
  %vm114 = vsmask.f32 3328
  %vm115 = vsmask.f32 7440
  %vm116 = vmor %vm114, %vm115
  %v118 = vshrl.u32 %v18, 16
  %v120 = vrot.slane %v118, 4
  %v121 = vshll.u32 %v18, 16
  %v123 = vrot.slane %v121, 5
  %v124 = vor.u32 %v120, %v123
  %v125 = vrot.slane %v124, 4
  %v127 = vshll.u32 %v19, 16
  %v129 = vrot.slane %v127, 5
  %v130 = vsel %vm116, %v125, %v129
  %v131 = vshrl.u32 %v19, 16
  %v133 = vrot.slane %v131, 4
  %v134 = vor.u32 %v133, %v129
  %v135 = vrot.slane %v134, 4
  %v137 = vshll.u32 %v82, 16
  %v139 = vrot.slane %v137, 5
  %v140 = vsel %vm116, %v135, %v139
  %v142 = vshrl.u32 %v20, 16
  %v144 = vrot.slane %v142, 4
  %v145 = vshll.u32 %v20, 16
  %v147 = vrot.slane %v145, 5
  %v148 = vor.u32 %v144, %v147
  %v149 = vrot.slane %v148, 4
  %v151 = vshll.u32 %v21, 16
  %v153 = vrot.slane %v151, 5
  %v154 = vsel %vm116, %v149, %v153
  %v155 = vshrl.u32 %v21, 16
  %v157 = vrot.slane %v155, 4
  %v158 = vor.u32 %v157, %v153
  %v159 = vrot.slane %v158, 4
  %v161 = vshll.u32 %v83, 16
  %v163 = vrot.slane %v161, 5
  %v164 = vsel %vm116, %v159, %v163
  %v166 = vshrl.u32 %v22, 16
  %v168 = vrot.slane %v166, 4
  %v169 = vshll.u32 %v22, 16
  %v171 = vrot.slane %v169, 5
  %v172 = vor.u32 %v168, %v171
  %v173 = vrot.slane %v172, 4
  %v175 = vshll.u32 %v23, 16
  %v177 = vrot.slane %v175, 5
  %v178 = vsel %vm116, %v173, %v177
  %v179 = vshrl.u32 %v23, 16
  %v181 = vrot.slane %v179, 4
  %v182 = vor.u32 %v181, %v177
  %v183 = vrot.slane %v182, 4
  %v185 = vshll.u32 %v84, 16
  %v187 = vrot.slane %v185, 5
  %v188 = vsel %vm116, %v183, %v187
  %v190 = vshrl.u32 %v24, 16
  %v192 = vrot.slane %v190, 4
  %v193 = vshll.u32 %v24, 16
  %v195 = vrot.slane %v193, 5
  %v196 = vor.u32 %v192, %v195
  %v197 = vrot.slane %v196, 4
  %v199 = vshll.u32 %v25, 16
  %v201 = vrot.slane %v199, 5
  %v202 = vsel %vm116, %v197, %v201
  %v203 = vshrl.u32 %v25, 16
  %v205 = vrot.slane %v203, 4
  %v206 = vor.u32 %v205, %v201
  %v207 = vrot.slane %v206, 4
  %v209 = vshll.u32 %v85, 16
  %v211 = vrot.slane %v209, 5
  %v212 = vsel %vm116, %v207, %v211
  %v214 = vshrl.u32 %v26, 16
  %v216 = vrot.slane %v214, 4
  %v217 = vshll.u32 %v26, 16
  %v219 = vrot.slane %v217, 5
  %v220 = vor.u32 %v216, %v219
  %v221 = vrot.slane %v220, 4
  %v223 = vshll.u32 %v27, 16
  %v225 = vrot.slane %v223, 5
  %v226 = vsel %vm116, %v221, %v225
  %v227 = vshrl.u32 %v27, 16
  %v229 = vrot.slane %v227, 4
  %v230 = vor.u32 %v229, %v225
  %v231 = vrot.slane %v230, 4
  %v233 = vshll.u32 %v86, 16
  %v235 = vrot.slane %v233, 5
  %v236 = vsel %vm116, %v231, %v235
  %v238 = vshrl.u32 %v28, 16
  %v240 = vrot.slane %v238, 4
  %v241 = vshll.u32 %v28, 16
  %v243 = vrot.slane %v241, 5
  %v244 = vor.u32 %v240, %v243
  %v245 = vrot.slane %v244, 4
  %v247 = vshll.u32 %v29, 16
  %v249 = vrot.slane %v247, 5
  %v250 = vsel %vm116, %v245, %v249
  %v251 = vshrl.u32 %v29, 16
  %v253 = vrot.slane %v251, 4
  %v254 = vor.u32 %v253, %v249
  %v255 = vrot.slane %v254, 4
  %v257 = vshll.u32 %v87, 16
  %v259 = vrot.slane %v257, 5
  %v260 = vsel %vm116, %v255, %v259
  %v262 = vshrl.u32 %v30, 16
  %v264 = vrot.slane %v262, 4
  %v265 = vshll.u32 %v30, 16
  %v267 = vrot.slane %v265, 5
  %v268 = vor.u32 %v264, %v267
  %v269 = vrot.slane %v268, 4
  %v271 = vshll.u32 %v31, 16
  %v273 = vrot.slane %v271, 5
  %v274 = vsel %vm116, %v269, %v273
  %v275 = vshrl.u32 %v31, 16
  %v277 = vrot.slane %v275, 4
  %v278 = vor.u32 %v277, %v273
  %v279 = vrot.slane %v278, 4
  %v281 = vshll.u32 %v88, 16
  %v283 = vrot.slane %v281, 5
  %v284 = vsel %vm116, %v279, %v283
  %v286 = vshrl.u32 %v32, 16
  %v288 = vrot.slane %v286, 4
  %v289 = vshll.u32 %v32, 16
  %v291 = vrot.slane %v289, 5
  %v292 = vor.u32 %v288, %v291
  %v293 = vrot.slane %v292, 4
  %v295 = vshll.u32 %v33, 16
  %v297 = vrot.slane %v295, 5
  %v298 = vsel %vm116, %v293, %v297
  %v299 = vshrl.u32 %v33, 16
  %v301 = vrot.slane %v299, 4
  %v302 = vor.u32 %v301, %v297
  %v303 = vrot.slane %v302, 4
  %v305 = vshll.u32 %v89, 16
  %v307 = vrot.slane %v305, 5
  %v308 = vsel %vm116, %v303, %v307
  %v310 = vshrl.u32 %v34, 16
  %v312 = vrot.slane %v310, 4
  %v313 = vshll.u32 %v34, 16
  %v315 = vrot.slane %v313, 5
  %v316 = vor.u32 %v312, %v315
  %v317 = vrot.slane %v316, 4
  %v319 = vshll.u32 %v35, 16
  %v321 = vrot.slane %v319, 5
  %v322 = vsel %vm116, %v317, %v321
  %v323 = vshrl.u32 %v35, 16
  %v325 = vrot.slane %v323, 4
  %v326 = vor.u32 %v325, %v321
  %v327 = vrot.slane %v326, 4
  %v329 = vshll.u32 %v90, 16
  %v331 = vrot.slane %v329, 5
  %v332 = vsel %vm116, %v327, %v331
  %v334 = vshrl.u32 %v36, 16
  %v336 = vrot.slane %v334, 4
  %v337 = vshll.u32 %v36, 16
  %v339 = vrot.slane %v337, 5
  %v340 = vor.u32 %v336, %v339
  %v341 = vrot.slane %v340, 4
  %v343 = vshll.u32 %v37, 16
  %v345 = vrot.slane %v343, 5
  %v346 = vsel %vm116, %v341, %v345
  %v347 = vshrl.u32 %v37, 16
  %v349 = vrot.slane %v347, 4
  %v350 = vor.u32 %v349, %v345
  %v351 = vrot.slane %v350, 4
  %v353 = vshll.u32 %v91, 16
  %v355 = vrot.slane %v353, 5
  %v356 = vsel %vm116, %v351, %v355
  %v358 = vshrl.u32 %v38, 16
  %v360 = vrot.slane %v358, 4
  %v361 = vshll.u32 %v38, 16
  %v363 = vrot.slane %v361, 5
  %v364 = vor.u32 %v360, %v363
  %v365 = vrot.slane %v364, 4
  %v367 = vshll.u32 %v39, 16
  %v369 = vrot.slane %v367, 5
  %v370 = vsel %vm116, %v365, %v369
  %v371 = vshrl.u32 %v39, 16
  %v373 = vrot.slane %v371, 4
  %v374 = vor.u32 %v373, %v369
  %v375 = vrot.slane %v374, 4
  %v377 = vshll.u32 %v92, 16
  %v379 = vrot.slane %v377, 5
  %v380 = vsel %vm116, %v375, %v379
  %v382 = vshrl.u32 %v40, 16
  %v384 = vrot.slane %v382, 4
  %v385 = vshll.u32 %v40, 16
  %v387 = vrot.slane %v385, 5
  %v388 = vor.u32 %v384, %v387
  %v389 = vrot.slane %v388, 4
  %v391 = vshll.u32 %v41, 16
  %v393 = vrot.slane %v391, 5
  %v394 = vsel %vm116, %v389, %v393
  %v395 = vshrl.u32 %v41, 16
  %v397 = vrot.slane %v395, 4
  %v398 = vor.u32 %v397, %v393
  %v399 = vrot.slane %v398, 4
  %v401 = vshll.u32 %v93, 16
  %v403 = vrot.slane %v401, 5
  %v404 = vsel %vm116, %v399, %v403
  %v406 = vshrl.u32 %v42, 16
  %v408 = vrot.slane %v406, 4
  %v409 = vshll.u32 %v42, 16
  %v411 = vrot.slane %v409, 5
  %v412 = vor.u32 %v408, %v411
  %v413 = vrot.slane %v412, 4
  %v415 = vshll.u32 %v43, 16
  %v417 = vrot.slane %v415, 5
  %v418 = vsel %vm116, %v413, %v417
  %v419 = vshrl.u32 %v43, 16
  %v421 = vrot.slane %v419, 4
  %v422 = vor.u32 %v421, %v417
  %v423 = vrot.slane %v422, 4
  %v425 = vshll.u32 %v94, 16
  %v427 = vrot.slane %v425, 5
  %v428 = vsel %vm116, %v423, %v427
  %v430 = vshrl.u32 %v44, 16
  %v432 = vrot.slane %v430, 4
  %v433 = vshll.u32 %v44, 16
  %v435 = vrot.slane %v433, 5
  %v436 = vor.u32 %v432, %v435
  %v437 = vrot.slane %v436, 4
  %v439 = vshll.u32 %v45, 16
  %v441 = vrot.slane %v439, 5
  %v442 = vsel %vm116, %v437, %v441
  %v443 = vshrl.u32 %v45, 16
  %v445 = vrot.slane %v443, 4
  %v446 = vor.u32 %v445, %v441
  %v447 = vrot.slane %v446, 4
  %v449 = vshll.u32 %v95, 16
  %v451 = vrot.slane %v449, 5
  %v452 = vsel %vm116, %v447, %v451
  %v454 = vshrl.u32 %v46, 16
  %v456 = vrot.slane %v454, 4
  %v457 = vshll.u32 %v46, 16
  %v459 = vrot.slane %v457, 5
  %v460 = vor.u32 %v456, %v459
  %v461 = vrot.slane %v460, 4
  %v463 = vshll.u32 %v47, 16
  %v465 = vrot.slane %v463, 5
  %v466 = vsel %vm116, %v461, %v465
  %v467 = vshrl.u32 %v47, 16
  %v469 = vrot.slane %v467, 4
  %v470 = vor.u32 %v469, %v465
  %v471 = vrot.slane %v470, 4
  %v473 = vshll.u32 %v96, 16
  %v475 = vrot.slane %v473, 5
  %v476 = vsel %vm116, %v471, %v475
  %v478 = vshrl.u32 %v48, 16
  %v480 = vrot.slane %v478, 4
  %v481 = vshll.u32 %v48, 16
  %v483 = vrot.slane %v481, 5
  %v484 = vor.u32 %v480, %v483
  %v485 = vrot.slane %v484, 4
  %v487 = vshll.u32 %v49, 16
  %v489 = vrot.slane %v487, 5
  %v490 = vsel %vm116, %v485, %v489
  %v491 = vshrl.u32 %v49, 16
  %v493 = vrot.slane %v491, 4
  %v494 = vor.u32 %v493, %v489
  %v495 = vrot.slane %v494, 4
  %v497 = vshll.u32 %v97, 16
  %v499 = vrot.slane %v497, 5
  %v500 = vsel %vm116, %v495, %v499
  %v502 = vshrl.u32 %v50, 16
  %v504 = vrot.slane %v502, 4
  %v505 = vshll.u32 %v50, 16
  %v507 = vrot.slane %v505, 5
  %v508 = vor.u32 %v504, %v507
  %v509 = vrot.slane %v508, 4
  %v511 = vshll.u32 %v51, 16
  %v513 = vrot.slane %v511, 5
  %v514 = vsel %vm116, %v509, %v513
  %v515 = vshrl.u32 %v51, 16
  %v517 = vrot.slane %v515, 4
  %v518 = vor.u32 %v517, %v513
  %v519 = vrot.slane %v518, 4
  %v521 = vshll.u32 %v98, 16
  %v523 = vrot.slane %v521, 5
  %v524 = vsel %vm116, %v519, %v523
  %v526 = vshrl.u32 %v52, 16
  %v528 = vrot.slane %v526, 4
  %v529 = vshll.u32 %v52, 16
  %v531 = vrot.slane %v529, 5
  %v532 = vor.u32 %v528, %v531
  %v533 = vrot.slane %v532, 4
  %v535 = vshll.u32 %v53, 16
  %v537 = vrot.slane %v535, 5
  %v538 = vsel %vm116, %v533, %v537
  %v539 = vshrl.u32 %v53, 16
  %v541 = vrot.slane %v539, 4
  %v542 = vor.u32 %v541, %v537
  %v543 = vrot.slane %v542, 4
  %v545 = vshll.u32 %v99, 16
  %v547 = vrot.slane %v545, 5
  %v548 = vsel %vm116, %v543, %v547
  %v550 = vshrl.u32 %v54, 16
  %v552 = vrot.slane %v550, 4
  %v553 = vshll.u32 %v54, 16
  %v555 = vrot.slane %v553, 5
  %v556 = vor.u32 %v552, %v555
  %v557 = vrot.slane %v556, 4
  %v559 = vshll.u32 %v55, 16
  %v561 = vrot.slane %v559, 5
  %v562 = vsel %vm116, %v557, %v561
  %v563 = vshrl.u32 %v55, 16
  %v565 = vrot.slane %v563, 4
  %v566 = vor.u32 %v565, %v561
  %v567 = vrot.slane %v566, 4
  %v569 = vshll.u32 %v100, 16
  %v571 = vrot.slane %v569, 5
  %v572 = vsel %vm116, %v567, %v571
  %v574 = vshrl.u32 %v56, 16
  %v576 = vrot.slane %v574, 4
  %v577 = vshll.u32 %v56, 16
  %v579 = vrot.slane %v577, 5
  %v580 = vor.u32 %v576, %v579
  %v581 = vrot.slane %v580, 4
  %v583 = vshll.u32 %v57, 16
  %v585 = vrot.slane %v583, 5
  %v586 = vsel %vm116, %v581, %v585
  %v587 = vshrl.u32 %v57, 16
  %v589 = vrot.slane %v587, 4
  %v590 = vor.u32 %v589, %v585
  %v591 = vrot.slane %v590, 4
  %v593 = vshll.u32 %v101, 16
  %v595 = vrot.slane %v593, 5
  %v596 = vsel %vm116, %v591, %v595
  %v598 = vshrl.u32 %v58, 16
  %v600 = vrot.slane %v598, 4
  %v601 = vshll.u32 %v58, 16
  %v603 = vrot.slane %v601, 5
  %v604 = vor.u32 %v600, %v603
  %v605 = vrot.slane %v604, 4
  %v607 = vshll.u32 %v59, 16
  %v609 = vrot.slane %v607, 5
  %v610 = vsel %vm116, %v605, %v609
  %v611 = vshrl.u32 %v59, 16
  %v613 = vrot.slane %v611, 4
  %v614 = vor.u32 %v613, %v609
  %v615 = vrot.slane %v614, 4
  %v617 = vshll.u32 %v102, 16
  %v619 = vrot.slane %v617, 5
  %v620 = vsel %vm116, %v615, %v619
  %v622 = vshrl.u32 %v60, 16
  %v624 = vrot.slane %v622, 4
  %v625 = vshll.u32 %v60, 16
  %v627 = vrot.slane %v625, 5
  %v628 = vor.u32 %v624, %v627
  %v629 = vrot.slane %v628, 4
  %v631 = vshll.u32 %v61, 16
  %v633 = vrot.slane %v631, 5
  %v634 = vsel %vm116, %v629, %v633
  %v635 = vshrl.u32 %v61, 16
  %v637 = vrot.slane %v635, 4
  %v638 = vor.u32 %v637, %v633
  %v639 = vrot.slane %v638, 4
  %v641 = vshll.u32 %v103, 16
  %v643 = vrot.slane %v641, 5
  %v644 = vsel %vm116, %v639, %v643
  %v646 = vshrl.u32 %v62, 16
  %v648 = vrot.slane %v646, 4
  %v649 = vshll.u32 %v62, 16
  %v651 = vrot.slane %v649, 5
  %v652 = vor.u32 %v648, %v651
  %v653 = vrot.slane %v652, 4
  %v655 = vshll.u32 %v63, 16
  %v657 = vrot.slane %v655, 5
  %v658 = vsel %vm116, %v653, %v657
  %v659 = vshrl.u32 %v63, 16
  %v661 = vrot.slane %v659, 4
  %v662 = vor.u32 %v661, %v657
  %v663 = vrot.slane %v662, 4
  %v665 = vshll.u32 %v104, 16
  %v667 = vrot.slane %v665, 5
  %v668 = vsel %vm116, %v663, %v667
  %v670 = vshrl.u32 %v64, 16
  %v672 = vrot.slane %v670, 4
  %v673 = vshll.u32 %v64, 16
  %v675 = vrot.slane %v673, 5
  %v676 = vor.u32 %v672, %v675
  %v677 = vrot.slane %v676, 4
  %v679 = vshll.u32 %v65, 16
  %v681 = vrot.slane %v679, 5
  %v682 = vsel %vm116, %v677, %v681
  %v683 = vshrl.u32 %v65, 16
  %v685 = vrot.slane %v683, 4
  %v686 = vor.u32 %v685, %v681
  %v687 = vrot.slane %v686, 4
  %v689 = vshll.u32 %v105, 16
  %v691 = vrot.slane %v689, 5
  %v692 = vsel %vm116, %v687, %v691
  %v694 = vshrl.u32 %v66, 16
  %v696 = vrot.slane %v694, 4
  %v697 = vshll.u32 %v66, 16
  %v699 = vrot.slane %v697, 5
  %v700 = vor.u32 %v696, %v699
  %v701 = vrot.slane %v700, 4
  %v703 = vshll.u32 %v67, 16
  %v705 = vrot.slane %v703, 5
  %v706 = vsel %vm116, %v701, %v705
  %v707 = vshrl.u32 %v67, 16
  %v709 = vrot.slane %v707, 4
  %v710 = vor.u32 %v709, %v705
  %v711 = vrot.slane %v710, 4
  %v713 = vshll.u32 %v106, 16
  %v715 = vrot.slane %v713, 5
  %v716 = vsel %vm116, %v711, %v715
  %v718 = vshrl.u32 %v68, 16
  %v720 = vrot.slane %v718, 4
  %v721 = vshll.u32 %v68, 16
  %v723 = vrot.slane %v721, 5
  %v724 = vor.u32 %v720, %v723
  %v725 = vrot.slane %v724, 4
  %v727 = vshll.u32 %v69, 16
  %v729 = vrot.slane %v727, 5
  %v730 = vsel %vm116, %v725, %v729
  %v731 = vshrl.u32 %v69, 16
  %v733 = vrot.slane %v731, 4
  %v734 = vor.u32 %v733, %v729
  %v735 = vrot.slane %v734, 4
  %v737 = vshll.u32 %v107, 16
  %v739 = vrot.slane %v737, 5
  %v740 = vsel %vm116, %v735, %v739
  %v742 = vshrl.u32 %v70, 16
  %v744 = vrot.slane %v742, 4
  %v745 = vshll.u32 %v70, 16
  %v747 = vrot.slane %v745, 5
  %v748 = vor.u32 %v744, %v747
  %v749 = vrot.slane %v748, 4
  %v751 = vshll.u32 %v71, 16
  %v753 = vrot.slane %v751, 5
  %v754 = vsel %vm116, %v749, %v753
  %v755 = vshrl.u32 %v71, 16
  %v757 = vrot.slane %v755, 4
  %v758 = vor.u32 %v757, %v753
  %v759 = vrot.slane %v758, 4
  %v761 = vshll.u32 %v108, 16
  %v763 = vrot.slane %v761, 5
  %v764 = vsel %vm116, %v759, %v763
  %v766 = vshrl.u32 %v72, 16
  %v768 = vrot.slane %v766, 4
  %v769 = vshll.u32 %v72, 16
  %v771 = vrot.slane %v769, 5
  %v772 = vor.u32 %v768, %v771
  %v773 = vrot.slane %v772, 4
  %v775 = vshll.u32 %v73, 16
  %v777 = vrot.slane %v775, 5
  %v778 = vsel %vm116, %v773, %v777
  %v779 = vshrl.u32 %v73, 16
  %v781 = vrot.slane %v779, 4
  %v782 = vor.u32 %v781, %v777
  %v783 = vrot.slane %v782, 4
  %v785 = vshll.u32 %v109, 16
  %v787 = vrot.slane %v785, 5
  %v788 = vsel %vm116, %v783, %v787
  %v790 = vshrl.u32 %v74, 16
  %v792 = vrot.slane %v790, 4
  %v793 = vshll.u32 %v74, 16
  %v795 = vrot.slane %v793, 5
  %v796 = vor.u32 %v792, %v795
  %v797 = vrot.slane %v796, 4
  %v799 = vshll.u32 %v75, 16
  %v801 = vrot.slane %v799, 5
  %v802 = vsel %vm116, %v797, %v801
  %v803 = vshrl.u32 %v75, 16
  %v805 = vrot.slane %v803, 4
  %v806 = vor.u32 %v805, %v801
  %v807 = vrot.slane %v806, 4
  %v809 = vshll.u32 %v110, 16
  %v811 = vrot.slane %v809, 5
  %v812 = vsel %vm116, %v807, %v811
  %v814 = vshrl.u32 %v76, 16
  %v816 = vrot.slane %v814, 4
  %v817 = vshll.u32 %v76, 16
  %v819 = vrot.slane %v817, 5
  %v820 = vor.u32 %v816, %v819
  %v821 = vrot.slane %v820, 4
  %v823 = vshll.u32 %v77, 16
  %v825 = vrot.slane %v823, 5
  %v826 = vsel %vm116, %v821, %v825
  %v827 = vshrl.u32 %v77, 16
  %v829 = vrot.slane %v827, 4
  %v830 = vor.u32 %v829, %v825
  %v831 = vrot.slane %v830, 4
  %v833 = vshll.u32 %v111, 16
  %v835 = vrot.slane %v833, 5
  %v836 = vsel %vm116, %v831, %v835
  %v838 = vshrl.u32 %v78, 16
  %v840 = vrot.slane %v838, 4
  %v841 = vshll.u32 %v78, 16
  %v843 = vrot.slane %v841, 5
  %v844 = vor.u32 %v840, %v843
  %v845 = vrot.slane %v844, 4
  %v847 = vshll.u32 %v79, 16
  %v849 = vrot.slane %v847, 5
  %v850 = vsel %vm116, %v845, %v849
  %v851 = vshrl.u32 %v79, 16
  %v853 = vrot.slane %v851, 4
  %v854 = vor.u32 %v853, %v849
  %v855 = vrot.slane %v854, 4
  %v857 = vshll.u32 %v112, 16
  %v859 = vrot.slane %v857, 5
  %v860 = vsel %vm116, %v855, %v859
  %v862 = vshrl.u32 %v80, 16
  %v864 = vrot.slane %v862, 4
  %v865 = vshll.u32 %v80, 16
  %v867 = vrot.slane %v865, 5
  %v868 = vor.u32 %v864, %v867
  %v869 = vrot.slane %v868, 4
  %v871 = vshll.u32 %v81, 16
  %v873 = vrot.slane %v871, 5
  %v874 = vsel %vm116, %v869, %v873
  %v875 = vshrl.u32 %v81, 16
  %v877 = vrot.slane %v875, 4
  %v878 = vor.u32 %v877, %v873
  %v879 = vrot.slane %v878, 4
  %v881 = vshll.u32 %v113, 16
  %v883 = vrot.slane %v881, 5
  %v884 = vsel %vm116, %v879, %v883
  %s885 = scalar_lea.vmem %s0, 12
  %v886 = vld [vmem:[%s885] sm:$0xf]
  %v887 = vld [vmem:[%s885 + $0x4] sm:$0xf]
  %v888 = vld [vmem:[%s885 + $0xc] sm:$0xf]
  %v889 = vld [vmem:[%s885 + $0x10] sm:$0xf]
  %v890 = vld [vmem:[%s885 + $0x18] sm:$0xf]
  %v891 = vld [vmem:[%s885 + $0x1c] sm:$0xf]
  %v892 = vld [vmem:[%s885 + $0x24] sm:$0xf]
  %v893 = vld [vmem:[%s885 + $0x28] sm:$0xf]
  %v894 = vld [vmem:[%s885 + $0x30] sm:$0xf]
  %v895 = vld [vmem:[%s885 + $0x34] sm:$0xf]
  %v896 = vld [vmem:[%s885 + $0x3c] sm:$0xf]
  %v897 = vld [vmem:[%s885 + $0x40] sm:$0xf]
  %v898 = vld [vmem:[%s885 + $0x48] sm:$0xf]
  %v899 = vld [vmem:[%s885 + $0x4c] sm:$0xf]
  %v900 = vld [vmem:[%s885 + $0x54] sm:$0xf]
  %v901 = vld [vmem:[%s885 + $0x58] sm:$0xf]
  %v902 = vld [vmem:[%s885 + $0x60] sm:$0xf]
  %v903 = vld [vmem:[%s885 + $0x64] sm:$0xf]
  %v904 = vld [vmem:[%s885 + $0x6c] sm:$0xf]
  %v905 = vld [vmem:[%s885 + $0x70] sm:$0xf]
  %v906 = vld [vmem:[%s885 + $0x78] sm:$0xf]
  %v907 = vld [vmem:[%s885 + $0x7c] sm:$0xf]
  %v908 = vld [vmem:[%s885 + $0x84] sm:$0xf]
  %v909 = vld [vmem:[%s885 + $0x88] sm:$0xf]
  %v910 = vld [vmem:[%s885 + $0x90] sm:$0xf]
  %v911 = vld [vmem:[%s885 + $0x94] sm:$0xf]
  %v912 = vld [vmem:[%s885 + $0x9c] sm:$0xf]
  %v913 = vld [vmem:[%s885 + $0xa0] sm:$0xf]
  %v914 = vld [vmem:[%s885 + $0xa8] sm:$0xf]
  %v915 = vld [vmem:[%s885 + $0xac] sm:$0xf]
  %v916 = vld [vmem:[%s885 + $0xb4] sm:$0xf]
  %v917 = vld [vmem:[%s885 + $0xb8] sm:$0xf]
  %v918 = vld [vmem:[%s885 + $0xcc] sm:$0xf]
  %v919 = vld [vmem:[%s885 + $0xd0] sm:$0xf]
  %v920 = vld [vmem:[%s885 + $0xd8] sm:$0xf]
  %v921 = vld [vmem:[%s885 + $0xdc] sm:$0xf]
  %v922 = vld [vmem:[%s885 + $0xe4] sm:$0xf]
  %v923 = vld [vmem:[%s885 + $0xe8] sm:$0xf]
  %v924 = vld [vmem:[%s885 + $0xf0] sm:$0xf]
  %v925 = vld [vmem:[%s885 + $0xf4] sm:$0xf]
  %v926 = vld [vmem:[%s885 + $0xfc] sm:$0xf]
  %v927 = vld [vmem:[%s885 + $0x100] sm:$0xf]
  %v928 = vld [vmem:[%s885 + $0x108] sm:$0xf]
  %v929 = vld [vmem:[%s885 + $0x10c] sm:$0xf]
  %v930 = vld [vmem:[%s885 + $0x114] sm:$0xf]
  %v931 = vld [vmem:[%s885 + $0x118] sm:$0xf]
  %v932 = vld [vmem:[%s885 + $0x120] sm:$0xf]
  %v933 = vld [vmem:[%s885 + $0x124] sm:$0xf]
  %v934 = vld [vmem:[%s885 + $0x12c] sm:$0xf]
  %v935 = vld [vmem:[%s885 + $0x130] sm:$0xf]
  %v936 = vld [vmem:[%s885 + $0x138] sm:$0xf]
  %v937 = vld [vmem:[%s885 + $0x13c] sm:$0xf]
  %v938 = vld [vmem:[%s885 + $0x144] sm:$0xf]
  %v939 = vld [vmem:[%s885 + $0x148] sm:$0xf]
  %v940 = vld [vmem:[%s885 + $0x150] sm:$0xf]
  %v941 = vld [vmem:[%s885 + $0x154] sm:$0xf]
  %v942 = vld [vmem:[%s885 + $0x15c] sm:$0xf]
  %v943 = vld [vmem:[%s885 + $0x160] sm:$0xf]
  %v944 = vld [vmem:[%s885 + $0x168] sm:$0xf]
  %v945 = vld [vmem:[%s885 + $0x16c] sm:$0xf]
  %v946 = vld [vmem:[%s885 + $0x174] sm:$0xf]
  %v947 = vld [vmem:[%s885 + $0x178] sm:$0xf]
  %v948 = vld [vmem:[%s885 + $0x180] sm:$0xf]
  %v949 = vld [vmem:[%s885 + $0x184] sm:$0xf]
  %v950 = vld [vmem:[%s885 + $0x8] sm:$0x1]
  %v951 = vld [vmem:[%s885 + $0x14] sm:$0x1]
  %v952 = vld [vmem:[%s885 + $0x20] sm:$0x1]
  %v953 = vld [vmem:[%s885 + $0x2c] sm:$0x1]
  %v954 = vld [vmem:[%s885 + $0x38] sm:$0x1]
  %v955 = vld [vmem:[%s885 + $0x44] sm:$0x1]
  %v956 = vld [vmem:[%s885 + $0x50] sm:$0x1]
  %v957 = vld [vmem:[%s885 + $0x5c] sm:$0x1]
  %v958 = vld [vmem:[%s885 + $0x68] sm:$0x1]
  %v959 = vld [vmem:[%s885 + $0x74] sm:$0x1]
  %v960 = vld [vmem:[%s885 + $0x80] sm:$0x1]
  %v961 = vld [vmem:[%s885 + $0x8c] sm:$0x1]
  %v962 = vld [vmem:[%s885 + $0x98] sm:$0x1]
  %v963 = vld [vmem:[%s885 + $0xa4] sm:$0x1]
  %v964 = vld [vmem:[%s885 + $0xb0] sm:$0x1]
  %v965 = vld [vmem:[%s885 + $0xbc] sm:$0x1]
  %v966 = vld [vmem:[%s885 + $0xd4] sm:$0x1]
  %v967 = vld [vmem:[%s885 + $0xe0] sm:$0x1]
  %v968 = vld [vmem:[%s885 + $0xec] sm:$0x1]
  %v969 = vld [vmem:[%s885 + $0xf8] sm:$0x1]
  %v970 = vld [vmem:[%s885 + $0x104] sm:$0x1]
  %v971 = vld [vmem:[%s885 + $0x110] sm:$0x1]
  %v972 = vld [vmem:[%s885 + $0x11c] sm:$0x1]
  %v973 = vld [vmem:[%s885 + $0x128] sm:$0x1]
  %v974 = vld [vmem:[%s885 + $0x134] sm:$0x1]
  %v975 = vld [vmem:[%s885 + $0x140] sm:$0x1]
  %v976 = vld [vmem:[%s885 + $0x14c] sm:$0x1]
  %v977 = vld [vmem:[%s885 + $0x158] sm:$0x1]
  %v978 = vld [vmem:[%s885 + $0x164] sm:$0x1]
  %v979 = vld [vmem:[%s885 + $0x170] sm:$0x1]
  %v980 = vld [vmem:[%s885 + $0x17c] sm:$0x1]
  %v981 = vld [vmem:[%s885 + $0x188] sm:$0x1]
  %v983 = vshrl.u32 %v886, 16
  %v985 = vrot.slane %v983, 4
  %v986 = vshll.u32 %v886, 16
  %v988 = vrot.slane %v986, 5
  %v989 = vor.u32 %v985, %v988
  %v990 = vrot.slane %v989, 4
  %v992 = vshll.u32 %v887, 16
  %v994 = vrot.slane %v992, 5
  %v995 = vsel %vm116, %v990, %v994
  %v996 = vshrl.u32 %v887, 16
  %v998 = vrot.slane %v996, 4
  %v999 = vor.u32 %v998, %v994
  %v1000 = vrot.slane %v999, 4
  %v1002 = vshll.u32 %v950, 16
  %v1004 = vrot.slane %v1002, 5
  %v1005 = vsel %vm116, %v1000, %v1004
  %v1007 = vshrl.u32 %v888, 16
  %v1009 = vrot.slane %v1007, 4
  %v1010 = vshll.u32 %v888, 16
  %v1012 = vrot.slane %v1010, 5
  %v1013 = vor.u32 %v1009, %v1012
  %v1014 = vrot.slane %v1013, 4
  %v1016 = vshll.u32 %v889, 16
  %v1018 = vrot.slane %v1016, 5
  %v1019 = vsel %vm116, %v1014, %v1018
  %v1020 = vshrl.u32 %v889, 16
  %v1022 = vrot.slane %v1020, 4
  %v1023 = vor.u32 %v1022, %v1018
  %v1024 = vrot.slane %v1023, 4
  %v1026 = vshll.u32 %v951, 16
  %v1028 = vrot.slane %v1026, 5
  %v1029 = vsel %vm116, %v1024, %v1028
  %v1031 = vshrl.u32 %v890, 16
  %v1033 = vrot.slane %v1031, 4
  %v1034 = vshll.u32 %v890, 16
  %v1036 = vrot.slane %v1034, 5
  %v1037 = vor.u32 %v1033, %v1036
  %v1038 = vrot.slane %v1037, 4
  %v1040 = vshll.u32 %v891, 16
  %v1042 = vrot.slane %v1040, 5
  %v1043 = vsel %vm116, %v1038, %v1042
  %v1044 = vshrl.u32 %v891, 16
  %v1046 = vrot.slane %v1044, 4
  %v1047 = vor.u32 %v1046, %v1042
  %v1048 = vrot.slane %v1047, 4
  %v1050 = vshll.u32 %v952, 16
  %v1052 = vrot.slane %v1050, 5
  %v1053 = vsel %vm116, %v1048, %v1052
  %v1055 = vshrl.u32 %v892, 16
  %v1057 = vrot.slane %v1055, 4
  %v1058 = vshll.u32 %v892, 16
  %v1060 = vrot.slane %v1058, 5
  %v1061 = vor.u32 %v1057, %v1060
  %v1062 = vrot.slane %v1061, 4
  %v1064 = vshll.u32 %v893, 16
  %v1066 = vrot.slane %v1064, 5
  %v1067 = vsel %vm116, %v1062, %v1066
  %v1068 = vshrl.u32 %v893, 16
  %v1070 = vrot.slane %v1068, 4
  %v1071 = vor.u32 %v1070, %v1066
  %v1072 = vrot.slane %v1071, 4
  %v1074 = vshll.u32 %v953, 16
  %v1076 = vrot.slane %v1074, 5
  %v1077 = vsel %vm116, %v1072, %v1076
  %v1079 = vshrl.u32 %v894, 16
  %v1081 = vrot.slane %v1079, 4
  %v1082 = vshll.u32 %v894, 16
  %v1084 = vrot.slane %v1082, 5
  %v1085 = vor.u32 %v1081, %v1084
  %v1086 = vrot.slane %v1085, 4
  %v1088 = vshll.u32 %v895, 16
  %v1090 = vrot.slane %v1088, 5
  %v1091 = vsel %vm116, %v1086, %v1090
  %v1092 = vshrl.u32 %v895, 16
  %v1094 = vrot.slane %v1092, 4
  %v1095 = vor.u32 %v1094, %v1090
  %v1096 = vrot.slane %v1095, 4
  %v1098 = vshll.u32 %v954, 16
  %v1100 = vrot.slane %v1098, 5
  %v1101 = vsel %vm116, %v1096, %v1100
  %v1103 = vshrl.u32 %v896, 16
  %v1105 = vrot.slane %v1103, 4
  %v1106 = vshll.u32 %v896, 16
  %v1108 = vrot.slane %v1106, 5
  %v1109 = vor.u32 %v1105, %v1108
  %v1110 = vrot.slane %v1109, 4
  %v1112 = vshll.u32 %v897, 16
  %v1114 = vrot.slane %v1112, 5
  %v1115 = vsel %vm116, %v1110, %v1114
  %v1116 = vshrl.u32 %v897, 16
  %v1118 = vrot.slane %v1116, 4
  %v1119 = vor.u32 %v1118, %v1114
  %v1120 = vrot.slane %v1119, 4
  %v1122 = vshll.u32 %v955, 16
  %v1124 = vrot.slane %v1122, 5
  %v1125 = vsel %vm116, %v1120, %v1124
  %v1127 = vshrl.u32 %v898, 16
  %v1129 = vrot.slane %v1127, 4
  %v1130 = vshll.u32 %v898, 16
  %v1132 = vrot.slane %v1130, 5
  %v1133 = vor.u32 %v1129, %v1132
  %v1134 = vrot.slane %v1133, 4
  %v1136 = vshll.u32 %v899, 16
  %v1138 = vrot.slane %v1136, 5
  %v1139 = vsel %vm116, %v1134, %v1138
  %v1140 = vshrl.u32 %v899, 16
  %v1142 = vrot.slane %v1140, 4
  %v1143 = vor.u32 %v1142, %v1138
  %v1144 = vrot.slane %v1143, 4
  %v1146 = vshll.u32 %v956, 16
  %v1148 = vrot.slane %v1146, 5
  %v1149 = vsel %vm116, %v1144, %v1148
  %v1151 = vshrl.u32 %v900, 16
  %v1153 = vrot.slane %v1151, 4
  %v1154 = vshll.u32 %v900, 16
  %v1156 = vrot.slane %v1154, 5
  %v1157 = vor.u32 %v1153, %v1156
  %v1158 = vrot.slane %v1157, 4
  %v1160 = vshll.u32 %v901, 16
  %v1162 = vrot.slane %v1160, 5
  %v1163 = vsel %vm116, %v1158, %v1162
  %v1164 = vshrl.u32 %v901, 16
  %v1166 = vrot.slane %v1164, 4
  %v1167 = vor.u32 %v1166, %v1162
  %v1168 = vrot.slane %v1167, 4
  %v1170 = vshll.u32 %v957, 16
  %v1172 = vrot.slane %v1170, 5
  %v1173 = vsel %vm116, %v1168, %v1172
  %v1175 = vshrl.u32 %v902, 16
  %v1177 = vrot.slane %v1175, 4
  %v1178 = vshll.u32 %v902, 16
  %v1180 = vrot.slane %v1178, 5
  %v1181 = vor.u32 %v1177, %v1180
  %v1182 = vrot.slane %v1181, 4
  %v1184 = vshll.u32 %v903, 16
  %v1186 = vrot.slane %v1184, 5
  %v1187 = vsel %vm116, %v1182, %v1186
  %v1188 = vshrl.u32 %v903, 16
  %v1190 = vrot.slane %v1188, 4
  %v1191 = vor.u32 %v1190, %v1186
  %v1192 = vrot.slane %v1191, 4
  %v1194 = vshll.u32 %v958, 16
  %v1196 = vrot.slane %v1194, 5
  %v1197 = vsel %vm116, %v1192, %v1196
  %v1199 = vshrl.u32 %v904, 16
  %v1201 = vrot.slane %v1199, 4
  %v1202 = vshll.u32 %v904, 16
  %v1204 = vrot.slane %v1202, 5
  %v1205 = vor.u32 %v1201, %v1204
  %v1206 = vrot.slane %v1205, 4
  %v1208 = vshll.u32 %v905, 16
  %v1210 = vrot.slane %v1208, 5
  %v1211 = vsel %vm116, %v1206, %v1210
  %v1212 = vshrl.u32 %v905, 16
  %v1214 = vrot.slane %v1212, 4
  %v1215 = vor.u32 %v1214, %v1210
  %v1216 = vrot.slane %v1215, 4
  %v1218 = vshll.u32 %v959, 16
  %v1220 = vrot.slane %v1218, 5
  %v1221 = vsel %vm116, %v1216, %v1220
  %v1223 = vshrl.u32 %v906, 16
  %v1225 = vrot.slane %v1223, 4
  %v1226 = vshll.u32 %v906, 16
  %v1228 = vrot.slane %v1226, 5
  %v1229 = vor.u32 %v1225, %v1228
  %v1230 = vrot.slane %v1229, 4
  %v1232 = vshll.u32 %v907, 16
  %v1234 = vrot.slane %v1232, 5
  %v1235 = vsel %vm116, %v1230, %v1234
  %v1236 = vshrl.u32 %v907, 16
  %v1238 = vrot.slane %v1236, 4
  %v1239 = vor.u32 %v1238, %v1234
  %v1240 = vrot.slane %v1239, 4
  %v1242 = vshll.u32 %v960, 16
  %v1244 = vrot.slane %v1242, 5
  %v1245 = vsel %vm116, %v1240, %v1244
  %v1247 = vshrl.u32 %v908, 16
  %v1249 = vrot.slane %v1247, 4
  %v1250 = vshll.u32 %v908, 16
  %v1252 = vrot.slane %v1250, 5
  %v1253 = vor.u32 %v1249, %v1252
  %v1254 = vrot.slane %v1253, 4
  %v1256 = vshll.u32 %v909, 16
  %v1258 = vrot.slane %v1256, 5
  %v1259 = vsel %vm116, %v1254, %v1258
  %v1260 = vshrl.u32 %v909, 16
  %v1262 = vrot.slane %v1260, 4
  %v1263 = vor.u32 %v1262, %v1258
  %v1264 = vrot.slane %v1263, 4
  %v1266 = vshll.u32 %v961, 16
  %v1268 = vrot.slane %v1266, 5
  %v1269 = vsel %vm116, %v1264, %v1268
  %v1271 = vshrl.u32 %v910, 16
  %v1273 = vrot.slane %v1271, 4
  %v1274 = vshll.u32 %v910, 16
  %v1276 = vrot.slane %v1274, 5
  %v1277 = vor.u32 %v1273, %v1276
  %v1278 = vrot.slane %v1277, 4
  %v1280 = vshll.u32 %v911, 16
  %v1282 = vrot.slane %v1280, 5
  %v1283 = vsel %vm116, %v1278, %v1282
  %v1284 = vshrl.u32 %v911, 16
  %v1286 = vrot.slane %v1284, 4
  %v1287 = vor.u32 %v1286, %v1282
  %v1288 = vrot.slane %v1287, 4
  %v1290 = vshll.u32 %v962, 16
  %v1292 = vrot.slane %v1290, 5
  %v1293 = vsel %vm116, %v1288, %v1292
  %v1295 = vshrl.u32 %v912, 16
  %v1297 = vrot.slane %v1295, 4
  %v1298 = vshll.u32 %v912, 16
  %v1300 = vrot.slane %v1298, 5
  %v1301 = vor.u32 %v1297, %v1300
  %v1302 = vrot.slane %v1301, 4
  %v1304 = vshll.u32 %v913, 16
  %v1306 = vrot.slane %v1304, 5
  %v1307 = vsel %vm116, %v1302, %v1306
  %v1308 = vshrl.u32 %v913, 16
  %v1310 = vrot.slane %v1308, 4
  %v1311 = vor.u32 %v1310, %v1306
  %v1312 = vrot.slane %v1311, 4
  %v1314 = vshll.u32 %v963, 16
  %v1316 = vrot.slane %v1314, 5
  %v1317 = vsel %vm116, %v1312, %v1316
  %v1319 = vshrl.u32 %v914, 16
  %v1321 = vrot.slane %v1319, 4
  %v1322 = vshll.u32 %v914, 16
  %v1324 = vrot.slane %v1322, 5
  %v1325 = vor.u32 %v1321, %v1324
  %v1326 = vrot.slane %v1325, 4
  %v1328 = vshll.u32 %v915, 16
  %v1330 = vrot.slane %v1328, 5
  %v1331 = vsel %vm116, %v1326, %v1330
  %v1332 = vshrl.u32 %v915, 16
  %v1334 = vrot.slane %v1332, 4
  %v1335 = vor.u32 %v1334, %v1330
  %v1336 = vrot.slane %v1335, 4
  %v1338 = vshll.u32 %v964, 16
  %v1340 = vrot.slane %v1338, 5
  %v1341 = vsel %vm116, %v1336, %v1340
  %v1343 = vshrl.u32 %v916, 16
  %v1345 = vrot.slane %v1343, 4
  %v1346 = vshll.u32 %v916, 16
  %v1348 = vrot.slane %v1346, 5
  %v1349 = vor.u32 %v1345, %v1348
  %v1350 = vrot.slane %v1349, 4
  %v1352 = vshll.u32 %v917, 16
  %v1354 = vrot.slane %v1352, 5
  %v1355 = vsel %vm116, %v1350, %v1354
  %v1356 = vshrl.u32 %v917, 16
  %v1358 = vrot.slane %v1356, 4
  %v1359 = vor.u32 %v1358, %v1354
  %v1360 = vrot.slane %v1359, 4
  %v1362 = vshll.u32 %v965, 16
  %v1364 = vrot.slane %v1362, 5
  %v1365 = vsel %vm116, %v1360, %v1364
  %v1367 = vshrl.u32 %v918, 16
  %v1369 = vrot.slane %v1367, 4
  %v1370 = vshll.u32 %v918, 16
  %v1372 = vrot.slane %v1370, 5
  %v1373 = vor.u32 %v1369, %v1372
  %v1374 = vrot.slane %v1373, 4
  %v1376 = vshll.u32 %v919, 16
  %v1378 = vrot.slane %v1376, 5
  %v1379 = vsel %vm116, %v1374, %v1378
  %v1380 = vshrl.u32 %v919, 16
  %v1382 = vrot.slane %v1380, 4
  %v1383 = vor.u32 %v1382, %v1378
  %v1384 = vrot.slane %v1383, 4
  %v1386 = vshll.u32 %v966, 16
  %v1388 = vrot.slane %v1386, 5
  %v1389 = vsel %vm116, %v1384, %v1388
  %v1391 = vshrl.u32 %v920, 16
  %v1393 = vrot.slane %v1391, 4
  %v1394 = vshll.u32 %v920, 16
  %v1396 = vrot.slane %v1394, 5
  %v1397 = vor.u32 %v1393, %v1396
  %v1398 = vrot.slane %v1397, 4
  %v1400 = vshll.u32 %v921, 16
  %v1402 = vrot.slane %v1400, 5
  %v1403 = vsel %vm116, %v1398, %v1402
  %v1404 = vshrl.u32 %v921, 16
  %v1406 = vrot.slane %v1404, 4
  %v1407 = vor.u32 %v1406, %v1402
  %v1408 = vrot.slane %v1407, 4
  %v1410 = vshll.u32 %v967, 16
  %v1412 = vrot.slane %v1410, 5
  %v1413 = vsel %vm116, %v1408, %v1412
  %v1415 = vshrl.u32 %v922, 16
  %v1417 = vrot.slane %v1415, 4
  %v1418 = vshll.u32 %v922, 16
  %v1420 = vrot.slane %v1418, 5
  %v1421 = vor.u32 %v1417, %v1420
  %v1422 = vrot.slane %v1421, 4
  %v1424 = vshll.u32 %v923, 16
  %v1426 = vrot.slane %v1424, 5
  %v1427 = vsel %vm116, %v1422, %v1426
  %v1428 = vshrl.u32 %v923, 16
  %v1430 = vrot.slane %v1428, 4
  %v1431 = vor.u32 %v1430, %v1426
  %v1432 = vrot.slane %v1431, 4
  %v1434 = vshll.u32 %v968, 16
  %v1436 = vrot.slane %v1434, 5
  %v1437 = vsel %vm116, %v1432, %v1436
  %v1439 = vshrl.u32 %v924, 16
  %v1441 = vrot.slane %v1439, 4
  %v1442 = vshll.u32 %v924, 16
  %v1444 = vrot.slane %v1442, 5
  %v1445 = vor.u32 %v1441, %v1444
  %v1446 = vrot.slane %v1445, 4
  %v1448 = vshll.u32 %v925, 16
  %v1450 = vrot.slane %v1448, 5
  %v1451 = vsel %vm116, %v1446, %v1450
  %v1452 = vshrl.u32 %v925, 16
  %v1454 = vrot.slane %v1452, 4
  %v1455 = vor.u32 %v1454, %v1450
  %v1456 = vrot.slane %v1455, 4
  %v1458 = vshll.u32 %v969, 16
  %v1460 = vrot.slane %v1458, 5
  %v1461 = vsel %vm116, %v1456, %v1460
  %v1463 = vshrl.u32 %v926, 16
  %v1465 = vrot.slane %v1463, 4
  %v1466 = vshll.u32 %v926, 16
  %v1468 = vrot.slane %v1466, 5
  %v1469 = vor.u32 %v1465, %v1468
  %v1470 = vrot.slane %v1469, 4
  %v1472 = vshll.u32 %v927, 16
  %v1474 = vrot.slane %v1472, 5
  %v1475 = vsel %vm116, %v1470, %v1474
  %v1476 = vshrl.u32 %v927, 16
  %v1478 = vrot.slane %v1476, 4
  %v1479 = vor.u32 %v1478, %v1474
  %v1480 = vrot.slane %v1479, 4
  %v1482 = vshll.u32 %v970, 16
  %v1484 = vrot.slane %v1482, 5
  %v1485 = vsel %vm116, %v1480, %v1484
  %v1487 = vshrl.u32 %v928, 16
  %v1489 = vrot.slane %v1487, 4
  %v1490 = vshll.u32 %v928, 16
  %v1492 = vrot.slane %v1490, 5
  %v1493 = vor.u32 %v1489, %v1492
  %v1494 = vrot.slane %v1493, 4
  %v1496 = vshll.u32 %v929, 16
  %v1498 = vrot.slane %v1496, 5
  %v1499 = vsel %vm116, %v1494, %v1498
  %v1500 = vshrl.u32 %v929, 16
  %v1502 = vrot.slane %v1500, 4
  %v1503 = vor.u32 %v1502, %v1498
  %v1504 = vrot.slane %v1503, 4
  %v1506 = vshll.u32 %v971, 16
  %v1508 = vrot.slane %v1506, 5
  %v1509 = vsel %vm116, %v1504, %v1508
  %v1511 = vshrl.u32 %v930, 16
  %v1513 = vrot.slane %v1511, 4
  %v1514 = vshll.u32 %v930, 16
  %v1516 = vrot.slane %v1514, 5
  %v1517 = vor.u32 %v1513, %v1516
  %v1518 = vrot.slane %v1517, 4
  %v1520 = vshll.u32 %v931, 16
  %v1522 = vrot.slane %v1520, 5
  %v1523 = vsel %vm116, %v1518, %v1522
  %v1524 = vshrl.u32 %v931, 16
  %v1526 = vrot.slane %v1524, 4
  %v1527 = vor.u32 %v1526, %v1522
  %v1528 = vrot.slane %v1527, 4
  %v1530 = vshll.u32 %v972, 16
  %v1532 = vrot.slane %v1530, 5
  %v1533 = vsel %vm116, %v1528, %v1532
  %v1535 = vshrl.u32 %v932, 16
  %v1537 = vrot.slane %v1535, 4
  %v1538 = vshll.u32 %v932, 16
  %v1540 = vrot.slane %v1538, 5
  %v1541 = vor.u32 %v1537, %v1540
  %v1542 = vrot.slane %v1541, 4
  %v1544 = vshll.u32 %v933, 16
  %v1546 = vrot.slane %v1544, 5
  %v1547 = vsel %vm116, %v1542, %v1546
  %v1548 = vshrl.u32 %v933, 16
  %v1550 = vrot.slane %v1548, 4
  %v1551 = vor.u32 %v1550, %v1546
  %v1552 = vrot.slane %v1551, 4
  %v1554 = vshll.u32 %v973, 16
  %v1556 = vrot.slane %v1554, 5
  %v1557 = vsel %vm116, %v1552, %v1556
  %v1559 = vshrl.u32 %v934, 16
  %v1561 = vrot.slane %v1559, 4
  %v1562 = vshll.u32 %v934, 16
  %v1564 = vrot.slane %v1562, 5
  %v1565 = vor.u32 %v1561, %v1564
  %v1566 = vrot.slane %v1565, 4
  %v1568 = vshll.u32 %v935, 16
  %v1570 = vrot.slane %v1568, 5
  %v1571 = vsel %vm116, %v1566, %v1570
  %v1572 = vshrl.u32 %v935, 16
  %v1574 = vrot.slane %v1572, 4
  %v1575 = vor.u32 %v1574, %v1570
  %v1576 = vrot.slane %v1575, 4
  %v1578 = vshll.u32 %v974, 16
  %v1580 = vrot.slane %v1578, 5
  %v1581 = vsel %vm116, %v1576, %v1580
  %v1583 = vshrl.u32 %v936, 16
  %v1585 = vrot.slane %v1583, 4
  %v1586 = vshll.u32 %v936, 16
  %v1588 = vrot.slane %v1586, 5
  %v1589 = vor.u32 %v1585, %v1588
  %v1590 = vrot.slane %v1589, 4
  %v1592 = vshll.u32 %v937, 16
  %v1594 = vrot.slane %v1592, 5
  %v1595 = vsel %vm116, %v1590, %v1594
  %v1596 = vshrl.u32 %v937, 16
  %v1598 = vrot.slane %v1596, 4
  %v1599 = vor.u32 %v1598, %v1594
  %v1600 = vrot.slane %v1599, 4
  %v1602 = vshll.u32 %v975, 16
  %v1604 = vrot.slane %v1602, 5
  %v1605 = vsel %vm116, %v1600, %v1604
  %v1607 = vshrl.u32 %v938, 16
  %v1609 = vrot.slane %v1607, 4
  %v1610 = vshll.u32 %v938, 16
  %v1612 = vrot.slane %v1610, 5
  %v1613 = vor.u32 %v1609, %v1612
  %v1614 = vrot.slane %v1613, 4
  %v1616 = vshll.u32 %v939, 16
  %v1618 = vrot.slane %v1616, 5
  %v1619 = vsel %vm116, %v1614, %v1618
  %v1620 = vshrl.u32 %v939, 16
  %v1622 = vrot.slane %v1620, 4
  %v1623 = vor.u32 %v1622, %v1618
  %v1624 = vrot.slane %v1623, 4
  %v1626 = vshll.u32 %v976, 16
  %v1628 = vrot.slane %v1626, 5
  %v1629 = vsel %vm116, %v1624, %v1628
  %v1631 = vshrl.u32 %v940, 16
  %v1633 = vrot.slane %v1631, 4
  %v1634 = vshll.u32 %v940, 16
  %v1636 = vrot.slane %v1634, 5
  %v1637 = vor.u32 %v1633, %v1636
  %v1638 = vrot.slane %v1637, 4
  %v1640 = vshll.u32 %v941, 16
  %v1642 = vrot.slane %v1640, 5
  %v1643 = vsel %vm116, %v1638, %v1642
  %v1644 = vshrl.u32 %v941, 16
  %v1646 = vrot.slane %v1644, 4
  %v1647 = vor.u32 %v1646, %v1642
  %v1648 = vrot.slane %v1647, 4
  %v1650 = vshll.u32 %v977, 16
  %v1652 = vrot.slane %v1650, 5
  %v1653 = vsel %vm116, %v1648, %v1652
  %v1655 = vshrl.u32 %v942, 16
  %v1657 = vrot.slane %v1655, 4
  %v1658 = vshll.u32 %v942, 16
  %v1660 = vrot.slane %v1658, 5
  %v1661 = vor.u32 %v1657, %v1660
  %v1662 = vrot.slane %v1661, 4
  %v1664 = vshll.u32 %v943, 16
  %v1666 = vrot.slane %v1664, 5
  %v1667 = vsel %vm116, %v1662, %v1666
  %v1668 = vshrl.u32 %v943, 16
  %v1670 = vrot.slane %v1668, 4
  %v1671 = vor.u32 %v1670, %v1666
  %v1672 = vrot.slane %v1671, 4
  %v1674 = vshll.u32 %v978, 16
  %v1676 = vrot.slane %v1674, 5
  %v1677 = vsel %vm116, %v1672, %v1676
  %v1679 = vshrl.u32 %v944, 16
  %v1681 = vrot.slane %v1679, 4
  %v1682 = vshll.u32 %v944, 16
  %v1684 = vrot.slane %v1682, 5
  %v1685 = vor.u32 %v1681, %v1684
  %v1686 = vrot.slane %v1685, 4
  %v1688 = vshll.u32 %v945, 16
  %v1690 = vrot.slane %v1688, 5
  %v1691 = vsel %vm116, %v1686, %v1690
  %v1692 = vshrl.u32 %v945, 16
  %v1694 = vrot.slane %v1692, 4
  %v1695 = vor.u32 %v1694, %v1690
  %v1696 = vrot.slane %v1695, 4
  %v1698 = vshll.u32 %v979, 16
  %v1700 = vrot.slane %v1698, 5
  %v1701 = vsel %vm116, %v1696, %v1700
  %v1703 = vshrl.u32 %v946, 16
  %v1705 = vrot.slane %v1703, 4
  %v1706 = vshll.u32 %v946, 16
  %v1708 = vrot.slane %v1706, 5
  %v1709 = vor.u32 %v1705, %v1708
  %v1710 = vrot.slane %v1709, 4
  %v1712 = vshll.u32 %v947, 16
  %v1714 = vrot.slane %v1712, 5
  %v1715 = vsel %vm116, %v1710, %v1714
  %v1716 = vshrl.u32 %v947, 16
  %v1718 = vrot.slane %v1716, 4
  %v1719 = vor.u32 %v1718, %v1714
  %v1720 = vrot.slane %v1719, 4
  %v1722 = vshll.u32 %v980, 16
  %v1724 = vrot.slane %v1722, 5
  %v1725 = vsel %vm116, %v1720, %v1724
  %v1727 = vshrl.u32 %v948, 16
  %v1729 = vrot.slane %v1727, 4
  %v1730 = vshll.u32 %v948, 16
  %v1732 = vrot.slane %v1730, 5
  %v1733 = vor.u32 %v1729, %v1732
  %v1734 = vrot.slane %v1733, 4
  %v1736 = vshll.u32 %v949, 16
  %v1738 = vrot.slane %v1736, 5
  %v1739 = vsel %vm116, %v1734, %v1738
  %v1740 = vshrl.u32 %v949, 16
  %v1742 = vrot.slane %v1740, 4
  %v1743 = vor.u32 %v1742, %v1738
  %v1744 = vrot.slane %v1743, 4
  %v1746 = vshll.u32 %v981, 16
  %v1748 = vrot.slane %v1746, 5
  %v1749 = vsel %vm116, %v1744, %v1748
  %v1814 = vunpack.c.l.b16 %v18
  %v1815 = vunpack.c.l.b16 %v19
  %v1816 = vunpack.c.l.b16 %v20
  %v1817 = vunpack.c.l.b16 %v21
  %v1818 = vunpack.c.l.b16 %v22
  %v1819 = vunpack.c.l.b16 %v23
  %v1820 = vunpack.c.l.b16 %v24
  %v1821 = vunpack.c.l.b16 %v25
  %v1822 = vunpack.c.l.b16 %v26
  %v1823 = vunpack.c.l.b16 %v27
  %v1824 = vunpack.c.l.b16 %v28
  %v1825 = vunpack.c.l.b16 %v29
  %v1826 = vunpack.c.l.b16 %v30
  %v1827 = vunpack.c.l.b16 %v31
  %v1828 = vunpack.c.l.b16 %v32
  %v1829 = vunpack.c.l.b16 %v33
  %v1830 = vunpack.c.l.b16 %v34
  %v1831 = vunpack.c.l.b16 %v35
  %v1832 = vunpack.c.l.b16 %v36
  %v1833 = vunpack.c.l.b16 %v37
  %v1834 = vunpack.c.l.b16 %v38
  %v1835 = vunpack.c.l.b16 %v39
  %v1836 = vunpack.c.l.b16 %v40
  %v1837 = vunpack.c.l.b16 %v41
  %v1838 = vunpack.c.l.b16 %v42
  %v1839 = vunpack.c.l.b16 %v43
  %v1840 = vunpack.c.l.b16 %v44
  %v1841 = vunpack.c.l.b16 %v45
  %v1842 = vunpack.c.l.b16 %v46
  %v1843 = vunpack.c.l.b16 %v47
  %v1844 = vunpack.c.l.b16 %v48
  %v1845 = vunpack.c.l.b16 %v49
  %v1846 = vunpack.c.l.b16 %v50
  %v1847 = vunpack.c.l.b16 %v51
  %v1848 = vunpack.c.l.b16 %v52
  %v1849 = vunpack.c.l.b16 %v53
  %v1850 = vunpack.c.l.b16 %v54
  %v1851 = vunpack.c.l.b16 %v55
  %v1852 = vunpack.c.l.b16 %v56
  %v1853 = vunpack.c.l.b16 %v57
  %v1854 = vunpack.c.l.b16 %v58
  %v1855 = vunpack.c.l.b16 %v59
  %v1856 = vunpack.c.l.b16 %v60
  %v1857 = vunpack.c.l.b16 %v61
  %v1858 = vunpack.c.l.b16 %v62
  %v1859 = vunpack.c.l.b16 %v63
  %v1860 = vunpack.c.l.b16 %v64
  %v1861 = vunpack.c.l.b16 %v65
  %v1862 = vunpack.c.l.b16 %v66
  %v1863 = vunpack.c.l.b16 %v67
  %v1864 = vunpack.c.l.b16 %v68
  %v1865 = vunpack.c.l.b16 %v69
  %v1866 = vunpack.c.l.b16 %v70
  %v1867 = vunpack.c.l.b16 %v71
  %v1868 = vunpack.c.l.b16 %v72
  %v1869 = vunpack.c.l.b16 %v73
  %v1870 = vunpack.c.l.b16 %v74
  %v1871 = vunpack.c.l.b16 %v75
  %v1872 = vunpack.c.l.b16 %v76
  %v1873 = vunpack.c.l.b16 %v77
  %v1874 = vunpack.c.l.b16 %v78
  %v1875 = vunpack.c.l.b16 %v79
  %v1876 = vunpack.c.l.b16 %v80
  %v1877 = vunpack.c.l.b16 %v81
  %v1878 = vpack.c.b16 %v1815, %v1814
  %v1879 = vpack.c.b16 %v1817, %v1816
  %v1880 = vpack.c.b16 %v1819, %v1818
  %v1881 = vpack.c.b16 %v1821, %v1820
  %v1882 = vpack.c.b16 %v1823, %v1822
  %v1883 = vpack.c.b16 %v1825, %v1824
  %v1884 = vpack.c.b16 %v1827, %v1826
  %v1885 = vpack.c.b16 %v1829, %v1828
  %v1886 = vpack.c.b16 %v1831, %v1830
  %v1887 = vpack.c.b16 %v1833, %v1832
  %v1888 = vpack.c.b16 %v1835, %v1834
  %v1889 = vpack.c.b16 %v1837, %v1836
  %v1890 = vpack.c.b16 %v1839, %v1838
  %v1891 = vpack.c.b16 %v1841, %v1840
  %v1892 = vpack.c.b16 %v1843, %v1842
  %v1893 = vpack.c.b16 %v1845, %v1844
  %v1894 = vpack.c.b16 %v1847, %v1846
  %v1895 = vpack.c.b16 %v1849, %v1848
  %v1896 = vpack.c.b16 %v1851, %v1850
  %v1897 = vpack.c.b16 %v1853, %v1852
  %v1898 = vpack.c.b16 %v1855, %v1854
  %v1899 = vpack.c.b16 %v1857, %v1856
  %v1900 = vpack.c.b16 %v1859, %v1858
  %v1901 = vpack.c.b16 %v1861, %v1860
  %v1902 = vpack.c.b16 %v1863, %v1862
  %v1903 = vpack.c.b16 %v1865, %v1864
  %v1904 = vpack.c.b16 %v1867, %v1866
  %v1905 = vpack.c.b16 %v1869, %v1868
  %v1906 = vpack.c.b16 %v1871, %v1870
  %v1907 = vpack.c.b16 %v1873, %v1872
  %v1908 = vpack.c.b16 %v1875, %v1874
  %v1909 = vpack.c.b16 %v1877, %v1876
  %v1910 = vunpack.c.l.b16 %v130
  %v1911 = vunpack.c.l.b16 %v140
  %v1912 = vunpack.c.l.b16 %v154
  %v1913 = vunpack.c.l.b16 %v164
  %v1914 = vunpack.c.l.b16 %v178
  %v1915 = vunpack.c.l.b16 %v188
  %v1916 = vunpack.c.l.b16 %v202
  %v1917 = vunpack.c.l.b16 %v212
  %v1918 = vunpack.c.l.b16 %v226
  %v1919 = vunpack.c.l.b16 %v236
  %v1920 = vunpack.c.l.b16 %v250
  %v1921 = vunpack.c.l.b16 %v260
  %v1922 = vunpack.c.l.b16 %v274
  %v1923 = vunpack.c.l.b16 %v284
  %v1924 = vunpack.c.l.b16 %v298
  %v1925 = vunpack.c.l.b16 %v308
  %v1926 = vunpack.c.l.b16 %v322
  %v1927 = vunpack.c.l.b16 %v332
  %v1928 = vunpack.c.l.b16 %v346
  %v1929 = vunpack.c.l.b16 %v356
  %v1930 = vunpack.c.l.b16 %v370
  %v1931 = vunpack.c.l.b16 %v380
  %v1932 = vunpack.c.l.b16 %v394
  %v1933 = vunpack.c.l.b16 %v404
  %v1934 = vunpack.c.l.b16 %v418
  %v1935 = vunpack.c.l.b16 %v428
  %v1936 = vunpack.c.l.b16 %v442
  %v1937 = vunpack.c.l.b16 %v452
  %v1938 = vunpack.c.l.b16 %v466
  %v1939 = vunpack.c.l.b16 %v476
  %v1940 = vunpack.c.l.b16 %v490
  %v1941 = vunpack.c.l.b16 %v500
  %v1942 = vunpack.c.l.b16 %v514
  %v1943 = vunpack.c.l.b16 %v524
  %v1944 = vunpack.c.l.b16 %v538
  %v1945 = vunpack.c.l.b16 %v548
  %v1946 = vunpack.c.l.b16 %v562
  %v1947 = vunpack.c.l.b16 %v572
  %v1948 = vunpack.c.l.b16 %v586
  %v1949 = vunpack.c.l.b16 %v596
  %v1950 = vunpack.c.l.b16 %v610
  %v1951 = vunpack.c.l.b16 %v620
  %v1952 = vunpack.c.l.b16 %v634
  %v1953 = vunpack.c.l.b16 %v644
  %v1954 = vunpack.c.l.b16 %v658
  %v1955 = vunpack.c.l.b16 %v668
  %v1956 = vunpack.c.l.b16 %v682
  %v1957 = vunpack.c.l.b16 %v692
  %v1958 = vunpack.c.l.b16 %v706
  %v1959 = vunpack.c.l.b16 %v716
  %v1960 = vunpack.c.l.b16 %v730
  %v1961 = vunpack.c.l.b16 %v740
  %v1962 = vunpack.c.l.b16 %v754
  %v1963 = vunpack.c.l.b16 %v764
  %v1964 = vunpack.c.l.b16 %v778
  %v1965 = vunpack.c.l.b16 %v788
  %v1966 = vunpack.c.l.b16 %v802
  %v1967 = vunpack.c.l.b16 %v812
  %v1968 = vunpack.c.l.b16 %v826
  %v1969 = vunpack.c.l.b16 %v836
  %v1970 = vunpack.c.l.b16 %v850
  %v1971 = vunpack.c.l.b16 %v860
  %v1972 = vunpack.c.l.b16 %v874
  %v1973 = vunpack.c.l.b16 %v884
  %v1974 = vpack.c.b16 %v1911, %v1910
  %v1975 = vpack.c.b16 %v1913, %v1912
  %v1976 = vpack.c.b16 %v1915, %v1914
  %v1977 = vpack.c.b16 %v1917, %v1916
  %v1978 = vpack.c.b16 %v1919, %v1918
  %v1979 = vpack.c.b16 %v1921, %v1920
  %v1980 = vpack.c.b16 %v1923, %v1922
  %v1981 = vpack.c.b16 %v1925, %v1924
  %v1982 = vpack.c.b16 %v1927, %v1926
  %v1983 = vpack.c.b16 %v1929, %v1928
  %v1984 = vpack.c.b16 %v1931, %v1930
  %v1985 = vpack.c.b16 %v1933, %v1932
  %v1986 = vpack.c.b16 %v1935, %v1934
  %v1987 = vpack.c.b16 %v1937, %v1936
  %v1988 = vpack.c.b16 %v1939, %v1938
  %v1989 = vpack.c.b16 %v1941, %v1940
  %v1990 = vpack.c.b16 %v1943, %v1942
  %v1991 = vpack.c.b16 %v1945, %v1944
  %v1992 = vpack.c.b16 %v1947, %v1946
  %v1993 = vpack.c.b16 %v1949, %v1948
  %v1994 = vpack.c.b16 %v1951, %v1950
  %v1995 = vpack.c.b16 %v1953, %v1952
  %v1996 = vpack.c.b16 %v1955, %v1954
  %v1997 = vpack.c.b16 %v1957, %v1956
  %v1998 = vpack.c.b16 %v1959, %v1958
  %v1999 = vpack.c.b16 %v1961, %v1960
  %v2000 = vpack.c.b16 %v1963, %v1962
  %v2001 = vpack.c.b16 %v1965, %v1964
  %v2002 = vpack.c.b16 %v1967, %v1966
  %v2003 = vpack.c.b16 %v1969, %v1968
  %v2004 = vpack.c.b16 %v1971, %v1970
  %v2005 = vpack.c.b16 %v1973, %v1972
  %2006 = vrot.lane.b32.xlu0 %v1974, 32
  %v2007 = vpop.permute.xlu0 %2006
  %2008 = vrot.lane.b32.xlu0 %v1975, 32
  %v2009 = vpop.permute.xlu0 %2008
  %2010 = vrot.lane.b32.xlu0 %v1976, 32
  %v2011 = vpop.permute.xlu0 %2010
  %2012 = vrot.lane.b32.xlu0 %v1977, 32
  %v2013 = vpop.permute.xlu0 %2012
  %2014 = vrot.lane.b32.xlu0 %v1978, 32
  %v2015 = vpop.permute.xlu0 %2014
  %2016 = vrot.lane.b32.xlu0 %v1979, 32
  %v2017 = vpop.permute.xlu0 %2016
  %2018 = vrot.lane.b32.xlu0 %v1980, 32
  %v2019 = vpop.permute.xlu0 %2018
  %2020 = vrot.lane.b32.xlu0 %v1981, 32
  %v2021 = vpop.permute.xlu0 %2020
  %2022 = vrot.lane.b32.xlu0 %v1982, 32
  %v2023 = vpop.permute.xlu0 %2022
  %2024 = vrot.lane.b32.xlu0 %v1983, 32
  %v2025 = vpop.permute.xlu0 %2024
  %2026 = vrot.lane.b32.xlu0 %v1984, 32
  %v2027 = vpop.permute.xlu0 %2026
  %2028 = vrot.lane.b32.xlu0 %v1985, 32
  %v2029 = vpop.permute.xlu0 %2028
  %2030 = vrot.lane.b32.xlu0 %v1986, 32
  %v2031 = vpop.permute.xlu0 %2030
  %2032 = vrot.lane.b32.xlu0 %v1987, 32
  %v2033 = vpop.permute.xlu0 %2032
  %2034 = vrot.lane.b32.xlu0 %v1988, 32
  %v2035 = vpop.permute.xlu0 %2034
  %2036 = vrot.lane.b32.xlu0 %v1989, 32
  %v2037 = vpop.permute.xlu0 %2036
  %2038 = vrot.lane.b32.xlu0 %v1990, 32
  %v2039 = vpop.permute.xlu0 %2038
  %2040 = vrot.lane.b32.xlu0 %v1991, 32
  %v2041 = vpop.permute.xlu0 %2040
  %2042 = vrot.lane.b32.xlu0 %v1992, 32
  %v2043 = vpop.permute.xlu0 %2042
  %2044 = vrot.lane.b32.xlu0 %v1993, 32
  %v2045 = vpop.permute.xlu0 %2044
  %2046 = vrot.lane.b32.xlu0 %v1994, 32
  %v2047 = vpop.permute.xlu0 %2046
  %2048 = vrot.lane.b32.xlu0 %v1995, 32
  %v2049 = vpop.permute.xlu0 %2048
  %2050 = vrot.lane.b32.xlu0 %v1996, 32
  %v2051 = vpop.permute.xlu0 %2050
  %2052 = vrot.lane.b32.xlu0 %v1997, 32
  %v2053 = vpop.permute.xlu0 %2052
  %2054 = vrot.lane.b32.xlu0 %v1998, 32
  %v2055 = vpop.permute.xlu0 %2054
  %2056 = vrot.lane.b32.xlu0 %v1999, 32
  %v2057 = vpop.permute.xlu0 %2056
  %2058 = vrot.lane.b32.xlu0 %v2000, 32
  %v2059 = vpop.permute.xlu0 %2058
  %2060 = vrot.lane.b32.xlu0 %v2001, 32
  %v2061 = vpop.permute.xlu0 %2060
  %2062 = vrot.lane.b32.xlu0 %v2002, 32
  %v2063 = vpop.permute.xlu0 %2062
  %2064 = vrot.lane.b32.xlu0 %v2003, 32
  %v2065 = vpop.permute.xlu0 %2064
  %2066 = vrot.lane.b32.xlu0 %v2004, 32
  %v2067 = vpop.permute.xlu0 %2066
  %2068 = vrot.lane.b32.xlu0 %v2005, 32
  %v2069 = vpop.permute.xlu0 %2068
  %v2134 = vunpack.c.l.b16 %v886
  %v2135 = vunpack.c.l.b16 %v887
  %v2136 = vunpack.c.l.b16 %v888
  %v2137 = vunpack.c.l.b16 %v889
  %v2138 = vunpack.c.l.b16 %v890
  %v2139 = vunpack.c.l.b16 %v891
  %v2140 = vunpack.c.l.b16 %v892
  %v2141 = vunpack.c.l.b16 %v893
  %v2142 = vunpack.c.l.b16 %v894
  %v2143 = vunpack.c.l.b16 %v895
  %v2144 = vunpack.c.l.b16 %v896
  %v2145 = vunpack.c.l.b16 %v897
  %v2146 = vunpack.c.l.b16 %v898
  %v2147 = vunpack.c.l.b16 %v899
  %v2148 = vunpack.c.l.b16 %v900
  %v2149 = vunpack.c.l.b16 %v901
  %v2150 = vunpack.c.l.b16 %v902
  %v2151 = vunpack.c.l.b16 %v903
  %v2152 = vunpack.c.l.b16 %v904
  %v2153 = vunpack.c.l.b16 %v905
  %v2154 = vunpack.c.l.b16 %v906
  %v2155 = vunpack.c.l.b16 %v907
  %v2156 = vunpack.c.l.b16 %v908
  %v2157 = vunpack.c.l.b16 %v909
  %v2158 = vunpack.c.l.b16 %v910
  %v2159 = vunpack.c.l.b16 %v911
  %v2160 = vunpack.c.l.b16 %v912
  %v2161 = vunpack.c.l.b16 %v913
  %v2162 = vunpack.c.l.b16 %v914
  %v2163 = vunpack.c.l.b16 %v915
  %v2164 = vunpack.c.l.b16 %v916
  %v2165 = vunpack.c.l.b16 %v917
  %v2166 = vunpack.c.l.b16 %v918
  %v2167 = vunpack.c.l.b16 %v919
  %v2168 = vunpack.c.l.b16 %v920
  %v2169 = vunpack.c.l.b16 %v921
  %v2170 = vunpack.c.l.b16 %v922
  %v2171 = vunpack.c.l.b16 %v923
  %v2172 = vunpack.c.l.b16 %v924
  %v2173 = vunpack.c.l.b16 %v925
  %v2174 = vunpack.c.l.b16 %v926
  %v2175 = vunpack.c.l.b16 %v927
  %v2176 = vunpack.c.l.b16 %v928
  %v2177 = vunpack.c.l.b16 %v929
  %v2178 = vunpack.c.l.b16 %v930
  %v2179 = vunpack.c.l.b16 %v931
  %v2180 = vunpack.c.l.b16 %v932
  %v2181 = vunpack.c.l.b16 %v933
  %v2182 = vunpack.c.l.b16 %v934
  %v2183 = vunpack.c.l.b16 %v935
  %v2184 = vunpack.c.l.b16 %v936
  %v2185 = vunpack.c.l.b16 %v937
  %v2186 = vunpack.c.l.b16 %v938
  %v2187 = vunpack.c.l.b16 %v939
  %v2188 = vunpack.c.l.b16 %v940
  %v2189 = vunpack.c.l.b16 %v941
  %v2190 = vunpack.c.l.b16 %v942
  %v2191 = vunpack.c.l.b16 %v943
  %v2192 = vunpack.c.l.b16 %v944
  %v2193 = vunpack.c.l.b16 %v945
  %v2194 = vunpack.c.l.b16 %v946
  %v2195 = vunpack.c.l.b16 %v947
  %v2196 = vunpack.c.l.b16 %v948
  %v2197 = vunpack.c.l.b16 %v949
  %v2198 = vpack.c.b16 %v2135, %v2134
  %v2199 = vpack.c.b16 %v2137, %v2136
  %v2200 = vpack.c.b16 %v2139, %v2138
  %v2201 = vpack.c.b16 %v2141, %v2140
  %v2202 = vpack.c.b16 %v2143, %v2142
  %v2203 = vpack.c.b16 %v2145, %v2144
  %v2204 = vpack.c.b16 %v2147, %v2146
  %v2205 = vpack.c.b16 %v2149, %v2148
  %v2206 = vpack.c.b16 %v2151, %v2150
  %v2207 = vpack.c.b16 %v2153, %v2152
  %v2208 = vpack.c.b16 %v2155, %v2154
  %v2209 = vpack.c.b16 %v2157, %v2156
  %v2210 = vpack.c.b16 %v2159, %v2158
  %v2211 = vpack.c.b16 %v2161, %v2160
  %v2212 = vpack.c.b16 %v2163, %v2162
  %v2213 = vpack.c.b16 %v2165, %v2164
  %v2214 = vpack.c.b16 %v2167, %v2166
  %v2215 = vpack.c.b16 %v2169, %v2168
  %v2216 = vpack.c.b16 %v2171, %v2170
  %v2217 = vpack.c.b16 %v2173, %v2172
  %v2218 = vpack.c.b16 %v2175, %v2174
  %v2219 = vpack.c.b16 %v2177, %v2176
  %v2220 = vpack.c.b16 %v2179, %v2178
  %v2221 = vpack.c.b16 %v2181, %v2180
  %v2222 = vpack.c.b16 %v2183, %v2182
  %v2223 = vpack.c.b16 %v2185, %v2184
  %v2224 = vpack.c.b16 %v2187, %v2186
  %v2225 = vpack.c.b16 %v2189, %v2188
  %v2226 = vpack.c.b16 %v2191, %v2190
  %v2227 = vpack.c.b16 %v2193, %v2192
  %v2228 = vpack.c.b16 %v2195, %v2194
  %v2229 = vpack.c.b16 %v2197, %v2196
  %2230 = vrot.lane.b32.xlu0 %v2198, 64
  %v2231 = vpop.permute.xlu0 %2230
  %2232 = vrot.lane.b32.xlu0 %v2199, 64
  %v2233 = vpop.permute.xlu0 %2232
  %2234 = vrot.lane.b32.xlu0 %v2200, 64
  %v2235 = vpop.permute.xlu0 %2234
  %2236 = vrot.lane.b32.xlu0 %v2201, 64
  %v2237 = vpop.permute.xlu0 %2236
  %2238 = vrot.lane.b32.xlu0 %v2202, 64
  %v2239 = vpop.permute.xlu0 %2238
  %2240 = vrot.lane.b32.xlu0 %v2203, 64
  %v2241 = vpop.permute.xlu0 %2240
  %2242 = vrot.lane.b32.xlu0 %v2204, 64
  %v2243 = vpop.permute.xlu0 %2242
  %2244 = vrot.lane.b32.xlu0 %v2205, 64
  %v2245 = vpop.permute.xlu0 %2244
  %2246 = vrot.lane.b32.xlu0 %v2206, 64
  %v2247 = vpop.permute.xlu0 %2246
  %2248 = vrot.lane.b32.xlu0 %v2207, 64
  %v2249 = vpop.permute.xlu0 %2248
  %2250 = vrot.lane.b32.xlu0 %v2208, 64
  %v2251 = vpop.permute.xlu0 %2250
  %2252 = vrot.lane.b32.xlu0 %v2209, 64
  %v2253 = vpop.permute.xlu0 %2252
  %2254 = vrot.lane.b32.xlu0 %v2210, 64
  %v2255 = vpop.permute.xlu0 %2254
  %2256 = vrot.lane.b32.xlu0 %v2211, 64
  %v2257 = vpop.permute.xlu0 %2256
  %2258 = vrot.lane.b32.xlu0 %v2212, 64
  %v2259 = vpop.permute.xlu0 %2258
  %2260 = vrot.lane.b32.xlu0 %v2213, 64
  %v2261 = vpop.permute.xlu0 %2260
  %2262 = vrot.lane.b32.xlu0 %v2214, 64
  %v2263 = vpop.permute.xlu0 %2262
  %2264 = vrot.lane.b32.xlu0 %v2215, 64
  %v2265 = vpop.permute.xlu0 %2264
  %2266 = vrot.lane.b32.xlu0 %v2216, 64
  %v2267 = vpop.permute.xlu0 %2266
  %2268 = vrot.lane.b32.xlu0 %v2217, 64
  %v2269 = vpop.permute.xlu0 %2268
  %2270 = vrot.lane.b32.xlu0 %v2218, 64
  %v2271 = vpop.permute.xlu0 %2270
  %2272 = vrot.lane.b32.xlu0 %v2219, 64
  %v2273 = vpop.permute.xlu0 %2272
  %2274 = vrot.lane.b32.xlu0 %v2220, 64
  %v2275 = vpop.permute.xlu0 %2274
  %2276 = vrot.lane.b32.xlu0 %v2221, 64
  %v2277 = vpop.permute.xlu0 %2276
  %2278 = vrot.lane.b32.xlu0 %v2222, 64
  %v2279 = vpop.permute.xlu0 %2278
  %2280 = vrot.lane.b32.xlu0 %v2223, 64
  %v2281 = vpop.permute.xlu0 %2280
  %2282 = vrot.lane.b32.xlu0 %v2224, 64
  %v2283 = vpop.permute.xlu0 %2282
  %2284 = vrot.lane.b32.xlu0 %v2225, 64
  %v2285 = vpop.permute.xlu0 %2284
  %2286 = vrot.lane.b32.xlu0 %v2226, 64
  %v2287 = vpop.permute.xlu0 %2286
  %2288 = vrot.lane.b32.xlu0 %v2227, 64
  %v2289 = vpop.permute.xlu0 %2288
  %2290 = vrot.lane.b32.xlu0 %v2228, 64
  %v2291 = vpop.permute.xlu0 %2290
  %2292 = vrot.lane.b32.xlu0 %v2229, 64
  %v2293 = vpop.permute.xlu0 %2292
  %v2294 = vunpack.c.l.b16 %v995
  %v2295 = vunpack.c.l.b16 %v1005
  %v2296 = vunpack.c.l.b16 %v1019
  %v2297 = vunpack.c.l.b16 %v1029
  %v2298 = vunpack.c.l.b16 %v1043
  %v2299 = vunpack.c.l.b16 %v1053
  %v2300 = vunpack.c.l.b16 %v1067
  %v2301 = vunpack.c.l.b16 %v1077
  %v2302 = vunpack.c.l.b16 %v1091
  %v2303 = vunpack.c.l.b16 %v1101
  %v2304 = vunpack.c.l.b16 %v1115
  %v2305 = vunpack.c.l.b16 %v1125
  %v2306 = vunpack.c.l.b16 %v1139
  %v2307 = vunpack.c.l.b16 %v1149
  %v2308 = vunpack.c.l.b16 %v1163
  %v2309 = vunpack.c.l.b16 %v1173
  %v2310 = vunpack.c.l.b16 %v1187
  %v2311 = vunpack.c.l.b16 %v1197
  %v2312 = vunpack.c.l.b16 %v1211
  %v2313 = vunpack.c.l.b16 %v1221
  %v2314 = vunpack.c.l.b16 %v1235
  %v2315 = vunpack.c.l.b16 %v1245
  %v2316 = vunpack.c.l.b16 %v1259
  %v2317 = vunpack.c.l.b16 %v1269
  %v2318 = vunpack.c.l.b16 %v1283
  %v2319 = vunpack.c.l.b16 %v1293
  %v2320 = vunpack.c.l.b16 %v1307
  %v2321 = vunpack.c.l.b16 %v1317
  %v2322 = vunpack.c.l.b16 %v1331
  %v2323 = vunpack.c.l.b16 %v1341
  %v2324 = vunpack.c.l.b16 %v1355
  %v2325 = vunpack.c.l.b16 %v1365
  %v2326 = vunpack.c.l.b16 %v1379
  %v2327 = vunpack.c.l.b16 %v1389
  %v2328 = vunpack.c.l.b16 %v1403
  %v2329 = vunpack.c.l.b16 %v1413
  %v2330 = vunpack.c.l.b16 %v1427
  %v2331 = vunpack.c.l.b16 %v1437
  %v2332 = vunpack.c.l.b16 %v1451
  %v2333 = vunpack.c.l.b16 %v1461
  %v2334 = vunpack.c.l.b16 %v1475
  %v2335 = vunpack.c.l.b16 %v1485
  %v2336 = vunpack.c.l.b16 %v1499
  %v2337 = vunpack.c.l.b16 %v1509
  %v2338 = vunpack.c.l.b16 %v1523
  %v2339 = vunpack.c.l.b16 %v1533
  %v2340 = vunpack.c.l.b16 %v1547
  %v2341 = vunpack.c.l.b16 %v1557
  %v2342 = vunpack.c.l.b16 %v1571
  %v2343 = vunpack.c.l.b16 %v1581
  %v2344 = vunpack.c.l.b16 %v1595
  %v2345 = vunpack.c.l.b16 %v1605
  %v2346 = vunpack.c.l.b16 %v1619
  %v2347 = vunpack.c.l.b16 %v1629
  %v2348 = vunpack.c.l.b16 %v1643
  %v2349 = vunpack.c.l.b16 %v1653
  %v2350 = vunpack.c.l.b16 %v1667
  %v2351 = vunpack.c.l.b16 %v1677
  %v2352 = vunpack.c.l.b16 %v1691
  %v2353 = vunpack.c.l.b16 %v1701
  %v2354 = vunpack.c.l.b16 %v1715
  %v2355 = vunpack.c.l.b16 %v1725
  %v2356 = vunpack.c.l.b16 %v1739
  %v2357 = vunpack.c.l.b16 %v1749
  %v2358 = vpack.c.b16 %v2295, %v2294
  %v2359 = vpack.c.b16 %v2297, %v2296
  %v2360 = vpack.c.b16 %v2299, %v2298
  %v2361 = vpack.c.b16 %v2301, %v2300
  %v2362 = vpack.c.b16 %v2303, %v2302
  %v2363 = vpack.c.b16 %v2305, %v2304
  %v2364 = vpack.c.b16 %v2307, %v2306
  %v2365 = vpack.c.b16 %v2309, %v2308
  %v2366 = vpack.c.b16 %v2311, %v2310
  %v2367 = vpack.c.b16 %v2313, %v2312
  %v2368 = vpack.c.b16 %v2315, %v2314
  %v2369 = vpack.c.b16 %v2317, %v2316
  %v2370 = vpack.c.b16 %v2319, %v2318
  %v2371 = vpack.c.b16 %v2321, %v2320
  %v2372 = vpack.c.b16 %v2323, %v2322
  %v2373 = vpack.c.b16 %v2325, %v2324
  %v2374 = vpack.c.b16 %v2327, %v2326
  %v2375 = vpack.c.b16 %v2329, %v2328
  %v2376 = vpack.c.b16 %v2331, %v2330
  %v2377 = vpack.c.b16 %v2333, %v2332
  %v2378 = vpack.c.b16 %v2335, %v2334
  %v2379 = vpack.c.b16 %v2337, %v2336
  %v2380 = vpack.c.b16 %v2339, %v2338
  %v2381 = vpack.c.b16 %v2341, %v2340
  %v2382 = vpack.c.b16 %v2343, %v2342
  %v2383 = vpack.c.b16 %v2345, %v2344
  %v2384 = vpack.c.b16 %v2347, %v2346
  %v2385 = vpack.c.b16 %v2349, %v2348
  %v2386 = vpack.c.b16 %v2351, %v2350
  %v2387 = vpack.c.b16 %v2353, %v2352
  %v2388 = vpack.c.b16 %v2355, %v2354
  %v2389 = vpack.c.b16 %v2357, %v2356
  %2390 = vrot.lane.b32.xlu0 %v2358, 96
  %v2391 = vpop.permute.xlu0 %2390
  %2392 = vrot.lane.b32.xlu0 %v2359, 96
  %v2393 = vpop.permute.xlu0 %2392
  %2394 = vrot.lane.b32.xlu0 %v2360, 96
  %v2395 = vpop.permute.xlu0 %2394
  %2396 = vrot.lane.b32.xlu0 %v2361, 96
  %v2397 = vpop.permute.xlu0 %2396
  %2398 = vrot.lane.b32.xlu0 %v2362, 96
  %v2399 = vpop.permute.xlu0 %2398
  %2400 = vrot.lane.b32.xlu0 %v2363, 96
  %v2401 = vpop.permute.xlu0 %2400
  %2402 = vrot.lane.b32.xlu0 %v2364, 96
  %v2403 = vpop.permute.xlu0 %2402
  %2404 = vrot.lane.b32.xlu0 %v2365, 96
  %v2405 = vpop.permute.xlu0 %2404
  %2406 = vrot.lane.b32.xlu0 %v2366, 96
  %v2407 = vpop.permute.xlu0 %2406
  %2408 = vrot.lane.b32.xlu0 %v2367, 96
  %v2409 = vpop.permute.xlu0 %2408
  %2410 = vrot.lane.b32.xlu0 %v2368, 96
  %v2411 = vpop.permute.xlu0 %2410
  %2412 = vrot.lane.b32.xlu0 %v2369, 96
  %v2413 = vpop.permute.xlu0 %2412
  %2414 = vrot.lane.b32.xlu0 %v2370, 96
  %v2415 = vpop.permute.xlu0 %2414
  %2416 = vrot.lane.b32.xlu0 %v2371, 96
  %v2417 = vpop.permute.xlu0 %2416
  %2418 = vrot.lane.b32.xlu0 %v2372, 96
  %v2419 = vpop.permute.xlu0 %2418
  %2420 = vrot.lane.b32.xlu0 %v2373, 96
  %v2421 = vpop.permute.xlu0 %2420
  %2422 = vrot.lane.b32.xlu0 %v2374, 96
  %v2423 = vpop.permute.xlu0 %2422
  %2424 = vrot.lane.b32.xlu0 %v2375, 96
  %v2425 = vpop.permute.xlu0 %2424
  %2426 = vrot.lane.b32.xlu0 %v2376, 96
  %v2427 = vpop.permute.xlu0 %2426
  %2428 = vrot.lane.b32.xlu0 %v2377, 96
  %v2429 = vpop.permute.xlu0 %2428
  %2430 = vrot.lane.b32.xlu0 %v2378, 96
  %v2431 = vpop.permute.xlu0 %2430
  %2432 = vrot.lane.b32.xlu0 %v2379, 96
  %v2433 = vpop.permute.xlu0 %2432
  %2434 = vrot.lane.b32.xlu0 %v2380, 96
  %v2435 = vpop.permute.xlu0 %2434
  %2436 = vrot.lane.b32.xlu0 %v2381, 96
  %v2437 = vpop.permute.xlu0 %2436
  %2438 = vrot.lane.b32.xlu0 %v2382, 96
  %v2439 = vpop.permute.xlu0 %2438
  %2440 = vrot.lane.b32.xlu0 %v2383, 96
  %v2441 = vpop.permute.xlu0 %2440
  %2442 = vrot.lane.b32.xlu0 %v2384, 96
  %v2443 = vpop.permute.xlu0 %2442
  %2444 = vrot.lane.b32.xlu0 %v2385, 96
  %v2445 = vpop.permute.xlu0 %2444
  %2446 = vrot.lane.b32.xlu0 %v2386, 96
  %v2447 = vpop.permute.xlu0 %2446
  %2448 = vrot.lane.b32.xlu0 %v2387, 96
  %v2449 = vpop.permute.xlu0 %2448
  %2450 = vrot.lane.b32.xlu0 %v2388, 96
  %v2451 = vpop.permute.xlu0 %2450
  %2452 = vrot.lane.b32.xlu0 %v2389, 96
  %v2453 = vpop.permute.xlu0 %2452
  %vm2454 = vcmask 261120
  %v2457 = vsel %vm2454, %v1878, %v2007
  %v2460 = vsel %vm2454, %v1879, %v2009
  %v2463 = vsel %vm2454, %v1880, %v2011
  %v2466 = vsel %vm2454, %v1881, %v2013
  %v2469 = vsel %vm2454, %v1882, %v2015
  %v2472 = vsel %vm2454, %v1883, %v2017
  %v2475 = vsel %vm2454, %v1884, %v2019
  %v2478 = vsel %vm2454, %v1885, %v2021
  %v2481 = vsel %vm2454, %v1886, %v2023
  %v2484 = vsel %vm2454, %v1887, %v2025
  %v2487 = vsel %vm2454, %v1888, %v2027
  %v2490 = vsel %vm2454, %v1889, %v2029
  %v2493 = vsel %vm2454, %v1890, %v2031
  %v2496 = vsel %vm2454, %v1891, %v2033
  %v2499 = vsel %vm2454, %v1892, %v2035
  %v2502 = vsel %vm2454, %v1893, %v2037
  %v2505 = vsel %vm2454, %v1894, %v2039
  %v2508 = vsel %vm2454, %v1895, %v2041
  %v2511 = vsel %vm2454, %v1896, %v2043
  %v2514 = vsel %vm2454, %v1897, %v2045
  %v2517 = vsel %vm2454, %v1898, %v2047
  %v2520 = vsel %vm2454, %v1899, %v2049
  %v2523 = vsel %vm2454, %v1900, %v2051
  %v2526 = vsel %vm2454, %v1901, %v2053
  %v2529 = vsel %vm2454, %v1902, %v2055
  %v2532 = vsel %vm2454, %v1903, %v2057
  %v2535 = vsel %vm2454, %v1904, %v2059
  %v2538 = vsel %vm2454, %v1905, %v2061
  %v2541 = vsel %vm2454, %v1906, %v2063
  %v2544 = vsel %vm2454, %v1907, %v2065
  %v2547 = vsel %vm2454, %v1908, %v2067
  %v2550 = vsel %vm2454, %v1909, %v2069
  %vm2551 = vcmask 523264
  %v2553 = vsel %vm2551, %v2457, %v2231
  %v2555 = vsel %vm2551, %v2460, %v2233
  %v2557 = vsel %vm2551, %v2463, %v2235
  %v2559 = vsel %vm2551, %v2466, %v2237
  %v2561 = vsel %vm2551, %v2469, %v2239
  %v2563 = vsel %vm2551, %v2472, %v2241
  %v2565 = vsel %vm2551, %v2475, %v2243
  %v2567 = vsel %vm2551, %v2478, %v2245
  %v2569 = vsel %vm2551, %v2481, %v2247
  %v2571 = vsel %vm2551, %v2484, %v2249
  %v2573 = vsel %vm2551, %v2487, %v2251
  %v2575 = vsel %vm2551, %v2490, %v2253
  %v2577 = vsel %vm2551, %v2493, %v2255
  %v2579 = vsel %vm2551, %v2496, %v2257
  %v2581 = vsel %vm2551, %v2499, %v2259
  %v2583 = vsel %vm2551, %v2502, %v2261
  %v2585 = vsel %vm2551, %v2505, %v2263
  %v2587 = vsel %vm2551, %v2508, %v2265
  %v2589 = vsel %vm2551, %v2511, %v2267
  %v2591 = vsel %vm2551, %v2514, %v2269
  %v2593 = vsel %vm2551, %v2517, %v2271
  %v2595 = vsel %vm2551, %v2520, %v2273
  %v2597 = vsel %vm2551, %v2523, %v2275
  %v2599 = vsel %vm2551, %v2526, %v2277
  %v2601 = vsel %vm2551, %v2529, %v2279
  %v2603 = vsel %vm2551, %v2532, %v2281
  %v2605 = vsel %vm2551, %v2535, %v2283
  %v2607 = vsel %vm2551, %v2538, %v2285
  %v2609 = vsel %vm2551, %v2541, %v2287
  %v2611 = vsel %vm2551, %v2544, %v2289
  %v2613 = vsel %vm2551, %v2547, %v2291
  %v2615 = vsel %vm2551, %v2550, %v2293
  %vm2616 = vcmask 785408
  %v2618 = vsel %vm2616, %v2553, %v2391
  %v2621 = vsel %vm2616, %v2555, %v2393
  %v2624 = vsel %vm2616, %v2557, %v2395
  %v2627 = vsel %vm2616, %v2559, %v2397
  %v2630 = vsel %vm2616, %v2561, %v2399
  %v2633 = vsel %vm2616, %v2563, %v2401
  %v2636 = vsel %vm2616, %v2565, %v2403
  %v2639 = vsel %vm2616, %v2567, %v2405
  %v2642 = vsel %vm2616, %v2569, %v2407
  %v2645 = vsel %vm2616, %v2571, %v2409
  %v2648 = vsel %vm2616, %v2573, %v2411
  %v2651 = vsel %vm2616, %v2575, %v2413
  %v2654 = vsel %vm2616, %v2577, %v2415
  %v2657 = vsel %vm2616, %v2579, %v2417
  %v2660 = vsel %vm2616, %v2581, %v2419
  %v2663 = vsel %vm2616, %v2583, %v2421
  %v2666 = vsel %vm2616, %v2585, %v2423
  %v2669 = vsel %vm2616, %v2587, %v2425
  %v2672 = vsel %vm2616, %v2589, %v2427
  %v2675 = vsel %vm2616, %v2591, %v2429
  %v2678 = vsel %vm2616, %v2593, %v2431
  %v2681 = vsel %vm2616, %v2595, %v2433
  %v2684 = vsel %vm2616, %v2597, %v2435
  %v2687 = vsel %vm2616, %v2599, %v2437
  %v2690 = vsel %vm2616, %v2601, %v2439
  %v2693 = vsel %vm2616, %v2603, %v2441
  %v2696 = vsel %vm2616, %v2605, %v2443
  %v2699 = vsel %vm2616, %v2607, %v2445
  %v2702 = vsel %vm2616, %v2609, %v2447
  %v2705 = vsel %vm2616, %v2611, %v2449
  %v2708 = vsel %vm2616, %v2613, %v2451
  %v2711 = vsel %vm2616, %v2615, %v2453
  %v2713 = vld [vmem:[%s1] sm:$0xf]
  %v2714 = vld [vmem:[%s1 + $0x4] sm:$0xf]
  %v2715 = vld [vmem:[%s1 + $0x8] sm:$0xf]
  %v2716 = vld [vmem:[%s1 + $0xc] sm:$0xf]
  %v2717 = vld [vmem:[%s1 + $0x10] sm:$0xf]
  %v2718 = vld [vmem:[%s1 + $0x14] sm:$0xf]
  %v2719 = vld [vmem:[%s1 + $0x18] sm:$0xf]
  %v2720 = vld [vmem:[%s1 + $0x1c] sm:$0xf]
  %v2721 = vld [vmem:[%s1 + $0x20] sm:$0xf]
  %v2722 = vld [vmem:[%s1 + $0x24] sm:$0xf]
  %v2723 = vld [vmem:[%s1 + $0x28] sm:$0xf]
  %v2724 = vld [vmem:[%s1 + $0x2c] sm:$0xf]
  %v2725 = vld [vmem:[%s1 + $0x30] sm:$0xf]
  %v2726 = vld [vmem:[%s1 + $0x34] sm:$0xf]
  %v2727 = vld [vmem:[%s1 + $0x38] sm:$0xf]
  %v2728 = vld [vmem:[%s1 + $0x3c] sm:$0xf]
  %v2745 = vunpack.c.l.b16 %v2713
  %v2746 = vunpack.c.l.b16 %v2714
  %v2747 = vunpack.c.l.b16 %v2715
  %v2748 = vunpack.c.l.b16 %v2716
  %v2749 = vunpack.c.l.b16 %v2717
  %v2750 = vunpack.c.l.b16 %v2718
  %v2751 = vunpack.c.l.b16 %v2719
  %v2752 = vunpack.c.l.b16 %v2720
  %v2753 = vunpack.c.l.b16 %v2721
  %v2754 = vunpack.c.l.b16 %v2722
  %v2755 = vunpack.c.l.b16 %v2723
  %v2756 = vunpack.c.l.b16 %v2724
  %v2757 = vunpack.c.l.b16 %v2725
  %v2758 = vunpack.c.l.b16 %v2726
  %v2759 = vunpack.c.l.b16 %v2727
  %v2760 = vunpack.c.l.b16 %v2728
  %v2761 = vpack.c.b16 %v2746, %v2745
  %v2762 = vpack.c.b16 %v2748, %v2747
  %v2763 = vpack.c.b16 %v2750, %v2749
  %v2764 = vpack.c.b16 %v2752, %v2751
  %v2765 = vpack.c.b16 %v2754, %v2753
  %v2766 = vpack.c.b16 %v2756, %v2755
  %v2767 = vpack.c.b16 %v2758, %v2757
  %v2768 = vpack.c.b16 %v2760, %v2759
  %2777 = vmatprep.subr.bf16.mxu0 0
  %2778 = vmatpush1.bf16.msra.mxu0 %v2768
  %2779 = vmatprep.subr.bf16.mxu0 0
  %2780 = vmatpush1.bf16.msra.mxu0 %v2767
  %2781 = vmatprep.subr.bf16.mxu0 0
  %2782 = vmatpush1.bf16.msra.mxu0 %v2766
  %2783 = vmatprep.subr.bf16.mxu0 0
  %2784 = vmatpush1.bf16.msra.mxu0 %v2765
  %2785 = vmatprep.subr.bf16.mxu0 0
  %2786 = vmatpush1.bf16.msra.mxu0 %v2764
  %2787 = vmatprep.subr.bf16.mxu0 0
  %2788 = vmatpush1.bf16.msra.mxu0 %v2763
  %2789 = vmatprep.subr.bf16.mxu0 0
  %2790 = vmatpush1.bf16.msra.mxu0 %v2762
  %2791 = vmatprep.subr.bf16.mxu0 0
  %2792 = vmatpush1.bf16.msra.mxu0 %v2761
  %2793 = vmatprep.subr.bf16.mxu0 0
  %2794 = vmatpush2.bf16.msra.mxu0 0
  %2795 = vmatprep.subr.bf16.mxu0 0
  %2796 = vmatpush2.bf16.msra.mxu0 0
  %2797 = vmatprep.subr.bf16.mxu0 0
  %2798 = vmatpush2.bf16.msra.mxu0 0
  %2799 = vmatprep.subr.bf16.mxu0 0
  %2800 = vmatpush2.bf16.msra.mxu0 0
  %2801 = vmatprep.subr.bf16.mxu0 0
  %2802 = vmatpush2.bf16.msra.mxu0 0
  %2803 = vmatprep.subr.bf16.mxu0 0
  %2804 = vmatpush2.bf16.msra.mxu0 0
  %2805 = vmatprep.subr.bf16.mxu0 0
  %2806 = vmatpush2.bf16.msra.mxu0 0
  %2807 = vmatprep.subr.bf16.mxu0 0
  %2808 = vmatpush2.bf16.msra.mxu0 0
  %2809 = vmatprep.mubr.bf16.mxu0 0
  %2810 = vmatmul.mubr.bf16.gmra.mxu0 %v2618
  %v2811 = vpop.f32.mrf.mxu0
  %v2812 = vadd.f32 0.0, %v2811
  %v2813 = vpop.f32.mrf.mxu0
  %v2814 = vpop.f32.mrf.mxu0
  %v2815 = vadd.f32 0.0, %v2814
  %v2816 = vpop.f32.mrf.mxu0
  %2817 = vmatprep.mubr.bf16.mxu0 0
  %2818 = vmatmul.mubr.bf16.gmra.mxu0 %v2621
  %v2819 = vpop.f32.mrf.mxu0
  %v2820 = vadd.f32 0.0, %v2819
  %v2821 = vpop.f32.mrf.mxu0
  %v2822 = vpop.f32.mrf.mxu0
  %v2823 = vadd.f32 0.0, %v2822
  %v2824 = vpop.f32.mrf.mxu0
  %2825 = vmatprep.mubr.bf16.mxu0 0
  %2826 = vmatmul.mubr.bf16.gmra.mxu0 %v2624
  %v2827 = vpop.f32.mrf.mxu0
  %v2828 = vadd.f32 0.0, %v2827
  %v2829 = vpop.f32.mrf.mxu0
  %v2830 = vpop.f32.mrf.mxu0
  %v2831 = vadd.f32 0.0, %v2830
  %v2832 = vpop.f32.mrf.mxu0
  %2833 = vmatprep.mubr.bf16.mxu0 0
  %2834 = vmatmul.mubr.bf16.gmra.mxu0 %v2627
  %v2835 = vpop.f32.mrf.mxu0
  %v2836 = vadd.f32 0.0, %v2835
  %v2837 = vpop.f32.mrf.mxu0
  %v2838 = vpop.f32.mrf.mxu0
  %v2839 = vadd.f32 0.0, %v2838
  %v2840 = vpop.f32.mrf.mxu0
  %2841 = vmatprep.mubr.bf16.mxu0 0
  %2842 = vmatmul.mubr.bf16.gmra.mxu0 %v2630
  %v2843 = vpop.f32.mrf.mxu0
  %v2844 = vadd.f32 0.0, %v2843
  %v2845 = vpop.f32.mrf.mxu0
  %v2846 = vpop.f32.mrf.mxu0
  %v2847 = vadd.f32 0.0, %v2846
  %v2848 = vpop.f32.mrf.mxu0
  %2849 = vmatprep.mubr.bf16.mxu0 0
  %2850 = vmatmul.mubr.bf16.gmra.mxu0 %v2633
  %v2851 = vpop.f32.mrf.mxu0
  %v2852 = vadd.f32 0.0, %v2851
  %v2853 = vpop.f32.mrf.mxu0
  %v2854 = vpop.f32.mrf.mxu0
  %v2855 = vadd.f32 0.0, %v2854
  %v2856 = vpop.f32.mrf.mxu0
  %2857 = vmatprep.mubr.bf16.mxu0 0
  %2858 = vmatmul.mubr.bf16.gmra.mxu0 %v2636
  %v2859 = vpop.f32.mrf.mxu0
  %v2860 = vadd.f32 0.0, %v2859
  %v2861 = vpop.f32.mrf.mxu0
  %v2862 = vpop.f32.mrf.mxu0
  %v2863 = vadd.f32 0.0, %v2862
  %v2864 = vpop.f32.mrf.mxu0
  %2865 = vmatprep.mubr.bf16.mxu0 0
  %2866 = vmatmul.mubr.bf16.gmra.mxu0 %v2639
  %v2867 = vpop.f32.mrf.mxu0
  %v2868 = vadd.f32 0.0, %v2867
  %v2869 = vpop.f32.mrf.mxu0
  %v2870 = vpop.f32.mrf.mxu0
  %v2871 = vadd.f32 0.0, %v2870
  %v2872 = vpop.f32.mrf.mxu0
  %2873 = vmatprep.mubr.bf16.mxu0 0
  %2874 = vmatmul.mubr.bf16.gmra.mxu0 %v2642
  %v2875 = vpop.f32.mrf.mxu0
  %v2876 = vadd.f32 0.0, %v2875
  %v2877 = vpop.f32.mrf.mxu0
  %v2878 = vpop.f32.mrf.mxu0
  %v2879 = vadd.f32 0.0, %v2878
  %v2880 = vpop.f32.mrf.mxu0
  %2881 = vmatprep.mubr.bf16.mxu0 0
  %2882 = vmatmul.mubr.bf16.gmra.mxu0 %v2645
  %v2883 = vpop.f32.mrf.mxu0
  %v2884 = vadd.f32 0.0, %v2883
  %v2885 = vpop.f32.mrf.mxu0
  %v2886 = vpop.f32.mrf.mxu0
  %v2887 = vadd.f32 0.0, %v2886
  %v2888 = vpop.f32.mrf.mxu0
  %2889 = vmatprep.mubr.bf16.mxu0 0
  %2890 = vmatmul.mubr.bf16.gmra.mxu0 %v2648
  %v2891 = vpop.f32.mrf.mxu0
  %v2892 = vadd.f32 0.0, %v2891
  %v2893 = vpop.f32.mrf.mxu0
  %v2894 = vpop.f32.mrf.mxu0
  %v2895 = vadd.f32 0.0, %v2894
  %v2896 = vpop.f32.mrf.mxu0
  %2897 = vmatprep.mubr.bf16.mxu0 0
  %2898 = vmatmul.mubr.bf16.gmra.mxu0 %v2651
  %v2899 = vpop.f32.mrf.mxu0
  %v2900 = vadd.f32 0.0, %v2899
  %v2901 = vpop.f32.mrf.mxu0
  %v2902 = vpop.f32.mrf.mxu0
  %v2903 = vadd.f32 0.0, %v2902
  %v2904 = vpop.f32.mrf.mxu0
  %2905 = vmatprep.mubr.bf16.mxu0 0
  %2906 = vmatmul.mubr.bf16.gmra.mxu0 %v2654
  %v2907 = vpop.f32.mrf.mxu0
  %v2908 = vadd.f32 0.0, %v2907
  %v2909 = vpop.f32.mrf.mxu0
  %v2910 = vpop.f32.mrf.mxu0
  %v2911 = vadd.f32 0.0, %v2910
  %v2912 = vpop.f32.mrf.mxu0
  %2913 = vmatprep.mubr.bf16.mxu0 0
  %2914 = vmatmul.mubr.bf16.gmra.mxu0 %v2657
  %v2915 = vpop.f32.mrf.mxu0
  %v2916 = vadd.f32 0.0, %v2915
  %v2917 = vpop.f32.mrf.mxu0
  %v2918 = vpop.f32.mrf.mxu0
  %v2919 = vadd.f32 0.0, %v2918
  %v2920 = vpop.f32.mrf.mxu0
  %2921 = vmatprep.mubr.bf16.mxu0 0
  %2922 = vmatmul.mubr.bf16.gmra.mxu0 %v2660
  %v2923 = vpop.f32.mrf.mxu0
  %v2924 = vadd.f32 0.0, %v2923
  %v2925 = vpop.f32.mrf.mxu0
  %v2926 = vpop.f32.mrf.mxu0
  %v2927 = vadd.f32 0.0, %v2926
  %v2928 = vpop.f32.mrf.mxu0
  %2929 = vmatprep.mubr.bf16.mxu0 0
  %2930 = vmatmul.mubr.bf16.gmra.mxu0 %v2663
  %v2931 = vpop.f32.mrf.mxu0
  %v2932 = vadd.f32 0.0, %v2931
  %v2933 = vpop.f32.mrf.mxu0
  %v2934 = vpop.f32.mrf.mxu0
  %v2935 = vadd.f32 0.0, %v2934
  %v2936 = vpop.f32.mrf.mxu0
  %2937 = vmatprep.mubr.bf16.mxu0 0
  %2938 = vmatmul.mubr.bf16.gmra.mxu0 %v2666
  %v2939 = vpop.f32.mrf.mxu0
  %v2940 = vadd.f32 0.0, %v2939
  %v2941 = vpop.f32.mrf.mxu0
  %v2942 = vpop.f32.mrf.mxu0
  %v2943 = vadd.f32 0.0, %v2942
  %v2944 = vpop.f32.mrf.mxu0
  %2945 = vmatprep.mubr.bf16.mxu0 0
  %2946 = vmatmul.mubr.bf16.gmra.mxu0 %v2669
  %v2947 = vpop.f32.mrf.mxu0
  %v2948 = vadd.f32 0.0, %v2947
  %v2949 = vpop.f32.mrf.mxu0
  %v2950 = vpop.f32.mrf.mxu0
  %v2951 = vadd.f32 0.0, %v2950
  %v2952 = vpop.f32.mrf.mxu0
  %2953 = vmatprep.mubr.bf16.mxu0 0
  %2954 = vmatmul.mubr.bf16.gmra.mxu0 %v2672
  %v2955 = vpop.f32.mrf.mxu0
  %v2956 = vadd.f32 0.0, %v2955
  %v2957 = vpop.f32.mrf.mxu0
  %v2958 = vpop.f32.mrf.mxu0
  %v2959 = vadd.f32 0.0, %v2958
  %v2960 = vpop.f32.mrf.mxu0
  %2961 = vmatprep.mubr.bf16.mxu0 0
  %2962 = vmatmul.mubr.bf16.gmra.mxu0 %v2675
  %v2963 = vpop.f32.mrf.mxu0
  %v2964 = vadd.f32 0.0, %v2963
  %v2965 = vpop.f32.mrf.mxu0
  %v2966 = vpop.f32.mrf.mxu0
  %v2967 = vadd.f32 0.0, %v2966
  %v2968 = vpop.f32.mrf.mxu0
  %2969 = vmatprep.mubr.bf16.mxu0 0
  %2970 = vmatmul.mubr.bf16.gmra.mxu0 %v2678
  %v2971 = vpop.f32.mrf.mxu0
  %v2972 = vadd.f32 0.0, %v2971
  %v2973 = vpop.f32.mrf.mxu0
  %v2974 = vpop.f32.mrf.mxu0
  %v2975 = vadd.f32 0.0, %v2974
  %v2976 = vpop.f32.mrf.mxu0
  %2977 = vmatprep.mubr.bf16.mxu0 0
  %2978 = vmatmul.mubr.bf16.gmra.mxu0 %v2681
  %v2979 = vpop.f32.mrf.mxu0
  %v2980 = vadd.f32 0.0, %v2979
  %v2981 = vpop.f32.mrf.mxu0
  %v2982 = vpop.f32.mrf.mxu0
  %v2983 = vadd.f32 0.0, %v2982
  %v2984 = vpop.f32.mrf.mxu0
  %2985 = vmatprep.mubr.bf16.mxu0 0
  %2986 = vmatmul.mubr.bf16.gmra.mxu0 %v2684
  %v2987 = vpop.f32.mrf.mxu0
  %v2988 = vadd.f32 0.0, %v2987
  %v2989 = vpop.f32.mrf.mxu0
  %v2990 = vpop.f32.mrf.mxu0
  %v2991 = vadd.f32 0.0, %v2990
  %v2992 = vpop.f32.mrf.mxu0
  %2993 = vmatprep.mubr.bf16.mxu0 0
  %2994 = vmatmul.mubr.bf16.gmra.mxu0 %v2687
  %v2995 = vpop.f32.mrf.mxu0
  %v2996 = vadd.f32 0.0, %v2995
  %v2997 = vpop.f32.mrf.mxu0
  %v2998 = vpop.f32.mrf.mxu0
  %v2999 = vadd.f32 0.0, %v2998
  %v3000 = vpop.f32.mrf.mxu0
  %3001 = vmatprep.mubr.bf16.mxu0 0
  %3002 = vmatmul.mubr.bf16.gmra.mxu0 %v2690
  %v3003 = vpop.f32.mrf.mxu0
  %v3004 = vadd.f32 0.0, %v3003
  %v3005 = vpop.f32.mrf.mxu0
  %v3006 = vpop.f32.mrf.mxu0
  %v3007 = vadd.f32 0.0, %v3006
  %v3008 = vpop.f32.mrf.mxu0
  %3009 = vmatprep.mubr.bf16.mxu0 0
  %3010 = vmatmul.mubr.bf16.gmra.mxu0 %v2693
  %v3011 = vpop.f32.mrf.mxu0
  %v3012 = vadd.f32 0.0, %v3011
  %v3013 = vpop.f32.mrf.mxu0
  %v3014 = vpop.f32.mrf.mxu0
  %v3015 = vadd.f32 0.0, %v3014
  %v3016 = vpop.f32.mrf.mxu0
  %3017 = vmatprep.mubr.bf16.mxu0 0
  %3018 = vmatmul.mubr.bf16.gmra.mxu0 %v2696
  %v3019 = vpop.f32.mrf.mxu0
  %v3020 = vadd.f32 0.0, %v3019
  %v3021 = vpop.f32.mrf.mxu0
  %v3022 = vpop.f32.mrf.mxu0
  %v3023 = vadd.f32 0.0, %v3022
  %v3024 = vpop.f32.mrf.mxu0
  %3025 = vmatprep.mubr.bf16.mxu0 0
  %3026 = vmatmul.mubr.bf16.gmra.mxu0 %v2699
  %v3027 = vpop.f32.mrf.mxu0
  %v3028 = vadd.f32 0.0, %v3027
  %v3029 = vpop.f32.mrf.mxu0
  %v3030 = vpop.f32.mrf.mxu0
  %v3031 = vadd.f32 0.0, %v3030
  %v3032 = vpop.f32.mrf.mxu0
  %3033 = vmatprep.mubr.bf16.mxu0 0
  %3034 = vmatmul.mubr.bf16.gmra.mxu0 %v2702
  %v3035 = vpop.f32.mrf.mxu0
  %v3036 = vadd.f32 0.0, %v3035
  %v3037 = vpop.f32.mrf.mxu0
  %v3038 = vpop.f32.mrf.mxu0
  %v3039 = vadd.f32 0.0, %v3038
  %v3040 = vpop.f32.mrf.mxu0
  %3041 = vmatprep.mubr.bf16.mxu0 0
  %3042 = vmatmul.mubr.bf16.gmra.mxu0 %v2705
  %v3043 = vpop.f32.mrf.mxu0
  %v3044 = vadd.f32 0.0, %v3043
  %v3045 = vpop.f32.mrf.mxu0
  %v3046 = vpop.f32.mrf.mxu0
  %v3047 = vadd.f32 0.0, %v3046
  %v3048 = vpop.f32.mrf.mxu0
  %3049 = vmatprep.mubr.bf16.mxu0 0
  %3050 = vmatmul.mubr.bf16.gmra.mxu0 %v2708
  %v3051 = vpop.f32.mrf.mxu0
  %v3052 = vadd.f32 0.0, %v3051
  %v3053 = vpop.f32.mrf.mxu0
  %v3054 = vpop.f32.mrf.mxu0
  %v3055 = vadd.f32 0.0, %v3054
  %v3056 = vpop.f32.mrf.mxu0
  %3057 = vmatprep.mubr.bf16.mxu0 0
  %3058 = vmatmul.mubr.bf16.gmra.mxu0 %v2711
  %v3059 = vpop.f32.mrf.mxu0
  %v3060 = vadd.f32 0.0, %v3059
  %v3061 = vpop.f32.mrf.mxu0
  %v3062 = vpop.f32.mrf.mxu0
  %v3063 = vadd.f32 0.0, %v3062
  %v3064 = vpop.f32.mrf.mxu0
  %3065 = vdwg.mxu0
  %v3066 = vld [vmem:[%s2] sm:$0x1]
  %v3067 = vld [vmem:[%s3] sm:$0x1]
  %vm3068 = vcmask 130048
  %v3069 = vsel %vm3068, %v2812, 0.0
  %v3070 = vsel %vm3068, %v2815, 0.0
  %v3071 = vadd.f32 %v3069, %v3070
  %v3072 = vsel %vm3068, %v2820, 0.0
  %v3073 = vadd.f32 %v3071, %v3072
  %v3074 = vsel %vm3068, %v2823, 0.0
  %v3075 = vadd.f32 %v3073, %v3074
  %v3076 = vsel %vm3068, %v2828, 0.0
  %v3077 = vadd.f32 %v3075, %v3076
  %v3078 = vsel %vm3068, %v2831, 0.0
  %v3079 = vadd.f32 %v3077, %v3078
  %v3080 = vsel %vm3068, %v2836, 0.0
  %v3081 = vadd.f32 %v3079, %v3080
  %v3082 = vsel %vm3068, %v2839, 0.0
  %v3083 = vadd.f32 %v3081, %v3082
  %v3084 = vsel %vm3068, %v2844, 0.0
  %v3085 = vadd.f32 %v3083, %v3084
  %v3086 = vsel %vm3068, %v2847, 0.0
  %v3087 = vadd.f32 %v3085, %v3086
  %v3088 = vsel %vm3068, %v2852, 0.0
  %v3089 = vadd.f32 %v3087, %v3088
  %v3090 = vsel %vm3068, %v2855, 0.0
  %v3091 = vadd.f32 %v3089, %v3090
  %v3092 = vsel %vm3068, %v2860, 0.0
  %v3093 = vadd.f32 %v3091, %v3092
  %v3094 = vsel %vm3068, %v2863, 0.0
  %v3095 = vadd.f32 %v3093, %v3094
  %v3096 = vsel %vm3068, %v2868, 0.0
  %v3097 = vadd.f32 %v3095, %v3096
  %v3098 = vsel %vm3068, %v2871, 0.0
  %v3099 = vadd.f32 %v3097, %v3098
  %v3100 = vsel %vm3068, %v2876, 0.0
  %v3101 = vadd.f32 %v3099, %v3100
  %v3102 = vsel %vm3068, %v2879, 0.0
  %v3103 = vadd.f32 %v3101, %v3102
  %v3104 = vsel %vm3068, %v2884, 0.0
  %v3105 = vadd.f32 %v3103, %v3104
  %v3106 = vsel %vm3068, %v2887, 0.0
  %v3107 = vadd.f32 %v3105, %v3106
  %v3108 = vsel %vm3068, %v2892, 0.0
  %v3109 = vadd.f32 %v3107, %v3108
  %v3110 = vsel %vm3068, %v2895, 0.0
  %v3111 = vadd.f32 %v3109, %v3110
  %v3112 = vsel %vm3068, %v2900, 0.0
  %v3113 = vadd.f32 %v3111, %v3112
  %v3114 = vsel %vm3068, %v2903, 0.0
  %v3115 = vadd.f32 %v3113, %v3114
  %v3116 = vsel %vm3068, %v2908, 0.0
  %v3117 = vadd.f32 %v3115, %v3116
  %v3118 = vsel %vm3068, %v2911, 0.0
  %v3119 = vadd.f32 %v3117, %v3118
  %v3120 = vsel %vm3068, %v2916, 0.0
  %v3121 = vadd.f32 %v3119, %v3120
  %v3122 = vsel %vm3068, %v2919, 0.0
  %v3123 = vadd.f32 %v3121, %v3122
  %v3124 = vsel %vm3068, %v2924, 0.0
  %v3125 = vadd.f32 %v3123, %v3124
  %v3126 = vsel %vm3068, %v2927, 0.0
  %v3127 = vadd.f32 %v3125, %v3126
  %v3128 = vsel %vm3068, %v2932, 0.0
  %v3129 = vadd.f32 %v3127, %v3128
  %v3130 = vsel %vm3068, %v2935, 0.0
  %v3131 = vadd.f32 %v3129, %v3130
  %v3132 = vsel %vm3068, %v2940, 0.0
  %v3133 = vadd.f32 %v3131, %v3132
  %v3134 = vsel %vm3068, %v2943, 0.0
  %v3135 = vadd.f32 %v3133, %v3134
  %v3136 = vsel %vm3068, %v2948, 0.0
  %v3137 = vadd.f32 %v3135, %v3136
  %v3138 = vsel %vm3068, %v2951, 0.0
  %v3139 = vadd.f32 %v3137, %v3138
  %v3140 = vsel %vm3068, %v2956, 0.0
  %v3141 = vadd.f32 %v3139, %v3140
  %v3142 = vsel %vm3068, %v2959, 0.0
  %v3143 = vadd.f32 %v3141, %v3142
  %v3144 = vsel %vm3068, %v2964, 0.0
  %v3145 = vadd.f32 %v3143, %v3144
  %v3146 = vsel %vm3068, %v2967, 0.0
  %v3147 = vadd.f32 %v3145, %v3146
  %v3148 = vsel %vm3068, %v2972, 0.0
  %v3149 = vadd.f32 %v3147, %v3148
  %v3150 = vsel %vm3068, %v2975, 0.0
  %v3151 = vadd.f32 %v3149, %v3150
  %v3152 = vsel %vm3068, %v2980, 0.0
  %v3153 = vadd.f32 %v3151, %v3152
  %v3154 = vsel %vm3068, %v2983, 0.0
  %v3155 = vadd.f32 %v3153, %v3154
  %v3156 = vsel %vm3068, %v2988, 0.0
  %v3157 = vadd.f32 %v3155, %v3156
  %v3158 = vsel %vm3068, %v2991, 0.0
  %v3159 = vadd.f32 %v3157, %v3158
  %v3160 = vsel %vm3068, %v2996, 0.0
  %v3161 = vadd.f32 %v3159, %v3160
  %v3162 = vsel %vm3068, %v2999, 0.0
  %v3163 = vadd.f32 %v3161, %v3162
  %v3164 = vsel %vm3068, %v3004, 0.0
  %v3165 = vadd.f32 %v3163, %v3164
  %v3166 = vsel %vm3068, %v3007, 0.0
  %v3167 = vadd.f32 %v3165, %v3166
  %v3168 = vsel %vm3068, %v3012, 0.0
  %v3169 = vadd.f32 %v3167, %v3168
  %v3170 = vsel %vm3068, %v3015, 0.0
  %v3171 = vadd.f32 %v3169, %v3170
  %v3172 = vsel %vm3068, %v3020, 0.0
  %v3173 = vadd.f32 %v3171, %v3172
  %v3174 = vsel %vm3068, %v3023, 0.0
  %v3175 = vadd.f32 %v3173, %v3174
  %v3176 = vsel %vm3068, %v3028, 0.0
  %v3177 = vadd.f32 %v3175, %v3176
  %v3178 = vsel %vm3068, %v3031, 0.0
  %v3179 = vadd.f32 %v3177, %v3178
  %v3180 = vsel %vm3068, %v3036, 0.0
  %v3181 = vadd.f32 %v3179, %v3180
  %v3182 = vsel %vm3068, %v3039, 0.0
  %v3183 = vadd.f32 %v3181, %v3182
  %v3184 = vsel %vm3068, %v3044, 0.0
  %v3185 = vadd.f32 %v3183, %v3184
  %v3186 = vsel %vm3068, %v3047, 0.0
  %v3187 = vadd.f32 %v3185, %v3186
  %v3188 = vsel %vm3068, %v3052, 0.0
  %v3189 = vadd.f32 %v3187, %v3188
  %v3190 = vsel %vm3068, %v3055, 0.0
  %v3191 = vadd.f32 %v3189, %v3190
  %v3192 = vsel %vm3068, %v3060, 0.0
  %v3193 = vadd.f32 %v3191, %v3192
  %v3194 = vsel %vm3068, %v3063, 0.0
  %v3195 = vadd.f32 %v3193, %v3194
  %v3196 = vrot.slane %v3195, 4
  %v3197 = vadd.f32 %v3195, %v3196
  %v3198 = vrot.slane %v3197, 2
  %v3199 = vadd.f32 %v3197, %v3198
  %v3200 = vrot.slane %v3199, 1
  %v3201 = vadd.f32 %v3199, %v3200
  %v3202 = vmul.f32 %v3201, 0.001953125
  %v3203 = vmul.f32 %v2812, %v2812
  %v3204 = vmul.f32 %v2815, %v2815
  %v3205 = vmul.f32 %v2820, %v2820
  %v3206 = vmul.f32 %v2823, %v2823
  %v3207 = vmul.f32 %v2828, %v2828
  %v3208 = vmul.f32 %v2831, %v2831
  %v3209 = vmul.f32 %v2836, %v2836
  %v3210 = vmul.f32 %v2839, %v2839
  %v3211 = vmul.f32 %v2844, %v2844
  %v3212 = vmul.f32 %v2847, %v2847
  %v3213 = vmul.f32 %v2852, %v2852
  %v3214 = vmul.f32 %v2855, %v2855
  %v3215 = vmul.f32 %v2860, %v2860
  %v3216 = vmul.f32 %v2863, %v2863
  %v3217 = vmul.f32 %v2868, %v2868
  %v3218 = vmul.f32 %v2871, %v2871
  %v3219 = vmul.f32 %v2876, %v2876
  %v3220 = vmul.f32 %v2879, %v2879
  %v3221 = vmul.f32 %v2884, %v2884
  %v3222 = vmul.f32 %v2887, %v2887
  %v3223 = vmul.f32 %v2892, %v2892
  %v3224 = vmul.f32 %v2895, %v2895
  %v3225 = vmul.f32 %v2900, %v2900
  %v3226 = vmul.f32 %v2903, %v2903
  %v3227 = vmul.f32 %v2908, %v2908
  %v3228 = vmul.f32 %v2911, %v2911
  %v3229 = vmul.f32 %v2916, %v2916
  %v3230 = vmul.f32 %v2919, %v2919
  %v3231 = vmul.f32 %v2924, %v2924
  %v3232 = vmul.f32 %v2927, %v2927
  %v3233 = vmul.f32 %v2932, %v2932
  %v3234 = vmul.f32 %v2935, %v2935
  %v3235 = vmul.f32 %v2940, %v2940
  %v3236 = vmul.f32 %v2943, %v2943
  %v3237 = vmul.f32 %v2948, %v2948
  %v3238 = vmul.f32 %v2951, %v2951
  %v3239 = vmul.f32 %v2956, %v2956
  %v3240 = vmul.f32 %v2959, %v2959
  %v3241 = vmul.f32 %v2964, %v2964
  %v3242 = vmul.f32 %v2967, %v2967
  %v3243 = vmul.f32 %v2972, %v2972
  %v3244 = vmul.f32 %v2975, %v2975
  %v3245 = vmul.f32 %v2980, %v2980
  %v3246 = vmul.f32 %v2983, %v2983
  %v3247 = vmul.f32 %v2988, %v2988
  %v3248 = vmul.f32 %v2991, %v2991
  %v3249 = vmul.f32 %v2996, %v2996
  %v3250 = vmul.f32 %v2999, %v2999
  %v3251 = vmul.f32 %v3004, %v3004
  %v3252 = vmul.f32 %v3007, %v3007
  %v3253 = vmul.f32 %v3012, %v3012
  %v3254 = vmul.f32 %v3015, %v3015
  %v3255 = vmul.f32 %v3020, %v3020
  %v3256 = vmul.f32 %v3023, %v3023
  %v3257 = vmul.f32 %v3028, %v3028
  %v3258 = vmul.f32 %v3031, %v3031
  %v3259 = vmul.f32 %v3036, %v3036
  %v3260 = vmul.f32 %v3039, %v3039
  %v3261 = vmul.f32 %v3044, %v3044
  %v3262 = vmul.f32 %v3047, %v3047
  %v3263 = vmul.f32 %v3052, %v3052
  %v3264 = vmul.f32 %v3055, %v3055
  %v3265 = vmul.f32 %v3060, %v3060
  %v3266 = vmul.f32 %v3063, %v3063
  %v3267 = vsel %vm3068, %v3203, 0.0
  %v3268 = vsel %vm3068, %v3204, 0.0
  %v3269 = vadd.f32 %v3267, %v3268
  %v3270 = vsel %vm3068, %v3205, 0.0
  %v3271 = vadd.f32 %v3269, %v3270
  %v3272 = vsel %vm3068, %v3206, 0.0
  %v3273 = vadd.f32 %v3271, %v3272
  %v3274 = vsel %vm3068, %v3207, 0.0
  %v3275 = vadd.f32 %v3273, %v3274
  %v3276 = vsel %vm3068, %v3208, 0.0
  %v3277 = vadd.f32 %v3275, %v3276
  %v3278 = vsel %vm3068, %v3209, 0.0
  %v3279 = vadd.f32 %v3277, %v3278
  %v3280 = vsel %vm3068, %v3210, 0.0
  %v3281 = vadd.f32 %v3279, %v3280
  %v3282 = vsel %vm3068, %v3211, 0.0
  %v3283 = vadd.f32 %v3281, %v3282
  %v3284 = vsel %vm3068, %v3212, 0.0
  %v3285 = vadd.f32 %v3283, %v3284
  %v3286 = vsel %vm3068, %v3213, 0.0
  %v3287 = vadd.f32 %v3285, %v3286
  %v3288 = vsel %vm3068, %v3214, 0.0
  %v3289 = vadd.f32 %v3287, %v3288
  %v3290 = vsel %vm3068, %v3215, 0.0
  %v3291 = vadd.f32 %v3289, %v3290
  %v3292 = vsel %vm3068, %v3216, 0.0
  %v3293 = vadd.f32 %v3291, %v3292
  %v3294 = vsel %vm3068, %v3217, 0.0
  %v3295 = vadd.f32 %v3293, %v3294
  %v3296 = vsel %vm3068, %v3218, 0.0
  %v3297 = vadd.f32 %v3295, %v3296
  %v3298 = vsel %vm3068, %v3219, 0.0
  %v3299 = vadd.f32 %v3297, %v3298
  %v3300 = vsel %vm3068, %v3220, 0.0
  %v3301 = vadd.f32 %v3299, %v3300
  %v3302 = vsel %vm3068, %v3221, 0.0
  %v3303 = vadd.f32 %v3301, %v3302
  %v3304 = vsel %vm3068, %v3222, 0.0
  %v3305 = vadd.f32 %v3303, %v3304
  %v3306 = vsel %vm3068, %v3223, 0.0
  %v3307 = vadd.f32 %v3305, %v3306
  %v3308 = vsel %vm3068, %v3224, 0.0
  %v3309 = vadd.f32 %v3307, %v3308
  %v3310 = vsel %vm3068, %v3225, 0.0
  %v3311 = vadd.f32 %v3309, %v3310
  %v3312 = vsel %vm3068, %v3226, 0.0
  %v3313 = vadd.f32 %v3311, %v3312
  %v3314 = vsel %vm3068, %v3227, 0.0
  %v3315 = vadd.f32 %v3313, %v3314
  %v3316 = vsel %vm3068, %v3228, 0.0
  %v3317 = vadd.f32 %v3315, %v3316
  %v3318 = vsel %vm3068, %v3229, 0.0
  %v3319 = vadd.f32 %v3317, %v3318
  %v3320 = vsel %vm3068, %v3230, 0.0
  %v3321 = vadd.f32 %v3319, %v3320
  %v3322 = vsel %vm3068, %v3231, 0.0
  %v3323 = vadd.f32 %v3321, %v3322
  %v3324 = vsel %vm3068, %v3232, 0.0
  %v3325 = vadd.f32 %v3323, %v3324
  %v3326 = vsel %vm3068, %v3233, 0.0
  %v3327 = vadd.f32 %v3325, %v3326
  %v3328 = vsel %vm3068, %v3234, 0.0
  %v3329 = vadd.f32 %v3327, %v3328
  %v3330 = vsel %vm3068, %v3235, 0.0
  %v3331 = vadd.f32 %v3329, %v3330
  %v3332 = vsel %vm3068, %v3236, 0.0
  %v3333 = vadd.f32 %v3331, %v3332
  %v3334 = vsel %vm3068, %v3237, 0.0
  %v3335 = vadd.f32 %v3333, %v3334
  %v3336 = vsel %vm3068, %v3238, 0.0
  %v3337 = vadd.f32 %v3335, %v3336
  %v3338 = vsel %vm3068, %v3239, 0.0
  %v3339 = vadd.f32 %v3337, %v3338
  %v3340 = vsel %vm3068, %v3240, 0.0
  %v3341 = vadd.f32 %v3339, %v3340
  %v3342 = vsel %vm3068, %v3241, 0.0
  %v3343 = vadd.f32 %v3341, %v3342
  %v3344 = vsel %vm3068, %v3242, 0.0
  %v3345 = vadd.f32 %v3343, %v3344
  %v3346 = vsel %vm3068, %v3243, 0.0
  %v3347 = vadd.f32 %v3345, %v3346
  %v3348 = vsel %vm3068, %v3244, 0.0
  %v3349 = vadd.f32 %v3347, %v3348
  %v3350 = vsel %vm3068, %v3245, 0.0
  %v3351 = vadd.f32 %v3349, %v3350
  %v3352 = vsel %vm3068, %v3246, 0.0
  %v3353 = vadd.f32 %v3351, %v3352
  %v3354 = vsel %vm3068, %v3247, 0.0
  %v3355 = vadd.f32 %v3353, %v3354
  %v3356 = vsel %vm3068, %v3248, 0.0
  %v3357 = vadd.f32 %v3355, %v3356
  %v3358 = vsel %vm3068, %v3249, 0.0
  %v3359 = vadd.f32 %v3357, %v3358
  %v3360 = vsel %vm3068, %v3250, 0.0
  %v3361 = vadd.f32 %v3359, %v3360
  %v3362 = vsel %vm3068, %v3251, 0.0
  %v3363 = vadd.f32 %v3361, %v3362
  %v3364 = vsel %vm3068, %v3252, 0.0
  %v3365 = vadd.f32 %v3363, %v3364
  %v3366 = vsel %vm3068, %v3253, 0.0
  %v3367 = vadd.f32 %v3365, %v3366
  %v3368 = vsel %vm3068, %v3254, 0.0
  %v3369 = vadd.f32 %v3367, %v3368
  %v3370 = vsel %vm3068, %v3255, 0.0
  %v3371 = vadd.f32 %v3369, %v3370
  %v3372 = vsel %vm3068, %v3256, 0.0
  %v3373 = vadd.f32 %v3371, %v3372
  %v3374 = vsel %vm3068, %v3257, 0.0
  %v3375 = vadd.f32 %v3373, %v3374
  %v3376 = vsel %vm3068, %v3258, 0.0
  %v3377 = vadd.f32 %v3375, %v3376
  %v3378 = vsel %vm3068, %v3259, 0.0
  %v3379 = vadd.f32 %v3377, %v3378
  %v3380 = vsel %vm3068, %v3260, 0.0
  %v3381 = vadd.f32 %v3379, %v3380
  %v3382 = vsel %vm3068, %v3261, 0.0
  %v3383 = vadd.f32 %v3381, %v3382
  %v3384 = vsel %vm3068, %v3262, 0.0
  %v3385 = vadd.f32 %v3383, %v3384
  %v3386 = vsel %vm3068, %v3263, 0.0
  %v3387 = vadd.f32 %v3385, %v3386
  %v3388 = vsel %vm3068, %v3264, 0.0
  %v3389 = vadd.f32 %v3387, %v3388
  %v3390 = vsel %vm3068, %v3265, 0.0
  %v3391 = vadd.f32 %v3389, %v3390
  %v3392 = vsel %vm3068, %v3266, 0.0
  %v3393 = vadd.f32 %v3391, %v3392
  %v3394 = vrot.slane %v3393, 4
  %v3395 = vadd.f32 %v3393, %v3394
  %v3396 = vrot.slane %v3395, 2
  %v3397 = vadd.f32 %v3395, %v3396
  %v3398 = vrot.slane %v3397, 1
  %v3399 = vadd.f32 %v3397, %v3398
  %v3400 = vmul.f32 %v3399, 0.001953125
  %v3401 = vmul.f32 %v3202, %v3202
  %v3402 = vsub.f32 %v3400, %v3401
  %v3403 = vadd.f32 %v3402, 1e-05
  %v3404 = vrsqrt.pop %v3403
  %v3405 = vmul.f32 %v3066, %v3404
  %v3406 = vmul.f32 %v3202, %v3405
  %v3407 = vsub.f32 %v3067, %v3406
  %v3409 = vlaneseq
  %v3410 = vshrl.u32 %v3409, 7
  %v3411 = vsub.s32 0, %v3410
  %v3412 = vrot.slane %v3405, %v3411
  %v3414 = vmul.f32 %v2812, %v3412
  %v3415 = vmul.f32 %v2815, %v3412
  %v3416 = vmul.f32 %v2820, %v3412
  %v3417 = vmul.f32 %v2823, %v3412
  %v3418 = vmul.f32 %v2828, %v3412
  %v3419 = vmul.f32 %v2831, %v3412
  %v3420 = vmul.f32 %v2836, %v3412
  %v3421 = vmul.f32 %v2839, %v3412
  %v3422 = vmul.f32 %v2844, %v3412
  %v3423 = vmul.f32 %v2847, %v3412
  %v3424 = vmul.f32 %v2852, %v3412
  %v3425 = vmul.f32 %v2855, %v3412
  %v3426 = vmul.f32 %v2860, %v3412
  %v3427 = vmul.f32 %v2863, %v3412
  %v3428 = vmul.f32 %v2868, %v3412
  %v3429 = vmul.f32 %v2871, %v3412
  %v3430 = vmul.f32 %v2876, %v3412
  %v3431 = vmul.f32 %v2879, %v3412
  %v3432 = vmul.f32 %v2884, %v3412
  %v3433 = vmul.f32 %v2887, %v3412
  %v3434 = vmul.f32 %v2892, %v3412
  %v3435 = vmul.f32 %v2895, %v3412
  %v3436 = vmul.f32 %v2900, %v3412
  %v3437 = vmul.f32 %v2903, %v3412
  %v3438 = vmul.f32 %v2908, %v3412
  %v3439 = vmul.f32 %v2911, %v3412
  %v3440 = vmul.f32 %v2916, %v3412
  %v3441 = vmul.f32 %v2919, %v3412
  %v3442 = vmul.f32 %v2924, %v3412
  %v3443 = vmul.f32 %v2927, %v3412
  %v3444 = vmul.f32 %v2932, %v3412
  %v3445 = vmul.f32 %v2935, %v3412
  %v3446 = vmul.f32 %v2940, %v3412
  %v3447 = vmul.f32 %v2943, %v3412
  %v3448 = vmul.f32 %v2948, %v3412
  %v3449 = vmul.f32 %v2951, %v3412
  %v3450 = vmul.f32 %v2956, %v3412
  %v3451 = vmul.f32 %v2959, %v3412
  %v3452 = vmul.f32 %v2964, %v3412
  %v3453 = vmul.f32 %v2967, %v3412
  %v3454 = vmul.f32 %v2972, %v3412
  %v3455 = vmul.f32 %v2975, %v3412
  %v3456 = vmul.f32 %v2980, %v3412
  %v3457 = vmul.f32 %v2983, %v3412
  %v3458 = vmul.f32 %v2988, %v3412
  %v3459 = vmul.f32 %v2991, %v3412
  %v3460 = vmul.f32 %v2996, %v3412
  %v3461 = vmul.f32 %v2999, %v3412
  %v3462 = vmul.f32 %v3004, %v3412
  %v3463 = vmul.f32 %v3007, %v3412
  %v3464 = vmul.f32 %v3012, %v3412
  %v3465 = vmul.f32 %v3015, %v3412
  %v3466 = vmul.f32 %v3020, %v3412
  %v3467 = vmul.f32 %v3023, %v3412
  %v3468 = vmul.f32 %v3028, %v3412
  %v3469 = vmul.f32 %v3031, %v3412
  %v3470 = vmul.f32 %v3036, %v3412
  %v3471 = vmul.f32 %v3039, %v3412
  %v3472 = vmul.f32 %v3044, %v3412
  %v3473 = vmul.f32 %v3047, %v3412
  %v3474 = vmul.f32 %v3052, %v3412
  %v3475 = vmul.f32 %v3055, %v3412
  %v3476 = vmul.f32 %v3060, %v3412
  %v3477 = vmul.f32 %v3063, %v3412
  %v3479 = vlaneseq
  %v3480 = vshrl.u32 %v3479, 7
  %v3481 = vsub.s32 0, %v3480
  %v3482 = vrot.slane %v3407, %v3481
  %v3484 = vadd.f32 %v3414, %v3482
  %v3485 = vadd.f32 %v3415, %v3482
  %v3486 = vadd.f32 %v3416, %v3482
  %v3487 = vadd.f32 %v3417, %v3482
  %v3488 = vadd.f32 %v3418, %v3482
  %v3489 = vadd.f32 %v3419, %v3482
  %v3490 = vadd.f32 %v3420, %v3482
  %v3491 = vadd.f32 %v3421, %v3482
  %v3492 = vadd.f32 %v3422, %v3482
  %v3493 = vadd.f32 %v3423, %v3482
  %v3494 = vadd.f32 %v3424, %v3482
  %v3495 = vadd.f32 %v3425, %v3482
  %v3496 = vadd.f32 %v3426, %v3482
  %v3497 = vadd.f32 %v3427, %v3482
  %v3498 = vadd.f32 %v3428, %v3482
  %v3499 = vadd.f32 %v3429, %v3482
  %v3500 = vadd.f32 %v3430, %v3482
  %v3501 = vadd.f32 %v3431, %v3482
  %v3502 = vadd.f32 %v3432, %v3482
  %v3503 = vadd.f32 %v3433, %v3482
  %v3504 = vadd.f32 %v3434, %v3482
  %v3505 = vadd.f32 %v3435, %v3482
  %v3506 = vadd.f32 %v3436, %v3482
  %v3507 = vadd.f32 %v3437, %v3482
  %v3508 = vadd.f32 %v3438, %v3482
  %v3509 = vadd.f32 %v3439, %v3482
  %v3510 = vadd.f32 %v3440, %v3482
  %v3511 = vadd.f32 %v3441, %v3482
  %v3512 = vadd.f32 %v3442, %v3482
  %v3513 = vadd.f32 %v3443, %v3482
  %v3514 = vadd.f32 %v3444, %v3482
  %v3515 = vadd.f32 %v3445, %v3482
  %v3516 = vadd.f32 %v3446, %v3482
  %v3517 = vadd.f32 %v3447, %v3482
  %v3518 = vadd.f32 %v3448, %v3482
  %v3519 = vadd.f32 %v3449, %v3482
  %v3520 = vadd.f32 %v3450, %v3482
  %v3521 = vadd.f32 %v3451, %v3482
  %v3522 = vadd.f32 %v3452, %v3482
  %v3523 = vadd.f32 %v3453, %v3482
  %v3524 = vadd.f32 %v3454, %v3482
  %v3525 = vadd.f32 %v3455, %v3482
  %v3526 = vadd.f32 %v3456, %v3482
  %v3527 = vadd.f32 %v3457, %v3482
  %v3528 = vadd.f32 %v3458, %v3482
  %v3529 = vadd.f32 %v3459, %v3482
  %v3530 = vadd.f32 %v3460, %v3482
  %v3531 = vadd.f32 %v3461, %v3482
  %v3532 = vadd.f32 %v3462, %v3482
  %v3533 = vadd.f32 %v3463, %v3482
  %v3534 = vadd.f32 %v3464, %v3482
  %v3535 = vadd.f32 %v3465, %v3482
  %v3536 = vadd.f32 %v3466, %v3482
  %v3537 = vadd.f32 %v3467, %v3482
  %v3538 = vadd.f32 %v3468, %v3482
  %v3539 = vadd.f32 %v3469, %v3482
  %v3540 = vadd.f32 %v3470, %v3482
  %v3541 = vadd.f32 %v3471, %v3482
  %v3542 = vadd.f32 %v3472, %v3482
  %v3543 = vadd.f32 %v3473, %v3482
  %v3544 = vadd.f32 %v3474, %v3482
  %v3545 = vadd.f32 %v3475, %v3482
  %v3546 = vadd.f32 %v3476, %v3482
  %v3547 = vadd.f32 %v3477, %v3482
  %vm3548 = vcmp.ge.f32.partialorder %v3484, 0.0
  %vm3549 = vcmp.ge.f32.partialorder %v3485, 0.0
  %vm3550 = vcmp.ge.f32.partialorder %v3486, 0.0
  %vm3551 = vcmp.ge.f32.partialorder %v3487, 0.0
  %vm3552 = vcmp.ge.f32.partialorder %v3488, 0.0
  %vm3553 = vcmp.ge.f32.partialorder %v3489, 0.0
  %vm3554 = vcmp.ge.f32.partialorder %v3490, 0.0
  %vm3555 = vcmp.ge.f32.partialorder %v3491, 0.0
  %vm3556 = vcmp.ge.f32.partialorder %v3492, 0.0
  %vm3557 = vcmp.ge.f32.partialorder %v3493, 0.0
  %vm3558 = vcmp.ge.f32.partialorder %v3494, 0.0
  %vm3559 = vcmp.ge.f32.partialorder %v3495, 0.0
  %vm3560 = vcmp.ge.f32.partialorder %v3496, 0.0
  %vm3561 = vcmp.ge.f32.partialorder %v3497, 0.0
  %vm3562 = vcmp.ge.f32.partialorder %v3498, 0.0
  %vm3563 = vcmp.ge.f32.partialorder %v3499, 0.0
  %vm3564 = vcmp.ge.f32.partialorder %v3500, 0.0
  %vm3565 = vcmp.ge.f32.partialorder %v3501, 0.0
  %vm3566 = vcmp.ge.f32.partialorder %v3502, 0.0
  %vm3567 = vcmp.ge.f32.partialorder %v3503, 0.0
  %vm3568 = vcmp.ge.f32.partialorder %v3504, 0.0
  %vm3569 = vcmp.ge.f32.partialorder %v3505, 0.0
  %vm3570 = vcmp.ge.f32.partialorder %v3506, 0.0
  %vm3571 = vcmp.ge.f32.partialorder %v3507, 0.0
  %vm3572 = vcmp.ge.f32.partialorder %v3508, 0.0
  %vm3573 = vcmp.ge.f32.partialorder %v3509, 0.0
  %vm3574 = vcmp.ge.f32.partialorder %v3510, 0.0
  %vm3575 = vcmp.ge.f32.partialorder %v3511, 0.0
  %vm3576 = vcmp.ge.f32.partialorder %v3512, 0.0
  %vm3577 = vcmp.ge.f32.partialorder %v3513, 0.0
  %vm3578 = vcmp.ge.f32.partialorder %v3514, 0.0
  %vm3579 = vcmp.ge.f32.partialorder %v3515, 0.0
  %vm3580 = vcmp.ge.f32.partialorder %v3516, 0.0
  %vm3581 = vcmp.ge.f32.partialorder %v3517, 0.0
  %vm3582 = vcmp.ge.f32.partialorder %v3518, 0.0
  %vm3583 = vcmp.ge.f32.partialorder %v3519, 0.0
  %vm3584 = vcmp.ge.f32.partialorder %v3520, 0.0
  %vm3585 = vcmp.ge.f32.partialorder %v3521, 0.0
  %vm3586 = vcmp.ge.f32.partialorder %v3522, 0.0
  %vm3587 = vcmp.ge.f32.partialorder %v3523, 0.0
  %vm3588 = vcmp.ge.f32.partialorder %v3524, 0.0
  %vm3589 = vcmp.ge.f32.partialorder %v3525, 0.0
  %vm3590 = vcmp.ge.f32.partialorder %v3526, 0.0
  %vm3591 = vcmp.ge.f32.partialorder %v3527, 0.0
  %vm3592 = vcmp.ge.f32.partialorder %v3528, 0.0
  %vm3593 = vcmp.ge.f32.partialorder %v3529, 0.0
  %vm3594 = vcmp.ge.f32.partialorder %v3530, 0.0
  %vm3595 = vcmp.ge.f32.partialorder %v3531, 0.0
  %vm3596 = vcmp.ge.f32.partialorder %v3532, 0.0
  %vm3597 = vcmp.ge.f32.partialorder %v3533, 0.0
  %vm3598 = vcmp.ge.f32.partialorder %v3534, 0.0
  %vm3599 = vcmp.ge.f32.partialorder %v3535, 0.0
  %vm3600 = vcmp.ge.f32.partialorder %v3536, 0.0
  %vm3601 = vcmp.ge.f32.partialorder %v3537, 0.0
  %vm3602 = vcmp.ge.f32.partialorder %v3538, 0.0
  %vm3603 = vcmp.ge.f32.partialorder %v3539, 0.0
  %vm3604 = vcmp.ge.f32.partialorder %v3540, 0.0
  %vm3605 = vcmp.ge.f32.partialorder %v3541, 0.0
  %vm3606 = vcmp.ge.f32.partialorder %v3542, 0.0
  %vm3607 = vcmp.ge.f32.partialorder %v3543, 0.0
  %vm3608 = vcmp.ge.f32.partialorder %v3544, 0.0
  %vm3609 = vcmp.ge.f32.partialorder %v3545, 0.0
  %vm3610 = vcmp.ge.f32.partialorder %v3546, 0.0
  %vm3611 = vcmp.ge.f32.partialorder %v3547, 0.0
  %v3612 = vmul.f32 %v3484, 0.2
  %v3613 = vmul.f32 %v3485, 0.2
  %v3614 = vmul.f32 %v3486, 0.2
  %v3615 = vmul.f32 %v3487, 0.2
  %v3616 = vmul.f32 %v3488, 0.2
  %v3617 = vmul.f32 %v3489, 0.2
  %v3618 = vmul.f32 %v3490, 0.2
  %v3619 = vmul.f32 %v3491, 0.2
  %v3620 = vmul.f32 %v3492, 0.2
  %v3621 = vmul.f32 %v3493, 0.2
  %v3622 = vmul.f32 %v3494, 0.2
  %v3623 = vmul.f32 %v3495, 0.2
  %v3624 = vmul.f32 %v3496, 0.2
  %v3625 = vmul.f32 %v3497, 0.2
  %v3626 = vmul.f32 %v3498, 0.2
  %v3627 = vmul.f32 %v3499, 0.2
  %v3628 = vmul.f32 %v3500, 0.2
  %v3629 = vmul.f32 %v3501, 0.2
  %v3630 = vmul.f32 %v3502, 0.2
  %v3631 = vmul.f32 %v3503, 0.2
  %v3632 = vmul.f32 %v3504, 0.2
  %v3633 = vmul.f32 %v3505, 0.2
  %v3634 = vmul.f32 %v3506, 0.2
  %v3635 = vmul.f32 %v3507, 0.2
  %v3636 = vmul.f32 %v3508, 0.2
  %v3637 = vmul.f32 %v3509, 0.2
  %v3638 = vmul.f32 %v3510, 0.2
  %v3639 = vmul.f32 %v3511, 0.2
  %v3640 = vmul.f32 %v3512, 0.2
  %v3641 = vmul.f32 %v3513, 0.2
  %v3642 = vmul.f32 %v3514, 0.2
  %v3643 = vmul.f32 %v3515, 0.2
  %v3644 = vmul.f32 %v3516, 0.2
  %v3645 = vmul.f32 %v3517, 0.2
  %v3646 = vmul.f32 %v3518, 0.2
  %v3647 = vmul.f32 %v3519, 0.2
  %v3648 = vmul.f32 %v3520, 0.2
  %v3649 = vmul.f32 %v3521, 0.2
  %v3650 = vmul.f32 %v3522, 0.2
  %v3651 = vmul.f32 %v3523, 0.2
  %v3652 = vmul.f32 %v3524, 0.2
  %v3653 = vmul.f32 %v3525, 0.2
  %v3654 = vmul.f32 %v3526, 0.2
  %v3655 = vmul.f32 %v3527, 0.2
  %v3656 = vmul.f32 %v3528, 0.2
  %v3657 = vmul.f32 %v3529, 0.2
  %v3658 = vmul.f32 %v3530, 0.2
  %v3659 = vmul.f32 %v3531, 0.2
  %v3660 = vmul.f32 %v3532, 0.2
  %v3661 = vmul.f32 %v3533, 0.2
  %v3662 = vmul.f32 %v3534, 0.2
  %v3663 = vmul.f32 %v3535, 0.2
  %v3664 = vmul.f32 %v3536, 0.2
  %v3665 = vmul.f32 %v3537, 0.2
  %v3666 = vmul.f32 %v3538, 0.2
  %v3667 = vmul.f32 %v3539, 0.2
  %v3668 = vmul.f32 %v3540, 0.2
  %v3669 = vmul.f32 %v3541, 0.2
  %v3670 = vmul.f32 %v3542, 0.2
  %v3671 = vmul.f32 %v3543, 0.2
  %v3672 = vmul.f32 %v3544, 0.2
  %v3673 = vmul.f32 %v3545, 0.2
  %v3674 = vmul.f32 %v3546, 0.2
  %v3675 = vmul.f32 %v3547, 0.2
  %v3676 = vsel %vm3548, %v3484, %v3612
  %v3677 = vsel %vm3549, %v3485, %v3613
  %v3678 = vsel %vm3550, %v3486, %v3614
  %v3679 = vsel %vm3551, %v3487, %v3615
  %v3680 = vsel %vm3552, %v3488, %v3616
  %v3681 = vsel %vm3553, %v3489, %v3617
  %v3682 = vsel %vm3554, %v3490, %v3618
  %v3683 = vsel %vm3555, %v3491, %v3619
  %v3684 = vsel %vm3556, %v3492, %v3620
  %v3685 = vsel %vm3557, %v3493, %v3621
  %v3686 = vsel %vm3558, %v3494, %v3622
  %v3687 = vsel %vm3559, %v3495, %v3623
  %v3688 = vsel %vm3560, %v3496, %v3624
  %v3689 = vsel %vm3561, %v3497, %v3625
  %v3690 = vsel %vm3562, %v3498, %v3626
  %v3691 = vsel %vm3563, %v3499, %v3627
  %v3692 = vsel %vm3564, %v3500, %v3628
  %v3693 = vsel %vm3565, %v3501, %v3629
  %v3694 = vsel %vm3566, %v3502, %v3630
  %v3695 = vsel %vm3567, %v3503, %v3631
  %v3696 = vsel %vm3568, %v3504, %v3632
  %v3697 = vsel %vm3569, %v3505, %v3633
  %v3698 = vsel %vm3570, %v3506, %v3634
  %v3699 = vsel %vm3571, %v3507, %v3635
  %v3700 = vsel %vm3572, %v3508, %v3636
  %v3701 = vsel %vm3573, %v3509, %v3637
  %v3702 = vsel %vm3574, %v3510, %v3638
  %v3703 = vsel %vm3575, %v3511, %v3639
  %v3704 = vsel %vm3576, %v3512, %v3640
  %v3705 = vsel %vm3577, %v3513, %v3641
  %v3706 = vsel %vm3578, %v3514, %v3642
  %v3707 = vsel %vm3579, %v3515, %v3643
  %v3708 = vsel %vm3580, %v3516, %v3644
  %v3709 = vsel %vm3581, %v3517, %v3645
  %v3710 = vsel %vm3582, %v3518, %v3646
  %v3711 = vsel %vm3583, %v3519, %v3647
  %v3712 = vsel %vm3584, %v3520, %v3648
  %v3713 = vsel %vm3585, %v3521, %v3649
  %v3714 = vsel %vm3586, %v3522, %v3650
  %v3715 = vsel %vm3587, %v3523, %v3651
  %v3716 = vsel %vm3588, %v3524, %v3652
  %v3717 = vsel %vm3589, %v3525, %v3653
  %v3718 = vsel %vm3590, %v3526, %v3654
  %v3719 = vsel %vm3591, %v3527, %v3655
  %v3720 = vsel %vm3592, %v3528, %v3656
  %v3721 = vsel %vm3593, %v3529, %v3657
  %v3722 = vsel %vm3594, %v3530, %v3658
  %v3723 = vsel %vm3595, %v3531, %v3659
  %v3724 = vsel %vm3596, %v3532, %v3660
  %v3725 = vsel %vm3597, %v3533, %v3661
  %v3726 = vsel %vm3598, %v3534, %v3662
  %v3727 = vsel %vm3599, %v3535, %v3663
  %v3728 = vsel %vm3600, %v3536, %v3664
  %v3729 = vsel %vm3601, %v3537, %v3665
  %v3730 = vsel %vm3602, %v3538, %v3666
  %v3731 = vsel %vm3603, %v3539, %v3667
  %v3732 = vsel %vm3604, %v3540, %v3668
  %v3733 = vsel %vm3605, %v3541, %v3669
  %v3734 = vsel %vm3606, %v3542, %v3670
  %v3735 = vsel %vm3607, %v3543, %v3671
  %v3736 = vsel %vm3608, %v3544, %v3672
  %v3737 = vsel %vm3609, %v3545, %v3673
  %v3738 = vsel %vm3610, %v3546, %v3674
  %v3739 = vsel %vm3611, %v3547, %v3675
  %v3740 = vpack.c.bf16 %v3677, %v3676
  %v3741 = vpack.c.bf16 %v3679, %v3678
  %v3742 = vpack.c.bf16 %v3681, %v3680
  %v3743 = vpack.c.bf16 %v3683, %v3682
  %v3744 = vpack.c.bf16 %v3685, %v3684
  %v3745 = vpack.c.bf16 %v3687, %v3686
  %v3746 = vpack.c.bf16 %v3689, %v3688
  %v3747 = vpack.c.bf16 %v3691, %v3690
  %v3748 = vpack.c.bf16 %v3693, %v3692
  %v3749 = vpack.c.bf16 %v3695, %v3694
  %v3750 = vpack.c.bf16 %v3697, %v3696
  %v3751 = vpack.c.bf16 %v3699, %v3698
  %v3752 = vpack.c.bf16 %v3701, %v3700
  %v3753 = vpack.c.bf16 %v3703, %v3702
  %v3754 = vpack.c.bf16 %v3705, %v3704
  %v3755 = vpack.c.bf16 %v3707, %v3706
  %v3756 = vpack.c.bf16 %v3709, %v3708
  %v3757 = vpack.c.bf16 %v3711, %v3710
  %v3758 = vpack.c.bf16 %v3713, %v3712
  %v3759 = vpack.c.bf16 %v3715, %v3714
  %v3760 = vpack.c.bf16 %v3717, %v3716
  %v3761 = vpack.c.bf16 %v3719, %v3718
  %v3762 = vpack.c.bf16 %v3721, %v3720
  %v3763 = vpack.c.bf16 %v3723, %v3722
  %v3764 = vpack.c.bf16 %v3725, %v3724
  %v3765 = vpack.c.bf16 %v3727, %v3726
  %v3766 = vpack.c.bf16 %v3729, %v3728
  %v3767 = vpack.c.bf16 %v3731, %v3730
  %v3768 = vpack.c.bf16 %v3733, %v3732
  %v3769 = vpack.c.bf16 %v3735, %v3734
  %v3770 = vpack.c.bf16 %v3737, %v3736
  %v3771 = vpack.c.bf16 %v3739, %v3738
  %v3804 = vunpack.c.l.b16 %v3740
  %v3805 = vunpack.c.h.b16 %v3740
  %v3806 = vunpack.c.l.b16 %v3741
  %v3807 = vunpack.c.h.b16 %v3741
  %v3808 = vunpack.c.l.b16 %v3742
  %v3809 = vunpack.c.h.b16 %v3742
  %v3810 = vunpack.c.l.b16 %v3743
  %v3811 = vunpack.c.h.b16 %v3743
  %v3812 = vunpack.c.l.b16 %v3744
  %v3813 = vunpack.c.h.b16 %v3744
  %v3814 = vunpack.c.l.b16 %v3745
  %v3815 = vunpack.c.h.b16 %v3745
  %v3816 = vunpack.c.l.b16 %v3746
  %v3817 = vunpack.c.h.b16 %v3746
  %v3818 = vunpack.c.l.b16 %v3747
  %v3819 = vunpack.c.h.b16 %v3747
  %v3820 = vunpack.c.l.b16 %v3748
  %v3821 = vunpack.c.h.b16 %v3748
  %v3822 = vunpack.c.l.b16 %v3749
  %v3823 = vunpack.c.h.b16 %v3749
  %v3824 = vunpack.c.l.b16 %v3750
  %v3825 = vunpack.c.h.b16 %v3750
  %v3826 = vunpack.c.l.b16 %v3751
  %v3827 = vunpack.c.h.b16 %v3751
  %v3828 = vunpack.c.l.b16 %v3752
  %v3829 = vunpack.c.h.b16 %v3752
  %v3830 = vunpack.c.l.b16 %v3753
  %v3831 = vunpack.c.h.b16 %v3753
  %v3832 = vunpack.c.l.b16 %v3754
  %v3833 = vunpack.c.h.b16 %v3754
  %v3834 = vunpack.c.l.b16 %v3755
  %v3835 = vunpack.c.h.b16 %v3755
  %v3836 = vunpack.c.l.b16 %v3756
  %v3837 = vunpack.c.h.b16 %v3756
  %v3838 = vunpack.c.l.b16 %v3757
  %v3839 = vunpack.c.h.b16 %v3757
  %v3840 = vunpack.c.l.b16 %v3758
  %v3841 = vunpack.c.h.b16 %v3758
  %v3842 = vunpack.c.l.b16 %v3759
  %v3843 = vunpack.c.h.b16 %v3759
  %v3844 = vunpack.c.l.b16 %v3760
  %v3845 = vunpack.c.h.b16 %v3760
  %v3846 = vunpack.c.l.b16 %v3761
  %v3847 = vunpack.c.h.b16 %v3761
  %v3848 = vunpack.c.l.b16 %v3762
  %v3849 = vunpack.c.h.b16 %v3762
  %v3850 = vunpack.c.l.b16 %v3763
  %v3851 = vunpack.c.h.b16 %v3763
  %v3852 = vunpack.c.l.b16 %v3764
  %v3853 = vunpack.c.h.b16 %v3764
  %v3854 = vunpack.c.l.b16 %v3765
  %v3855 = vunpack.c.h.b16 %v3765
  %v3856 = vunpack.c.l.b16 %v3766
  %v3857 = vunpack.c.h.b16 %v3766
  %v3858 = vunpack.c.l.b16 %v3767
  %v3859 = vunpack.c.h.b16 %v3767
  %v3860 = vunpack.c.l.b16 %v3768
  %v3861 = vunpack.c.h.b16 %v3768
  %v3862 = vunpack.c.l.b16 %v3769
  %v3863 = vunpack.c.h.b16 %v3769
  %v3864 = vunpack.c.l.b16 %v3770
  %v3865 = vunpack.c.h.b16 %v3770
  %v3866 = vunpack.c.l.b16 %v3771
  %v3867 = vunpack.c.h.b16 %v3771
  %v3868 = vpack.c.b16 %v3804, %v3804
  %v3869 = vpack.c.b16 %v3805, %v3805
  %v3870 = vpack.c.b16 %v3806, %v3806
  %v3871 = vpack.c.b16 %v3807, %v3807
  %v3872 = vpack.c.b16 %v3808, %v3808
  %v3873 = vpack.c.b16 %v3809, %v3809
  %v3874 = vpack.c.b16 %v3810, %v3810
  %v3875 = vpack.c.b16 %v3811, %v3811
  %v3876 = vpack.c.b16 %v3812, %v3812
  %v3877 = vpack.c.b16 %v3813, %v3813
  %v3878 = vpack.c.b16 %v3814, %v3814
  %v3879 = vpack.c.b16 %v3815, %v3815
  %v3880 = vpack.c.b16 %v3816, %v3816
  %v3881 = vpack.c.b16 %v3817, %v3817
  %v3882 = vpack.c.b16 %v3818, %v3818
  %v3883 = vpack.c.b16 %v3819, %v3819
  %v3884 = vpack.c.b16 %v3820, %v3820
  %v3885 = vpack.c.b16 %v3821, %v3821
  %v3886 = vpack.c.b16 %v3822, %v3822
  %v3887 = vpack.c.b16 %v3823, %v3823
  %v3888 = vpack.c.b16 %v3824, %v3824
  %v3889 = vpack.c.b16 %v3825, %v3825
  %v3890 = vpack.c.b16 %v3826, %v3826
  %v3891 = vpack.c.b16 %v3827, %v3827
  %v3892 = vpack.c.b16 %v3828, %v3828
  %v3893 = vpack.c.b16 %v3829, %v3829
  %v3894 = vpack.c.b16 %v3830, %v3830
  %v3895 = vpack.c.b16 %v3831, %v3831
  %v3896 = vpack.c.b16 %v3832, %v3832
  %v3897 = vpack.c.b16 %v3833, %v3833
  %v3898 = vpack.c.b16 %v3834, %v3834
  %v3899 = vpack.c.b16 %v3835, %v3835
  %v3900 = vpack.c.b16 %v3836, %v3836
  %v3901 = vpack.c.b16 %v3837, %v3837
  %v3902 = vpack.c.b16 %v3838, %v3838
  %v3903 = vpack.c.b16 %v3839, %v3839
  %v3904 = vpack.c.b16 %v3840, %v3840
  %v3905 = vpack.c.b16 %v3841, %v3841
  %v3906 = vpack.c.b16 %v3842, %v3842
  %v3907 = vpack.c.b16 %v3843, %v3843
  %v3908 = vpack.c.b16 %v3844, %v3844
  %v3909 = vpack.c.b16 %v3845, %v3845
  %v3910 = vpack.c.b16 %v3846, %v3846
  %v3911 = vpack.c.b16 %v3847, %v3847
  %v3912 = vpack.c.b16 %v3848, %v3848
  %v3913 = vpack.c.b16 %v3849, %v3849
  %v3914 = vpack.c.b16 %v3850, %v3850
  %v3915 = vpack.c.b16 %v3851, %v3851
  %v3916 = vpack.c.b16 %v3852, %v3852
  %v3917 = vpack.c.b16 %v3853, %v3853
  %v3918 = vpack.c.b16 %v3854, %v3854
  %v3919 = vpack.c.b16 %v3855, %v3855
  %v3920 = vpack.c.b16 %v3856, %v3856
  %v3921 = vpack.c.b16 %v3857, %v3857
  %v3922 = vpack.c.b16 %v3858, %v3858
  %v3923 = vpack.c.b16 %v3859, %v3859
  %v3924 = vpack.c.b16 %v3860, %v3860
  %v3925 = vpack.c.b16 %v3861, %v3861
  %v3926 = vpack.c.b16 %v3862, %v3862
  %v3927 = vpack.c.b16 %v3863, %v3863
  %v3928 = vpack.c.b16 %v3864, %v3864
  %v3929 = vpack.c.b16 %v3865, %v3865
  %v3930 = vpack.c.b16 %v3866, %v3866
  %v3931 = vpack.c.b16 %v3867, %v3867
  %vm3996 = vcmask 125952
  %3997 = vst.msk [vmem:[%s4] sm:$0xf] %vm3996, %v3868
  %3998 = vst.msk [vmem:[%s4 + $0x4] sm:$0xf] %vm3996, %v3869
  %3999 = vst.msk [vmem:[%s4 + $0x8] sm:$0xf] %vm3996, %v3870
  %4000 = vst.msk [vmem:[%s4 + $0xc] sm:$0xf] %vm3996, %v3871
  %4001 = vst.msk [vmem:[%s4 + $0x10] sm:$0xf] %vm3996, %v3872
  %4002 = vst.msk [vmem:[%s4 + $0x14] sm:$0xf] %vm3996, %v3873
  %4003 = vst.msk [vmem:[%s4 + $0x18] sm:$0xf] %vm3996, %v3874
  %4004 = vst.msk [vmem:[%s4 + $0x1c] sm:$0xf] %vm3996, %v3875
  %4005 = vst.msk [vmem:[%s4 + $0x20] sm:$0xf] %vm3996, %v3876
  %4006 = vst.msk [vmem:[%s4 + $0x24] sm:$0xf] %vm3996, %v3877
  %4007 = vst.msk [vmem:[%s4 + $0x28] sm:$0xf] %vm3996, %v3878
  %4008 = vst.msk [vmem:[%s4 + $0x2c] sm:$0xf] %vm3996, %v3879
  %4009 = vst.msk [vmem:[%s4 + $0x30] sm:$0xf] %vm3996, %v3880
  %4010 = vst.msk [vmem:[%s4 + $0x34] sm:$0xf] %vm3996, %v3881
  %4011 = vst.msk [vmem:[%s4 + $0x38] sm:$0xf] %vm3996, %v3882
  %4012 = vst.msk [vmem:[%s4 + $0x3c] sm:$0xf] %vm3996, %v3883
  %4013 = vst.msk [vmem:[%s4 + $0x40] sm:$0xf] %vm3996, %v3884
  %4014 = vst.msk [vmem:[%s4 + $0x44] sm:$0xf] %vm3996, %v3885
  %4015 = vst.msk [vmem:[%s4 + $0x48] sm:$0xf] %vm3996, %v3886
  %4016 = vst.msk [vmem:[%s4 + $0x4c] sm:$0xf] %vm3996, %v3887
  %4017 = vst.msk [vmem:[%s4 + $0x50] sm:$0xf] %vm3996, %v3888
  %4018 = vst.msk [vmem:[%s4 + $0x54] sm:$0xf] %vm3996, %v3889
  %4019 = vst.msk [vmem:[%s4 + $0x58] sm:$0xf] %vm3996, %v3890
  %4020 = vst.msk [vmem:[%s4 + $0x5c] sm:$0xf] %vm3996, %v3891
  %4021 = vst.msk [vmem:[%s4 + $0x60] sm:$0xf] %vm3996, %v3892
  %4022 = vst.msk [vmem:[%s4 + $0x64] sm:$0xf] %vm3996, %v3893
  %4023 = vst.msk [vmem:[%s4 + $0x68] sm:$0xf] %vm3996, %v3894
  %4024 = vst.msk [vmem:[%s4 + $0x6c] sm:$0xf] %vm3996, %v3895
  %4025 = vst.msk [vmem:[%s4 + $0x70] sm:$0xf] %vm3996, %v3896
  %4026 = vst.msk [vmem:[%s4 + $0x74] sm:$0xf] %vm3996, %v3897
  %4027 = vst.msk [vmem:[%s4 + $0x78] sm:$0xf] %vm3996, %v3898
  %4028 = vst.msk [vmem:[%s4 + $0x7c] sm:$0xf] %vm3996, %v3899
  %4029 = vst.msk [vmem:[%s4 + $0x80] sm:$0xf] %vm3996, %v3900
  %4030 = vst.msk [vmem:[%s4 + $0x84] sm:$0xf] %vm3996, %v3901
  %4031 = vst.msk [vmem:[%s4 + $0x88] sm:$0xf] %vm3996, %v3902
  %4032 = vst.msk [vmem:[%s4 + $0x8c] sm:$0xf] %vm3996, %v3903
  %4033 = vst.msk [vmem:[%s4 + $0x90] sm:$0xf] %vm3996, %v3904
  %4034 = vst.msk [vmem:[%s4 + $0x94] sm:$0xf] %vm3996, %v3905
  %4035 = vst.msk [vmem:[%s4 + $0x98] sm:$0xf] %vm3996, %v3906
  %4036 = vst.msk [vmem:[%s4 + $0x9c] sm:$0xf] %vm3996, %v3907
  %4037 = vst.msk [vmem:[%s4 + $0xa0] sm:$0xf] %vm3996, %v3908
  %4038 = vst.msk [vmem:[%s4 + $0xa4] sm:$0xf] %vm3996, %v3909
  %4039 = vst.msk [vmem:[%s4 + $0xa8] sm:$0xf] %vm3996, %v3910
  %4040 = vst.msk [vmem:[%s4 + $0xac] sm:$0xf] %vm3996, %v3911
  %4041 = vst.msk [vmem:[%s4 + $0xb0] sm:$0xf] %vm3996, %v3912
  %4042 = vst.msk [vmem:[%s4 + $0xb4] sm:$0xf] %vm3996, %v3913
  %4043 = vst.msk [vmem:[%s4 + $0xb8] sm:$0xf] %vm3996, %v3914
  %4044 = vst.msk [vmem:[%s4 + $0xbc] sm:$0xf] %vm3996, %v3915
  %4045 = vst.msk [vmem:[%s4 + $0xc0] sm:$0xf] %vm3996, %v3916
  %4046 = vst.msk [vmem:[%s4 + $0xc4] sm:$0xf] %vm3996, %v3917
  %4047 = vst.msk [vmem:[%s4 + $0xc8] sm:$0xf] %vm3996, %v3918
  %4048 = vst.msk [vmem:[%s4 + $0xcc] sm:$0xf] %vm3996, %v3919
  %4049 = vst.msk [vmem:[%s4 + $0xd0] sm:$0xf] %vm3996, %v3920
  %4050 = vst.msk [vmem:[%s4 + $0xd4] sm:$0xf] %vm3996, %v3921
  %4051 = vst.msk [vmem:[%s4 + $0xd8] sm:$0xf] %vm3996, %v3922
  %4052 = vst.msk [vmem:[%s4 + $0xdc] sm:$0xf] %vm3996, %v3923
  %4053 = vst.msk [vmem:[%s4 + $0xe0] sm:$0xf] %vm3996, %v3924
  %4054 = vst.msk [vmem:[%s4 + $0xe4] sm:$0xf] %vm3996, %v3925
  %4055 = vst.msk [vmem:[%s4 + $0xe8] sm:$0xf] %vm3996, %v3926
  %4056 = vst.msk [vmem:[%s4 + $0xec] sm:$0xf] %vm3996, %v3927
  %4057 = vst.msk [vmem:[%s4 + $0xf0] sm:$0xf] %vm3996, %v3928
  %4058 = vst.msk [vmem:[%s4 + $0xf4] sm:$0xf] %vm3996, %v3929
  %4059 = vst.msk [vmem:[%s4 + $0xf8] sm:$0xf] %vm3996, %v3930
  %4060 = vst.msk [vmem:[%s4 + $0xfc] sm:$0xf] %vm3996, %v3931
  // Predicated region
  $region18: #{discriminator_forward.5} parent=0 // pred_check
    _
  $region19: #{discriminator_forward.5} parent=0 // pred_check_branch
    %4062 = sbr.rel (0) target = $region21
  $region20: #{discriminator_forward.5} parent=0 // pred_region
    _
  $region21: #{discriminator_forward.5} parent=0 // pred_fallthru
    _
  // Predicated region
  $region22: #{discriminator_forward.5} parent=0 // pred_check
    _
  $region23: #{discriminator_forward.5} parent=0 // pred_check_branch
    %4064 = sbr.rel (0) target = $region25
  $region24: #{discriminator_forward.5} parent=0 // pred_region
    _
  $region25: #{discriminator_forward.5} parent=0 // pred_fallthru
    _

// kernel: discriminator_forward.7
$region0: #{discriminator_forward.7}
  #allocation0 [shape = 'u32[]', space=smem, size = 0x4, offset = 0x4, fixed_abs, tag = 'smem constant byte address 0x4 - core index']
  #allocation1 [shape = 'u32[144,128]{1,0:T(1,128)}', space=vmem, size = 0x12000, scoped, tag = 'internal scratch']
  %s0 = inlined_call_operand.vmem [shape: bf16[32,512], index: 0, kind: input, shape index: {}]
  %s1 = inlined_call_operand.vmem [shape: bf16[512,64], index: 1, kind: input, shape index: {}]
  %s2 = inlined_call_operand.vmem [shape: f32[1,64], index: 2, kind: input, shape index: {}]
  %s3 = inlined_call_operand.vmem [shape: f32[1,64], index: 3, kind: input, shape index: {}]
  %s4 = inlined_call_operand.vmem [shape: f32[16,64], index: 4, kind: input, shape index: {}]
  %s5 = inlined_call_operand.vmem [shape: f32[2,1], index: 5, kind: output, shape index: {}]
  %s6 = sld [smem:[#allocation0]]
  $region30: #{discriminator_forward.7} parent=0
    _
  %s8 = ssub.s32 1, %s6
  %s9 = scalar_select 0, %s8, %s6
  // Predicated region
  $region2: #{discriminator_forward.7} parent=0 // pred_check
    _
  $region3: #{discriminator_forward.7} parent=0 // pred_check_branch
    %11 = sbr.rel (0) target = $region5
  $region4: #{discriminator_forward.7} parent=0 // pred_region
    _
  $region5: #{discriminator_forward.7} parent=0 // pred_fallthru
    _
  // Predicated region
  $region6: #{discriminator_forward.7} parent=0 // pred_check
    _
  $region7: #{discriminator_forward.7} parent=0 // pred_check_branch
    %13 = sbr.rel (0) target = $region9
  $region8: #{discriminator_forward.7} parent=0 // pred_region
    _
  $region9: #{discriminator_forward.7} parent=0 // pred_fallthru
    _
  // Predicated region
  $region10: #{discriminator_forward.7} parent=0 // pred_check
    _
  $region11: #{discriminator_forward.7} parent=0 // pred_check_branch
    %15 = sbr.rel (0) target = $region13
  $region12: #{discriminator_forward.7} parent=0 // pred_region
    _
  $region13: #{discriminator_forward.7} parent=0 // pred_fallthru
    _
  // Predicated region
  $region14: #{discriminator_forward.7} parent=0 // pred_check
    _
  $region15: #{discriminator_forward.7} parent=0 // pred_check_branch
    %17 = sbr.rel (0) target = $region17
  $region16: #{discriminator_forward.7} parent=0 // pred_region
    _
  $region17: #{discriminator_forward.7} parent=0 // pred_fallthru
    _
  // Predicated region
  $region18: #{discriminator_forward.7} parent=0 // pred_check
    _
  $region19: #{discriminator_forward.7} parent=0 // pred_check_branch
    %19 = sbr.rel (0) target = $region21
  $region20: #{discriminator_forward.7} parent=0 // pred_region
    _
  $region21: #{discriminator_forward.7} parent=0 // pred_fallthru
    _
  %v21 = vld [vmem:[%s0] sm:$0xff]
  %v22 = vld [vmem:[%s0 + $0x8] sm:$0xff]
  %v23 = vld [vmem:[%s0 + $0x10] sm:$0xff]
  %v24 = vld [vmem:[%s0 + $0x18] sm:$0xff]
  %v25 = vld [vmem:[%s0 + $0x20] sm:$0xff]
  %v26 = vld [vmem:[%s0 + $0x28] sm:$0xff]
  %v27 = vld [vmem:[%s0 + $0x30] sm:$0xff]
  %v28 = vld [vmem:[%s0 + $0x38] sm:$0xff]
  %v29 = vld [vmem:[%s1] sm:$0xf]
  %v30 = vld [vmem:[%s1 + $0x4] sm:$0xf]
  %v31 = vld [vmem:[%s1 + $0x8] sm:$0xf]
  %v32 = vld [vmem:[%s1 + $0xc] sm:$0xf]
  %v33 = vld [vmem:[%s1 + $0x10] sm:$0xf]
  %v34 = vld [vmem:[%s1 + $0x14] sm:$0xf]
  %v35 = vld [vmem:[%s1 + $0x18] sm:$0xf]
  %v36 = vld [vmem:[%s1 + $0x1c] sm:$0xf]
  %v37 = vld [vmem:[%s1 + $0x20] sm:$0xf]
  %v38 = vld [vmem:[%s1 + $0x24] sm:$0xf]
  %v39 = vld [vmem:[%s1 + $0x28] sm:$0xf]
  %v40 = vld [vmem:[%s1 + $0x2c] sm:$0xf]
  %v41 = vld [vmem:[%s1 + $0x30] sm:$0xf]
  %v42 = vld [vmem:[%s1 + $0x34] sm:$0xf]
  %v43 = vld [vmem:[%s1 + $0x38] sm:$0xf]
  %v44 = vld [vmem:[%s1 + $0x3c] sm:$0xf]
  %v45 = vld [vmem:[%s1 + $0x40] sm:$0xf]
  %v46 = vld [vmem:[%s1 + $0x44] sm:$0xf]
  %v47 = vld [vmem:[%s1 + $0x48] sm:$0xf]
  %v48 = vld [vmem:[%s1 + $0x4c] sm:$0xf]
  %v49 = vld [vmem:[%s1 + $0x50] sm:$0xf]
  %v50 = vld [vmem:[%s1 + $0x54] sm:$0xf]
  %v51 = vld [vmem:[%s1 + $0x58] sm:$0xf]
  %v52 = vld [vmem:[%s1 + $0x5c] sm:$0xf]
  %v53 = vld [vmem:[%s1 + $0x60] sm:$0xf]
  %v54 = vld [vmem:[%s1 + $0x64] sm:$0xf]
  %v55 = vld [vmem:[%s1 + $0x68] sm:$0xf]
  %v56 = vld [vmem:[%s1 + $0x6c] sm:$0xf]
  %v57 = vld [vmem:[%s1 + $0x70] sm:$0xf]
  %v58 = vld [vmem:[%s1 + $0x74] sm:$0xf]
  %v59 = vld [vmem:[%s1 + $0x78] sm:$0xf]
  %v60 = vld [vmem:[%s1 + $0x7c] sm:$0xf]
  %v61 = vld [vmem:[%s1 + $0x80] sm:$0xf]
  %v62 = vld [vmem:[%s1 + $0x84] sm:$0xf]
  %v63 = vld [vmem:[%s1 + $0x88] sm:$0xf]
  %v64 = vld [vmem:[%s1 + $0x8c] sm:$0xf]
  %v65 = vld [vmem:[%s1 + $0x90] sm:$0xf]
  %v66 = vld [vmem:[%s1 + $0x94] sm:$0xf]
  %v67 = vld [vmem:[%s1 + $0x98] sm:$0xf]
  %v68 = vld [vmem:[%s1 + $0x9c] sm:$0xf]
  %v69 = vld [vmem:[%s1 + $0xa0] sm:$0xf]
  %v70 = vld [vmem:[%s1 + $0xa4] sm:$0xf]
  %v71 = vld [vmem:[%s1 + $0xa8] sm:$0xf]
  %v72 = vld [vmem:[%s1 + $0xac] sm:$0xf]
  %v73 = vld [vmem:[%s1 + $0xb0] sm:$0xf]
  %v74 = vld [vmem:[%s1 + $0xb4] sm:$0xf]
  %v75 = vld [vmem:[%s1 + $0xb8] sm:$0xf]
  %v76 = vld [vmem:[%s1 + $0xbc] sm:$0xf]
  %v77 = vld [vmem:[%s1 + $0xc0] sm:$0xf]
  %v78 = vld [vmem:[%s1 + $0xc4] sm:$0xf]
  %v79 = vld [vmem:[%s1 + $0xc8] sm:$0xf]
  %v80 = vld [vmem:[%s1 + $0xcc] sm:$0xf]
  %v81 = vld [vmem:[%s1 + $0xd0] sm:$0xf]
  %v82 = vld [vmem:[%s1 + $0xd4] sm:$0xf]
  %v83 = vld [vmem:[%s1 + $0xd8] sm:$0xf]
  %v84 = vld [vmem:[%s1 + $0xdc] sm:$0xf]
  %v85 = vld [vmem:[%s1 + $0xe0] sm:$0xf]
  %v86 = vld [vmem:[%s1 + $0xe4] sm:$0xf]
  %v87 = vld [vmem:[%s1 + $0xe8] sm:$0xf]
  %v88 = vld [vmem:[%s1 + $0xec] sm:$0xf]
  %v89 = vld [vmem:[%s1 + $0xf0] sm:$0xf]
  %v90 = vld [vmem:[%s1 + $0xf4] sm:$0xf]
  %v91 = vld [vmem:[%s1 + $0xf8] sm:$0xf]
  %v92 = vld [vmem:[%s1 + $0xfc] sm:$0xf]
  %v101 = vunpack.c.l.b16 %v21
  %v102 = vunpack.c.h.b16 %v21
  %v103 = vunpack.c.l.b16 %v22
  %v104 = vunpack.c.h.b16 %v22
  %v105 = vunpack.c.l.b16 %v23
  %v106 = vunpack.c.h.b16 %v23
  %v107 = vunpack.c.l.b16 %v24
  %v108 = vunpack.c.h.b16 %v24
  %v109 = vunpack.c.l.b16 %v25
  %v110 = vunpack.c.h.b16 %v25
  %v111 = vunpack.c.l.b16 %v26
  %v112 = vunpack.c.h.b16 %v26
  %v113 = vunpack.c.l.b16 %v27
  %v114 = vunpack.c.h.b16 %v27
  %v115 = vunpack.c.l.b16 %v28
  %v116 = vunpack.c.h.b16 %v28
  %v117 = vpack.c.b16 %v105, %v101
  %v118 = vpack.c.b16 %v106, %v102
  %v119 = vpack.c.b16 %v107, %v103
  %v120 = vpack.c.b16 %v108, %v104
  %v121 = vpack.c.b16 %v113, %v109
  %v122 = vpack.c.b16 %v114, %v110
  %v123 = vpack.c.b16 %v115, %v111
  %v124 = vpack.c.b16 %v116, %v112
  %v197 = vunpack.c.l.b16 %v29
  %v198 = vunpack.c.l.b16 %v30
  %v199 = vunpack.c.l.b16 %v31
  %v200 = vunpack.c.l.b16 %v32
  %v201 = vunpack.c.l.b16 %v33
  %v202 = vunpack.c.l.b16 %v34
  %v203 = vunpack.c.l.b16 %v35
  %v204 = vunpack.c.l.b16 %v36
  %v205 = vunpack.c.l.b16 %v37
  %v206 = vunpack.c.l.b16 %v38
  %v207 = vunpack.c.l.b16 %v39
  %v208 = vunpack.c.l.b16 %v40
  %v209 = vunpack.c.l.b16 %v41
  %v210 = vunpack.c.l.b16 %v42
  %v211 = vunpack.c.l.b16 %v43
  %v212 = vunpack.c.l.b16 %v44
  %v213 = vunpack.c.l.b16 %v45
  %v214 = vunpack.c.l.b16 %v46
  %v215 = vunpack.c.l.b16 %v47
  %v216 = vunpack.c.l.b16 %v48
  %v217 = vunpack.c.l.b16 %v49
  %v218 = vunpack.c.l.b16 %v50
  %v219 = vunpack.c.l.b16 %v51
  %v220 = vunpack.c.l.b16 %v52
  %v221 = vunpack.c.l.b16 %v53
  %v222 = vunpack.c.l.b16 %v54
  %v223 = vunpack.c.l.b16 %v55
  %v224 = vunpack.c.l.b16 %v56
  %v225 = vunpack.c.l.b16 %v57
  %v226 = vunpack.c.l.b16 %v58
  %v227 = vunpack.c.l.b16 %v59
  %v228 = vunpack.c.l.b16 %v60
  %v229 = vunpack.c.l.b16 %v61
  %v230 = vunpack.c.l.b16 %v62
  %v231 = vunpack.c.l.b16 %v63
  %v232 = vunpack.c.l.b16 %v64
  %v233 = vunpack.c.l.b16 %v65
  %v234 = vunpack.c.l.b16 %v66
  %v235 = vunpack.c.l.b16 %v67
  %v236 = vunpack.c.l.b16 %v68
  %v237 = vunpack.c.l.b16 %v69
  %v238 = vunpack.c.l.b16 %v70
  %v239 = vunpack.c.l.b16 %v71
  %v240 = vunpack.c.l.b16 %v72
  %v241 = vunpack.c.l.b16 %v73
  %v242 = vunpack.c.l.b16 %v74
  %v243 = vunpack.c.l.b16 %v75
  %v244 = vunpack.c.l.b16 %v76
  %v245 = vunpack.c.l.b16 %v77
  %v246 = vunpack.c.l.b16 %v78
  %v247 = vunpack.c.l.b16 %v79
  %v248 = vunpack.c.l.b16 %v80
  %v249 = vunpack.c.l.b16 %v81
  %v250 = vunpack.c.l.b16 %v82
  %v251 = vunpack.c.l.b16 %v83
  %v252 = vunpack.c.l.b16 %v84
  %v253 = vunpack.c.l.b16 %v85
  %v254 = vunpack.c.l.b16 %v86
  %v255 = vunpack.c.l.b16 %v87
  %v256 = vunpack.c.l.b16 %v88
  %v257 = vunpack.c.l.b16 %v89
  %v258 = vunpack.c.l.b16 %v90
  %v259 = vunpack.c.l.b16 %v91
  %v260 = vunpack.c.l.b16 %v92
  %v261 = vpack.c.b16 %v198, %v197
  %v262 = vpack.c.b16 %v200, %v199
  %v263 = vpack.c.b16 %v202, %v201
  %v264 = vpack.c.b16 %v204, %v203
  %v265 = vpack.c.b16 %v206, %v205
  %v266 = vpack.c.b16 %v208, %v207
  %v267 = vpack.c.b16 %v210, %v209
  %v268 = vpack.c.b16 %v212, %v211
  %v269 = vpack.c.b16 %v214, %v213
  %v270 = vpack.c.b16 %v216, %v215
  %v271 = vpack.c.b16 %v218, %v217
  %v272 = vpack.c.b16 %v220, %v219
  %v273 = vpack.c.b16 %v222, %v221
  %v274 = vpack.c.b16 %v224, %v223
  %v275 = vpack.c.b16 %v226, %v225
  %v276 = vpack.c.b16 %v228, %v227
  %v277 = vpack.c.b16 %v230, %v229
  %v278 = vpack.c.b16 %v232, %v231
  %v279 = vpack.c.b16 %v234, %v233
  %v280 = vpack.c.b16 %v236, %v235
  %v281 = vpack.c.b16 %v238, %v237
  %v282 = vpack.c.b16 %v240, %v239
  %v283 = vpack.c.b16 %v242, %v241
  %v284 = vpack.c.b16 %v244, %v243
  %v285 = vpack.c.b16 %v246, %v245
  %v286 = vpack.c.b16 %v248, %v247
  %v287 = vpack.c.b16 %v250, %v249
  %v288 = vpack.c.b16 %v252, %v251
  %v289 = vpack.c.b16 %v254, %v253
  %v290 = vpack.c.b16 %v256, %v255
  %v291 = vpack.c.b16 %v258, %v257
  %v292 = vpack.c.b16 %v260, %v259
  %325 = vmatprep.subr.bf16.mxu0 0
  %326 = vmatpush1.bf16.msra.mxu0 %v268
  %327 = vmatprep.subr.bf16.mxu0 0
  %328 = vmatpush1.bf16.msra.mxu0 %v267
  %329 = vmatprep.subr.bf16.mxu0 0
  %330 = vmatpush1.bf16.msra.mxu0 %v266
  %331 = vmatprep.subr.bf16.mxu0 0
  %332 = vmatpush1.bf16.msra.mxu0 %v265
  %333 = vmatprep.subr.bf16.mxu0 0
  %334 = vmatpush1.bf16.msra.mxu0 %v264
  %335 = vmatprep.subr.bf16.mxu0 0
  %336 = vmatpush1.bf16.msra.mxu0 %v263
  %337 = vmatprep.subr.bf16.mxu0 0
  %338 = vmatpush1.bf16.msra.mxu0 %v262
  %339 = vmatprep.subr.bf16.mxu0 0
  %340 = vmatpush1.bf16.msra.mxu0 %v261
  %341 = vmatprep.subr.bf16.mxu0 0
  %342 = vmatpush2.bf16.msra.mxu0 %v276
  %343 = vmatprep.subr.bf16.mxu0 0
  %344 = vmatpush2.bf16.msra.mxu0 %v275
  %345 = vmatprep.subr.bf16.mxu0 0
  %346 = vmatpush2.bf16.msra.mxu0 %v274
  %347 = vmatprep.subr.bf16.mxu0 0
  %348 = vmatpush2.bf16.msra.mxu0 %v273
  %349 = vmatprep.subr.bf16.mxu0 0
  %350 = vmatpush2.bf16.msra.mxu0 %v272
  %351 = vmatprep.subr.bf16.mxu0 0
  %352 = vmatpush2.bf16.msra.mxu0 %v271
  %353 = vmatprep.subr.bf16.mxu0 0
  %354 = vmatpush2.bf16.msra.mxu0 %v270
  %355 = vmatprep.subr.bf16.mxu0 0
  %356 = vmatpush2.bf16.msra.mxu0 %v269
  %357 = vmatprep.mubr.bf16.mxu0 %v118
  %358 = vmatmul.mubr.bf16.gmra.mxu0 %v117
  %v359 = vpop.f32.mrf.mxu0
  %v360 = vadd.f32 0.0, %v359
  %v361 = vpop.f32.mrf.mxu0
  %v362 = vpop.f32.mrf.mxu0
  %v363 = vadd.f32 0.0, %v362
  %v364 = vpop.f32.mrf.mxu0
  %365 = vmatprep.mubr.bf16.mxu0 %v122
  %366 = vmatmul.mubr.bf16.gmra.mxu0 %v121
  %v367 = vpop.f32.mrf.mxu0
  %v368 = vadd.f32 0.0, %v367
  %v369 = vpop.f32.mrf.mxu0
  %v370 = vpop.f32.mrf.mxu0
  %v371 = vadd.f32 0.0, %v370
  %v372 = vpop.f32.mrf.mxu0
  %373 = vdwg.mxu0
  %374 = vmatprep.subr.bf16.mxu0 0
  %375 = vmatpush1.bf16.msra.mxu0 %v284
  %376 = vmatprep.subr.bf16.mxu0 0
  %377 = vmatpush1.bf16.msra.mxu0 %v283
  %378 = vmatprep.subr.bf16.mxu0 0
  %379 = vmatpush1.bf16.msra.mxu0 %v282
  %380 = vmatprep.subr.bf16.mxu0 0
  %381 = vmatpush1.bf16.msra.mxu0 %v281
  %382 = vmatprep.subr.bf16.mxu0 0
  %383 = vmatpush1.bf16.msra.mxu0 %v280
  %384 = vmatprep.subr.bf16.mxu0 0
  %385 = vmatpush1.bf16.msra.mxu0 %v279
  %386 = vmatprep.subr.bf16.mxu0 0
  %387 = vmatpush1.bf16.msra.mxu0 %v278
  %388 = vmatprep.subr.bf16.mxu0 0
  %389 = vmatpush1.bf16.msra.mxu0 %v277
  %390 = vmatprep.subr.bf16.mxu0 0
  %391 = vmatpush2.bf16.msra.mxu0 %v292
  %392 = vmatprep.subr.bf16.mxu0 0
  %393 = vmatpush2.bf16.msra.mxu0 %v291
  %394 = vmatprep.subr.bf16.mxu0 0
  %395 = vmatpush2.bf16.msra.mxu0 %v290
  %396 = vmatprep.subr.bf16.mxu0 0
  %397 = vmatpush2.bf16.msra.mxu0 %v289
  %398 = vmatprep.subr.bf16.mxu0 0
  %399 = vmatpush2.bf16.msra.mxu0 %v288
  %400 = vmatprep.subr.bf16.mxu0 0
  %401 = vmatpush2.bf16.msra.mxu0 %v287
  %402 = vmatprep.subr.bf16.mxu0 0
  %403 = vmatpush2.bf16.msra.mxu0 %v286
  %404 = vmatprep.subr.bf16.mxu0 0
  %405 = vmatpush2.bf16.msra.mxu0 %v285
  %406 = vmatprep.mubr.bf16.mxu0 %v120
  %407 = vmatmul.mubr.bf16.gmra.mxu0 %v119
  %v408 = vpop.f32.mrf.mxu0
  %v409 = vadd.f32 %v360, %v408
  %v410 = vpop.f32.mrf.mxu0
  %v411 = vpop.f32.mrf.mxu0
  %v412 = vadd.f32 %v363, %v411
  %v413 = vpop.f32.mrf.mxu0
  %414 = vmatprep.mubr.bf16.mxu0 %v124
  %415 = vmatmul.mubr.bf16.gmra.mxu0 %v123
  %v416 = vpop.f32.mrf.mxu0
  %v417 = vadd.f32 %v368, %v416
  %v418 = vpop.f32.mrf.mxu0
  %v419 = vpop.f32.mrf.mxu0
  %v420 = vadd.f32 %v371, %v419
  %v421 = vpop.f32.mrf.mxu0
  %422 = vdwg.mxu0
  %v423 = vld [vmem:[%s2] sm:$0x1]
  %v424 = vld [vmem:[%s3] sm:$0x1]
  %vm425 = vcmask 523264
  %v426 = vsel %vm425, %v409, 0.0
  %v427 = vsel %vm425, %v412, 0.0
  %v428 = vadd.f32 %v426, %v427
  %v429 = vsel %vm425, %v417, 0.0
  %v430 = vadd.f32 %v428, %v429
  %v431 = vsel %vm425, %v420, 0.0
  %v432 = vadd.f32 %v430, %v431
  %v433 = vrot.slane %v432, 4
  %v434 = vadd.f32 %v432, %v433
  %v435 = vrot.slane %v434, 2
  %v436 = vadd.f32 %v434, %v435
  %v437 = vrot.slane %v436, 1
  %v438 = vadd.f32 %v436, %v437
  %v439 = vmul.f32 %v438, 0.03125
  %v440 = vmul.f32 %v409, %v409
  %v441 = vmul.f32 %v412, %v412
  %v442 = vmul.f32 %v417, %v417
  %v443 = vmul.f32 %v420, %v420
  %v444 = vsel %vm425, %v440, 0.0
  %v445 = vsel %vm425, %v441, 0.0
  %v446 = vadd.f32 %v444, %v445
  %v447 = vsel %vm425, %v442, 0.0
  %v448 = vadd.f32 %v446, %v447
  %v449 = vsel %vm425, %v443, 0.0
  %v450 = vadd.f32 %v448, %v449
  %v451 = vrot.slane %v450, 4
  %v452 = vadd.f32 %v450, %v451
  %v453 = vrot.slane %v452, 2
  %v454 = vadd.f32 %v452, %v453
  %v455 = vrot.slane %v454, 1
  %v456 = vadd.f32 %v454, %v455
  %v457 = vmul.f32 %v456, 0.03125
  %v458 = vmul.f32 %v439, %v439
  %v459 = vsub.f32 %v457, %v458
  %v460 = vadd.f32 %v459, 1e-05
  %v461 = vrsqrt.pop %v460
  %v462 = vmul.f32 %v423, %v461
  %v463 = vmul.f32 %v439, %v462
  %v464 = vsub.f32 %v424, %v463
  %v466 = vlaneseq
  %v467 = vshrl.u32 %v466, 7
  %v468 = vsub.s32 0, %v467
  %v469 = vrot.slane %v462, %v468
  %v471 = vmul.f32 %v409, %v469
  %v472 = vmul.f32 %v412, %v469
  %v473 = vmul.f32 %v417, %v469
  %v474 = vmul.f32 %v420, %v469
  %v476 = vlaneseq
  %v477 = vshrl.u32 %v476, 7
  %v478 = vsub.s32 0, %v477
  %v479 = vrot.slane %v464, %v478
  %v481 = vadd.f32 %v471, %v479
  %v482 = vadd.f32 %v472, %v479
  %v483 = vadd.f32 %v473, %v479
  %v484 = vadd.f32 %v474, %v479
  %vm485 = vcmp.ge.f32.partialorder %v481, 0.0
  %vm486 = vcmp.ge.f32.partialorder %v482, 0.0
  %vm487 = vcmp.ge.f32.partialorder %v483, 0.0
  %vm488 = vcmp.ge.f32.partialorder %v484, 0.0
  %v489 = vmul.f32 %v481, 0.2
  %v490 = vmul.f32 %v482, 0.2
  %v491 = vmul.f32 %v483, 0.2
  %v492 = vmul.f32 %v484, 0.2
  %v493 = vsel %vm485, %v481, %v489
  %v494 = vsel %vm486, %v482, %v490
  %v495 = vsel %vm487, %v483, %v491
  %v496 = vsel %vm488, %v484, %v492
  %v497 = vld [vmem:[%s4] sm:$0xff]
  %v498 = vld [vmem:[%s4 + $0x8] sm:$0xff]
  %v499 = vmul.f32 %v493, %v497
  %v500 = vmul.f32 %v494, %v498
  %v501 = vmul.f32 %v495, %v497
  %v502 = vmul.f32 %v496, %v498
  %v503 = vsel %vm425, %v499, 0.0
  %504 = vadd.xlane.f32.xlu0 %v503
  %v505 = vpop.xlane.xlu0 %504
  %v506 = vsel %vm425, %v500, 0.0
  %507 = vadd.xlane.f32.xlu0 %v506
  %v508 = vpop.xlane.xlu0 %507
  %v509 = vsel %vm425, %v501, 0.0
  %510 = vadd.xlane.f32.xlu0 %v509
  %v511 = vpop.xlane.xlu0 %510
  %v512 = vsel %vm425, %v502, 0.0
  %513 = vadd.xlane.f32.xlu0 %v512
  %v514 = vpop.xlane.xlu0 %513
  %v519 = vlaneseq
  %v520 = vand.u32 %v519, 127
  %v521 = vlaneseq
  %v522 = vshrl.u32 %v521, 7
  %v523 = vsub.s32 %v520, %v522
  %v524 = vrot.slane %v505, %v523
  %v525 = vadd.s32 %v520, 4294967288
  %v526 = vlaneseq
  %v527 = vshrl.u32 %v526, 7
  %v528 = vsub.s32 %v525, %v527
  %v529 = vrot.slane %v508, %v528
  %vm530 = vcmask 130112
  %v531 = vsel %vm530, %v529, %v524
  %v532 = vlaneseq
  %v533 = vshrl.u32 %v532, 7
  %v534 = vsub.s32 %v520, %v533
  %v535 = vrot.slane %v511, %v534
  %v536 = vlaneseq
  %v537 = vshrl.u32 %v536, 7
  %v538 = vsub.s32 %v525, %v537
  %v539 = vrot.slane %v514, %v538
  %v540 = vsel %vm530, %v539, %v535
  %vm541 = vcmask 1041409
  %v542 = vsel %vm541, %v540, %v531
  %vm544 = vcmask 123904
  %v545 = vsel %vm544, %v542, 0.0
  %546 = vadd.xlane.f32.xlu0 %v545
  %v547 = vpop.xlane.xlu0 %546
  %v548 = vxor.u32 %v547, 2147483648
  %v549 = vmul.f32 %v548, 1.442695
  %v550 = vpow.pop %v549
  %v551 = vadd.f32 %v550, 1.0
  %v552 = vrcp.pop %v551
  %v553 = vmul.f32 1.0, %v552
  %vm554 = vcmask 1024
  %555 = vst.msk [vmem:[%s5] sm:$0x3] %vm554, %v553
  // Predicated region
  $region22: #{discriminator_forward.7} parent=0 // pred_check
    _
  $region23: #{discriminator_forward.7} parent=0 // pred_check_branch
    %557 = sbr.rel (0) target = $region25
  $region24: #{discriminator_forward.7} parent=0 // pred_region
    _
  $region25: #{discriminator_forward.7} parent=0 // pred_fallthru
    _
  // Predicated region
  $region26: #{discriminator_forward.7} parent=0 // pred_check
    _
  $region27: #{discriminator_forward.7} parent=0 // pred_check_branch
    %559 = sbr.rel (0) target = $region29
  $region28: #{discriminator_forward.7} parent=0 // pred_region
    _
  $region29: #{discriminator_forward.7} parent=0 // pred_fallthru
    _

</llo_original>
